<compile_context>
chip_gen: v6e
topology: v6e:2x2x1
jax: 0.10.0
libtpu: 0.0.40
codegen_flags: <defaults>
</compile_context>

<pallas_src>
import jax
import jax.numpy as jnp
from jax import lax
from jax.experimental import pallas as pl
from jax.experimental.pallas import tpu as pltpu


def _vmem_spec():
    return pl.BlockSpec(memory_space=pltpu.MemorySpace.VMEM)


def _vmem_limit_bytes():
    """Generation-aware VMEM request: ~3/4 of physical VMEM, capped at 100 MiB.

    -> ~48 MiB on v7x (64 MiB physical), ~96 MiB on v5e/v6e (128 MiB physical).
    """
    cap = None
    try:
        info = pltpu.get_tpu_info()
        cap = int(getattr(info, "vmem_capacity_bytes", 0)) or None
    except Exception:
        cap = None
    if cap is None:
        cap = 128 * 1024 * 1024
    return int(min(cap * 3 // 4, 100 * 1024 * 1024))


# -----------------------------------------------------------------------------
# Column-phase source maps (shared by weight prep and the kernel body).
# For output column x, tap dx in {0,1,2} reads logical column x+dx-1; t=r+dx-1
# decides which low-res source (and +-1 column offset) supplies it. Taps that
# land on the same source have their weight matrices summed.
# -----------------------------------------------------------------------------
def _stage1_sources(r):
    # Conv over a 2x-upsampled single tensor; output phases r in {0,1}.
    srcs = {}
    for dx in range(3):
        t = r + dx - 1
        off = -1 if t < 0 else (0 if t < 2 else 1)
        srcs.setdefault(off, []).append(dx)
    return sorted(srcs.items())


def _stage2_sources(r):
    # Conv over the 2x-upsample of a 2-phase (E/O) signal; phases r in {0..3}.
    srcs = {}
    for dx in range(3):
        t = r + dx - 1
        if t < 0:
            key = ('O', -1)
        elif t < 2:
            key = ('E', 0)
        elif t < 4:
            key = ('O', 0)
        else:
            key = ('E', 1)
        srcs.setdefault(key, []).append(dx)
    return sorted(srcs.items())


def _stage3_sources(r):
    # Plain conv over a 4-phase signal; phases r in {0..3}.
    srcs = {}
    for dx in range(3):
        t = r + dx - 1
        if t < 0:
            key = (3, -1)
        elif t < 4:
            key = (t, 0)
        else:
            key = (0, 1)
        srcs.setdefault(key, []).append(dx)
    return sorted(srcs.items())


# Unified source list for the merged stage-3 matmul (order shared by the
# weight packer and the kernel's patch builder).
_STAGE3_KEYS = tuple(sorted({k for r in range(4) for k, _ in _stage3_sources(r)}))


# -----------------------------------------------------------------------------
# In-kernel helpers (pure jnp on VMEM values).
# -----------------------------------------------------------------------------
def _shift_w(x, d):
    # d=-1: result[j] = x[j-1] (zero at j=0); d=+1: result[j] = x[j+1].
    b_, h_, w_, c_ = x.shape
    z = jnp.zeros((b_, h_, 1, c_), x.dtype)
    if d < 0:
        return jnp.concatenate([z, x[:, :, :w_ - 1, :]], axis=2)
    return jnp.concatenate([x[:, :, 1:, :], z], axis=2)


def _up_h(x):
    # Nearest-neighbour x2 along H (leading dim): pure leading-dim ops.
    b_, h_, w_, c_ = x.shape
    y = jnp.concatenate([x[:, :, None, :, :], x[:, :, None, :, :]], axis=2)
    return y.reshape(b_, 2 * h_, w_, c_)


def _pad_h(x):
    # One zero row above and below (leading-dim concat).
    b_, h_, w_, c_ = x.shape
    z = jnp.zeros((b_, 1, w_, c_), x.dtype)
    return jnp.concatenate([z, x, z], axis=1)


def _patch(src_list, h_out):
    # src_list: H-padded sources (B, h_out+2, W, C). Build the im2col slab with
    # K = 3 * len(src_list) * C (dy-major, then source) and flatten rows.
    slabs = [src[:, dy:dy + h_out, :, :] for dy in range(3) for src in src_list]
    pt = jnp.concatenate(slabs, axis=-1)
    b_, _, w_, k_ = pt.shape
    return pt.reshape(b_ * h_out * w_, k_)


def _bn_lrelu(flats, gamma, beta, eps, slope):
    # flats: list of (rows, C) f32 phase outputs; joint stats == stats over
    # (N, H, W) as in PyTorch training-mode BatchNorm (biased variance).
    # One-pass stats: sum and sum-of-squares, var = E[x^2] - mean^2 (f32).
    n = float(sum(f.shape[0] for f in flats))
    s1 = jnp.sum(flats[0], axis=0, keepdims=True)
    s2 = jnp.sum(flats[0] * flats[0], axis=0, keepdims=True)
    for f in flats[1:]:
        s1 = s1 + jnp.sum(f, axis=0, keepdims=True)
        s2 = s2 + jnp.sum(f * f, axis=0, keepdims=True)
    mean = s1 * (1.0 / n)
    var = s2 * (1.0 / n) - mean * mean
    scale = lax.rsqrt(var + eps) * gamma          # (1, C)
    shift = beta - mean * scale
    outs = []
    for f in flats:
        y = f * scale + shift
        outs.append(jnp.maximum(y, slope * y))    # LeakyReLU(slope<1)
    return outs


# -----------------------------------------------------------------------------
# Fused kernel: Linear + (Up+Conv+BN+LReLU) x2 + Conv + Tanh, all in VMEM.
# -----------------------------------------------------------------------------
def _make_fused_kernel(B, s, c3p, eps=0.8, slope=0.2):
    C1, C2 = 128, 64
    H1, H2 = 2 * s, 4 * s
    bf16, f32 = jnp.bfloat16, jnp.float32

    def kernel(noise_ref, l1w_ref, l1b_ref,
               w1_ref, g1_ref, bt1_ref,
               w20_ref, w212_ref, w23_ref, g2_ref, bt2_ref,
               w3_ref, b3_ref, o_ref):
        # --- l1: Linear(latent -> 128*s*s); columns pre-permuted to NHWC -----
        x1 = (jnp.dot(noise_ref[...].astype(bf16), l1w_ref[...],
                      preferred_element_type=f32) + l1b_ref[...])
        x1 = x1.reshape(B, s, s, C1).astype(bf16)

        # --- stage 1: Upsample(x2) + Conv1(128->128) + BN + LeakyReLU --------
        # (conv bias dropped: cancelled exactly by training-mode BN)
        src1 = {
            -1: _pad_h(_up_h(_shift_w(x1, -1))),
            0: _pad_h(_up_h(x1)),
            1: _pad_h(_up_h(_shift_w(x1, 1))),
        }
        outs1 = []
        for r in range(2):
            srcs = [src1[off] for off, _ in _stage1_sources(r)]
            outs1.append(jnp.dot(_patch(srcs, H1), w1_ref[r],
                                 preferred_element_type=f32))
        outs1 = _bn_lrelu(outs1, g1_ref[...], bt1_ref[...], eps, slope)
        e1 = outs1[0].reshape(B, H1, s, C1).astype(bf16)    # even columns
        o1 = outs1[1].reshape(B, H1, s, C1).astype(bf16)    # odd columns

        # --- stage 2: Upsample(x2) + Conv2(128->64) + BN + LeakyReLU ---------
        # Phases r=1 and r=2 share their source set -> one N=128 matmul.
        src2 = {
            ('E', 0): _pad_h(_up_h(e1)),
            ('E', 1): _pad_h(_up_h(_shift_w(e1, 1))),
            ('O', -1): _pad_h(_up_h(_shift_w(o1, -1))),
            ('O', 0): _pad_h(_up_h(o1)),
        }
        slab_r0 = _patch([src2[k] for k, _ in _stage2_sources(0)], H2)
        slab_r12 = _patch([src2[k] for k, _ in _stage2_sources(1)], H2)
        slab_r3 = _patch([src2[k] for k, _ in _stage2_sources(3)], H2)
        out_r0 = jnp.dot(slab_r0, w20_ref[...], preferred_element_type=f32)
        out_r12 = jnp.dot(slab_r12, w212_ref[...], preferred_element_type=f32)
        out_r3 = jnp.dot(slab_r3, w23_ref[...], preferred_element_type=f32)
        outs2 = [out_r0, out_r12[:, :C2], out_r12[:, C2:], out_r3]
        outs2 = _bn_lrelu(outs2, g2_ref[...], bt2_ref[...], eps, slope)
        p = [o.reshape(B, H2, s, C2).astype(bf16) for o in outs2]

        # --- stage 3: Conv3(64->channels, padded to c3p) + Tanh --------------
        # All 4 column phases merged into one matmul over a unified 6-source
        # slab (zero weight blocks for unused sources); N = 4*c3p = 128 lanes,
        # so the final store is a single lane-dense write.
        src3 = {
            (0, 0): _pad_h(p[0]), (1, 0): _pad_h(p[1]),
            (2, 0): _pad_h(p[2]), (3, 0): _pad_h(p[3]),
            (3, -1): _pad_h(_shift_w(p[3], -1)),
            (0, 1): _pad_h(_shift_w(p[0], 1)),
        }
        slab3 = _patch([src3[k] for k in _STAGE3_KEYS], H2)
        acc3 = jnp.dot(slab3, w3_ref[...], preferred_element_type=f32)
        o_ref[...] = jnp.tanh(acc3 + b3_ref[...]).reshape(B, H2, s, 4 * c3p)

    return kernel


# -----------------------------------------------------------------------------
# Parameter construction / kernel-ready prep.
# -----------------------------------------------------------------------------
def init_generator_params(key, latent_dim, img_size, channels):
    init_size = img_size // 4
    d_l1 = 128 * init_size * init_size
    ks = jax.random.split(key, 8)

    def uni(k, shape, fan_in):
        bound = 1.0 / jnp.sqrt(float(fan_in))
        return jax.random.uniform(k, shape, jnp.float32, -bound, bound)

    return {
        "l1_w": uni(ks[0], (latent_dim, d_l1), latent_dim),
        "l1_b": uni(ks[1], (d_l1,), latent_dim),
        "c1_w": uni(ks[2], (3, 3, 128, 128), 128 * 9),   # HWIO
        "c1_b": uni(ks[3], (128,), 128 * 9),
        "bn1_g": jnp.ones((128,), jnp.float32),
        "bn1_b": jnp.zeros((128,), jnp.float32),
        "c2_w": uni(ks[4], (3, 3, 128, 64), 128 * 9),
        "c2_b": uni(ks[5], (64,), 128 * 9),
        "bn2_g": jnp.ones((64,), jnp.float32),
        "bn2_b": jnp.zeros((64,), jnp.float32),
        "c3_w": uni(ks[6], (3, 3, 64, channels), 64 * 9),
        "c3_b": uni(ks[7], (channels,), 64 * 9),
    }


def prepare_params(params, img_size, channels):
    assert img_size % 4 == 0 and channels <= 128
    s = img_size // 4
    d = 128 * s * s
    bf16, f32 = jnp.bfloat16, jnp.float32
    c3p = 32 if channels <= 32 else (64 if channels <= 64 else 128)

    # Pre-permute l1 columns from NCHW-flat to NHWC-flat so the in-kernel
    # reshape (B, d) -> (B, s, s, 128) is a pure layout split.
    l1_w = jnp.transpose(params['l1_w'].reshape(-1, 128, s, s),
                         (0, 2, 3, 1)).reshape(-1, d)
    l1_b = jnp.transpose(params['l1_b'].reshape(128, s, s),
                         (1, 2, 0)).reshape(1, d)

    def phase_blocks(w_hwio, src_fn, n_phase):
        ws = []
        for r in range(n_phase):
            blocks = []
            for dy in range(3):
                for _, dxs in src_fn(r):
                    blk = w_hwio[dy, dxs[0]]
                    for dx in dxs[1:]:
                        blk = blk + w_hwio[dy, dx]
                    blocks.append(blk)
            ws.append(jnp.concatenate(blocks, axis=0))
        return ws

    w1 = jnp.stack(phase_blocks(params['c1_w'], _stage1_sources, 2)).astype(bf16)

    w2 = phase_blocks(params['c2_w'], _stage2_sources, 4)       # 4 x (768, 64)
    w2_0 = w2[0].astype(bf16)
    w2_12 = jnp.concatenate([w2[1], w2[2]], axis=1).astype(bf16)  # (768, 128)
    w2_3 = w2[3].astype(bf16)

    # Stage-3: unified 6-source K slab; per-phase weights zero-padded on the
    # sources that phase does not use; channels padded to c3p; phases
    # concatenated along N -> (3*6*64, 4*c3p).
    w3_pad = jnp.pad(params['c3_w'],
                     ((0, 0), (0, 0), (0, 0), (0, c3p - channels)))
    cols = []
    for r in range(4):
        srcs = dict(_stage3_sources(r))
        blocks = []
        for dy in range(3):
            for key in _STAGE3_KEYS:
                if key in srcs:
                    dxs = srcs[key]
                    blk = w3_pad[dy, dxs[0]]
                    for dx in dxs[1:]:
                        blk = blk + w3_pad[dy, dx]
                else:
                    blk = jnp.zeros((64, c3p), f32)
                blocks.append(blk)
        cols.append(jnp.concatenate(blocks, axis=0))
    w3_m = jnp.concatenate(cols, axis=1).astype(bf16)            # (1152, 4*c3p)
    b3_m = jnp.tile(jnp.pad(params['c3_b'], (0, c3p - channels)),
                    4).reshape(1, 4 * c3p).astype(f32)

    return {
        'l1_w': l1_w.astype(bf16),
        'l1_b': l1_b.astype(f32),
        'w1': w1,                                                 # (2,768,128)
        'g1': params['bn1_g'].reshape(1, -1).astype(f32),
        'bt1': params['bn1_b'].reshape(1, -1).astype(f32),
        'w2_0': w2_0, 'w2_12': w2_12, 'w2_3': w2_3,
        'g2': params['bn2_g'].reshape(1, -1).astype(f32),
        'bt2': params['bn2_b'].reshape(1, -1).astype(f32),
        'w3': w3_m,
        'b3': b3_m,
    }


# -----------------------------------------------------------------------------
# Full Generator forward (one pallas_call).
# -----------------------------------------------------------------------------
def generator_forward(prepped, noise, img_size, channels):
    s = img_size // 4
    B, latent_dim = noise.shape
    d = prepped['l1_w'].shape[1]
    c3p4 = prepped['w3'].shape[1]
    c3p = c3p4 // 4

    args = (noise, prepped['l1_w'], prepped['l1_b'],
            prepped['w1'], prepped['g1'], prepped['bt1'],
            prepped['w2_0'], prepped['w2_12'], prepped['w2_3'],
            prepped['g2'], prepped['bt2'],
            prepped['w3'], prepped['b3'])

    flops = (2 * B * latent_dim * d
             + 2 * B * (2 * s) ** 2 * 9 * 128 * 128
             + 2 * B * (4 * s) ** 2 * 9 * 128 * 64
             + 2 * B * (4 * s) ** 2 * 9 * 64 * c3p)
    transcendentals = B * (4 * s) ** 2 * c3p
    out_bytes = B * (4 * s) * s * c3p4 * 4
    bytes_accessed = int(sum(int(a.size) * a.dtype.itemsize for a in args)
                         + out_bytes)

    fused = pl.pallas_call(
        _make_fused_kernel(B, s, c3p),
        out_shape=jax.ShapeDtypeStruct((B, 4 * s, s, c3p4), jnp.float32),
        in_specs=[_vmem_spec()] * len(args),
        out_specs=_vmem_spec(),
        compiler_params=pltpu.CompilerParams(
            vmem_limit_bytes=_vmem_limit_bytes()),
        cost_estimate=pl.CostEstimate(flops=int(flops),
                                      transcendentals=int(transcendentals),
                                      bytes_accessed=bytes_accessed),
    )(*args)

    # (B, 4s, s, 4*c3p) -> NCHW image; tiny final layout fixup in XLA.
    y = fused.reshape(B, 4 * s, s, 4, c3p)[..., :channels]
    return jnp.transpose(y, (0, 4, 1, 2, 3)).reshape(B, channels, 4 * s, 4 * s)


# -----------------------------------------------------------------------------
# Pure-XLA reference of the PyTorch module (validation only).
# -----------------------------------------------------------------------------
def reference_forward(params, noise, img_size, channels):
    s = img_size // 4
    B = noise.shape[0]
    out = noise @ params['l1_w'] + params['l1_b']
    x = jnp.transpose(out.reshape(B, 128, s, s), (0, 2, 3, 1))   # NHWC

    def up(v):
        return jnp.repeat(jnp.repeat(v, 2, axis=1), 2, axis=2)

    def conv(v, w, b):
        return lax.conv_general_dilated(
            v, w, (1, 1), 'SAME',
            dimension_numbers=('NHWC', 'HWIO', 'NHWC')) + b

    def bn_lrelu(v, g, bt):
        m = jnp.mean(v, axis=(0, 1, 2))
        var = jnp.mean((v - m) ** 2, axis=(0, 1, 2))
        y = (v - m) * lax.rsqrt(var + 0.8) * g + bt
        return jnp.where(y >= 0.0, y, 0.2 * y)

    x = bn_lrelu(conv(up(x), params['c1_w'], params['c1_b']),
                 params['bn1_g'], params['bn1_b'])
    x = bn_lrelu(conv(up(x), params['c2_w'], params['c2_b']),
                 params['bn2_g'], params['bn2_b'])
    x = jnp.tanh(conv(x, params['c3_w'], params['c3_b']))
    return jnp.transpose(x, (0, 3, 1, 2))


if __name__ == "__main__":
    latent_dim = 32
    img_size = 16
    channels = 1
    batch = 2

    key = jax.random.PRNGKey(0)
    kp, kn = jax.random.split(key)
    params = init_generator_params(kp, latent_dim, img_size, channels)
    noise = jax.random.normal(kn, (batch, latent_dim), jnp.float32)

    prepped = prepare_params(params, img_size, channels)
    fwd = jax.jit(generator_forward, static_argnums=(2, 3))
    img = jax.block_until_ready(fwd(prepped, noise, img_size, channels))

    assert img.shape == (batch, channels, img_size, img_size), img.shape
    assert bool(jnp.all(jnp.isfinite(img)))
    assert bool(jnp.all(jnp.abs(img) <= 1.0))   # tanh range

    # Validate against the f32 XLA reference (kernel uses bf16 MXU inputs and
    # omits the BN-cancelled conv biases).
    ref = jax.block_until_ready(
        reference_forward(params, noise, img_size, channels))
    max_err = float(jnp.max(jnp.abs(img - ref)))
    assert max_err < 5e-2, f"max |pallas - reference| = {max_err}"

    print("KERNEL_OK")
</pallas_src>

<mosaic_0001>
module attributes {stable_mosaic.version = 11 : i64} {
  func.func @kernel(%arg0: memref<2x32xf32, #tpu.memory_space<vmem>>, %arg1: memref<32x2048xbf16, #tpu.memory_space<vmem>>, %arg2: memref<1x2048xf32, #tpu.memory_space<vmem>>, %arg3: memref<2x768x128xbf16, #tpu.memory_space<vmem>>, %arg4: memref<1x128xf32, #tpu.memory_space<vmem>>, %arg5: memref<1x128xf32, #tpu.memory_space<vmem>>, %arg6: memref<768x64xbf16, #tpu.memory_space<vmem>>, %arg7: memref<768x128xbf16, #tpu.memory_space<vmem>>, %arg8: memref<768x64xbf16, #tpu.memory_space<vmem>>, %arg9: memref<1x64xf32, #tpu.memory_space<vmem>>, %arg10: memref<1x64xf32, #tpu.memory_space<vmem>>, %arg11: memref<1152x128xbf16, #tpu.memory_space<vmem>>, %arg12: memref<1x128xf32, #tpu.memory_space<vmem>>, %arg13: memref<2x16x4x128xf32, #tpu.memory_space<vmem>>) attributes {dimension_semantics = [], scalar_prefetch = 0 : i64, scratch_operands = 0 : i64, tpu.core_type = #tpu.core_type<tc>} {
    %c0 = arith.constant 0 : index
    %c0_0 = arith.constant 0 : index
    %0 = vector.load %arg0[%c0, %c0_0] : memref<2x32xf32, #tpu.memory_space<vmem>>, vector<2x32xf32>
    %1 = arith.truncf %0 : vector<2x32xf32> to vector<2x32xbf16>
    %c0_1 = arith.constant 0 : index
    %c0_2 = arith.constant 0 : index
    %2 = vector.load %arg1[%c0_1, %c0_2] : memref<32x2048xbf16, #tpu.memory_space<vmem>>, vector<32x2048xbf16>
    %cst = arith.constant dense<0.000000e+00> : vector<2x2048xf32>
    %3 = tpu.matmul %1, %2, %cst {dimension_numbers = #tpu.dot_dimension_numbers<[1], [0], [0], [1], [0, 0, 1, 1], [], []>} : vector<2x32xbf16>, vector<32x2048xbf16>, vector<2x2048xf32> -> vector<2x2048xf32>
    %c0_3 = arith.constant 0 : index
    %c0_4 = arith.constant 0 : index
    %4 = vector.load %arg2[%c0_3, %c0_4] : memref<1x2048xf32, #tpu.memory_space<vmem>>, vector<1x2048xf32>
    %5 = vector.broadcast %4 : vector<1x2048xf32> to vector<2x2048xf32>
    %6 = arith.addf %3, %5 : vector<2x2048xf32>
    %7 = vector.shape_cast %6 : vector<2x2048xf32> to vector<2x4x4x128xf32>
    %8 = arith.truncf %7 : vector<2x4x4x128xf32> to vector<2x4x4x128xbf16>
    %cst_5 = arith.constant 0.000000e+00 : bf16
    %9 = vector.broadcast %cst_5 : bf16 to vector<2x4x1x128xbf16>
    %10 = vector.extract_strided_slice %8 {offsets = [0, 0, 0, 0], sizes = [2, 4, 3, 128], strides = [1, 1, 1, 1]} : vector<2x4x4x128xbf16> to vector<2x4x3x128xbf16>
    %11 = tpu.concatenate %9, %10 in 2 : vector<2x4x1x128xbf16>, vector<2x4x3x128xbf16> -> vector<2x4x4x128xbf16>
    %12 = vector.shape_cast %11 : vector<2x4x4x128xbf16> to vector<2x4x1x4x128xbf16>
    %13 = vector.shape_cast %11 : vector<2x4x4x128xbf16> to vector<2x4x1x4x128xbf16>
    %14 = tpu.concatenate %12, %13 in 2 : vector<2x4x1x4x128xbf16>, vector<2x4x1x4x128xbf16> -> vector<2x4x2x4x128xbf16>
    %15 = vector.shape_cast %14 : vector<2x4x2x4x128xbf16> to vector<2x8x4x128xbf16>
    %cst_6 = arith.constant 0.000000e+00 : bf16
    %16 = vector.broadcast %cst_6 : bf16 to vector<2x1x4x128xbf16>
    %17 = tpu.concatenate %16, %15, %16 in 1 : vector<2x1x4x128xbf16>, vector<2x8x4x128xbf16>, vector<2x1x4x128xbf16> -> vector<2x10x4x128xbf16>
    %18 = vector.shape_cast %8 : vector<2x4x4x128xbf16> to vector<2x4x1x4x128xbf16>
    %19 = vector.shape_cast %8 : vector<2x4x4x128xbf16> to vector<2x4x1x4x128xbf16>
    %20 = tpu.concatenate %18, %19 in 2 : vector<2x4x1x4x128xbf16>, vector<2x4x1x4x128xbf16> -> vector<2x4x2x4x128xbf16>
    %21 = vector.shape_cast %20 : vector<2x4x2x4x128xbf16> to vector<2x8x4x128xbf16>
    %cst_7 = arith.constant 0.000000e+00 : bf16
    %22 = vector.broadcast %cst_7 : bf16 to vector<2x1x4x128xbf16>
    %23 = tpu.concatenate %22, %21, %22 in 1 : vector<2x1x4x128xbf16>, vector<2x8x4x128xbf16>, vector<2x1x4x128xbf16> -> vector<2x10x4x128xbf16>
    %cst_8 = arith.constant 0.000000e+00 : bf16
    %24 = vector.broadcast %cst_8 : bf16 to vector<2x4x1x128xbf16>
    %25 = vector.extract_strided_slice %8 {offsets = [0, 0, 1, 0], sizes = [2, 4, 3, 128], strides = [1, 1, 1, 1]} : vector<2x4x4x128xbf16> to vector<2x4x3x128xbf16>
    %26 = tpu.concatenate %25, %24 in 2 : vector<2x4x3x128xbf16>, vector<2x4x1x128xbf16> -> vector<2x4x4x128xbf16>
    %27 = vector.shape_cast %26 : vector<2x4x4x128xbf16> to vector<2x4x1x4x128xbf16>
    %28 = vector.shape_cast %26 : vector<2x4x4x128xbf16> to vector<2x4x1x4x128xbf16>
    %29 = tpu.concatenate %27, %28 in 2 : vector<2x4x1x4x128xbf16>, vector<2x4x1x4x128xbf16> -> vector<2x4x2x4x128xbf16>
    %30 = vector.shape_cast %29 : vector<2x4x2x4x128xbf16> to vector<2x8x4x128xbf16>
    %cst_9 = arith.constant 0.000000e+00 : bf16
    %31 = vector.broadcast %cst_9 : bf16 to vector<2x1x4x128xbf16>
    %32 = tpu.concatenate %31, %30, %31 in 1 : vector<2x1x4x128xbf16>, vector<2x8x4x128xbf16>, vector<2x1x4x128xbf16> -> vector<2x10x4x128xbf16>
    %33 = vector.extract_strided_slice %17 {offsets = [0, 0, 0, 0], sizes = [2, 8, 4, 128], strides = [1, 1, 1, 1]} : vector<2x10x4x128xbf16> to vector<2x8x4x128xbf16>
    %34 = vector.extract_strided_slice %23 {offsets = [0, 0, 0, 0], sizes = [2, 8, 4, 128], strides = [1, 1, 1, 1]} : vector<2x10x4x128xbf16> to vector<2x8x4x128xbf16>
    %35 = vector.extract_strided_slice %17 {offsets = [0, 1, 0, 0], sizes = [2, 8, 4, 128], strides = [1, 1, 1, 1]} : vector<2x10x4x128xbf16> to vector<2x8x4x128xbf16>
    %36 = vector.extract_strided_slice %23 {offsets = [0, 1, 0, 0], sizes = [2, 8, 4, 128], strides = [1, 1, 1, 1]} : vector<2x10x4x128xbf16> to vector<2x8x4x128xbf16>
    %37 = vector.extract_strided_slice %17 {offsets = [0, 2, 0, 0], sizes = [2, 8, 4, 128], strides = [1, 1, 1, 1]} : vector<2x10x4x128xbf16> to vector<2x8x4x128xbf16>
    %38 = vector.extract_strided_slice %23 {offsets = [0, 2, 0, 0], sizes = [2, 8, 4, 128], strides = [1, 1, 1, 1]} : vector<2x10x4x128xbf16> to vector<2x8x4x128xbf16>
    %39 = tpu.concatenate %33, %34, %35, %36, %37, %38 in 3 : vector<2x8x4x128xbf16>, vector<2x8x4x128xbf16>, vector<2x8x4x128xbf16>, vector<2x8x4x128xbf16>, vector<2x8x4x128xbf16>, vector<2x8x4x128xbf16> -> vector<2x8x4x768xbf16>
    %40 = vector.shape_cast %39 : vector<2x8x4x768xbf16> to vector<64x768xbf16>
    %c0_10 = arith.constant 0 : index
    %c0_11 = arith.constant 0 : index
    %c0_12 = arith.constant 0 : index
    %41 = vector.load %arg3[%c0_10, %c0_11, %c0_12] : memref<2x768x128xbf16, #tpu.memory_space<vmem>>, vector<1x768x128xbf16>
    %42 = vector.shape_cast %41 : vector<1x768x128xbf16> to vector<768x128xbf16>
    %cst_13 = arith.constant dense<0.000000e+00> : vector<64x128xf32>
    %43 = tpu.matmul %40, %42, %cst_13 {dimension_numbers = #tpu.dot_dimension_numbers<[1], [0], [0], [1], [0, 0, 1, 1], [], []>} : vector<64x768xbf16>, vector<768x128xbf16>, vector<64x128xf32> -> vector<64x128xf32>
    %44 = vector.extract_strided_slice %23 {offsets = [0, 0, 0, 0], sizes = [2, 8, 4, 128], strides = [1, 1, 1, 1]} : vector<2x10x4x128xbf16> to vector<2x8x4x128xbf16>
    %45 = vector.extract_strided_slice %32 {offsets = [0, 0, 0, 0], sizes = [2, 8, 4, 128], strides = [1, 1, 1, 1]} : vector<2x10x4x128xbf16> to vector<2x8x4x128xbf16>
    %46 = vector.extract_strided_slice %23 {offsets = [0, 1, 0, 0], sizes = [2, 8, 4, 128], strides = [1, 1, 1, 1]} : vector<2x10x4x128xbf16> to vector<2x8x4x128xbf16>
    %47 = vector.extract_strided_slice %32 {offsets = [0, 1, 0, 0], sizes = [2, 8, 4, 128], strides = [1, 1, 1, 1]} : vector<2x10x4x128xbf16> to vector<2x8x4x128xbf16>
    %48 = vector.extract_strided_slice %23 {offsets = [0, 2, 0, 0], sizes = [2, 8, 4, 128], strides = [1, 1, 1, 1]} : vector<2x10x4x128xbf16> to vector<2x8x4x128xbf16>
    %49 = vector.extract_strided_slice %32 {offsets = [0, 2, 0, 0], sizes = [2, 8, 4, 128], strides = [1, 1, 1, 1]} : vector<2x10x4x128xbf16> to vector<2x8x4x128xbf16>
    %50 = tpu.concatenate %44, %45, %46, %47, %48, %49 in 3 : vector<2x8x4x128xbf16>, vector<2x8x4x128xbf16>, vector<2x8x4x128xbf16>, vector<2x8x4x128xbf16>, vector<2x8x4x128xbf16>, vector<2x8x4x128xbf16> -> vector<2x8x4x768xbf16>
    %51 = vector.shape_cast %50 : vector<2x8x4x768xbf16> to vector<64x768xbf16>
    %c1 = arith.constant 1 : index
    %c0_14 = arith.constant 0 : index
    %c0_15 = arith.constant 0 : index
    %52 = vector.load %arg3[%c1, %c0_14, %c0_15] : memref<2x768x128xbf16, #tpu.memory_space<vmem>>, vector<1x768x128xbf16>
    %53 = vector.shape_cast %52 : vector<1x768x128xbf16> to vector<768x128xbf16>
    %cst_16 = arith.constant dense<0.000000e+00> : vector<64x128xf32>
    %54 = tpu.matmul %51, %53, %cst_16 {dimension_numbers = #tpu.dot_dimension_numbers<[1], [0], [0], [1], [0, 0, 1, 1], [], []>} : vector<64x768xbf16>, vector<768x128xbf16>, vector<64x128xf32> -> vector<64x128xf32>
    %c0_17 = arith.constant 0 : index
    %c0_18 = arith.constant 0 : index
    %55 = vector.load %arg4[%c0_17, %c0_18] : memref<1x128xf32, #tpu.memory_space<vmem>>, vector<1x128xf32>
    %c0_19 = arith.constant 0 : index
    %c0_20 = arith.constant 0 : index
    %56 = vector.load %arg5[%c0_19, %c0_20] : memref<1x128xf32, #tpu.memory_space<vmem>>, vector<1x128xf32>
    %cst_21 = arith.constant dense<0.000000e+00> : vector<128xf32>
    %57 = vector.multi_reduction <add>, %43, %cst_21 [0] : vector<64x128xf32> to vector<128xf32>
    %58 = vector.shape_cast %57 : vector<128xf32> to vector<1x128xf32>
    %59 = arith.mulf %43, %43 : vector<64x128xf32>
    %cst_22 = arith.constant dense<0.000000e+00> : vector<128xf32>
    %60 = vector.multi_reduction <add>, %59, %cst_22 [0] : vector<64x128xf32> to vector<128xf32>
    %61 = vector.shape_cast %60 : vector<128xf32> to vector<1x128xf32>
    %cst_23 = arith.constant dense<0.000000e+00> : vector<128xf32>
    %62 = vector.multi_reduction <add>, %54, %cst_23 [0] : vector<64x128xf32> to vector<128xf32>
    %63 = vector.shape_cast %62 : vector<128xf32> to vector<1x128xf32>
    %64 = arith.addf %58, %63 : vector<1x128xf32>
    %65 = arith.mulf %54, %54 : vector<64x128xf32>
    %cst_24 = arith.constant dense<0.000000e+00> : vector<128xf32>
    %66 = vector.multi_reduction <add>, %65, %cst_24 [0] : vector<64x128xf32> to vector<128xf32>
    %67 = vector.shape_cast %66 : vector<128xf32> to vector<1x128xf32>
    %68 = arith.addf %61, %67 : vector<1x128xf32>
    %cst_25 = arith.constant 7.812500e-03 : f32
    %69 = vector.broadcast %cst_25 : f32 to vector<1x128xf32>
    %70 = arith.mulf %64, %69 : vector<1x128xf32>
    %cst_26 = arith.constant 7.812500e-03 : f32
    %71 = vector.broadcast %cst_26 : f32 to vector<1x128xf32>
    %72 = arith.mulf %68, %71 : vector<1x128xf32>
    %73 = arith.mulf %70, %70 : vector<1x128xf32>
    %74 = arith.subf %72, %73 : vector<1x128xf32>
    %cst_27 = arith.constant 8.000000e-01 : f32
    %75 = vector.broadcast %cst_27 : f32 to vector<1x128xf32>
    %76 = arith.addf %74, %75 : vector<1x128xf32>
    %77 = math.rsqrt %76 : vector<1x128xf32>
    %78 = arith.mulf %77, %55 : vector<1x128xf32>
    %79 = arith.mulf %70, %78 : vector<1x128xf32>
    %80 = arith.subf %56, %79 : vector<1x128xf32>
    %81 = vector.broadcast %78 : vector<1x128xf32> to vector<64x128xf32>
    %82 = arith.mulf %43, %81 : vector<64x128xf32>
    %83 = vector.broadcast %80 : vector<1x128xf32> to vector<64x128xf32>
    %84 = arith.addf %82, %83 : vector<64x128xf32>
    %cst_28 = arith.constant 2.000000e-01 : f32
    %85 = vector.broadcast %cst_28 : f32 to vector<64x128xf32>
    %86 = arith.mulf %85, %84 : vector<64x128xf32>
    %87 = arith.maximumf %84, %86 : vector<64x128xf32>
    %88 = vector.broadcast %78 : vector<1x128xf32> to vector<64x128xf32>
    %89 = arith.mulf %54, %88 : vector<64x128xf32>
    %90 = vector.broadcast %80 : vector<1x128xf32> to vector<64x128xf32>
    %91 = arith.addf %89, %90 : vector<64x128xf32>
    %cst_29 = arith.constant 2.000000e-01 : f32
    %92 = vector.broadcast %cst_29 : f32 to vector<64x128xf32>
    %93 = arith.mulf %92, %91 : vector<64x128xf32>
    %94 = arith.maximumf %91, %93 : vector<64x128xf32>
    %95 = vector.shape_cast %87 : vector<64x128xf32> to vector<2x8x4x128xf32>
    %96 = arith.truncf %95 : vector<2x8x4x128xf32> to vector<2x8x4x128xbf16>
    %97 = vector.shape_cast %94 : vector<64x128xf32> to vector<2x8x4x128xf32>
    %98 = arith.truncf %97 : vector<2x8x4x128xf32> to vector<2x8x4x128xbf16>
    %99 = vector.shape_cast %96 : vector<2x8x4x128xbf16> to vector<2x8x1x4x128xbf16>
    %100 = vector.shape_cast %96 : vector<2x8x4x128xbf16> to vector<2x8x1x4x128xbf16>
    %101 = tpu.concatenate %99, %100 in 2 : vector<2x8x1x4x128xbf16>, vector<2x8x1x4x128xbf16> -> vector<2x8x2x4x128xbf16>
    %102 = vector.shape_cast %101 : vector<2x8x2x4x128xbf16> to vector<2x16x4x128xbf16>
    %cst_30 = arith.constant 0.000000e+00 : bf16
    %103 = vector.broadcast %cst_30 : bf16 to vector<2x1x4x128xbf16>
    %104 = tpu.concatenate %103, %102, %103 in 1 : vector<2x1x4x128xbf16>, vector<2x16x4x128xbf16>, vector<2x1x4x128xbf16> -> vector<2x18x4x128xbf16>
    %cst_31 = arith.constant 0.000000e+00 : bf16
    %105 = vector.broadcast %cst_31 : bf16 to vector<2x8x1x128xbf16>
    %106 = vector.extract_strided_slice %96 {offsets = [0, 0, 1, 0], sizes = [2, 8, 3, 128], strides = [1, 1, 1, 1]} : vector<2x8x4x128xbf16> to vector<2x8x3x128xbf16>
    %107 = tpu.concatenate %106, %105 in 2 : vector<2x8x3x128xbf16>, vector<2x8x1x128xbf16> -> vector<2x8x4x128xbf16>
    %108 = vector.shape_cast %107 : vector<2x8x4x128xbf16> to vector<2x8x1x4x128xbf16>
    %109 = vector.shape_cast %107 : vector<2x8x4x128xbf16> to vector<2x8x1x4x128xbf16>
    %110 = tpu.concatenate %108, %109 in 2 : vector<2x8x1x4x128xbf16>, vector<2x8x1x4x128xbf16> -> vector<2x8x2x4x128xbf16>
    %111 = vector.shape_cast %110 : vector<2x8x2x4x128xbf16> to vector<2x16x4x128xbf16>
    %cst_32 = arith.constant 0.000000e+00 : bf16
    %112 = vector.broadcast %cst_32 : bf16 to vector<2x1x4x128xbf16>
    %113 = tpu.concatenate %112, %111, %112 in 1 : vector<2x1x4x128xbf16>, vector<2x16x4x128xbf16>, vector<2x1x4x128xbf16> -> vector<2x18x4x128xbf16>
    %cst_33 = arith.constant 0.000000e+00 : bf16
    %114 = vector.broadcast %cst_33 : bf16 to vector<2x8x1x128xbf16>
    %115 = vector.extract_strided_slice %98 {offsets = [0, 0, 0, 0], sizes = [2, 8, 3, 128], strides = [1, 1, 1, 1]} : vector<2x8x4x128xbf16> to vector<2x8x3x128xbf16>
    %116 = tpu.concatenate %114, %115 in 2 : vector<2x8x1x128xbf16>, vector<2x8x3x128xbf16> -> vector<2x8x4x128xbf16>
    %117 = vector.shape_cast %116 : vector<2x8x4x128xbf16> to vector<2x8x1x4x128xbf16>
    %118 = vector.shape_cast %116 : vector<2x8x4x128xbf16> to vector<2x8x1x4x128xbf16>
    %119 = tpu.concatenate %117, %118 in 2 : vector<2x8x1x4x128xbf16>, vector<2x8x1x4x128xbf16> -> vector<2x8x2x4x128xbf16>
    %120 = vector.shape_cast %119 : vector<2x8x2x4x128xbf16> to vector<2x16x4x128xbf16>
    %cst_34 = arith.constant 0.000000e+00 : bf16
    %121 = vector.broadcast %cst_34 : bf16 to vector<2x1x4x128xbf16>
    %122 = tpu.concatenate %121, %120, %121 in 1 : vector<2x1x4x128xbf16>, vector<2x16x4x128xbf16>, vector<2x1x4x128xbf16> -> vector<2x18x4x128xbf16>
    %123 = vector.shape_cast %98 : vector<2x8x4x128xbf16> to vector<2x8x1x4x128xbf16>
    %124 = vector.shape_cast %98 : vector<2x8x4x128xbf16> to vector<2x8x1x4x128xbf16>
    %125 = tpu.concatenate %123, %124 in 2 : vector<2x8x1x4x128xbf16>, vector<2x8x1x4x128xbf16> -> vector<2x8x2x4x128xbf16>
    %126 = vector.shape_cast %125 : vector<2x8x2x4x128xbf16> to vector<2x16x4x128xbf16>
    %cst_35 = arith.constant 0.000000e+00 : bf16
    %127 = vector.broadcast %cst_35 : bf16 to vector<2x1x4x128xbf16>
    %128 = tpu.concatenate %127, %126, %127 in 1 : vector<2x1x4x128xbf16>, vector<2x16x4x128xbf16>, vector<2x1x4x128xbf16> -> vector<2x18x4x128xbf16>
    %129 = vector.extract_strided_slice %104 {offsets = [0, 0, 0, 0], sizes = [2, 16, 4, 128], strides = [1, 1, 1, 1]} : vector<2x18x4x128xbf16> to vector<2x16x4x128xbf16>
    %130 = vector.extract_strided_slice %122 {offsets = [0, 0, 0, 0], sizes = [2, 16, 4, 128], strides = [1, 1, 1, 1]} : vector<2x18x4x128xbf16> to vector<2x16x4x128xbf16>
    %131 = vector.extract_strided_slice %104 {offsets = [0, 1, 0, 0], sizes = [2, 16, 4, 128], strides = [1, 1, 1, 1]} : vector<2x18x4x128xbf16> to vector<2x16x4x128xbf16>
    %132 = vector.extract_strided_slice %122 {offsets = [0, 1, 0, 0], sizes = [2, 16, 4, 128], strides = [1, 1, 1, 1]} : vector<2x18x4x128xbf16> to vector<2x16x4x128xbf16>
    %133 = vector.extract_strided_slice %104 {offsets = [0, 2, 0, 0], sizes = [2, 16, 4, 128], strides = [1, 1, 1, 1]} : vector<2x18x4x128xbf16> to vector<2x16x4x128xbf16>
    %134 = vector.extract_strided_slice %122 {offsets = [0, 2, 0, 0], sizes = [2, 16, 4, 128], strides = [1, 1, 1, 1]} : vector<2x18x4x128xbf16> to vector<2x16x4x128xbf16>
    %135 = tpu.concatenate %129, %130, %131, %132, %133, %134 in 3 : vector<2x16x4x128xbf16>, vector<2x16x4x128xbf16>, vector<2x16x4x128xbf16>, vector<2x16x4x128xbf16>, vector<2x16x4x128xbf16>, vector<2x16x4x128xbf16> -> vector<2x16x4x768xbf16>
    %136 = vector.shape_cast %135 : vector<2x16x4x768xbf16> to vector<128x768xbf16>
    %137 = vector.extract_strided_slice %104 {offsets = [0, 0, 0, 0], sizes = [2, 16, 4, 128], strides = [1, 1, 1, 1]} : vector<2x18x4x128xbf16> to vector<2x16x4x128xbf16>
    %138 = vector.extract_strided_slice %128 {offsets = [0, 0, 0, 0], sizes = [2, 16, 4, 128], strides = [1, 1, 1, 1]} : vector<2x18x4x128xbf16> to vector<2x16x4x128xbf16>
    %139 = vector.extract_strided_slice %104 {offsets = [0, 1, 0, 0], sizes = [2, 16, 4, 128], strides = [1, 1, 1, 1]} : vector<2x18x4x128xbf16> to vector<2x16x4x128xbf16>
    %140 = vector.extract_strided_slice %128 {offsets = [0, 1, 0, 0], sizes = [2, 16, 4, 128], strides = [1, 1, 1, 1]} : vector<2x18x4x128xbf16> to vector<2x16x4x128xbf16>
    %141 = vector.extract_strided_slice %104 {offsets = [0, 2, 0, 0], sizes = [2, 16, 4, 128], strides = [1, 1, 1, 1]} : vector<2x18x4x128xbf16> to vector<2x16x4x128xbf16>
    %142 = vector.extract_strided_slice %128 {offsets = [0, 2, 0, 0], sizes = [2, 16, 4, 128], strides = [1, 1, 1, 1]} : vector<2x18x4x128xbf16> to vector<2x16x4x128xbf16>
    %143 = tpu.concatenate %137, %138, %139, %140, %141, %142 in 3 : vector<2x16x4x128xbf16>, vector<2x16x4x128xbf16>, vector<2x16x4x128xbf16>, vector<2x16x4x128xbf16>, vector<2x16x4x128xbf16>, vector<2x16x4x128xbf16> -> vector<2x16x4x768xbf16>
    %144 = vector.shape_cast %143 : vector<2x16x4x768xbf16> to vector<128x768xbf16>
    %145 = vector.extract_strided_slice %113 {offsets = [0, 0, 0, 0], sizes = [2, 16, 4, 128], strides = [1, 1, 1, 1]} : vector<2x18x4x128xbf16> to vector<2x16x4x128xbf16>
    %146 = vector.extract_strided_slice %128 {offsets = [0, 0, 0, 0], sizes = [2, 16, 4, 128], strides = [1, 1, 1, 1]} : vector<2x18x4x128xbf16> to vector<2x16x4x128xbf16>
    %147 = vector.extract_strided_slice %113 {offsets = [0, 1, 0, 0], sizes = [2, 16, 4, 128], strides = [1, 1, 1, 1]} : vector<2x18x4x128xbf16> to vector<2x16x4x128xbf16>
    %148 = vector.extract_strided_slice %128 {offsets = [0, 1, 0, 0], sizes = [2, 16, 4, 128], strides = [1, 1, 1, 1]} : vector<2x18x4x128xbf16> to vector<2x16x4x128xbf16>
    %149 = vector.extract_strided_slice %113 {offsets = [0, 2, 0, 0], sizes = [2, 16, 4, 128], strides = [1, 1, 1, 1]} : vector<2x18x4x128xbf16> to vector<2x16x4x128xbf16>
    %150 = vector.extract_strided_slice %128 {offsets = [0, 2, 0, 0], sizes = [2, 16, 4, 128], strides = [1, 1, 1, 1]} : vector<2x18x4x128xbf16> to vector<2x16x4x128xbf16>
    %151 = tpu.concatenate %145, %146, %147, %148, %149, %150 in 3 : vector<2x16x4x128xbf16>, vector<2x16x4x128xbf16>, vector<2x16x4x128xbf16>, vector<2x16x4x128xbf16>, vector<2x16x4x128xbf16>, vector<2x16x4x128xbf16> -> vector<2x16x4x768xbf16>
    %152 = vector.shape_cast %151 : vector<2x16x4x768xbf16> to vector<128x768xbf16>
    %c0_36 = arith.constant 0 : index
    %c0_37 = arith.constant 0 : index
    %153 = vector.load %arg6[%c0_36, %c0_37] : memref<768x64xbf16, #tpu.memory_space<vmem>>, vector<768x64xbf16>
    %cst_38 = arith.constant dense<0.000000e+00> : vector<128x64xf32>
    %154 = tpu.matmul %136, %153, %cst_38 {dimension_numbers = #tpu.dot_dimension_numbers<[1], [0], [0], [1], [0, 0, 1, 1], [], []>} : vector<128x768xbf16>, vector<768x64xbf16>, vector<128x64xf32> -> vector<128x64xf32>
    %c0_39 = arith.constant 0 : index
    %c0_40 = arith.constant 0 : index
    %155 = vector.load %arg7[%c0_39, %c0_40] : memref<768x128xbf16, #tpu.memory_space<vmem>>, vector<768x128xbf16>
    %cst_41 = arith.constant dense<0.000000e+00> : vector<128x128xf32>
    %156 = tpu.matmul %144, %155, %cst_41 {dimension_numbers = #tpu.dot_dimension_numbers<[1], [0], [0], [1], [0, 0, 1, 1], [], []>} : vector<128x768xbf16>, vector<768x128xbf16>, vector<128x128xf32> -> vector<128x128xf32>
    %c0_42 = arith.constant 0 : index
    %c0_43 = arith.constant 0 : index
    %157 = vector.load %arg8[%c0_42, %c0_43] : memref<768x64xbf16, #tpu.memory_space<vmem>>, vector<768x64xbf16>
    %cst_44 = arith.constant dense<0.000000e+00> : vector<128x64xf32>
    %158 = tpu.matmul %152, %157, %cst_44 {dimension_numbers = #tpu.dot_dimension_numbers<[1], [0], [0], [1], [0, 0, 1, 1], [], []>} : vector<128x768xbf16>, vector<768x64xbf16>, vector<128x64xf32> -> vector<128x64xf32>
    %159 = vector.extract_strided_slice %156 {offsets = [0, 0], sizes = [128, 64], strides = [1, 1]} : vector<128x128xf32> to vector<128x64xf32>
    %160 = vector.extract_strided_slice %156 {offsets = [0, 64], sizes = [128, 64], strides = [1, 1]} : vector<128x128xf32> to vector<128x64xf32>
    %c0_45 = arith.constant 0 : index
    %c0_46 = arith.constant 0 : index
    %161 = vector.load %arg9[%c0_45, %c0_46] : memref<1x64xf32, #tpu.memory_space<vmem>>, vector<1x64xf32>
    %c0_47 = arith.constant 0 : index
    %c0_48 = arith.constant 0 : index
    %162 = vector.load %arg10[%c0_47, %c0_48] : memref<1x64xf32, #tpu.memory_space<vmem>>, vector<1x64xf32>
    %cst_49 = arith.constant dense<0.000000e+00> : vector<64xf32>
    %163 = vector.multi_reduction <add>, %154, %cst_49 [0] : vector<128x64xf32> to vector<64xf32>
    %164 = vector.shape_cast %163 : vector<64xf32> to vector<1x64xf32>
    %165 = arith.mulf %154, %154 : vector<128x64xf32>
    %cst_50 = arith.constant dense<0.000000e+00> : vector<64xf32>
    %166 = vector.multi_reduction <add>, %165, %cst_50 [0] : vector<128x64xf32> to vector<64xf32>
    %167 = vector.shape_cast %166 : vector<64xf32> to vector<1x64xf32>
    %cst_51 = arith.constant dense<0.000000e+00> : vector<64xf32>
    %168 = vector.multi_reduction <add>, %159, %cst_51 [0] : vector<128x64xf32> to vector<64xf32>
    %169 = vector.shape_cast %168 : vector<64xf32> to vector<1x64xf32>
    %170 = arith.addf %164, %169 : vector<1x64xf32>
    %171 = arith.mulf %159, %159 : vector<128x64xf32>
    %cst_52 = arith.constant dense<0.000000e+00> : vector<64xf32>
    %172 = vector.multi_reduction <add>, %171, %cst_52 [0] : vector<128x64xf32> to vector<64xf32>
    %173 = vector.shape_cast %172 : vector<64xf32> to vector<1x64xf32>
    %174 = arith.addf %167, %173 : vector<1x64xf32>
    %cst_53 = arith.constant dense<0.000000e+00> : vector<64xf32>
    %175 = vector.multi_reduction <add>, %160, %cst_53 [0] : vector<128x64xf32> to vector<64xf32>
    %176 = vector.shape_cast %175 : vector<64xf32> to vector<1x64xf32>
    %177 = arith.addf %170, %176 : vector<1x64xf32>
    %178 = arith.mulf %160, %160 : vector<128x64xf32>
    %cst_54 = arith.constant dense<0.000000e+00> : vector<64xf32>
    %179 = vector.multi_reduction <add>, %178, %cst_54 [0] : vector<128x64xf32> to vector<64xf32>
    %180 = vector.shape_cast %179 : vector<64xf32> to vector<1x64xf32>
    %181 = arith.addf %174, %180 : vector<1x64xf32>
    %cst_55 = arith.constant dense<0.000000e+00> : vector<64xf32>
    %182 = vector.multi_reduction <add>, %158, %cst_55 [0] : vector<128x64xf32> to vector<64xf32>
    %183 = vector.shape_cast %182 : vector<64xf32> to vector<1x64xf32>
    %184 = arith.addf %177, %183 : vector<1x64xf32>
    %185 = arith.mulf %158, %158 : vector<128x64xf32>
    %cst_56 = arith.constant dense<0.000000e+00> : vector<64xf32>
    %186 = vector.multi_reduction <add>, %185, %cst_56 [0] : vector<128x64xf32> to vector<64xf32>
    %187 = vector.shape_cast %186 : vector<64xf32> to vector<1x64xf32>
    %188 = arith.addf %181, %187 : vector<1x64xf32>
    %cst_57 = arith.constant 0.001953125 : f32
    %189 = vector.broadcast %cst_57 : f32 to vector<1x64xf32>
    %190 = arith.mulf %184, %189 : vector<1x64xf32>
    %cst_58 = arith.constant 0.001953125 : f32
    %191 = vector.broadcast %cst_58 : f32 to vector<1x64xf32>
    %192 = arith.mulf %188, %191 : vector<1x64xf32>
    %193 = arith.mulf %190, %190 : vector<1x64xf32>
    %194 = arith.subf %192, %193 : vector<1x64xf32>
    %cst_59 = arith.constant 8.000000e-01 : f32
    %195 = vector.broadcast %cst_59 : f32 to vector<1x64xf32>
    %196 = arith.addf %194, %195 : vector<1x64xf32>
    %197 = math.rsqrt %196 : vector<1x64xf32>
    %198 = arith.mulf %197, %161 : vector<1x64xf32>
    %199 = arith.mulf %190, %198 : vector<1x64xf32>
    %200 = arith.subf %162, %199 : vector<1x64xf32>
    %201 = vector.broadcast %198 : vector<1x64xf32> to vector<128x64xf32>
    %202 = arith.mulf %154, %201 : vector<128x64xf32>
    %203 = vector.broadcast %200 : vector<1x64xf32> to vector<128x64xf32>
    %204 = arith.addf %202, %203 : vector<128x64xf32>
    %cst_60 = arith.constant 2.000000e-01 : f32
    %205 = vector.broadcast %cst_60 : f32 to vector<128x64xf32>
    %206 = arith.mulf %205, %204 : vector<128x64xf32>
    %207 = arith.maximumf %204, %206 : vector<128x64xf32>
    %208 = vector.broadcast %198 : vector<1x64xf32> to vector<128x64xf32>
    %209 = arith.mulf %159, %208 : vector<128x64xf32>
    %210 = vector.broadcast %200 : vector<1x64xf32> to vector<128x64xf32>
    %211 = arith.addf %209, %210 : vector<128x64xf32>
    %cst_61 = arith.constant 2.000000e-01 : f32
    %212 = vector.broadcast %cst_61 : f32 to vector<128x64xf32>
    %213 = arith.mulf %212, %211 : vector<128x64xf32>
    %214 = arith.maximumf %211, %213 : vector<128x64xf32>
    %215 = vector.broadcast %198 : vector<1x64xf32> to vector<128x64xf32>
    %216 = arith.mulf %160, %215 : vector<128x64xf32>
    %217 = vector.broadcast %200 : vector<1x64xf32> to vector<128x64xf32>
    %218 = arith.addf %216, %217 : vector<128x64xf32>
    %cst_62 = arith.constant 2.000000e-01 : f32
    %219 = vector.broadcast %cst_62 : f32 to vector<128x64xf32>
    %220 = arith.mulf %219, %218 : vector<128x64xf32>
    %221 = arith.maximumf %218, %220 : vector<128x64xf32>
    %222 = vector.broadcast %198 : vector<1x64xf32> to vector<128x64xf32>
    %223 = arith.mulf %158, %222 : vector<128x64xf32>
    %224 = vector.broadcast %200 : vector<1x64xf32> to vector<128x64xf32>
    %225 = arith.addf %223, %224 : vector<128x64xf32>
    %cst_63 = arith.constant 2.000000e-01 : f32
    %226 = vector.broadcast %cst_63 : f32 to vector<128x64xf32>
    %227 = arith.mulf %226, %225 : vector<128x64xf32>
    %228 = arith.maximumf %225, %227 : vector<128x64xf32>
    %229 = vector.shape_cast %207 : vector<128x64xf32> to vector<2x16x4x64xf32>
    %230 = arith.truncf %229 : vector<2x16x4x64xf32> to vector<2x16x4x64xbf16>
    %231 = vector.shape_cast %214 : vector<128x64xf32> to vector<2x16x4x64xf32>
    %232 = arith.truncf %231 : vector<2x16x4x64xf32> to vector<2x16x4x64xbf16>
    %233 = vector.shape_cast %221 : vector<128x64xf32> to vector<2x16x4x64xf32>
    %234 = arith.truncf %233 : vector<2x16x4x64xf32> to vector<2x16x4x64xbf16>
    %235 = vector.shape_cast %228 : vector<128x64xf32> to vector<2x16x4x64xf32>
    %236 = arith.truncf %235 : vector<2x16x4x64xf32> to vector<2x16x4x64xbf16>
    %cst_64 = arith.constant 0.000000e+00 : bf16
    %237 = vector.broadcast %cst_64 : bf16 to vector<2x1x4x64xbf16>
    %238 = tpu.concatenate %237, %230, %237 in 1 : vector<2x1x4x64xbf16>, vector<2x16x4x64xbf16>, vector<2x1x4x64xbf16> -> vector<2x18x4x64xbf16>
    %cst_65 = arith.constant 0.000000e+00 : bf16
    %239 = vector.broadcast %cst_65 : bf16 to vector<2x1x4x64xbf16>
    %240 = tpu.concatenate %239, %232, %239 in 1 : vector<2x1x4x64xbf16>, vector<2x16x4x64xbf16>, vector<2x1x4x64xbf16> -> vector<2x18x4x64xbf16>
    %cst_66 = arith.constant 0.000000e+00 : bf16
    %241 = vector.broadcast %cst_66 : bf16 to vector<2x1x4x64xbf16>
    %242 = tpu.concatenate %241, %234, %241 in 1 : vector<2x1x4x64xbf16>, vector<2x16x4x64xbf16>, vector<2x1x4x64xbf16> -> vector<2x18x4x64xbf16>
    %cst_67 = arith.constant 0.000000e+00 : bf16
    %243 = vector.broadcast %cst_67 : bf16 to vector<2x1x4x64xbf16>
    %244 = tpu.concatenate %243, %236, %243 in 1 : vector<2x1x4x64xbf16>, vector<2x16x4x64xbf16>, vector<2x1x4x64xbf16> -> vector<2x18x4x64xbf16>
    %cst_68 = arith.constant 0.000000e+00 : bf16
    %245 = vector.broadcast %cst_68 : bf16 to vector<2x16x1x64xbf16>
    %246 = vector.extract_strided_slice %236 {offsets = [0, 0, 0, 0], sizes = [2, 16, 3, 64], strides = [1, 1, 1, 1]} : vector<2x16x4x64xbf16> to vector<2x16x3x64xbf16>
    %247 = tpu.concatenate %245, %246 in 2 : vector<2x16x1x64xbf16>, vector<2x16x3x64xbf16> -> vector<2x16x4x64xbf16>
    %cst_69 = arith.constant 0.000000e+00 : bf16
    %248 = vector.broadcast %cst_69 : bf16 to vector<2x1x4x64xbf16>
    %249 = tpu.concatenate %248, %247, %248 in 1 : vector<2x1x4x64xbf16>, vector<2x16x4x64xbf16>, vector<2x1x4x64xbf16> -> vector<2x18x4x64xbf16>
    %cst_70 = arith.constant 0.000000e+00 : bf16
    %250 = vector.broadcast %cst_70 : bf16 to vector<2x16x1x64xbf16>
    %251 = vector.extract_strided_slice %230 {offsets = [0, 0, 1, 0], sizes = [2, 16, 3, 64], strides = [1, 1, 1, 1]} : vector<2x16x4x64xbf16> to vector<2x16x3x64xbf16>
    %252 = tpu.concatenate %251, %250 in 2 : vector<2x16x3x64xbf16>, vector<2x16x1x64xbf16> -> vector<2x16x4x64xbf16>
    %cst_71 = arith.constant 0.000000e+00 : bf16
    %253 = vector.broadcast %cst_71 : bf16 to vector<2x1x4x64xbf16>
    %254 = tpu.concatenate %253, %252, %253 in 1 : vector<2x1x4x64xbf16>, vector<2x16x4x64xbf16>, vector<2x1x4x64xbf16> -> vector<2x18x4x64xbf16>
    %255 = vector.extract_strided_slice %238 {offsets = [0, 0, 0, 0], sizes = [2, 16, 4, 64], strides = [1, 1, 1, 1]} : vector<2x18x4x64xbf16> to vector<2x16x4x64xbf16>
    %256 = vector.extract_strided_slice %254 {offsets = [0, 0, 0, 0], sizes = [2, 16, 4, 64], strides = [1, 1, 1, 1]} : vector<2x18x4x64xbf16> to vector<2x16x4x64xbf16>
    %257 = vector.extract_strided_slice %240 {offsets = [0, 0, 0, 0], sizes = [2, 16, 4, 64], strides = [1, 1, 1, 1]} : vector<2x18x4x64xbf16> to vector<2x16x4x64xbf16>
    %258 = vector.extract_strided_slice %242 {offsets = [0, 0, 0, 0], sizes = [2, 16, 4, 64], strides = [1, 1, 1, 1]} : vector<2x18x4x64xbf16> to vector<2x16x4x64xbf16>
    %259 = vector.extract_strided_slice %249 {offsets = [0, 0, 0, 0], sizes = [2, 16, 4, 64], strides = [1, 1, 1, 1]} : vector<2x18x4x64xbf16> to vector<2x16x4x64xbf16>
    %260 = vector.extract_strided_slice %244 {offsets = [0, 0, 0, 0], sizes = [2, 16, 4, 64], strides = [1, 1, 1, 1]} : vector<2x18x4x64xbf16> to vector<2x16x4x64xbf16>
    %261 = vector.extract_strided_slice %238 {offsets = [0, 1, 0, 0], sizes = [2, 16, 4, 64], strides = [1, 1, 1, 1]} : vector<2x18x4x64xbf16> to vector<2x16x4x64xbf16>
    %262 = vector.extract_strided_slice %254 {offsets = [0, 1, 0, 0], sizes = [2, 16, 4, 64], strides = [1, 1, 1, 1]} : vector<2x18x4x64xbf16> to vector<2x16x4x64xbf16>
    %263 = vector.extract_strided_slice %240 {offsets = [0, 1, 0, 0], sizes = [2, 16, 4, 64], strides = [1, 1, 1, 1]} : vector<2x18x4x64xbf16> to vector<2x16x4x64xbf16>
    %264 = vector.extract_strided_slice %242 {offsets = [0, 1, 0, 0], sizes = [2, 16, 4, 64], strides = [1, 1, 1, 1]} : vector<2x18x4x64xbf16> to vector<2x16x4x64xbf16>
    %265 = vector.extract_strided_slice %249 {offsets = [0, 1, 0, 0], sizes = [2, 16, 4, 64], strides = [1, 1, 1, 1]} : vector<2x18x4x64xbf16> to vector<2x16x4x64xbf16>
    %266 = vector.extract_strided_slice %244 {offsets = [0, 1, 0, 0], sizes = [2, 16, 4, 64], strides = [1, 1, 1, 1]} : vector<2x18x4x64xbf16> to vector<2x16x4x64xbf16>
    %267 = vector.extract_strided_slice %238 {offsets = [0, 2, 0, 0], sizes = [2, 16, 4, 64], strides = [1, 1, 1, 1]} : vector<2x18x4x64xbf16> to vector<2x16x4x64xbf16>
    %268 = vector.extract_strided_slice %254 {offsets = [0, 2, 0, 0], sizes = [2, 16, 4, 64], strides = [1, 1, 1, 1]} : vector<2x18x4x64xbf16> to vector<2x16x4x64xbf16>
    %269 = vector.extract_strided_slice %240 {offsets = [0, 2, 0, 0], sizes = [2, 16, 4, 64], strides = [1, 1, 1, 1]} : vector<2x18x4x64xbf16> to vector<2x16x4x64xbf16>
    %270 = vector.extract_strided_slice %242 {offsets = [0, 2, 0, 0], sizes = [2, 16, 4, 64], strides = [1, 1, 1, 1]} : vector<2x18x4x64xbf16> to vector<2x16x4x64xbf16>
    %271 = vector.extract_strided_slice %249 {offsets = [0, 2, 0, 0], sizes = [2, 16, 4, 64], strides = [1, 1, 1, 1]} : vector<2x18x4x64xbf16> to vector<2x16x4x64xbf16>
    %272 = vector.extract_strided_slice %244 {offsets = [0, 2, 0, 0], sizes = [2, 16, 4, 64], strides = [1, 1, 1, 1]} : vector<2x18x4x64xbf16> to vector<2x16x4x64xbf16>
    %273 = tpu.concatenate %255, %256, %257, %258, %259, %260, %261, %262, %263, %264, %265, %266, %267, %268, %269, %270 in 3 : vector<2x16x4x64xbf16>, vector<2x16x4x64xbf16>, vector<2x16x4x64xbf16>, vector<2x16x4x64xbf16>, vector<2x16x4x64xbf16>, vector<2x16x4x64xbf16>, vector<2x16x4x64xbf16>, vector<2x16x4x64xbf16>, vector<2x16x4x64xbf16>, vector<2x16x4x64xbf16>, vector<2x16x4x64xbf16>, vector<2x16x4x64xbf16>, vector<2x16x4x64xbf16>, vector<2x16x4x64xbf16>, vector<2x16x4x64xbf16>, vector<2x16x4x64xbf16> -> vector<2x16x4x1024xbf16>
    %274 = tpu.concatenate %271, %272 in 3 : vector<2x16x4x64xbf16>, vector<2x16x4x64xbf16> -> vector<2x16x4x128xbf16>
    %275 = tpu.concatenate %273, %274 in 3 : vector<2x16x4x1024xbf16>, vector<2x16x4x128xbf16> -> vector<2x16x4x1152xbf16>
    %276 = vector.shape_cast %275 : vector<2x16x4x1152xbf16> to vector<128x1152xbf16>
    %c0_72 = arith.constant 0 : index
    %c0_73 = arith.constant 0 : index
    %277 = vector.load %arg11[%c0_72, %c0_73] : memref<1152x128xbf16, #tpu.memory_space<vmem>>, vector<1152x128xbf16>
    %cst_74 = arith.constant dense<0.000000e+00> : vector<128x128xf32>
    %278 = tpu.matmul %276, %277, %cst_74 {dimension_numbers = #tpu.dot_dimension_numbers<[1], [0], [0], [1], [0, 0, 1, 1], [], []>} : vector<128x1152xbf16>, vector<1152x128xbf16>, vector<128x128xf32> -> vector<128x128xf32>
    %c0_75 = arith.constant 0 : index
    %c0_76 = arith.constant 0 : index
    %279 = vector.load %arg12[%c0_75, %c0_76] : memref<1x128xf32, #tpu.memory_space<vmem>>, vector<1x128xf32>
    %280 = vector.broadcast %279 : vector<1x128xf32> to vector<128x128xf32>
    %281 = arith.addf %278, %280 : vector<128x128xf32>
    %282 = math.tanh %281 : vector<128x128xf32>
    %283 = vector.shape_cast %282 : vector<128x128xf32> to vector<2x16x4x128xf32>
    %c0_77 = arith.constant 0 : index
    %c0_78 = arith.constant 0 : index
    %c0_79 = arith.constant 0 : index
    %c0_80 = arith.constant 0 : index
    %284 = vector.load %arg13[%c0_77, %c0_78, %c0_79, %c0_80] : memref<2x16x4x128xf32, #tpu.memory_space<vmem>>, vector<2x16x4x128xf32>
    tpu.vector_store %arg13[%c0_77, %c0_78, %c0_79, %c0_80], %283 {strides = array<i32>} : memref<2x16x4x128xf32, #tpu.memory_space<vmem>>, vector<2x16x4x128xf32>,
    return
  }
}

</mosaic_0001>

<llo_original>
// kernel: generator_forward.1
$region0: #{generator_forward.1}
  #allocation0 [shape = 'u32[]', space=smem, size = 0x4, offset = 0x4, fixed_abs, tag = 'smem constant byte address 0x4 - core index']
  #allocation1 [shape = 'u32[144,128]{1,0:T(1,128)}', space=vmem, size = 0x12000, scoped, tag = 'internal scratch']
  %s0 = inlined_call_operand.vmem [shape: f32[2,32], index: 0, kind: input, shape index: {}]
  %s1 = inlined_call_operand.hbm [shape: bf16[32,2048], index: 1, kind: input, shape index: {}]
  %s2 = inlined_call_operand.hbm [shape: f32[1,2048], index: 2, kind: input, shape index: {}]
  %s3 = inlined_call_operand.vmem [shape: bf16[2,768,128], index: 3, kind: input, shape index: {}]
  %s4 = inlined_call_operand.vmem [shape: f32[1,128], index: 4, kind: input, shape index: {}]
  %s5 = inlined_call_operand.vmem [shape: f32[1,128], index: 5, kind: input, shape index: {}]
  %s6 = inlined_call_operand.vmem [shape: bf16[768,64], index: 6, kind: input, shape index: {}]
  %s7 = inlined_call_operand.vmem [shape: bf16[768,128], index: 7, kind: input, shape index: {}]
  %s8 = inlined_call_operand.vmem [shape: bf16[768,64], index: 8, kind: input, shape index: {}]
  %s9 = inlined_call_operand.vmem [shape: f32[1,64], index: 9, kind: input, shape index: {}]
  %s10 = inlined_call_operand.vmem [shape: f32[1,64], index: 10, kind: input, shape index: {}]
  %s11 = inlined_call_operand.hbm [shape: bf16[1152,128], index: 11, kind: input, shape index: {}]
  %s12 = inlined_call_operand.vmem [shape: f32[1,128], index: 12, kind: input, shape index: {}]
  %s13 = inlined_call_operand.vmem [shape: f32[2,16,4,128], index: 13, kind: output, shape index: {}]
  %s14 = sld [smem:[#allocation0]]
  $region74: #{generator_forward.1} parent=0
    _
  %s16 = ssub.s32 1, %s14
  %s17 = scalar_select 0, %s16, %s14
  $region1: #{generator_forward.1} parent=0
    #allocation2 [shape = 'u8[131072]{0}', space=vmem, size = 0x20000, scoped, tag = 'input window, operand 1, single buffered']
    #allocation3 [shape = 's32[1]{0}', space=sflag, size = 0x4, scoped, tag = 'scoped memory for generator_forward.1']
    #allocation4 [shape = 'u8[8192]{0}', space=vmem, size = 0x2000, scoped, tag = 'input window, operand 2, single buffered']
    #allocation5 [shape = 's32[1]{0}', space=sflag, size = 0x4, scoped, tag = 'scoped memory for generator_forward.1']
    #allocation6 [shape = 'u8[294912]{0}', space=vmem, size = 0x48000, scoped, tag = 'input window, operand 11, single buffered']
    %18 = vsyncpa [#allocation3], 0
    %19 = vsyncpa [#allocation5], 0
    // Predicated region
    $region2: #{generator_forward.1} parent=1 // pred_check
      _
    $region3: #{generator_forward.1} parent=1 // pred_check_branch
      %21 = sbr.rel (0) target = $region5
    $region4: #{generator_forward.1} parent=1 // pred_region
      _
    $region5: #{generator_forward.1} parent=1 // pred_fallthru
      _
    // Predicated region
    $region6: #{generator_forward.1} parent=1 // pred_check
      _
    $region7: #{generator_forward.1} parent=1 // pred_check_branch
      %23 = sbr.rel (0) target = $region9
    $region8: #{generator_forward.1} parent=1 // pred_region
      %s25 = ssub.s32 4096, 4096
      %26 = vsyncadd [#allocation3], %s25
      %s27 = sshll.u32 [#allocation2], 4
      %s28 = int_to_ptr.vmem [resolvable:$true] %s27
      %33 = dma.hbm_to_vmem [thread:$0]  %s1, 4096, %s28, [#allocation3], 1024, 1024, 64
    $region9: #{generator_forward.1} parent=1 // pred_fallthru
      _
    // Predicated region
    $region10: #{generator_forward.1} parent=1 // pred_check
      _
    $region11: #{generator_forward.1} parent=1 // pred_check_branch
      %35 = sbr.rel (0) target = $region13
    $region12: #{generator_forward.1} parent=1 // pred_region
      %s37 = ssub.s32 256, 256
      %38 = vsyncadd [#allocation5], %s37
      %s40 = sshll.u32 [#allocation4], 4
      %s41 = int_to_ptr.vmem [resolvable:$true] %s40
      %43 = dma.hbm_to_vmem [thread:$0]  %s2, 256, %s41, [#allocation5]
    $region13: #{generator_forward.1} parent=1 // pred_fallthru
      _
    // Predicated region
    $region14: #{generator_forward.1} parent=1 // pred_check
      _
    $region15: #{generator_forward.1} parent=1 // pred_check_branch
      %45 = sbr.rel (0) target = $region17
    $region16: #{generator_forward.1} parent=1 // pred_region
      _
    $region17: #{generator_forward.1} parent=1 // pred_fallthru
      _
    // Predicated region
    $region18: #{generator_forward.1} parent=1 // pred_check
      _
    $region19: #{generator_forward.1} parent=1 // pred_check_branch
      %47 = sbr.rel (0) target = $region21
    $region20: #{generator_forward.1} parent=1 // pred_region
      _
    $region21: #{generator_forward.1} parent=1 // pred_fallthru
      _
    // Predicated region
    $region22: #{generator_forward.1} parent=1 // pred_check
      _
    $region23: #{generator_forward.1} parent=1 // pred_check_branch
      %49 = sbr.rel (0) target = $region25
    $region24: #{generator_forward.1} parent=1 // pred_region
      _
    $region25: #{generator_forward.1} parent=1 // pred_fallthru
      _
    // Predicated region
    $region26: #{generator_forward.1} parent=1 // pred_check
      _
    $region27: #{generator_forward.1} parent=1 // pred_check_branch
      %51 = sbr.rel (0) target = $region29
    $region28: #{generator_forward.1} parent=1 // pred_region
      _
    $region29: #{generator_forward.1} parent=1 // pred_fallthru
      _
    // Predicated region
    $region30: #{generator_forward.1} parent=1 // pred_check
      _
    $region31: #{generator_forward.1} parent=1 // pred_check_branch
      %53 = sbr.rel (0) target = $region33
    $region32: #{generator_forward.1} parent=1 // pred_region
      _
    $region33: #{generator_forward.1} parent=1 // pred_fallthru
      _
    // Predicated region
    $region34: #{generator_forward.1} parent=1 // pred_check
      _
    $region35: #{generator_forward.1} parent=1 // pred_check_branch
      %55 = sbr.rel (0) target = $region37
    $region36: #{generator_forward.1} parent=1 // pred_region
      _
    $region37: #{generator_forward.1} parent=1 // pred_fallthru
      _
    // Predicated region
    $region38: #{generator_forward.1} parent=1 // pred_check
      _
    $region39: #{generator_forward.1} parent=1 // pred_check_branch
      %57 = sbr.rel (0) target = $region41
    $region40: #{generator_forward.1} parent=1 // pred_region
      _
    $region41: #{generator_forward.1} parent=1 // pred_fallthru
      _
    // Predicated region
    $region42: #{generator_forward.1} parent=1 // pred_check
      _
    $region43: #{generator_forward.1} parent=1 // pred_check_branch
      %59 = sbr.rel (0) target = $region45
    $region44: #{generator_forward.1} parent=1 // pred_region
      _
    $region45: #{generator_forward.1} parent=1 // pred_fallthru
      _
    // Predicated region
    $region46: #{generator_forward.1} parent=1 // pred_check
      _
    $region47: #{generator_forward.1} parent=1 // pred_check_branch
      %61 = sbr.rel (0) target = $region49
    $region48: #{generator_forward.1} parent=1 // pred_region
      %s63 = ssub.s32 9216, 9216
      %64 = vsyncadd [#allocation5], %s63
      %s65 = sshll.u32 [#allocation6], 4
      %s66 = int_to_ptr.vmem [resolvable:$true] %s65
      %71 = dma.hbm_to_vmem [thread:$0]  %s11, 9216, %s66, [#allocation5], 64, 64, 4
    $region49: #{generator_forward.1} parent=1 // pred_fallthru
      _
    // Predicated region
    $region50: #{generator_forward.1} parent=1 // pred_check
      _
    $region51: #{generator_forward.1} parent=1 // pred_check_branch
      %73 = sbr.rel (0) target = $region53
    $region52: #{generator_forward.1} parent=1 // pred_region
      _
    $region53: #{generator_forward.1} parent=1 // pred_fallthru
      _
    // Predicated region
    $region54: #{generator_forward.1} parent=1 // pred_check
      _
    $region55: #{generator_forward.1} parent=1 // pred_check_branch
      %75 = sbr.rel (0) target = $region57
    $region56: #{generator_forward.1} parent=1 // pred_region
      %76 = dma.done [#allocation3], 4096
    $region57: #{generator_forward.1} parent=1 // pred_fallthru
      _
    // Predicated region
    $region58: #{generator_forward.1} parent=1 // pred_check
      _
    $region59: #{generator_forward.1} parent=1 // pred_check_branch
      %78 = sbr.rel (0) target = $region61
    $region60: #{generator_forward.1} parent=1 // pred_region
      %79 = dma.done [#allocation5], 256
    $region61: #{generator_forward.1} parent=1 // pred_fallthru
      _
    // Predicated region
    $region62: #{generator_forward.1} parent=1 // pred_check
      _
    $region63: #{generator_forward.1} parent=1 // pred_check_branch
      %81 = sbr.rel (0) target = $region65
    $region64: #{generator_forward.1} parent=1 // pred_region
      %82 = dma.done [#allocation5], 9216
    $region65: #{generator_forward.1} parent=1 // pred_fallthru
      _
    %v84 = vld [vmem:[%s0] sm:$0x3]
    %v85 = vpack.c.bf16 %v84, %v84
    %v86 = vld [vmem:[#allocation2] sm:$0xff]
    %v87 = vld [vmem:[#allocation2 + $0x8] sm:$0xff]
    %v88 = vld [vmem:[#allocation2 + $0x10] sm:$0xff]
    %v89 = vld [vmem:[#allocation2 + $0x18] sm:$0xff]
    %v90 = vld [vmem:[#allocation2 + $0x20] sm:$0xff]
    %v91 = vld [vmem:[#allocation2 + $0x28] sm:$0xff]
    %v92 = vld [vmem:[#allocation2 + $0x30] sm:$0xff]
    %v93 = vld [vmem:[#allocation2 + $0x38] sm:$0xff]
    %v94 = vld [vmem:[#allocation2 + $0x40] sm:$0xff]
    %v95 = vld [vmem:[#allocation2 + $0x48] sm:$0xff]
    %v96 = vld [vmem:[#allocation2 + $0x50] sm:$0xff]
    %v97 = vld [vmem:[#allocation2 + $0x58] sm:$0xff]
    %v98 = vld [vmem:[#allocation2 + $0x60] sm:$0xff]
    %v99 = vld [vmem:[#allocation2 + $0x68] sm:$0xff]
    %v100 = vld [vmem:[#allocation2 + $0x70] sm:$0xff]
    %v101 = vld [vmem:[#allocation2 + $0x78] sm:$0xff]
    %v102 = vld [vmem:[#allocation2 + $0x80] sm:$0xff]
    %v103 = vld [vmem:[#allocation2 + $0x88] sm:$0xff]
    %v104 = vld [vmem:[#allocation2 + $0x90] sm:$0xff]
    %v105 = vld [vmem:[#allocation2 + $0x98] sm:$0xff]
    %v106 = vld [vmem:[#allocation2 + $0xa0] sm:$0xff]
    %v107 = vld [vmem:[#allocation2 + $0xa8] sm:$0xff]
    %v108 = vld [vmem:[#allocation2 + $0xb0] sm:$0xff]
    %v109 = vld [vmem:[#allocation2 + $0xb8] sm:$0xff]
    %v110 = vld [vmem:[#allocation2 + $0xc0] sm:$0xff]
    %v111 = vld [vmem:[#allocation2 + $0xc8] sm:$0xff]
    %v112 = vld [vmem:[#allocation2 + $0xd0] sm:$0xff]
    %v113 = vld [vmem:[#allocation2 + $0xd8] sm:$0xff]
    %v114 = vld [vmem:[#allocation2 + $0xe0] sm:$0xff]
    %v115 = vld [vmem:[#allocation2 + $0xe8] sm:$0xff]
    %v116 = vld [vmem:[#allocation2 + $0xf0] sm:$0xff]
    %v117 = vld [vmem:[#allocation2 + $0xf8] sm:$0xff]
    %v118 = vld [vmem:[#allocation4] sm:$0xff]
    %v119 = vld [vmem:[#allocation4 + $0x8] sm:$0xff]
    %v122 = vlaneseq
    %v123 = vshrl.u32 %v122, 7
    %v124 = vsub.s32 0, %v123
    %v125 = vrot.slane %v118, %v124
    %v126 = vlaneseq
    %v127 = vshrl.u32 %v126, 7
    %v128 = vsub.s32 1, %v127
    %v129 = vrot.slane %v118, %v128
    %v130 = vlaneseq
    %v131 = vshrl.u32 %v130, 7
    %v132 = vsub.s32 2, %v131
    %v133 = vrot.slane %v118, %v132
    %v134 = vlaneseq
    %v135 = vshrl.u32 %v134, 7
    %v136 = vsub.s32 3, %v135
    %v137 = vrot.slane %v118, %v136
    %v138 = vlaneseq
    %v139 = vshrl.u32 %v138, 7
    %v140 = vsub.s32 4, %v139
    %v141 = vrot.slane %v118, %v140
    %v142 = vlaneseq
    %v143 = vshrl.u32 %v142, 7
    %v144 = vsub.s32 5, %v143
    %v145 = vrot.slane %v118, %v144
    %v146 = vlaneseq
    %v147 = vshrl.u32 %v146, 7
    %v148 = vsub.s32 6, %v147
    %v149 = vrot.slane %v118, %v148
    %v150 = vlaneseq
    %v151 = vshrl.u32 %v150, 7
    %v152 = vsub.s32 7, %v151
    %v153 = vrot.slane %v118, %v152
    %v154 = vlaneseq
    %v155 = vshrl.u32 %v154, 7
    %v156 = vsub.s32 0, %v155
    %v157 = vrot.slane %v119, %v156
    %v158 = vlaneseq
    %v159 = vshrl.u32 %v158, 7
    %v160 = vsub.s32 1, %v159
    %v161 = vrot.slane %v119, %v160
    %v162 = vlaneseq
    %v163 = vshrl.u32 %v162, 7
    %v164 = vsub.s32 2, %v163
    %v165 = vrot.slane %v119, %v164
    %v166 = vlaneseq
    %v167 = vshrl.u32 %v166, 7
    %v168 = vsub.s32 3, %v167
    %v169 = vrot.slane %v119, %v168
    %v170 = vlaneseq
    %v171 = vshrl.u32 %v170, 7
    %v172 = vsub.s32 4, %v171
    %v173 = vrot.slane %v119, %v172
    %v174 = vlaneseq
    %v175 = vshrl.u32 %v174, 7
    %v176 = vsub.s32 5, %v175
    %v177 = vrot.slane %v119, %v176
    %v178 = vlaneseq
    %v179 = vshrl.u32 %v178, 7
    %v180 = vsub.s32 6, %v179
    %v181 = vrot.slane %v119, %v180
    %v182 = vlaneseq
    %v183 = vshrl.u32 %v182, 7
    %v184 = vsub.s32 7, %v183
    %v185 = vrot.slane %v119, %v184
    %v234 = vunpack.c.l.b16 %v86
    %v235 = vunpack.c.h.b16 %v86
    %v236 = vunpack.c.l.b16 %v87
    %v237 = vunpack.c.h.b16 %v87
    %v238 = vunpack.c.l.b16 %v88
    %v239 = vunpack.c.h.b16 %v88
    %v240 = vunpack.c.l.b16 %v89
    %v241 = vunpack.c.h.b16 %v89
    %v242 = vunpack.c.l.b16 %v90
    %v243 = vunpack.c.h.b16 %v90
    %v244 = vunpack.c.l.b16 %v91
    %v245 = vunpack.c.h.b16 %v91
    %v246 = vunpack.c.l.b16 %v92
    %v247 = vunpack.c.h.b16 %v92
    %v248 = vunpack.c.l.b16 %v93
    %v249 = vunpack.c.h.b16 %v93
    %v250 = vunpack.c.l.b16 %v94
    %v251 = vunpack.c.h.b16 %v94
    %v252 = vunpack.c.l.b16 %v95
    %v253 = vunpack.c.h.b16 %v95
    %v254 = vunpack.c.l.b16 %v96
    %v255 = vunpack.c.h.b16 %v96
    %v256 = vunpack.c.l.b16 %v97
    %v257 = vunpack.c.h.b16 %v97
    %v258 = vunpack.c.l.b16 %v98
    %v259 = vunpack.c.h.b16 %v98
    %v260 = vunpack.c.l.b16 %v99
    %v261 = vunpack.c.h.b16 %v99
    %v262 = vunpack.c.l.b16 %v100
    %v263 = vunpack.c.h.b16 %v100
    %v264 = vunpack.c.l.b16 %v101
    %v265 = vunpack.c.h.b16 %v101
    %v266 = vunpack.c.l.b16 %v102
    %v267 = vunpack.c.h.b16 %v102
    %v268 = vunpack.c.l.b16 %v103
    %v269 = vunpack.c.h.b16 %v103
    %v270 = vunpack.c.l.b16 %v104
    %v271 = vunpack.c.h.b16 %v104
    %v272 = vunpack.c.l.b16 %v105
    %v273 = vunpack.c.h.b16 %v105
    %v274 = vunpack.c.l.b16 %v106
    %v275 = vunpack.c.h.b16 %v106
    %v276 = vunpack.c.l.b16 %v107
    %v277 = vunpack.c.h.b16 %v107
    %v278 = vunpack.c.l.b16 %v108
    %v279 = vunpack.c.h.b16 %v108
    %v280 = vunpack.c.l.b16 %v109
    %v281 = vunpack.c.h.b16 %v109
    %v282 = vunpack.c.l.b16 %v110
    %v283 = vunpack.c.h.b16 %v110
    %v284 = vunpack.c.l.b16 %v111
    %v285 = vunpack.c.h.b16 %v111
    %v286 = vunpack.c.l.b16 %v112
    %v287 = vunpack.c.h.b16 %v112
    %v288 = vunpack.c.l.b16 %v113
    %v289 = vunpack.c.h.b16 %v113
    %v290 = vunpack.c.l.b16 %v114
    %v291 = vunpack.c.h.b16 %v114
    %v292 = vunpack.c.l.b16 %v115
    %v293 = vunpack.c.h.b16 %v115
    %v294 = vunpack.c.l.b16 %v116
    %v295 = vunpack.c.h.b16 %v116
    %v296 = vunpack.c.l.b16 %v117
    %v297 = vunpack.c.h.b16 %v117
    %v298 = vpack.c.b16 %v250, %v234
    %v299 = vpack.c.b16 %v251, %v235
    %v300 = vpack.c.b16 %v252, %v236
    %v301 = vpack.c.b16 %v253, %v237
    %v302 = vpack.c.b16 %v254, %v238
    %v303 = vpack.c.b16 %v255, %v239
    %v304 = vpack.c.b16 %v256, %v240
    %v305 = vpack.c.b16 %v257, %v241
    %v306 = vpack.c.b16 %v258, %v242
    %v307 = vpack.c.b16 %v259, %v243
    %v308 = vpack.c.b16 %v260, %v244
    %v309 = vpack.c.b16 %v261, %v245
    %v310 = vpack.c.b16 %v262, %v246
    %v311 = vpack.c.b16 %v263, %v247
    %v312 = vpack.c.b16 %v264, %v248
    %v313 = vpack.c.b16 %v265, %v249
    %v314 = vpack.c.b16 %v282, %v266
    %v315 = vpack.c.b16 %v283, %v267
    %v316 = vpack.c.b16 %v284, %v268
    %v317 = vpack.c.b16 %v285, %v269
    %v318 = vpack.c.b16 %v286, %v270
    %v319 = vpack.c.b16 %v287, %v271
    %v320 = vpack.c.b16 %v288, %v272
    %v321 = vpack.c.b16 %v289, %v273
    %v322 = vpack.c.b16 %v290, %v274
    %v323 = vpack.c.b16 %v291, %v275
    %v324 = vpack.c.b16 %v292, %v276
    %v325 = vpack.c.b16 %v293, %v277
    %v326 = vpack.c.b16 %v294, %v278
    %v327 = vpack.c.b16 %v295, %v279
    %v328 = vpack.c.b16 %v296, %v280
    %v329 = vpack.c.b16 %v297, %v281
    %vm362 = vcmask 261120
    %v364 = vsel %vm362, %v85, 0
    %366 = vmatprep.subr.bf16.mxu0 0
    %367 = vmatpush1.bf16.msra.mxu0 0
    %368 = vmatprep.subr.bf16.mxu0 0
    %369 = vmatpush1.bf16.msra.mxu0 0
    %370 = vmatprep.subr.bf16.mxu0 0
    %371 = vmatpush1.bf16.msra.mxu0 0
    %372 = vmatprep.subr.bf16.mxu0 0
    %373 = vmatpush1.bf16.msra.mxu0 0
    %374 = vmatprep.subr.bf16.mxu0 0
    %375 = vmatpush1.bf16.msra.mxu0 0
    %376 = vmatprep.subr.bf16.mxu0 0
    %377 = vmatpush1.bf16.msra.mxu0 0
    %378 = vmatprep.subr.bf16.mxu0 %v315
    %379 = vmatpush1.bf16.msra.mxu0 %v314
    %380 = vmatprep.subr.bf16.mxu0 %v299
    %381 = vmatpush1.bf16.msra.mxu0 %v298
    %382 = vmatprep.subr.bf16.mxu0 0
    %383 = vmatpush2.bf16.msra.mxu0 0
    %384 = vmatprep.subr.bf16.mxu0 0
    %385 = vmatpush2.bf16.msra.mxu0 0
    %386 = vmatprep.subr.bf16.mxu0 0
    %387 = vmatpush2.bf16.msra.mxu0 0
    %388 = vmatprep.subr.bf16.mxu0 0
    %389 = vmatpush2.bf16.msra.mxu0 0
    %390 = vmatprep.subr.bf16.mxu0 0
    %391 = vmatpush2.bf16.msra.mxu0 0
    %392 = vmatprep.subr.bf16.mxu0 0
    %393 = vmatpush2.bf16.msra.mxu0 0
    %394 = vmatprep.subr.bf16.mxu0 0
    %395 = vmatpush2.bf16.msra.mxu0 0
    %396 = vmatprep.subr.bf16.mxu0 0
    %397 = vmatpush2.bf16.msra.mxu0 0
    %398 = vmatprep.mubr.bf16.mxu0 0
    %399 = vmatmul.mubr.bf16.gmra.mxu0 %v364
    %v400 = vpop.f32.mrf.mxu0
    %v401 = vadd.f32 %v125, %v400
    %v402 = vpop.f32.mrf.mxu0
    %v403 = vadd.f32 %v129, %v402
    %v404 = vpop.f32.mrf.mxu0
    %v405 = vpop.f32.mrf.mxu0
    %406 = vdwg.mxu0
    %407 = vmatprep.subr.bf16.mxu0 0
    %408 = vmatpush1.bf16.msra.mxu0 0
    %409 = vmatprep.subr.bf16.mxu0 0
    %410 = vmatpush1.bf16.msra.mxu0 0
    %411 = vmatprep.subr.bf16.mxu0 0
    %412 = vmatpush1.bf16.msra.mxu0 0
    %413 = vmatprep.subr.bf16.mxu0 0
    %414 = vmatpush1.bf16.msra.mxu0 0
    %415 = vmatprep.subr.bf16.mxu0 0
    %416 = vmatpush1.bf16.msra.mxu0 0
    %417 = vmatprep.subr.bf16.mxu0 0
    %418 = vmatpush1.bf16.msra.mxu0 0
    %419 = vmatprep.subr.bf16.mxu0 %v317
    %420 = vmatpush1.bf16.msra.mxu0 %v316
    %421 = vmatprep.subr.bf16.mxu0 %v301
    %422 = vmatpush1.bf16.msra.mxu0 %v300
    %423 = vmatprep.subr.bf16.mxu0 0
    %424 = vmatpush2.bf16.msra.mxu0 0
    %425 = vmatprep.subr.bf16.mxu0 0
    %426 = vmatpush2.bf16.msra.mxu0 0
    %427 = vmatprep.subr.bf16.mxu0 0
    %428 = vmatpush2.bf16.msra.mxu0 0
    %429 = vmatprep.subr.bf16.mxu0 0
    %430 = vmatpush2.bf16.msra.mxu0 0
    %431 = vmatprep.subr.bf16.mxu0 0
    %432 = vmatpush2.bf16.msra.mxu0 0
    %433 = vmatprep.subr.bf16.mxu0 0
    %434 = vmatpush2.bf16.msra.mxu0 0
    %435 = vmatprep.subr.bf16.mxu0 0
    %436 = vmatpush2.bf16.msra.mxu0 0
    %437 = vmatprep.subr.bf16.mxu0 0
    %438 = vmatpush2.bf16.msra.mxu0 0
    %439 = vmatprep.mubr.bf16.mxu0 0
    %440 = vmatmul.mubr.bf16.gmra.mxu0 %v364
    %v441 = vpop.f32.mrf.mxu0
    %v442 = vadd.f32 %v133, %v441
    %v443 = vpop.f32.mrf.mxu0
    %v444 = vadd.f32 %v137, %v443
    %v445 = vpop.f32.mrf.mxu0
    %v446 = vpop.f32.mrf.mxu0
    %447 = vdwg.mxu0
    %448 = vmatprep.subr.bf16.mxu0 0
    %449 = vmatpush1.bf16.msra.mxu0 0
    %450 = vmatprep.subr.bf16.mxu0 0
    %451 = vmatpush1.bf16.msra.mxu0 0
    %452 = vmatprep.subr.bf16.mxu0 0
    %453 = vmatpush1.bf16.msra.mxu0 0
    %454 = vmatprep.subr.bf16.mxu0 0
    %455 = vmatpush1.bf16.msra.mxu0 0
    %456 = vmatprep.subr.bf16.mxu0 0
    %457 = vmatpush1.bf16.msra.mxu0 0
    %458 = vmatprep.subr.bf16.mxu0 0
    %459 = vmatpush1.bf16.msra.mxu0 0
    %460 = vmatprep.subr.bf16.mxu0 %v319
    %461 = vmatpush1.bf16.msra.mxu0 %v318
    %462 = vmatprep.subr.bf16.mxu0 %v303
    %463 = vmatpush1.bf16.msra.mxu0 %v302
    %464 = vmatprep.subr.bf16.mxu0 0
    %465 = vmatpush2.bf16.msra.mxu0 0
    %466 = vmatprep.subr.bf16.mxu0 0
    %467 = vmatpush2.bf16.msra.mxu0 0
    %468 = vmatprep.subr.bf16.mxu0 0
    %469 = vmatpush2.bf16.msra.mxu0 0
    %470 = vmatprep.subr.bf16.mxu0 0
    %471 = vmatpush2.bf16.msra.mxu0 0
    %472 = vmatprep.subr.bf16.mxu0 0
    %473 = vmatpush2.bf16.msra.mxu0 0
    %474 = vmatprep.subr.bf16.mxu0 0
    %475 = vmatpush2.bf16.msra.mxu0 0
    %476 = vmatprep.subr.bf16.mxu0 0
    %477 = vmatpush2.bf16.msra.mxu0 0
    %478 = vmatprep.subr.bf16.mxu0 0
    %479 = vmatpush2.bf16.msra.mxu0 0
    %480 = vmatprep.mubr.bf16.mxu0 0
    %481 = vmatmul.mubr.bf16.gmra.mxu0 %v364
    %v482 = vpop.f32.mrf.mxu0
    %v483 = vadd.f32 %v141, %v482
    %v484 = vpop.f32.mrf.mxu0
    %v485 = vadd.f32 %v145, %v484
    %v486 = vpop.f32.mrf.mxu0
    %v487 = vpop.f32.mrf.mxu0
    %488 = vdwg.mxu0
    %489 = vmatprep.subr.bf16.mxu0 0
    %490 = vmatpush1.bf16.msra.mxu0 0
    %491 = vmatprep.subr.bf16.mxu0 0
    %492 = vmatpush1.bf16.msra.mxu0 0
    %493 = vmatprep.subr.bf16.mxu0 0
    %494 = vmatpush1.bf16.msra.mxu0 0
    %495 = vmatprep.subr.bf16.mxu0 0
    %496 = vmatpush1.bf16.msra.mxu0 0
    %497 = vmatprep.subr.bf16.mxu0 0
    %498 = vmatpush1.bf16.msra.mxu0 0
    %499 = vmatprep.subr.bf16.mxu0 0
    %500 = vmatpush1.bf16.msra.mxu0 0
    %501 = vmatprep.subr.bf16.mxu0 %v321
    %502 = vmatpush1.bf16.msra.mxu0 %v320
    %503 = vmatprep.subr.bf16.mxu0 %v305
    %504 = vmatpush1.bf16.msra.mxu0 %v304
    %505 = vmatprep.subr.bf16.mxu0 0
    %506 = vmatpush2.bf16.msra.mxu0 0
    %507 = vmatprep.subr.bf16.mxu0 0
    %508 = vmatpush2.bf16.msra.mxu0 0
    %509 = vmatprep.subr.bf16.mxu0 0
    %510 = vmatpush2.bf16.msra.mxu0 0
    %511 = vmatprep.subr.bf16.mxu0 0
    %512 = vmatpush2.bf16.msra.mxu0 0
    %513 = vmatprep.subr.bf16.mxu0 0
    %514 = vmatpush2.bf16.msra.mxu0 0
    %515 = vmatprep.subr.bf16.mxu0 0
    %516 = vmatpush2.bf16.msra.mxu0 0
    %517 = vmatprep.subr.bf16.mxu0 0
    %518 = vmatpush2.bf16.msra.mxu0 0
    %519 = vmatprep.subr.bf16.mxu0 0
    %520 = vmatpush2.bf16.msra.mxu0 0
    %521 = vmatprep.mubr.bf16.mxu0 0
    %522 = vmatmul.mubr.bf16.gmra.mxu0 %v364
    %v523 = vpop.f32.mrf.mxu0
    %v524 = vadd.f32 %v149, %v523
    %v525 = vpop.f32.mrf.mxu0
    %v526 = vadd.f32 %v153, %v525
    %v527 = vpop.f32.mrf.mxu0
    %v528 = vpop.f32.mrf.mxu0
    %529 = vdwg.mxu0
    %530 = vmatprep.subr.bf16.mxu0 0
    %531 = vmatpush1.bf16.msra.mxu0 0
    %532 = vmatprep.subr.bf16.mxu0 0
    %533 = vmatpush1.bf16.msra.mxu0 0
    %534 = vmatprep.subr.bf16.mxu0 0
    %535 = vmatpush1.bf16.msra.mxu0 0
    %536 = vmatprep.subr.bf16.mxu0 0
    %537 = vmatpush1.bf16.msra.mxu0 0
    %538 = vmatprep.subr.bf16.mxu0 0
    %539 = vmatpush1.bf16.msra.mxu0 0
    %540 = vmatprep.subr.bf16.mxu0 0
    %541 = vmatpush1.bf16.msra.mxu0 0
    %542 = vmatprep.subr.bf16.mxu0 %v323
    %543 = vmatpush1.bf16.msra.mxu0 %v322
    %544 = vmatprep.subr.bf16.mxu0 %v307
    %545 = vmatpush1.bf16.msra.mxu0 %v306
    %546 = vmatprep.subr.bf16.mxu0 0
    %547 = vmatpush2.bf16.msra.mxu0 0
    %548 = vmatprep.subr.bf16.mxu0 0
    %549 = vmatpush2.bf16.msra.mxu0 0
    %550 = vmatprep.subr.bf16.mxu0 0
    %551 = vmatpush2.bf16.msra.mxu0 0
    %552 = vmatprep.subr.bf16.mxu0 0
    %553 = vmatpush2.bf16.msra.mxu0 0
    %554 = vmatprep.subr.bf16.mxu0 0
    %555 = vmatpush2.bf16.msra.mxu0 0
    %556 = vmatprep.subr.bf16.mxu0 0
    %557 = vmatpush2.bf16.msra.mxu0 0
    %558 = vmatprep.subr.bf16.mxu0 0
    %559 = vmatpush2.bf16.msra.mxu0 0
    %560 = vmatprep.subr.bf16.mxu0 0
    %561 = vmatpush2.bf16.msra.mxu0 0
    %562 = vmatprep.mubr.bf16.mxu0 0
    %563 = vmatmul.mubr.bf16.gmra.mxu0 %v364
    %v564 = vpop.f32.mrf.mxu0
    %v565 = vadd.f32 %v157, %v564
    %v566 = vpop.f32.mrf.mxu0
    %v567 = vadd.f32 %v161, %v566
    %v568 = vpop.f32.mrf.mxu0
    %v569 = vpop.f32.mrf.mxu0
    %570 = vdwg.mxu0
    %571 = vmatprep.subr.bf16.mxu0 0
    %572 = vmatpush1.bf16.msra.mxu0 0
    %573 = vmatprep.subr.bf16.mxu0 0
    %574 = vmatpush1.bf16.msra.mxu0 0
    %575 = vmatprep.subr.bf16.mxu0 0
    %576 = vmatpush1.bf16.msra.mxu0 0
    %577 = vmatprep.subr.bf16.mxu0 0
    %578 = vmatpush1.bf16.msra.mxu0 0
    %579 = vmatprep.subr.bf16.mxu0 0
    %580 = vmatpush1.bf16.msra.mxu0 0
    %581 = vmatprep.subr.bf16.mxu0 0
    %582 = vmatpush1.bf16.msra.mxu0 0
    %583 = vmatprep.subr.bf16.mxu0 %v325
    %584 = vmatpush1.bf16.msra.mxu0 %v324
    %585 = vmatprep.subr.bf16.mxu0 %v309
    %586 = vmatpush1.bf16.msra.mxu0 %v308
    %587 = vmatprep.subr.bf16.mxu0 0
    %588 = vmatpush2.bf16.msra.mxu0 0
    %589 = vmatprep.subr.bf16.mxu0 0
    %590 = vmatpush2.bf16.msra.mxu0 0
    %591 = vmatprep.subr.bf16.mxu0 0
    %592 = vmatpush2.bf16.msra.mxu0 0
    %593 = vmatprep.subr.bf16.mxu0 0
    %594 = vmatpush2.bf16.msra.mxu0 0
    %595 = vmatprep.subr.bf16.mxu0 0
    %596 = vmatpush2.bf16.msra.mxu0 0
    %597 = vmatprep.subr.bf16.mxu0 0
    %598 = vmatpush2.bf16.msra.mxu0 0
    %599 = vmatprep.subr.bf16.mxu0 0
    %600 = vmatpush2.bf16.msra.mxu0 0
    %601 = vmatprep.subr.bf16.mxu0 0
    %602 = vmatpush2.bf16.msra.mxu0 0
    %603 = vmatprep.mubr.bf16.mxu0 0
    %604 = vmatmul.mubr.bf16.gmra.mxu0 %v364
    %v605 = vpop.f32.mrf.mxu0
    %v606 = vadd.f32 %v165, %v605
    %v607 = vpop.f32.mrf.mxu0
    %v608 = vadd.f32 %v169, %v607
    %v609 = vpop.f32.mrf.mxu0
    %v610 = vpop.f32.mrf.mxu0
    %611 = vdwg.mxu0
    %612 = vmatprep.subr.bf16.mxu0 0
    %613 = vmatpush1.bf16.msra.mxu0 0
    %614 = vmatprep.subr.bf16.mxu0 0
    %615 = vmatpush1.bf16.msra.mxu0 0
    %616 = vmatprep.subr.bf16.mxu0 0
    %617 = vmatpush1.bf16.msra.mxu0 0
    %618 = vmatprep.subr.bf16.mxu0 0
    %619 = vmatpush1.bf16.msra.mxu0 0
    %620 = vmatprep.subr.bf16.mxu0 0
    %621 = vmatpush1.bf16.msra.mxu0 0
    %622 = vmatprep.subr.bf16.mxu0 0
    %623 = vmatpush1.bf16.msra.mxu0 0
    %624 = vmatprep.subr.bf16.mxu0 %v327
    %625 = vmatpush1.bf16.msra.mxu0 %v326
    %626 = vmatprep.subr.bf16.mxu0 %v311
    %627 = vmatpush1.bf16.msra.mxu0 %v310
    %628 = vmatprep.subr.bf16.mxu0 0
    %629 = vmatpush2.bf16.msra.mxu0 0
    %630 = vmatprep.subr.bf16.mxu0 0
    %631 = vmatpush2.bf16.msra.mxu0 0
    %632 = vmatprep.subr.bf16.mxu0 0
    %633 = vmatpush2.bf16.msra.mxu0 0
    %634 = vmatprep.subr.bf16.mxu0 0
    %635 = vmatpush2.bf16.msra.mxu0 0
    %636 = vmatprep.subr.bf16.mxu0 0
    %637 = vmatpush2.bf16.msra.mxu0 0
    %638 = vmatprep.subr.bf16.mxu0 0
    %639 = vmatpush2.bf16.msra.mxu0 0
    %640 = vmatprep.subr.bf16.mxu0 0
    %641 = vmatpush2.bf16.msra.mxu0 0
    %642 = vmatprep.subr.bf16.mxu0 0
    %643 = vmatpush2.bf16.msra.mxu0 0
    %644 = vmatprep.mubr.bf16.mxu0 0
    %645 = vmatmul.mubr.bf16.gmra.mxu0 %v364
    %v646 = vpop.f32.mrf.mxu0
    %v647 = vadd.f32 %v173, %v646
    %v648 = vpop.f32.mrf.mxu0
    %v649 = vadd.f32 %v177, %v648
    %v650 = vpop.f32.mrf.mxu0
    %v651 = vpop.f32.mrf.mxu0
    %652 = vdwg.mxu0
    %653 = vmatprep.subr.bf16.mxu0 0
    %654 = vmatpush1.bf16.msra.mxu0 0
    %655 = vmatprep.subr.bf16.mxu0 0
    %656 = vmatpush1.bf16.msra.mxu0 0
    %657 = vmatprep.subr.bf16.mxu0 0
    %658 = vmatpush1.bf16.msra.mxu0 0
    %659 = vmatprep.subr.bf16.mxu0 0
    %660 = vmatpush1.bf16.msra.mxu0 0
    %661 = vmatprep.subr.bf16.mxu0 0
    %662 = vmatpush1.bf16.msra.mxu0 0
    %663 = vmatprep.subr.bf16.mxu0 0
    %664 = vmatpush1.bf16.msra.mxu0 0
    %665 = vmatprep.subr.bf16.mxu0 %v329
    %666 = vmatpush1.bf16.msra.mxu0 %v328
    %667 = vmatprep.subr.bf16.mxu0 %v313
    %668 = vmatpush1.bf16.msra.mxu0 %v312
    %669 = vmatprep.subr.bf16.mxu0 0
    %670 = vmatpush2.bf16.msra.mxu0 0
    %671 = vmatprep.subr.bf16.mxu0 0
    %672 = vmatpush2.bf16.msra.mxu0 0
    %673 = vmatprep.subr.bf16.mxu0 0
    %674 = vmatpush2.bf16.msra.mxu0 0
    %675 = vmatprep.subr.bf16.mxu0 0
    %676 = vmatpush2.bf16.msra.mxu0 0
    %677 = vmatprep.subr.bf16.mxu0 0
    %678 = vmatpush2.bf16.msra.mxu0 0
    %679 = vmatprep.subr.bf16.mxu0 0
    %680 = vmatpush2.bf16.msra.mxu0 0
    %681 = vmatprep.subr.bf16.mxu0 0
    %682 = vmatpush2.bf16.msra.mxu0 0
    %683 = vmatprep.subr.bf16.mxu0 0
    %684 = vmatpush2.bf16.msra.mxu0 0
    %685 = vmatprep.mubr.bf16.mxu0 0
    %686 = vmatmul.mubr.bf16.gmra.mxu0 %v364
    %v687 = vpop.f32.mrf.mxu0
    %v688 = vadd.f32 %v181, %v687
    %v689 = vpop.f32.mrf.mxu0
    %v690 = vadd.f32 %v185, %v689
    %v691 = vpop.f32.mrf.mxu0
    %v692 = vpop.f32.mrf.mxu0
    %693 = vdwg.mxu0
    %vm694 = vcmask 1040384
    %v695 = vsel %vm694, %v401, 0.0
    %v696 = vrot.slane %v403, 7
    %vm697 = vcmask 1041409
    %v698 = vsel %vm697, %v696, %v695
    %v699 = vrot.slane %v442, 6
    %vm700 = vcmask 1042434
    %v701 = vsel %vm700, %v699, %v698
    %v702 = vrot.slane %v444, 5
    %vm703 = vcmask 1043459
    %v704 = vsel %vm703, %v702, %v701
    %v705 = vsel %vm694, %v483, 0.0
    %v706 = vrot.slane %v485, 7
    %v707 = vsel %vm697, %v706, %v705
    %v708 = vrot.slane %v524, 6
    %v709 = vsel %vm700, %v708, %v707
    %v710 = vrot.slane %v526, 5
    %v711 = vsel %vm703, %v710, %v709
    %v712 = vsel %vm694, %v565, 0.0
    %v713 = vrot.slane %v567, 7
    %v714 = vsel %vm697, %v713, %v712
    %v715 = vrot.slane %v606, 6
    %v716 = vsel %vm700, %v715, %v714
    %v717 = vrot.slane %v608, 5
    %v718 = vsel %vm703, %v717, %v716
    %v719 = vsel %vm694, %v647, 0.0
    %v720 = vrot.slane %v649, 7
    %v721 = vsel %vm697, %v720, %v719
    %v722 = vrot.slane %v688, 6
    %v723 = vsel %vm700, %v722, %v721
    %v724 = vrot.slane %v690, 5
    %v725 = vsel %vm703, %v724, %v723
    %v726 = vrot.slane %v401, 1
    %v727 = vsel %vm694, %v726, 0.0
    %v728 = vsel %vm697, %v403, %v727
    %v729 = vrot.slane %v442, 7
    %v730 = vsel %vm700, %v729, %v728
    %v731 = vrot.slane %v444, 6
    %v732 = vsel %vm703, %v731, %v730
    %v733 = vrot.slane %v483, 1
    %v734 = vsel %vm694, %v733, 0.0
    %v735 = vsel %vm697, %v485, %v734
    %v736 = vrot.slane %v524, 7
    %v737 = vsel %vm700, %v736, %v735
    %v738 = vrot.slane %v526, 6
    %v739 = vsel %vm703, %v738, %v737
    %v740 = vrot.slane %v565, 1
    %v741 = vsel %vm694, %v740, 0.0
    %v742 = vsel %vm697, %v567, %v741
    %v743 = vrot.slane %v606, 7
    %v744 = vsel %vm700, %v743, %v742
    %v745 = vrot.slane %v608, 6
    %v746 = vsel %vm703, %v745, %v744
    %v747 = vrot.slane %v647, 1
    %v748 = vsel %vm694, %v747, 0.0
    %v749 = vsel %vm697, %v649, %v748
    %v750 = vrot.slane %v688, 7
    %v751 = vsel %vm700, %v750, %v749
    %v752 = vrot.slane %v690, 6
    %v753 = vsel %vm703, %v752, %v751
    %v754 = vpack.c.bf16 %v704, %v704
    %v755 = vpack.c.bf16 %v711, %v711
    %v756 = vpack.c.bf16 %v718, %v718
    %v757 = vpack.c.bf16 %v725, %v725
    %v758 = vpack.c.bf16 %v732, %v732
    %v759 = vpack.c.bf16 %v739, %v739
    %v760 = vpack.c.bf16 %v746, %v746
    %v761 = vpack.c.bf16 %v753, %v753
    %v763 = vshrl.u32 %v754, 16
    %v765 = vrot.slane %v763, 7
    %v766 = vshll.u32 %v754, 16
    %v768 = vor.u32 %v765, %v766
    %v770 = vshrl.u32 %v755, 16
    %v772 = vrot.slane %v770, 7
    %v773 = vshll.u32 %v755, 16
    %v775 = vor.u32 %v772, %v773
    %v777 = vshrl.u32 %v756, 16
    %v779 = vrot.slane %v777, 7
    %v780 = vshll.u32 %v756, 16
    %v782 = vor.u32 %v779, %v780
    %v784 = vshrl.u32 %v757, 16
    %v786 = vrot.slane %v784, 7
    %v787 = vshll.u32 %v757, 16
    %v789 = vor.u32 %v786, %v787
    %v791 = vshrl.u32 %v758, 16
    %v793 = vrot.slane %v791, 7
    %v794 = vshll.u32 %v758, 16
    %v796 = vor.u32 %v793, %v794
    %v798 = vshrl.u32 %v759, 16
    %v800 = vrot.slane %v798, 7
    %v801 = vshll.u32 %v759, 16
    %v803 = vor.u32 %v800, %v801
    %v805 = vshrl.u32 %v760, 16
    %v807 = vrot.slane %v805, 7
    %v808 = vshll.u32 %v760, 16
    %v810 = vor.u32 %v807, %v808
    %v812 = vshrl.u32 %v761, 16
    %v814 = vrot.slane %v812, 7
    %v815 = vshll.u32 %v761, 16
    %v817 = vor.u32 %v814, %v815
    %vm826 = vcmask 1040384
    %vm827 = vsmask.f32 256
    %vm828 = vmand %vm826, %vm827
    %v829 = vsel %vm828, 0, %v768
    %v830 = vsel %vm828, 0, %v775
    %v831 = vsel %vm828, 0, %v782
    %v832 = vsel %vm828, 0, %v789
    %v833 = vsel %vm828, 0, %v796
    %v834 = vsel %vm828, 0, %v803
    %v835 = vsel %vm828, 0, %v810
    %v836 = vsel %vm828, 0, %v817
    %v837 = vrot.slane %v766, 1
    %v838 = vor.u32 %v763, %v837
    %v839 = vrot.slane %v773, 1
    %v840 = vor.u32 %v770, %v839
    %v841 = vrot.slane %v780, 1
    %v842 = vor.u32 %v777, %v841
    %v843 = vrot.slane %v787, 1
    %v844 = vor.u32 %v784, %v843
    %v845 = vrot.slane %v794, 1
    %v846 = vor.u32 %v791, %v845
    %v847 = vrot.slane %v801, 1
    %v848 = vor.u32 %v798, %v847
    %v849 = vrot.slane %v808, 1
    %v850 = vor.u32 %v805, %v849
    %v851 = vrot.slane %v815, 1
    %v852 = vor.u32 %v812, %v851
    %vm861 = vcmask 1041408
    %vm862 = vsmask.f32 1280
    %vm863 = vmand %vm861, %vm862
    %v864 = vsel %vm863, %v838, 0
    %v865 = vsel %vm863, %v840, 0
    %v866 = vsel %vm863, %v842, 0
    %v867 = vsel %vm863, %v844, 0
    %v868 = vsel %vm863, %v846, 0
    %v869 = vsel %vm863, %v848, 0
    %v870 = vsel %vm863, %v850, 0
    %v871 = vsel %vm863, %v852, 0
    %v889 = vcombine.low 0, 0
    %v890 = vcombine.low %v829, %v754
    %v892 = vunpack.c.l.s4 1983009808
    %v893 = vunpack.c.0.s8 %v892
    %v894 = vlaneseq
    %v895 = vshrl.u32 %v894, 7
    %v896 = vsub.s32 %v893, %v895
    %v897 = vrot.slane %v889, %v896
    %v899 = vunpack.c.l.s4 1983009808
    %v900 = vunpack.c.0.s8 %v899
    %v901 = vlaneseq
    %v902 = vshrl.u32 %v901, 7
    %v903 = vsub.s32 %v900, %v902
    %v904 = vrot.slane %v890, %v903
    %v905 = vcombine.low %v897, %v904
    %v906 = vcombine.low %v904, %v904
    %v907 = vcombine.low %v830, %v755
    %v909 = vunpack.c.l.s4 1983009808
    %v910 = vunpack.c.0.s8 %v909
    %v911 = vlaneseq
    %v912 = vshrl.u32 %v911, 7
    %v913 = vsub.s32 %v910, %v912
    %v914 = vrot.slane %v907, %v913
    %v915 = vcombine.low %v904, %v914
    %v916 = vcombine.low %v914, %v914
    %v917 = vcombine.low %v831, %v756
    %v919 = vunpack.c.l.s4 1983009808
    %v920 = vunpack.c.0.s8 %v919
    %v921 = vlaneseq
    %v922 = vshrl.u32 %v921, 7
    %v923 = vsub.s32 %v920, %v922
    %v924 = vrot.slane %v917, %v923
    %v925 = vcombine.low %v914, %v924
    %v926 = vcombine.low %v924, %v924
    %v927 = vcombine.low %v832, %v757
    %v929 = vunpack.c.l.s4 1983009808
    %v930 = vunpack.c.0.s8 %v929
    %v931 = vlaneseq
    %v932 = vshrl.u32 %v931, 7
    %v933 = vsub.s32 %v930, %v932
    %v934 = vrot.slane %v927, %v933
    %v935 = vcombine.low %v924, %v934
    %v936 = vcombine.low %v934, %v934
    %v937 = vcombine.low %v833, %v758
    %v939 = vunpack.c.l.s4 1983009808
    %v940 = vunpack.c.0.s8 %v939
    %v941 = vlaneseq
    %v942 = vshrl.u32 %v941, 7
    %v943 = vsub.s32 %v940, %v942
    %v944 = vrot.slane %v937, %v943
    %v945 = vcombine.low %v897, %v944
    %v946 = vcombine.low %v944, %v944
    %v947 = vcombine.low %v834, %v759
    %v949 = vunpack.c.l.s4 1983009808
    %v950 = vunpack.c.0.s8 %v949
    %v951 = vlaneseq
    %v952 = vshrl.u32 %v951, 7
    %v953 = vsub.s32 %v950, %v952
    %v954 = vrot.slane %v947, %v953
    %v955 = vcombine.low %v944, %v954
    %v956 = vcombine.low %v954, %v954
    %v957 = vcombine.low %v835, %v760
    %v959 = vunpack.c.l.s4 1983009808
    %v960 = vunpack.c.0.s8 %v959
    %v961 = vlaneseq
    %v962 = vshrl.u32 %v961, 7
    %v963 = vsub.s32 %v960, %v962
    %v964 = vrot.slane %v957, %v963
    %v965 = vcombine.low %v954, %v964
    %v966 = vcombine.low %v964, %v964
    %v967 = vcombine.low %v836, %v761
    %v969 = vunpack.c.l.s4 1983009808
    %v970 = vunpack.c.0.s8 %v969
    %v971 = vlaneseq
    %v972 = vshrl.u32 %v971, 7
    %v973 = vsub.s32 %v970, %v972
    %v974 = vrot.slane %v967, %v973
    %v975 = vcombine.low %v964, %v974
    %v976 = vcombine.low %v974, %v974
    %v977 = vld [vmem:[%s3] sm:$0xf]
    %v978 = vld [vmem:[%s3 + $0x4] sm:$0xf]
    %v979 = vld [vmem:[%s3 + $0x8] sm:$0xf]
    %v980 = vld [vmem:[%s3 + $0xc] sm:$0xf]
    %v981 = vld [vmem:[%s3 + $0x10] sm:$0xf]
    %v982 = vld [vmem:[%s3 + $0x14] sm:$0xf]
    %v983 = vld [vmem:[%s3 + $0x18] sm:$0xf]
    %v984 = vld [vmem:[%s3 + $0x1c] sm:$0xf]
    %v985 = vld [vmem:[%s3 + $0x20] sm:$0xf]
    %v986 = vld [vmem:[%s3 + $0x24] sm:$0xf]
    %v987 = vld [vmem:[%s3 + $0x28] sm:$0xf]
    %v988 = vld [vmem:[%s3 + $0x2c] sm:$0xf]
    %v989 = vld [vmem:[%s3 + $0x30] sm:$0xf]
    %v990 = vld [vmem:[%s3 + $0x34] sm:$0xf]
    %v991 = vld [vmem:[%s3 + $0x38] sm:$0xf]
    %v992 = vld [vmem:[%s3 + $0x3c] sm:$0xf]
    %v993 = vld [vmem:[%s3 + $0x40] sm:$0xf]
    %v994 = vld [vmem:[%s3 + $0x44] sm:$0xf]
    %v995 = vld [vmem:[%s3 + $0x48] sm:$0xf]
    %v996 = vld [vmem:[%s3 + $0x4c] sm:$0xf]
    %v997 = vld [vmem:[%s3 + $0x50] sm:$0xf]
    %v998 = vld [vmem:[%s3 + $0x54] sm:$0xf]
    %v999 = vld [vmem:[%s3 + $0x58] sm:$0xf]
    %v1000 = vld [vmem:[%s3 + $0x5c] sm:$0xf]
    %v1001 = vld [vmem:[%s3 + $0x60] sm:$0xf]
    %v1002 = vld [vmem:[%s3 + $0x64] sm:$0xf]
    %v1003 = vld [vmem:[%s3 + $0x68] sm:$0xf]
    %v1004 = vld [vmem:[%s3 + $0x6c] sm:$0xf]
    %v1005 = vld [vmem:[%s3 + $0x70] sm:$0xf]
    %v1006 = vld [vmem:[%s3 + $0x74] sm:$0xf]
    %v1007 = vld [vmem:[%s3 + $0x78] sm:$0xf]
    %v1008 = vld [vmem:[%s3 + $0x7c] sm:$0xf]
    %v1009 = vld [vmem:[%s3 + $0x80] sm:$0xf]
    %v1010 = vld [vmem:[%s3 + $0x84] sm:$0xf]
    %v1011 = vld [vmem:[%s3 + $0x88] sm:$0xf]
    %v1012 = vld [vmem:[%s3 + $0x8c] sm:$0xf]
    %v1013 = vld [vmem:[%s3 + $0x90] sm:$0xf]
    %v1014 = vld [vmem:[%s3 + $0x94] sm:$0xf]
    %v1015 = vld [vmem:[%s3 + $0x98] sm:$0xf]
    %v1016 = vld [vmem:[%s3 + $0x9c] sm:$0xf]
    %v1017 = vld [vmem:[%s3 + $0xa0] sm:$0xf]
    %v1018 = vld [vmem:[%s3 + $0xa4] sm:$0xf]
    %v1019 = vld [vmem:[%s3 + $0xa8] sm:$0xf]
    %v1020 = vld [vmem:[%s3 + $0xac] sm:$0xf]
    %v1021 = vld [vmem:[%s3 + $0xb0] sm:$0xf]
    %v1022 = vld [vmem:[%s3 + $0xb4] sm:$0xf]
    %v1023 = vld [vmem:[%s3 + $0xb8] sm:$0xf]
    %v1024 = vld [vmem:[%s3 + $0xbc] sm:$0xf]
    %v1025 = vld [vmem:[%s3 + $0xc0] sm:$0xf]
    %v1026 = vld [vmem:[%s3 + $0xc4] sm:$0xf]
    %v1027 = vld [vmem:[%s3 + $0xc8] sm:$0xf]
    %v1028 = vld [vmem:[%s3 + $0xcc] sm:$0xf]
    %v1029 = vld [vmem:[%s3 + $0xd0] sm:$0xf]
    %v1030 = vld [vmem:[%s3 + $0xd4] sm:$0xf]
    %v1031 = vld [vmem:[%s3 + $0xd8] sm:$0xf]
    %v1032 = vld [vmem:[%s3 + $0xdc] sm:$0xf]
    %v1033 = vld [vmem:[%s3 + $0xe0] sm:$0xf]
    %v1034 = vld [vmem:[%s3 + $0xe4] sm:$0xf]
    %v1035 = vld [vmem:[%s3 + $0xe8] sm:$0xf]
    %v1036 = vld [vmem:[%s3 + $0xec] sm:$0xf]
    %v1037 = vld [vmem:[%s3 + $0xf0] sm:$0xf]
    %v1038 = vld [vmem:[%s3 + $0xf4] sm:$0xf]
    %v1039 = vld [vmem:[%s3 + $0xf8] sm:$0xf]
    %v1040 = vld [vmem:[%s3 + $0xfc] sm:$0xf]
    %v1041 = vld [vmem:[%s3 + $0x100] sm:$0xf]
    %v1042 = vld [vmem:[%s3 + $0x104] sm:$0xf]
    %v1043 = vld [vmem:[%s3 + $0x108] sm:$0xf]
    %v1044 = vld [vmem:[%s3 + $0x10c] sm:$0xf]
    %v1045 = vld [vmem:[%s3 + $0x110] sm:$0xf]
    %v1046 = vld [vmem:[%s3 + $0x114] sm:$0xf]
    %v1047 = vld [vmem:[%s3 + $0x118] sm:$0xf]
    %v1048 = vld [vmem:[%s3 + $0x11c] sm:$0xf]
    %v1049 = vld [vmem:[%s3 + $0x120] sm:$0xf]
    %v1050 = vld [vmem:[%s3 + $0x124] sm:$0xf]
    %v1051 = vld [vmem:[%s3 + $0x128] sm:$0xf]
    %v1052 = vld [vmem:[%s3 + $0x12c] sm:$0xf]
    %v1053 = vld [vmem:[%s3 + $0x130] sm:$0xf]
    %v1054 = vld [vmem:[%s3 + $0x134] sm:$0xf]
    %v1055 = vld [vmem:[%s3 + $0x138] sm:$0xf]
    %v1056 = vld [vmem:[%s3 + $0x13c] sm:$0xf]
    %v1057 = vld [vmem:[%s3 + $0x140] sm:$0xf]
    %v1058 = vld [vmem:[%s3 + $0x144] sm:$0xf]
    %v1059 = vld [vmem:[%s3 + $0x148] sm:$0xf]
    %v1060 = vld [vmem:[%s3 + $0x14c] sm:$0xf]
    %v1061 = vld [vmem:[%s3 + $0x150] sm:$0xf]
    %v1062 = vld [vmem:[%s3 + $0x154] sm:$0xf]
    %v1063 = vld [vmem:[%s3 + $0x158] sm:$0xf]
    %v1064 = vld [vmem:[%s3 + $0x15c] sm:$0xf]
    %v1065 = vld [vmem:[%s3 + $0x160] sm:$0xf]
    %v1066 = vld [vmem:[%s3 + $0x164] sm:$0xf]
    %v1067 = vld [vmem:[%s3 + $0x168] sm:$0xf]
    %v1068 = vld [vmem:[%s3 + $0x16c] sm:$0xf]
    %v1069 = vld [vmem:[%s3 + $0x170] sm:$0xf]
    %v1070 = vld [vmem:[%s3 + $0x174] sm:$0xf]
    %v1071 = vld [vmem:[%s3 + $0x178] sm:$0xf]
    %v1072 = vld [vmem:[%s3 + $0x17c] sm:$0xf]
    %v1073 = vcombine.low %v905, %v906
    %v1074 = vcombine.high %v905, %v906
    %v1075 = vcombine.low %v915, %v916
    %v1076 = vcombine.high %v915, %v916
    %v1078 = vunpack.c.l.s4 1983009808
    %v1079 = vunpack.c.0.s8 %v1078
    %v1080 = vlaneseq
    %v1081 = vshrl.u32 %v1080, 7
    %v1082 = vsub.s32 %v1079, %v1081
    %v1083 = vrot.slane %v1073, %v1082
    %v1085 = vunpack.c.l.s4 1983009808
    %v1086 = vunpack.c.0.s8 %v1085
    %v1087 = vlaneseq
    %v1088 = vshrl.u32 %v1087, 7
    %v1089 = vsub.s32 %v1086, %v1088
    %v1090 = vrot.slane %v1074, %v1089
    %v1092 = vunpack.c.l.s4 1983009808
    %v1093 = vunpack.c.0.s8 %v1092
    %v1094 = vlaneseq
    %v1095 = vshrl.u32 %v1094, 7
    %v1096 = vsub.s32 %v1093, %v1095
    %v1097 = vrot.slane %v1075, %v1096
    %v1099 = vunpack.c.l.s4 1983009808
    %v1100 = vunpack.c.0.s8 %v1099
    %v1101 = vlaneseq
    %v1102 = vshrl.u32 %v1101, 7
    %v1103 = vsub.s32 %v1100, %v1102
    %v1104 = vrot.slane %v1076, %v1103
    %v1105 = vcombine.low %v1083, %v1097
    %v1106 = vcombine.high %v1083, %v1097
    %v1107 = vcombine.low %v1090, %v1104
    %v1108 = vcombine.high %v1090, %v1104
    %v1110 = vunpack.c.l.s4 1983009808
    %v1111 = vunpack.c.0.s8 %v1110
    %v1112 = vlaneseq
    %v1113 = vshrl.u32 %v1112, 7
    %v1114 = vsub.s32 %v1111, %v1113
    %v1115 = vrot.slane %v915, %v1114
    %v1117 = vunpack.c.l.s4 1983009808
    %v1118 = vunpack.c.0.s8 %v1117
    %v1119 = vlaneseq
    %v1120 = vshrl.u32 %v1119, 7
    %v1121 = vsub.s32 %v1118, %v1120
    %v1122 = vrot.slane %v925, %v1121
    %v1123 = vcombine.low %v1115, %v1122
    %v1124 = vcombine.high %v1115, %v1122
    %v1125 = vcombine.low %v925, %v926
    %v1126 = vcombine.high %v925, %v926
    %v1127 = vcombine.low %v935, %v936
    %v1128 = vcombine.high %v935, %v936
    %v1130 = vunpack.c.l.s4 1983009808
    %v1131 = vunpack.c.0.s8 %v1130
    %v1132 = vlaneseq
    %v1133 = vshrl.u32 %v1132, 7
    %v1134 = vsub.s32 %v1131, %v1133
    %v1135 = vrot.slane %v1125, %v1134
    %v1137 = vunpack.c.l.s4 1983009808
    %v1138 = vunpack.c.0.s8 %v1137
    %v1139 = vlaneseq
    %v1140 = vshrl.u32 %v1139, 7
    %v1141 = vsub.s32 %v1138, %v1140
    %v1142 = vrot.slane %v1126, %v1141
    %v1144 = vunpack.c.l.s4 1983009808
    %v1145 = vunpack.c.0.s8 %v1144
    %v1146 = vlaneseq
    %v1147 = vshrl.u32 %v1146, 7
    %v1148 = vsub.s32 %v1145, %v1147
    %v1149 = vrot.slane %v1127, %v1148
    %v1151 = vunpack.c.l.s4 1983009808
    %v1152 = vunpack.c.0.s8 %v1151
    %v1153 = vlaneseq
    %v1154 = vshrl.u32 %v1153, 7
    %v1155 = vsub.s32 %v1152, %v1154
    %v1156 = vrot.slane %v1128, %v1155
    %v1157 = vcombine.low %v1135, %v1149
    %v1158 = vcombine.high %v1135, %v1149
    %v1159 = vcombine.low %v1142, %v1156
    %v1160 = vcombine.high %v1142, %v1156
    %v1161 = vcombine.low %v934, %v897
    %v1163 = vunpack.c.l.s4 1983009808
    %v1164 = vunpack.c.0.s8 %v1163
    %v1165 = vlaneseq
    %v1166 = vshrl.u32 %v1165, 7
    %v1167 = vsub.s32 %v1164, %v1166
    %v1168 = vrot.slane %v935, %v1167
    %v1170 = vunpack.c.l.s4 1983009808
    %v1171 = vunpack.c.0.s8 %v1170
    %v1172 = vlaneseq
    %v1173 = vshrl.u32 %v1172, 7
    %v1174 = vsub.s32 %v1171, %v1173
    %v1175 = vrot.slane %v1161, %v1174
    %v1176 = vcombine.low %v1168, %v1175
    %v1177 = vcombine.high %v1168, %v1175
    %v1178 = vcombine.low %v945, %v946
    %v1179 = vcombine.high %v945, %v946
    %v1180 = vcombine.low %v955, %v956
    %v1181 = vcombine.high %v955, %v956
    %v1183 = vunpack.c.l.s4 1983009808
    %v1184 = vunpack.c.0.s8 %v1183
    %v1185 = vlaneseq
    %v1186 = vshrl.u32 %v1185, 7
    %v1187 = vsub.s32 %v1184, %v1186
    %v1188 = vrot.slane %v1178, %v1187
    %v1190 = vunpack.c.l.s4 1983009808
    %v1191 = vunpack.c.0.s8 %v1190
    %v1192 = vlaneseq
    %v1193 = vshrl.u32 %v1192, 7
    %v1194 = vsub.s32 %v1191, %v1193
    %v1195 = vrot.slane %v1179, %v1194
    %v1197 = vunpack.c.l.s4 1983009808
    %v1198 = vunpack.c.0.s8 %v1197
    %v1199 = vlaneseq
    %v1200 = vshrl.u32 %v1199, 7
    %v1201 = vsub.s32 %v1198, %v1200
    %v1202 = vrot.slane %v1180, %v1201
    %v1204 = vunpack.c.l.s4 1983009808
    %v1205 = vunpack.c.0.s8 %v1204
    %v1206 = vlaneseq
    %v1207 = vshrl.u32 %v1206, 7
    %v1208 = vsub.s32 %v1205, %v1207
    %v1209 = vrot.slane %v1181, %v1208
    %v1210 = vcombine.low %v1188, %v1202
    %v1211 = vcombine.high %v1188, %v1202
    %v1212 = vcombine.low %v1195, %v1209
    %v1213 = vcombine.high %v1195, %v1209
    %v1215 = vunpack.c.l.s4 1983009808
    %v1216 = vunpack.c.0.s8 %v1215
    %v1217 = vlaneseq
    %v1218 = vshrl.u32 %v1217, 7
    %v1219 = vsub.s32 %v1216, %v1218
    %v1220 = vrot.slane %v955, %v1219
    %v1222 = vunpack.c.l.s4 1983009808
    %v1223 = vunpack.c.0.s8 %v1222
    %v1224 = vlaneseq
    %v1225 = vshrl.u32 %v1224, 7
    %v1226 = vsub.s32 %v1223, %v1225
    %v1227 = vrot.slane %v965, %v1226
    %v1228 = vcombine.low %v1220, %v1227
    %v1229 = vcombine.high %v1220, %v1227
    %v1230 = vcombine.low %v965, %v966
    %v1231 = vcombine.high %v965, %v966
    %v1232 = vcombine.low %v975, %v976
    %v1233 = vcombine.high %v975, %v976
    %v1235 = vunpack.c.l.s4 1983009808
    %v1236 = vunpack.c.0.s8 %v1235
    %v1237 = vlaneseq
    %v1238 = vshrl.u32 %v1237, 7
    %v1239 = vsub.s32 %v1236, %v1238
    %v1240 = vrot.slane %v1230, %v1239
    %v1242 = vunpack.c.l.s4 1983009808
    %v1243 = vunpack.c.0.s8 %v1242
    %v1244 = vlaneseq
    %v1245 = vshrl.u32 %v1244, 7
    %v1246 = vsub.s32 %v1243, %v1245
    %v1247 = vrot.slane %v1231, %v1246
    %v1249 = vunpack.c.l.s4 1983009808
    %v1250 = vunpack.c.0.s8 %v1249
    %v1251 = vlaneseq
    %v1252 = vshrl.u32 %v1251, 7
    %v1253 = vsub.s32 %v1250, %v1252
    %v1254 = vrot.slane %v1232, %v1253
    %v1256 = vunpack.c.l.s4 1983009808
    %v1257 = vunpack.c.0.s8 %v1256
    %v1258 = vlaneseq
    %v1259 = vshrl.u32 %v1258, 7
    %v1260 = vsub.s32 %v1257, %v1259
    %v1261 = vrot.slane %v1233, %v1260
    %v1262 = vcombine.low %v1240, %v1254
    %v1263 = vcombine.high %v1240, %v1254
    %v1264 = vcombine.low %v1247, %v1261
    %v1265 = vcombine.high %v1247, %v1261
    %v1266 = vcombine.low %v974, %v897
    %v1268 = vunpack.c.l.s4 1983009808
    %v1269 = vunpack.c.0.s8 %v1268
    %v1270 = vlaneseq
    %v1271 = vshrl.u32 %v1270, 7
    %v1272 = vsub.s32 %v1269, %v1271
    %v1273 = vrot.slane %v975, %v1272
    %v1275 = vunpack.c.l.s4 1983009808
    %v1276 = vunpack.c.0.s8 %v1275
    %v1277 = vlaneseq
    %v1278 = vshrl.u32 %v1277, 7
    %v1279 = vsub.s32 %v1276, %v1278
    %v1280 = vrot.slane %v1266, %v1279
    %v1281 = vcombine.low %v1273, %v1280
    %v1282 = vcombine.high %v1273, %v1280
    %v1403 = vunpack.c.l.b16 %v977
    %v1404 = vunpack.c.l.b16 %v978
    %v1405 = vunpack.c.l.b16 %v979
    %v1406 = vunpack.c.l.b16 %v980
    %v1407 = vunpack.c.l.b16 %v981
    %v1408 = vunpack.c.l.b16 %v982
    %v1409 = vunpack.c.l.b16 %v983
    %v1410 = vunpack.c.l.b16 %v984
    %v1411 = vunpack.c.l.b16 %v985
    %v1412 = vunpack.c.l.b16 %v986
    %v1413 = vunpack.c.l.b16 %v987
    %v1414 = vunpack.c.l.b16 %v988
    %v1415 = vunpack.c.l.b16 %v989
    %v1416 = vunpack.c.l.b16 %v990
    %v1417 = vunpack.c.l.b16 %v991
    %v1418 = vunpack.c.l.b16 %v992
    %v1419 = vunpack.c.l.b16 %v993
    %v1420 = vunpack.c.l.b16 %v994
    %v1421 = vunpack.c.l.b16 %v995
    %v1422 = vunpack.c.l.b16 %v996
    %v1423 = vunpack.c.l.b16 %v997
    %v1424 = vunpack.c.l.b16 %v998
    %v1425 = vunpack.c.l.b16 %v999
    %v1426 = vunpack.c.l.b16 %v1000
    %v1427 = vunpack.c.l.b16 %v1001
    %v1428 = vunpack.c.l.b16 %v1002
    %v1429 = vunpack.c.l.b16 %v1003
    %v1430 = vunpack.c.l.b16 %v1004
    %v1431 = vunpack.c.l.b16 %v1005
    %v1432 = vunpack.c.l.b16 %v1006
    %v1433 = vunpack.c.l.b16 %v1007
    %v1434 = vunpack.c.l.b16 %v1008
    %v1435 = vunpack.c.l.b16 %v1009
    %v1436 = vunpack.c.l.b16 %v1010
    %v1437 = vunpack.c.l.b16 %v1011
    %v1438 = vunpack.c.l.b16 %v1012
    %v1439 = vunpack.c.l.b16 %v1013
    %v1440 = vunpack.c.l.b16 %v1014
    %v1441 = vunpack.c.l.b16 %v1015
    %v1442 = vunpack.c.l.b16 %v1016
    %v1443 = vunpack.c.l.b16 %v1017
    %v1444 = vunpack.c.l.b16 %v1018
    %v1445 = vunpack.c.l.b16 %v1019
    %v1446 = vunpack.c.l.b16 %v1020
    %v1447 = vunpack.c.l.b16 %v1021
    %v1448 = vunpack.c.l.b16 %v1022
    %v1449 = vunpack.c.l.b16 %v1023
    %v1450 = vunpack.c.l.b16 %v1024
    %v1451 = vunpack.c.l.b16 %v1025
    %v1452 = vunpack.c.l.b16 %v1026
    %v1453 = vunpack.c.l.b16 %v1027
    %v1454 = vunpack.c.l.b16 %v1028
    %v1455 = vunpack.c.l.b16 %v1029
    %v1456 = vunpack.c.l.b16 %v1030
    %v1457 = vunpack.c.l.b16 %v1031
    %v1458 = vunpack.c.l.b16 %v1032
    %v1459 = vunpack.c.l.b16 %v1033
    %v1460 = vunpack.c.l.b16 %v1034
    %v1461 = vunpack.c.l.b16 %v1035
    %v1462 = vunpack.c.l.b16 %v1036
    %v1463 = vunpack.c.l.b16 %v1037
    %v1464 = vunpack.c.l.b16 %v1038
    %v1465 = vunpack.c.l.b16 %v1039
    %v1466 = vunpack.c.l.b16 %v1040
    %v1467 = vunpack.c.l.b16 %v1041
    %v1468 = vunpack.c.l.b16 %v1042
    %v1469 = vunpack.c.l.b16 %v1043
    %v1470 = vunpack.c.l.b16 %v1044
    %v1471 = vunpack.c.l.b16 %v1045
    %v1472 = vunpack.c.l.b16 %v1046
    %v1473 = vunpack.c.l.b16 %v1047
    %v1474 = vunpack.c.l.b16 %v1048
    %v1475 = vunpack.c.l.b16 %v1049
    %v1476 = vunpack.c.l.b16 %v1050
    %v1477 = vunpack.c.l.b16 %v1051
    %v1478 = vunpack.c.l.b16 %v1052
    %v1479 = vunpack.c.l.b16 %v1053
    %v1480 = vunpack.c.l.b16 %v1054
    %v1481 = vunpack.c.l.b16 %v1055
    %v1482 = vunpack.c.l.b16 %v1056
    %v1483 = vunpack.c.l.b16 %v1057
    %v1484 = vunpack.c.l.b16 %v1058
    %v1485 = vunpack.c.l.b16 %v1059
    %v1486 = vunpack.c.l.b16 %v1060
    %v1487 = vunpack.c.l.b16 %v1061
    %v1488 = vunpack.c.l.b16 %v1062
    %v1489 = vunpack.c.l.b16 %v1063
    %v1490 = vunpack.c.l.b16 %v1064
    %v1491 = vunpack.c.l.b16 %v1065
    %v1492 = vunpack.c.l.b16 %v1066
    %v1493 = vunpack.c.l.b16 %v1067
    %v1494 = vunpack.c.l.b16 %v1068
    %v1495 = vunpack.c.l.b16 %v1069
    %v1496 = vunpack.c.l.b16 %v1070
    %v1497 = vunpack.c.l.b16 %v1071
    %v1498 = vunpack.c.l.b16 %v1072
    %v1499 = vpack.c.b16 %v1404, %v1403
    %v1500 = vpack.c.b16 %v1406, %v1405
    %v1501 = vpack.c.b16 %v1408, %v1407
    %v1502 = vpack.c.b16 %v1410, %v1409
    %v1503 = vpack.c.b16 %v1412, %v1411
    %v1504 = vpack.c.b16 %v1414, %v1413
    %v1505 = vpack.c.b16 %v1416, %v1415
    %v1506 = vpack.c.b16 %v1418, %v1417
    %v1507 = vpack.c.b16 %v1420, %v1419
    %v1508 = vpack.c.b16 %v1422, %v1421
    %v1509 = vpack.c.b16 %v1424, %v1423
    %v1510 = vpack.c.b16 %v1426, %v1425
    %v1511 = vpack.c.b16 %v1428, %v1427
    %v1512 = vpack.c.b16 %v1430, %v1429
    %v1513 = vpack.c.b16 %v1432, %v1431
    %v1514 = vpack.c.b16 %v1434, %v1433
    %v1515 = vpack.c.b16 %v1436, %v1435
    %v1516 = vpack.c.b16 %v1438, %v1437
    %v1517 = vpack.c.b16 %v1440, %v1439
    %v1518 = vpack.c.b16 %v1442, %v1441
    %v1519 = vpack.c.b16 %v1444, %v1443
    %v1520 = vpack.c.b16 %v1446, %v1445
    %v1521 = vpack.c.b16 %v1448, %v1447
    %v1522 = vpack.c.b16 %v1450, %v1449
    %v1523 = vpack.c.b16 %v1452, %v1451
    %v1524 = vpack.c.b16 %v1454, %v1453
    %v1525 = vpack.c.b16 %v1456, %v1455
    %v1526 = vpack.c.b16 %v1458, %v1457
    %v1527 = vpack.c.b16 %v1460, %v1459
    %v1528 = vpack.c.b16 %v1462, %v1461
    %v1529 = vpack.c.b16 %v1464, %v1463
    %v1530 = vpack.c.b16 %v1466, %v1465
    %v1531 = vpack.c.b16 %v1468, %v1467
    %v1532 = vpack.c.b16 %v1470, %v1469
    %v1533 = vpack.c.b16 %v1472, %v1471
    %v1534 = vpack.c.b16 %v1474, %v1473
    %v1535 = vpack.c.b16 %v1476, %v1475
    %v1536 = vpack.c.b16 %v1478, %v1477
    %v1537 = vpack.c.b16 %v1480, %v1479
    %v1538 = vpack.c.b16 %v1482, %v1481
    %v1539 = vpack.c.b16 %v1484, %v1483
    %v1540 = vpack.c.b16 %v1486, %v1485
    %v1541 = vpack.c.b16 %v1488, %v1487
    %v1542 = vpack.c.b16 %v1490, %v1489
    %v1543 = vpack.c.b16 %v1492, %v1491
    %v1544 = vpack.c.b16 %v1494, %v1493
    %v1545 = vpack.c.b16 %v1496, %v1495
    %v1546 = vpack.c.b16 %v1498, %v1497
    %1595 = vmatprep.subr.bf16.mxu0 0
    %1596 = vmatpush1.bf16.msra.mxu0 %v1506
    %1597 = vmatprep.subr.bf16.mxu0 0
    %1598 = vmatpush1.bf16.msra.mxu0 %v1505
    %1599 = vmatprep.subr.bf16.mxu0 0
    %1600 = vmatpush1.bf16.msra.mxu0 %v1504
    %1601 = vmatprep.subr.bf16.mxu0 0
    %1602 = vmatpush1.bf16.msra.mxu0 %v1503
    %1603 = vmatprep.subr.bf16.mxu0 0
    %1604 = vmatpush1.bf16.msra.mxu0 %v1502
    %1605 = vmatprep.subr.bf16.mxu0 0
    %1606 = vmatpush1.bf16.msra.mxu0 %v1501
    %1607 = vmatprep.subr.bf16.mxu0 0
    %1608 = vmatpush1.bf16.msra.mxu0 %v1500
    %1609 = vmatprep.subr.bf16.mxu0 0
    %1610 = vmatpush1.bf16.msra.mxu0 %v1499
    %1611 = vmatprep.subr.bf16.mxu0 0
    %1612 = vmatpush2.bf16.msra.mxu0 %v1514
    %1613 = vmatprep.subr.bf16.mxu0 0
    %1614 = vmatpush2.bf16.msra.mxu0 %v1513
    %1615 = vmatprep.subr.bf16.mxu0 0
    %1616 = vmatpush2.bf16.msra.mxu0 %v1512
    %1617 = vmatprep.subr.bf16.mxu0 0
    %1618 = vmatpush2.bf16.msra.mxu0 %v1511
    %1619 = vmatprep.subr.bf16.mxu0 0
    %1620 = vmatpush2.bf16.msra.mxu0 %v1510
    %1621 = vmatprep.subr.bf16.mxu0 0
    %1622 = vmatpush2.bf16.msra.mxu0 %v1509
    %1623 = vmatprep.subr.bf16.mxu0 0
    %1624 = vmatpush2.bf16.msra.mxu0 %v1508
    %1625 = vmatprep.subr.bf16.mxu0 0
    %1626 = vmatpush2.bf16.msra.mxu0 %v1507
    %1627 = vmatprep.mubr.bf16.mxu0 %v1106
    %1628 = vmatmul.mubr.bf16.gmra.mxu0 %v1105
    %v1629 = vpop.f32.mrf.mxu0
    %v1630 = vadd.f32 0.0, %v1629
    %v1631 = vpop.f32.mrf.mxu0
    %v1632 = vpop.f32.mrf.mxu0
    %v1633 = vadd.f32 0.0, %v1632
    %v1634 = vpop.f32.mrf.mxu0
    %1635 = vmatprep.mubr.bf16.mxu0 %v1158
    %1636 = vmatmul.mubr.bf16.gmra.mxu0 %v1157
    %v1637 = vpop.f32.mrf.mxu0
    %v1638 = vadd.f32 0.0, %v1637
    %v1639 = vpop.f32.mrf.mxu0
    %v1640 = vpop.f32.mrf.mxu0
    %v1641 = vadd.f32 0.0, %v1640
    %v1642 = vpop.f32.mrf.mxu0
    %1643 = vmatprep.mubr.bf16.mxu0 %v1211
    %1644 = vmatmul.mubr.bf16.gmra.mxu0 %v1210
    %v1645 = vpop.f32.mrf.mxu0
    %v1646 = vadd.f32 0.0, %v1645
    %v1647 = vpop.f32.mrf.mxu0
    %v1648 = vpop.f32.mrf.mxu0
    %v1649 = vadd.f32 0.0, %v1648
    %v1650 = vpop.f32.mrf.mxu0
    %1651 = vmatprep.mubr.bf16.mxu0 %v1263
    %1652 = vmatmul.mubr.bf16.gmra.mxu0 %v1262
    %v1653 = vpop.f32.mrf.mxu0
    %v1654 = vadd.f32 0.0, %v1653
    %v1655 = vpop.f32.mrf.mxu0
    %v1656 = vpop.f32.mrf.mxu0
    %v1657 = vadd.f32 0.0, %v1656
    %v1658 = vpop.f32.mrf.mxu0
    %1659 = vdwg.mxu0
    %1660 = vmatprep.subr.bf16.mxu0 0
    %1661 = vmatpush1.bf16.msra.mxu0 %v1522
    %1662 = vmatprep.subr.bf16.mxu0 0
    %1663 = vmatpush1.bf16.msra.mxu0 %v1521
    %1664 = vmatprep.subr.bf16.mxu0 0
    %1665 = vmatpush1.bf16.msra.mxu0 %v1520
    %1666 = vmatprep.subr.bf16.mxu0 0
    %1667 = vmatpush1.bf16.msra.mxu0 %v1519
    %1668 = vmatprep.subr.bf16.mxu0 0
    %1669 = vmatpush1.bf16.msra.mxu0 %v1518
    %1670 = vmatprep.subr.bf16.mxu0 0
    %1671 = vmatpush1.bf16.msra.mxu0 %v1517
    %1672 = vmatprep.subr.bf16.mxu0 0
    %1673 = vmatpush1.bf16.msra.mxu0 %v1516
    %1674 = vmatprep.subr.bf16.mxu0 0
    %1675 = vmatpush1.bf16.msra.mxu0 %v1515
    %1676 = vmatprep.subr.bf16.mxu0 0
    %1677 = vmatpush2.bf16.msra.mxu0 %v1530
    %1678 = vmatprep.subr.bf16.mxu0 0
    %1679 = vmatpush2.bf16.msra.mxu0 %v1529
    %1680 = vmatprep.subr.bf16.mxu0 0
    %1681 = vmatpush2.bf16.msra.mxu0 %v1528
    %1682 = vmatprep.subr.bf16.mxu0 0
    %1683 = vmatpush2.bf16.msra.mxu0 %v1527
    %1684 = vmatprep.subr.bf16.mxu0 0
    %1685 = vmatpush2.bf16.msra.mxu0 %v1526
    %1686 = vmatprep.subr.bf16.mxu0 0
    %1687 = vmatpush2.bf16.msra.mxu0 %v1525
    %1688 = vmatprep.subr.bf16.mxu0 0
    %1689 = vmatpush2.bf16.msra.mxu0 %v1524
    %1690 = vmatprep.subr.bf16.mxu0 0
    %1691 = vmatpush2.bf16.msra.mxu0 %v1523
    %1692 = vmatprep.mubr.bf16.mxu0 %v1108
    %1693 = vmatmul.mubr.bf16.gmra.mxu0 %v1107
    %v1694 = vpop.f32.mrf.mxu0
    %v1695 = vadd.f32 %v1630, %v1694
    %v1696 = vpop.f32.mrf.mxu0
    %v1697 = vpop.f32.mrf.mxu0
    %v1698 = vadd.f32 %v1633, %v1697
    %v1699 = vpop.f32.mrf.mxu0
    %1700 = vmatprep.mubr.bf16.mxu0 %v1160
    %1701 = vmatmul.mubr.bf16.gmra.mxu0 %v1159
    %v1702 = vpop.f32.mrf.mxu0
    %v1703 = vadd.f32 %v1638, %v1702
    %v1704 = vpop.f32.mrf.mxu0
    %v1705 = vpop.f32.mrf.mxu0
    %v1706 = vadd.f32 %v1641, %v1705
    %v1707 = vpop.f32.mrf.mxu0
    %1708 = vmatprep.mubr.bf16.mxu0 %v1213
    %1709 = vmatmul.mubr.bf16.gmra.mxu0 %v1212
    %v1710 = vpop.f32.mrf.mxu0
    %v1711 = vadd.f32 %v1646, %v1710
    %v1712 = vpop.f32.mrf.mxu0
    %v1713 = vpop.f32.mrf.mxu0
    %v1714 = vadd.f32 %v1649, %v1713
    %v1715 = vpop.f32.mrf.mxu0
    %1716 = vmatprep.mubr.bf16.mxu0 %v1265
    %1717 = vmatmul.mubr.bf16.gmra.mxu0 %v1264
    %v1718 = vpop.f32.mrf.mxu0
    %v1719 = vadd.f32 %v1654, %v1718
    %v1720 = vpop.f32.mrf.mxu0
    %v1721 = vpop.f32.mrf.mxu0
    %v1722 = vadd.f32 %v1657, %v1721
    %v1723 = vpop.f32.mrf.mxu0
    %1724 = vdwg.mxu0
    %1725 = vmatprep.subr.bf16.mxu0 0
    %1726 = vmatpush1.bf16.msra.mxu0 %v1538
    %1727 = vmatprep.subr.bf16.mxu0 0
    %1728 = vmatpush1.bf16.msra.mxu0 %v1537
    %1729 = vmatprep.subr.bf16.mxu0 0
    %1730 = vmatpush1.bf16.msra.mxu0 %v1536
    %1731 = vmatprep.subr.bf16.mxu0 0
    %1732 = vmatpush1.bf16.msra.mxu0 %v1535
    %1733 = vmatprep.subr.bf16.mxu0 0
    %1734 = vmatpush1.bf16.msra.mxu0 %v1534
    %1735 = vmatprep.subr.bf16.mxu0 0
    %1736 = vmatpush1.bf16.msra.mxu0 %v1533
    %1737 = vmatprep.subr.bf16.mxu0 0
    %1738 = vmatpush1.bf16.msra.mxu0 %v1532
    %1739 = vmatprep.subr.bf16.mxu0 0
    %1740 = vmatpush1.bf16.msra.mxu0 %v1531
    %1741 = vmatprep.subr.bf16.mxu0 0
    %1742 = vmatpush2.bf16.msra.mxu0 %v1546
    %1743 = vmatprep.subr.bf16.mxu0 0
    %1744 = vmatpush2.bf16.msra.mxu0 %v1545
    %1745 = vmatprep.subr.bf16.mxu0 0
    %1746 = vmatpush2.bf16.msra.mxu0 %v1544
    %1747 = vmatprep.subr.bf16.mxu0 0
    %1748 = vmatpush2.bf16.msra.mxu0 %v1543
    %1749 = vmatprep.subr.bf16.mxu0 0
    %1750 = vmatpush2.bf16.msra.mxu0 %v1542
    %1751 = vmatprep.subr.bf16.mxu0 0
    %1752 = vmatpush2.bf16.msra.mxu0 %v1541
    %1753 = vmatprep.subr.bf16.mxu0 0
    %1754 = vmatpush2.bf16.msra.mxu0 %v1540
    %1755 = vmatprep.subr.bf16.mxu0 0
    %1756 = vmatpush2.bf16.msra.mxu0 %v1539
    %1757 = vmatprep.mubr.bf16.mxu0 %v1124
    %1758 = vmatmul.mubr.bf16.gmra.mxu0 %v1123
    %v1759 = vpop.f32.mrf.mxu0
    %v1760 = vadd.f32 %v1695, %v1759
    %v1761 = vpop.f32.mrf.mxu0
    %v1762 = vpop.f32.mrf.mxu0
    %v1763 = vadd.f32 %v1698, %v1762
    %v1764 = vpop.f32.mrf.mxu0
    %1765 = vmatprep.mubr.bf16.mxu0 %v1177
    %1766 = vmatmul.mubr.bf16.gmra.mxu0 %v1176
    %v1767 = vpop.f32.mrf.mxu0
    %v1768 = vadd.f32 %v1703, %v1767
    %v1769 = vpop.f32.mrf.mxu0
    %v1770 = vpop.f32.mrf.mxu0
    %v1771 = vadd.f32 %v1706, %v1770
    %v1772 = vpop.f32.mrf.mxu0
    %1773 = vmatprep.mubr.bf16.mxu0 %v1229
    %1774 = vmatmul.mubr.bf16.gmra.mxu0 %v1228
    %v1775 = vpop.f32.mrf.mxu0
    %v1776 = vadd.f32 %v1711, %v1775
    %v1777 = vpop.f32.mrf.mxu0
    %v1778 = vpop.f32.mrf.mxu0
    %v1779 = vadd.f32 %v1714, %v1778
    %v1780 = vpop.f32.mrf.mxu0
    %1781 = vmatprep.mubr.bf16.mxu0 %v1282
    %1782 = vmatmul.mubr.bf16.gmra.mxu0 %v1281
    %v1783 = vpop.f32.mrf.mxu0
    %v1784 = vadd.f32 %v1719, %v1783
    %v1785 = vpop.f32.mrf.mxu0
    %v1786 = vpop.f32.mrf.mxu0
    %v1787 = vadd.f32 %v1722, %v1786
    %v1788 = vpop.f32.mrf.mxu0
    %1789 = vdwg.mxu0
    %v1798 = vcombine.low %v754, %v864
    %v1800 = vunpack.c.l.s4 1983009808
    %v1801 = vunpack.c.0.s8 %v1800
    %v1802 = vlaneseq
    %v1803 = vshrl.u32 %v1802, 7
    %v1804 = vsub.s32 %v1801, %v1803
    %v1805 = vrot.slane %v1798, %v1804
    %v1806 = vcombine.low %v897, %v1805
    %v1807 = vcombine.low %v1805, %v1805
    %v1808 = vcombine.low %v755, %v865
    %v1810 = vunpack.c.l.s4 1983009808
    %v1811 = vunpack.c.0.s8 %v1810
    %v1812 = vlaneseq
    %v1813 = vshrl.u32 %v1812, 7
    %v1814 = vsub.s32 %v1811, %v1813
    %v1815 = vrot.slane %v1808, %v1814
    %v1816 = vcombine.low %v1805, %v1815
    %v1817 = vcombine.low %v1815, %v1815
    %v1818 = vcombine.low %v756, %v866
    %v1820 = vunpack.c.l.s4 1983009808
    %v1821 = vunpack.c.0.s8 %v1820
    %v1822 = vlaneseq
    %v1823 = vshrl.u32 %v1822, 7
    %v1824 = vsub.s32 %v1821, %v1823
    %v1825 = vrot.slane %v1818, %v1824
    %v1826 = vcombine.low %v1815, %v1825
    %v1827 = vcombine.low %v1825, %v1825
    %v1828 = vcombine.low %v757, %v867
    %v1830 = vunpack.c.l.s4 1983009808
    %v1831 = vunpack.c.0.s8 %v1830
    %v1832 = vlaneseq
    %v1833 = vshrl.u32 %v1832, 7
    %v1834 = vsub.s32 %v1831, %v1833
    %v1835 = vrot.slane %v1828, %v1834
    %v1836 = vcombine.low %v1825, %v1835
    %v1837 = vcombine.low %v1835, %v1835
    %v1838 = vcombine.low %v758, %v868
    %v1840 = vunpack.c.l.s4 1983009808
    %v1841 = vunpack.c.0.s8 %v1840
    %v1842 = vlaneseq
    %v1843 = vshrl.u32 %v1842, 7
    %v1844 = vsub.s32 %v1841, %v1843
    %v1845 = vrot.slane %v1838, %v1844
    %v1846 = vcombine.low %v897, %v1845
    %v1847 = vcombine.low %v1845, %v1845
    %v1848 = vcombine.low %v759, %v869
    %v1850 = vunpack.c.l.s4 1983009808
    %v1851 = vunpack.c.0.s8 %v1850
    %v1852 = vlaneseq
    %v1853 = vshrl.u32 %v1852, 7
    %v1854 = vsub.s32 %v1851, %v1853
    %v1855 = vrot.slane %v1848, %v1854
    %v1856 = vcombine.low %v1845, %v1855
    %v1857 = vcombine.low %v1855, %v1855
    %v1858 = vcombine.low %v760, %v870
    %v1860 = vunpack.c.l.s4 1983009808
    %v1861 = vunpack.c.0.s8 %v1860
    %v1862 = vlaneseq
    %v1863 = vshrl.u32 %v1862, 7
    %v1864 = vsub.s32 %v1861, %v1863
    %v1865 = vrot.slane %v1858, %v1864
    %v1866 = vcombine.low %v1855, %v1865
    %v1867 = vcombine.low %v1865, %v1865
    %v1868 = vcombine.low %v761, %v871
    %v1870 = vunpack.c.l.s4 1983009808
    %v1871 = vunpack.c.0.s8 %v1870
    %v1872 = vlaneseq
    %v1873 = vshrl.u32 %v1872, 7
    %v1874 = vsub.s32 %v1871, %v1873
    %v1875 = vrot.slane %v1868, %v1874
    %v1876 = vcombine.low %v1865, %v1875
    %v1877 = vcombine.low %v1875, %v1875
    %s1878 = scalar_lea.vmem %s3, 384
    %v1879 = vld [vmem:[%s1878] sm:$0xf]
    %v1880 = vld [vmem:[%s1878 + $0x4] sm:$0xf]
    %v1881 = vld [vmem:[%s1878 + $0x8] sm:$0xf]
    %v1882 = vld [vmem:[%s1878 + $0xc] sm:$0xf]
    %v1883 = vld [vmem:[%s1878 + $0x10] sm:$0xf]
    %v1884 = vld [vmem:[%s1878 + $0x14] sm:$0xf]
    %v1885 = vld [vmem:[%s1878 + $0x18] sm:$0xf]
    %v1886 = vld [vmem:[%s1878 + $0x1c] sm:$0xf]
    %v1887 = vld [vmem:[%s1878 + $0x20] sm:$0xf]
    %v1888 = vld [vmem:[%s1878 + $0x24] sm:$0xf]
    %v1889 = vld [vmem:[%s1878 + $0x28] sm:$0xf]
    %v1890 = vld [vmem:[%s1878 + $0x2c] sm:$0xf]
    %v1891 = vld [vmem:[%s1878 + $0x30] sm:$0xf]
    %v1892 = vld [vmem:[%s1878 + $0x34] sm:$0xf]
    %v1893 = vld [vmem:[%s1878 + $0x38] sm:$0xf]
    %v1894 = vld [vmem:[%s1878 + $0x3c] sm:$0xf]
    %v1895 = vld [vmem:[%s1878 + $0x40] sm:$0xf]
    %v1896 = vld [vmem:[%s1878 + $0x44] sm:$0xf]
    %v1897 = vld [vmem:[%s1878 + $0x48] sm:$0xf]
    %v1898 = vld [vmem:[%s1878 + $0x4c] sm:$0xf]
    %v1899 = vld [vmem:[%s1878 + $0x50] sm:$0xf]
    %v1900 = vld [vmem:[%s1878 + $0x54] sm:$0xf]
    %v1901 = vld [vmem:[%s1878 + $0x58] sm:$0xf]
    %v1902 = vld [vmem:[%s1878 + $0x5c] sm:$0xf]
    %v1903 = vld [vmem:[%s1878 + $0x60] sm:$0xf]
    %v1904 = vld [vmem:[%s1878 + $0x64] sm:$0xf]
    %v1905 = vld [vmem:[%s1878 + $0x68] sm:$0xf]
    %v1906 = vld [vmem:[%s1878 + $0x6c] sm:$0xf]
    %v1907 = vld [vmem:[%s1878 + $0x70] sm:$0xf]
    %v1908 = vld [vmem:[%s1878 + $0x74] sm:$0xf]
    %v1909 = vld [vmem:[%s1878 + $0x78] sm:$0xf]
    %v1910 = vld [vmem:[%s1878 + $0x7c] sm:$0xf]
    %v1911 = vld [vmem:[%s1878 + $0x80] sm:$0xf]
    %v1912 = vld [vmem:[%s1878 + $0x84] sm:$0xf]
    %v1913 = vld [vmem:[%s1878 + $0x88] sm:$0xf]
    %v1914 = vld [vmem:[%s1878 + $0x8c] sm:$0xf]
    %v1915 = vld [vmem:[%s1878 + $0x90] sm:$0xf]
    %v1916 = vld [vmem:[%s1878 + $0x94] sm:$0xf]
    %v1917 = vld [vmem:[%s1878 + $0x98] sm:$0xf]
    %v1918 = vld [vmem:[%s1878 + $0x9c] sm:$0xf]
    %v1919 = vld [vmem:[%s1878 + $0xa0] sm:$0xf]
    %v1920 = vld [vmem:[%s1878 + $0xa4] sm:$0xf]
    %v1921 = vld [vmem:[%s1878 + $0xa8] sm:$0xf]
    %v1922 = vld [vmem:[%s1878 + $0xac] sm:$0xf]
    %v1923 = vld [vmem:[%s1878 + $0xb0] sm:$0xf]
    %v1924 = vld [vmem:[%s1878 + $0xb4] sm:$0xf]
    %v1925 = vld [vmem:[%s1878 + $0xb8] sm:$0xf]
    %v1926 = vld [vmem:[%s1878 + $0xbc] sm:$0xf]
    %v1927 = vld [vmem:[%s1878 + $0xc0] sm:$0xf]
    %v1928 = vld [vmem:[%s1878 + $0xc4] sm:$0xf]
    %v1929 = vld [vmem:[%s1878 + $0xc8] sm:$0xf]
    %v1930 = vld [vmem:[%s1878 + $0xcc] sm:$0xf]
    %v1931 = vld [vmem:[%s1878 + $0xd0] sm:$0xf]
    %v1932 = vld [vmem:[%s1878 + $0xd4] sm:$0xf]
    %v1933 = vld [vmem:[%s1878 + $0xd8] sm:$0xf]
    %v1934 = vld [vmem:[%s1878 + $0xdc] sm:$0xf]
    %v1935 = vld [vmem:[%s1878 + $0xe0] sm:$0xf]
    %v1936 = vld [vmem:[%s1878 + $0xe4] sm:$0xf]
    %v1937 = vld [vmem:[%s1878 + $0xe8] sm:$0xf]
    %v1938 = vld [vmem:[%s1878 + $0xec] sm:$0xf]
    %v1939 = vld [vmem:[%s1878 + $0xf0] sm:$0xf]
    %v1940 = vld [vmem:[%s1878 + $0xf4] sm:$0xf]
    %v1941 = vld [vmem:[%s1878 + $0xf8] sm:$0xf]
    %v1942 = vld [vmem:[%s1878 + $0xfc] sm:$0xf]
    %v1943 = vld [vmem:[%s1878 + $0x100] sm:$0xf]
    %v1944 = vld [vmem:[%s1878 + $0x104] sm:$0xf]
    %v1945 = vld [vmem:[%s1878 + $0x108] sm:$0xf]
    %v1946 = vld [vmem:[%s1878 + $0x10c] sm:$0xf]
    %v1947 = vld [vmem:[%s1878 + $0x110] sm:$0xf]
    %v1948 = vld [vmem:[%s1878 + $0x114] sm:$0xf]
    %v1949 = vld [vmem:[%s1878 + $0x118] sm:$0xf]
    %v1950 = vld [vmem:[%s1878 + $0x11c] sm:$0xf]
    %v1951 = vld [vmem:[%s1878 + $0x120] sm:$0xf]
    %v1952 = vld [vmem:[%s1878 + $0x124] sm:$0xf]
    %v1953 = vld [vmem:[%s1878 + $0x128] sm:$0xf]
    %v1954 = vld [vmem:[%s1878 + $0x12c] sm:$0xf]
    %v1955 = vld [vmem:[%s1878 + $0x130] sm:$0xf]
    %v1956 = vld [vmem:[%s1878 + $0x134] sm:$0xf]
    %v1957 = vld [vmem:[%s1878 + $0x138] sm:$0xf]
    %v1958 = vld [vmem:[%s1878 + $0x13c] sm:$0xf]
    %v1959 = vld [vmem:[%s1878 + $0x140] sm:$0xf]
    %v1960 = vld [vmem:[%s1878 + $0x144] sm:$0xf]
    %v1961 = vld [vmem:[%s1878 + $0x148] sm:$0xf]
    %v1962 = vld [vmem:[%s1878 + $0x14c] sm:$0xf]
    %v1963 = vld [vmem:[%s1878 + $0x150] sm:$0xf]
    %v1964 = vld [vmem:[%s1878 + $0x154] sm:$0xf]
    %v1965 = vld [vmem:[%s1878 + $0x158] sm:$0xf]
    %v1966 = vld [vmem:[%s1878 + $0x15c] sm:$0xf]
    %v1967 = vld [vmem:[%s1878 + $0x160] sm:$0xf]
    %v1968 = vld [vmem:[%s1878 + $0x164] sm:$0xf]
    %v1969 = vld [vmem:[%s1878 + $0x168] sm:$0xf]
    %v1970 = vld [vmem:[%s1878 + $0x16c] sm:$0xf]
    %v1971 = vld [vmem:[%s1878 + $0x170] sm:$0xf]
    %v1972 = vld [vmem:[%s1878 + $0x174] sm:$0xf]
    %v1973 = vld [vmem:[%s1878 + $0x178] sm:$0xf]
    %v1974 = vld [vmem:[%s1878 + $0x17c] sm:$0xf]
    %v1975 = vcombine.low %v1806, %v1807
    %v1976 = vcombine.high %v1806, %v1807
    %v1977 = vcombine.low %v1816, %v1817
    %v1978 = vcombine.high %v1816, %v1817
    %v1980 = vunpack.c.l.s4 1983009808
    %v1981 = vunpack.c.0.s8 %v1980
    %v1982 = vlaneseq
    %v1983 = vshrl.u32 %v1982, 7
    %v1984 = vsub.s32 %v1981, %v1983
    %v1985 = vrot.slane %v1975, %v1984
    %v1987 = vunpack.c.l.s4 1983009808
    %v1988 = vunpack.c.0.s8 %v1987
    %v1989 = vlaneseq
    %v1990 = vshrl.u32 %v1989, 7
    %v1991 = vsub.s32 %v1988, %v1990
    %v1992 = vrot.slane %v1976, %v1991
    %v1994 = vunpack.c.l.s4 1983009808
    %v1995 = vunpack.c.0.s8 %v1994
    %v1996 = vlaneseq
    %v1997 = vshrl.u32 %v1996, 7
    %v1998 = vsub.s32 %v1995, %v1997
    %v1999 = vrot.slane %v1977, %v1998
    %v2001 = vunpack.c.l.s4 1983009808
    %v2002 = vunpack.c.0.s8 %v2001
    %v2003 = vlaneseq
    %v2004 = vshrl.u32 %v2003, 7
    %v2005 = vsub.s32 %v2002, %v2004
    %v2006 = vrot.slane %v1978, %v2005
    %v2007 = vcombine.low %v1985, %v1999
    %v2008 = vcombine.high %v1985, %v1999
    %v2009 = vcombine.low %v1992, %v2006
    %v2010 = vcombine.high %v1992, %v2006
    %v2012 = vunpack.c.l.s4 1983009808
    %v2013 = vunpack.c.0.s8 %v2012
    %v2014 = vlaneseq
    %v2015 = vshrl.u32 %v2014, 7
    %v2016 = vsub.s32 %v2013, %v2015
    %v2017 = vrot.slane %v1816, %v2016
    %v2019 = vunpack.c.l.s4 1983009808
    %v2020 = vunpack.c.0.s8 %v2019
    %v2021 = vlaneseq
    %v2022 = vshrl.u32 %v2021, 7
    %v2023 = vsub.s32 %v2020, %v2022
    %v2024 = vrot.slane %v1826, %v2023
    %v2025 = vcombine.low %v2017, %v2024
    %v2026 = vcombine.high %v2017, %v2024
    %v2027 = vcombine.low %v1826, %v1827
    %v2028 = vcombine.high %v1826, %v1827
    %v2029 = vcombine.low %v1836, %v1837
    %v2030 = vcombine.high %v1836, %v1837
    %v2032 = vunpack.c.l.s4 1983009808
    %v2033 = vunpack.c.0.s8 %v2032
    %v2034 = vlaneseq
    %v2035 = vshrl.u32 %v2034, 7
    %v2036 = vsub.s32 %v2033, %v2035
    %v2037 = vrot.slane %v2027, %v2036
    %v2039 = vunpack.c.l.s4 1983009808
    %v2040 = vunpack.c.0.s8 %v2039
    %v2041 = vlaneseq
    %v2042 = vshrl.u32 %v2041, 7
    %v2043 = vsub.s32 %v2040, %v2042
    %v2044 = vrot.slane %v2028, %v2043
    %v2046 = vunpack.c.l.s4 1983009808
    %v2047 = vunpack.c.0.s8 %v2046
    %v2048 = vlaneseq
    %v2049 = vshrl.u32 %v2048, 7
    %v2050 = vsub.s32 %v2047, %v2049
    %v2051 = vrot.slane %v2029, %v2050
    %v2053 = vunpack.c.l.s4 1983009808
    %v2054 = vunpack.c.0.s8 %v2053
    %v2055 = vlaneseq
    %v2056 = vshrl.u32 %v2055, 7
    %v2057 = vsub.s32 %v2054, %v2056
    %v2058 = vrot.slane %v2030, %v2057
    %v2059 = vcombine.low %v2037, %v2051
    %v2060 = vcombine.high %v2037, %v2051
    %v2061 = vcombine.low %v2044, %v2058
    %v2062 = vcombine.high %v2044, %v2058
    %v2063 = vcombine.low %v1835, %v897
    %v2065 = vunpack.c.l.s4 1983009808
    %v2066 = vunpack.c.0.s8 %v2065
    %v2067 = vlaneseq
    %v2068 = vshrl.u32 %v2067, 7
    %v2069 = vsub.s32 %v2066, %v2068
    %v2070 = vrot.slane %v1836, %v2069
    %v2072 = vunpack.c.l.s4 1983009808
    %v2073 = vunpack.c.0.s8 %v2072
    %v2074 = vlaneseq
    %v2075 = vshrl.u32 %v2074, 7
    %v2076 = vsub.s32 %v2073, %v2075
    %v2077 = vrot.slane %v2063, %v2076
    %v2078 = vcombine.low %v2070, %v2077
    %v2079 = vcombine.high %v2070, %v2077
    %v2080 = vcombine.low %v1846, %v1847
    %v2081 = vcombine.high %v1846, %v1847
    %v2082 = vcombine.low %v1856, %v1857
    %v2083 = vcombine.high %v1856, %v1857
    %v2085 = vunpack.c.l.s4 1983009808
    %v2086 = vunpack.c.0.s8 %v2085
    %v2087 = vlaneseq
    %v2088 = vshrl.u32 %v2087, 7
    %v2089 = vsub.s32 %v2086, %v2088
    %v2090 = vrot.slane %v2080, %v2089
    %v2092 = vunpack.c.l.s4 1983009808
    %v2093 = vunpack.c.0.s8 %v2092
    %v2094 = vlaneseq
    %v2095 = vshrl.u32 %v2094, 7
    %v2096 = vsub.s32 %v2093, %v2095
    %v2097 = vrot.slane %v2081, %v2096
    %v2099 = vunpack.c.l.s4 1983009808
    %v2100 = vunpack.c.0.s8 %v2099
    %v2101 = vlaneseq
    %v2102 = vshrl.u32 %v2101, 7
    %v2103 = vsub.s32 %v2100, %v2102
    %v2104 = vrot.slane %v2082, %v2103
    %v2106 = vunpack.c.l.s4 1983009808
    %v2107 = vunpack.c.0.s8 %v2106
    %v2108 = vlaneseq
    %v2109 = vshrl.u32 %v2108, 7
    %v2110 = vsub.s32 %v2107, %v2109
    %v2111 = vrot.slane %v2083, %v2110
    %v2112 = vcombine.low %v2090, %v2104
    %v2113 = vcombine.high %v2090, %v2104
    %v2114 = vcombine.low %v2097, %v2111
    %v2115 = vcombine.high %v2097, %v2111
    %v2117 = vunpack.c.l.s4 1983009808
    %v2118 = vunpack.c.0.s8 %v2117
    %v2119 = vlaneseq
    %v2120 = vshrl.u32 %v2119, 7
    %v2121 = vsub.s32 %v2118, %v2120
    %v2122 = vrot.slane %v1856, %v2121
    %v2124 = vunpack.c.l.s4 1983009808
    %v2125 = vunpack.c.0.s8 %v2124
    %v2126 = vlaneseq
    %v2127 = vshrl.u32 %v2126, 7
    %v2128 = vsub.s32 %v2125, %v2127
    %v2129 = vrot.slane %v1866, %v2128
    %v2130 = vcombine.low %v2122, %v2129
    %v2131 = vcombine.high %v2122, %v2129
    %v2132 = vcombine.low %v1866, %v1867
    %v2133 = vcombine.high %v1866, %v1867
    %v2134 = vcombine.low %v1876, %v1877
    %v2135 = vcombine.high %v1876, %v1877
    %v2137 = vunpack.c.l.s4 1983009808
    %v2138 = vunpack.c.0.s8 %v2137
    %v2139 = vlaneseq
    %v2140 = vshrl.u32 %v2139, 7
    %v2141 = vsub.s32 %v2138, %v2140
    %v2142 = vrot.slane %v2132, %v2141
    %v2144 = vunpack.c.l.s4 1983009808
    %v2145 = vunpack.c.0.s8 %v2144
    %v2146 = vlaneseq
    %v2147 = vshrl.u32 %v2146, 7
    %v2148 = vsub.s32 %v2145, %v2147
    %v2149 = vrot.slane %v2133, %v2148
    %v2151 = vunpack.c.l.s4 1983009808
    %v2152 = vunpack.c.0.s8 %v2151
    %v2153 = vlaneseq
    %v2154 = vshrl.u32 %v2153, 7
    %v2155 = vsub.s32 %v2152, %v2154
    %v2156 = vrot.slane %v2134, %v2155
    %v2158 = vunpack.c.l.s4 1983009808
    %v2159 = vunpack.c.0.s8 %v2158
    %v2160 = vlaneseq
    %v2161 = vshrl.u32 %v2160, 7
    %v2162 = vsub.s32 %v2159, %v2161
    %v2163 = vrot.slane %v2135, %v2162
    %v2164 = vcombine.low %v2142, %v2156
    %v2165 = vcombine.high %v2142, %v2156
    %v2166 = vcombine.low %v2149, %v2163
    %v2167 = vcombine.high %v2149, %v2163
    %v2168 = vcombine.low %v1875, %v897
    %v2170 = vunpack.c.l.s4 1983009808
    %v2171 = vunpack.c.0.s8 %v2170
    %v2172 = vlaneseq
    %v2173 = vshrl.u32 %v2172, 7
    %v2174 = vsub.s32 %v2171, %v2173
    %v2175 = vrot.slane %v1876, %v2174
    %v2177 = vunpack.c.l.s4 1983009808
    %v2178 = vunpack.c.0.s8 %v2177
    %v2179 = vlaneseq
    %v2180 = vshrl.u32 %v2179, 7
    %v2181 = vsub.s32 %v2178, %v2180
    %v2182 = vrot.slane %v2168, %v2181
    %v2183 = vcombine.low %v2175, %v2182
    %v2184 = vcombine.high %v2175, %v2182
    %v2305 = vunpack.c.l.b16 %v1879
    %v2306 = vunpack.c.l.b16 %v1880
    %v2307 = vunpack.c.l.b16 %v1881
    %v2308 = vunpack.c.l.b16 %v1882
    %v2309 = vunpack.c.l.b16 %v1883
    %v2310 = vunpack.c.l.b16 %v1884
    %v2311 = vunpack.c.l.b16 %v1885
    %v2312 = vunpack.c.l.b16 %v1886
    %v2313 = vunpack.c.l.b16 %v1887
    %v2314 = vunpack.c.l.b16 %v1888
    %v2315 = vunpack.c.l.b16 %v1889
    %v2316 = vunpack.c.l.b16 %v1890
    %v2317 = vunpack.c.l.b16 %v1891
    %v2318 = vunpack.c.l.b16 %v1892
    %v2319 = vunpack.c.l.b16 %v1893
    %v2320 = vunpack.c.l.b16 %v1894
    %v2321 = vunpack.c.l.b16 %v1895
    %v2322 = vunpack.c.l.b16 %v1896
    %v2323 = vunpack.c.l.b16 %v1897
    %v2324 = vunpack.c.l.b16 %v1898
    %v2325 = vunpack.c.l.b16 %v1899
    %v2326 = vunpack.c.l.b16 %v1900
    %v2327 = vunpack.c.l.b16 %v1901
    %v2328 = vunpack.c.l.b16 %v1902
    %v2329 = vunpack.c.l.b16 %v1903
    %v2330 = vunpack.c.l.b16 %v1904
    %v2331 = vunpack.c.l.b16 %v1905
    %v2332 = vunpack.c.l.b16 %v1906
    %v2333 = vunpack.c.l.b16 %v1907
    %v2334 = vunpack.c.l.b16 %v1908
    %v2335 = vunpack.c.l.b16 %v1909
    %v2336 = vunpack.c.l.b16 %v1910
    %v2337 = vunpack.c.l.b16 %v1911
    %v2338 = vunpack.c.l.b16 %v1912
    %v2339 = vunpack.c.l.b16 %v1913
    %v2340 = vunpack.c.l.b16 %v1914
    %v2341 = vunpack.c.l.b16 %v1915
    %v2342 = vunpack.c.l.b16 %v1916
    %v2343 = vunpack.c.l.b16 %v1917
    %v2344 = vunpack.c.l.b16 %v1918
    %v2345 = vunpack.c.l.b16 %v1919
    %v2346 = vunpack.c.l.b16 %v1920
    %v2347 = vunpack.c.l.b16 %v1921
    %v2348 = vunpack.c.l.b16 %v1922
    %v2349 = vunpack.c.l.b16 %v1923
    %v2350 = vunpack.c.l.b16 %v1924
    %v2351 = vunpack.c.l.b16 %v1925
    %v2352 = vunpack.c.l.b16 %v1926
    %v2353 = vunpack.c.l.b16 %v1927
    %v2354 = vunpack.c.l.b16 %v1928
    %v2355 = vunpack.c.l.b16 %v1929
    %v2356 = vunpack.c.l.b16 %v1930
    %v2357 = vunpack.c.l.b16 %v1931
    %v2358 = vunpack.c.l.b16 %v1932
    %v2359 = vunpack.c.l.b16 %v1933
    %v2360 = vunpack.c.l.b16 %v1934
    %v2361 = vunpack.c.l.b16 %v1935
    %v2362 = vunpack.c.l.b16 %v1936
    %v2363 = vunpack.c.l.b16 %v1937
    %v2364 = vunpack.c.l.b16 %v1938
    %v2365 = vunpack.c.l.b16 %v1939
    %v2366 = vunpack.c.l.b16 %v1940
    %v2367 = vunpack.c.l.b16 %v1941
    %v2368 = vunpack.c.l.b16 %v1942
    %v2369 = vunpack.c.l.b16 %v1943
    %v2370 = vunpack.c.l.b16 %v1944
    %v2371 = vunpack.c.l.b16 %v1945
    %v2372 = vunpack.c.l.b16 %v1946
    %v2373 = vunpack.c.l.b16 %v1947
    %v2374 = vunpack.c.l.b16 %v1948
    %v2375 = vunpack.c.l.b16 %v1949
    %v2376 = vunpack.c.l.b16 %v1950
    %v2377 = vunpack.c.l.b16 %v1951
    %v2378 = vunpack.c.l.b16 %v1952
    %v2379 = vunpack.c.l.b16 %v1953
    %v2380 = vunpack.c.l.b16 %v1954
    %v2381 = vunpack.c.l.b16 %v1955
    %v2382 = vunpack.c.l.b16 %v1956
    %v2383 = vunpack.c.l.b16 %v1957
    %v2384 = vunpack.c.l.b16 %v1958
    %v2385 = vunpack.c.l.b16 %v1959
    %v2386 = vunpack.c.l.b16 %v1960
    %v2387 = vunpack.c.l.b16 %v1961
    %v2388 = vunpack.c.l.b16 %v1962
    %v2389 = vunpack.c.l.b16 %v1963
    %v2390 = vunpack.c.l.b16 %v1964
    %v2391 = vunpack.c.l.b16 %v1965
    %v2392 = vunpack.c.l.b16 %v1966
    %v2393 = vunpack.c.l.b16 %v1967
    %v2394 = vunpack.c.l.b16 %v1968
    %v2395 = vunpack.c.l.b16 %v1969
    %v2396 = vunpack.c.l.b16 %v1970
    %v2397 = vunpack.c.l.b16 %v1971
    %v2398 = vunpack.c.l.b16 %v1972
    %v2399 = vunpack.c.l.b16 %v1973
    %v2400 = vunpack.c.l.b16 %v1974
    %v2401 = vpack.c.b16 %v2306, %v2305
    %v2402 = vpack.c.b16 %v2308, %v2307
    %v2403 = vpack.c.b16 %v2310, %v2309
    %v2404 = vpack.c.b16 %v2312, %v2311
    %v2405 = vpack.c.b16 %v2314, %v2313
    %v2406 = vpack.c.b16 %v2316, %v2315
    %v2407 = vpack.c.b16 %v2318, %v2317
    %v2408 = vpack.c.b16 %v2320, %v2319
    %v2409 = vpack.c.b16 %v2322, %v2321
    %v2410 = vpack.c.b16 %v2324, %v2323
    %v2411 = vpack.c.b16 %v2326, %v2325
    %v2412 = vpack.c.b16 %v2328, %v2327
    %v2413 = vpack.c.b16 %v2330, %v2329
    %v2414 = vpack.c.b16 %v2332, %v2331
    %v2415 = vpack.c.b16 %v2334, %v2333
    %v2416 = vpack.c.b16 %v2336, %v2335
    %v2417 = vpack.c.b16 %v2338, %v2337
    %v2418 = vpack.c.b16 %v2340, %v2339
    %v2419 = vpack.c.b16 %v2342, %v2341
    %v2420 = vpack.c.b16 %v2344, %v2343
    %v2421 = vpack.c.b16 %v2346, %v2345
    %v2422 = vpack.c.b16 %v2348, %v2347
    %v2423 = vpack.c.b16 %v2350, %v2349
    %v2424 = vpack.c.b16 %v2352, %v2351
    %v2425 = vpack.c.b16 %v2354, %v2353
    %v2426 = vpack.c.b16 %v2356, %v2355
    %v2427 = vpack.c.b16 %v2358, %v2357
    %v2428 = vpack.c.b16 %v2360, %v2359
    %v2429 = vpack.c.b16 %v2362, %v2361
    %v2430 = vpack.c.b16 %v2364, %v2363
    %v2431 = vpack.c.b16 %v2366, %v2365
    %v2432 = vpack.c.b16 %v2368, %v2367
    %v2433 = vpack.c.b16 %v2370, %v2369
    %v2434 = vpack.c.b16 %v2372, %v2371
    %v2435 = vpack.c.b16 %v2374, %v2373
    %v2436 = vpack.c.b16 %v2376, %v2375
    %v2437 = vpack.c.b16 %v2378, %v2377
    %v2438 = vpack.c.b16 %v2380, %v2379
    %v2439 = vpack.c.b16 %v2382, %v2381
    %v2440 = vpack.c.b16 %v2384, %v2383
    %v2441 = vpack.c.b16 %v2386, %v2385
    %v2442 = vpack.c.b16 %v2388, %v2387
    %v2443 = vpack.c.b16 %v2390, %v2389
    %v2444 = vpack.c.b16 %v2392, %v2391
    %v2445 = vpack.c.b16 %v2394, %v2393
    %v2446 = vpack.c.b16 %v2396, %v2395
    %v2447 = vpack.c.b16 %v2398, %v2397
    %v2448 = vpack.c.b16 %v2400, %v2399
    %2497 = vmatprep.subr.bf16.mxu0 0
    %2498 = vmatpush1.bf16.msra.mxu0 %v2408
    %2499 = vmatprep.subr.bf16.mxu0 0
    %2500 = vmatpush1.bf16.msra.mxu0 %v2407
    %2501 = vmatprep.subr.bf16.mxu0 0
    %2502 = vmatpush1.bf16.msra.mxu0 %v2406
    %2503 = vmatprep.subr.bf16.mxu0 0
    %2504 = vmatpush1.bf16.msra.mxu0 %v2405
    %2505 = vmatprep.subr.bf16.mxu0 0
    %2506 = vmatpush1.bf16.msra.mxu0 %v2404
    %2507 = vmatprep.subr.bf16.mxu0 0
    %2508 = vmatpush1.bf16.msra.mxu0 %v2403
    %2509 = vmatprep.subr.bf16.mxu0 0
    %2510 = vmatpush1.bf16.msra.mxu0 %v2402
    %2511 = vmatprep.subr.bf16.mxu0 0
    %2512 = vmatpush1.bf16.msra.mxu0 %v2401
    %2513 = vmatprep.subr.bf16.mxu0 0
    %2514 = vmatpush2.bf16.msra.mxu0 %v2416
    %2515 = vmatprep.subr.bf16.mxu0 0
    %2516 = vmatpush2.bf16.msra.mxu0 %v2415
    %2517 = vmatprep.subr.bf16.mxu0 0
    %2518 = vmatpush2.bf16.msra.mxu0 %v2414
    %2519 = vmatprep.subr.bf16.mxu0 0
    %2520 = vmatpush2.bf16.msra.mxu0 %v2413
    %2521 = vmatprep.subr.bf16.mxu0 0
    %2522 = vmatpush2.bf16.msra.mxu0 %v2412
    %2523 = vmatprep.subr.bf16.mxu0 0
    %2524 = vmatpush2.bf16.msra.mxu0 %v2411
    %2525 = vmatprep.subr.bf16.mxu0 0
    %2526 = vmatpush2.bf16.msra.mxu0 %v2410
    %2527 = vmatprep.subr.bf16.mxu0 0
    %2528 = vmatpush2.bf16.msra.mxu0 %v2409
    %2529 = vmatprep.mubr.bf16.mxu0 %v2008
    %2530 = vmatmul.mubr.bf16.gmra.mxu0 %v2007
    %v2531 = vpop.f32.mrf.mxu0
    %v2532 = vadd.f32 0.0, %v2531
    %v2533 = vpop.f32.mrf.mxu0
    %v2534 = vpop.f32.mrf.mxu0
    %v2535 = vadd.f32 0.0, %v2534
    %v2536 = vpop.f32.mrf.mxu0
    %2537 = vmatprep.mubr.bf16.mxu0 %v2060
    %2538 = vmatmul.mubr.bf16.gmra.mxu0 %v2059
    %v2539 = vpop.f32.mrf.mxu0
    %v2540 = vadd.f32 0.0, %v2539
    %v2541 = vpop.f32.mrf.mxu0
    %v2542 = vpop.f32.mrf.mxu0
    %v2543 = vadd.f32 0.0, %v2542
    %v2544 = vpop.f32.mrf.mxu0
    %2545 = vmatprep.mubr.bf16.mxu0 %v2113
    %2546 = vmatmul.mubr.bf16.gmra.mxu0 %v2112
    %v2547 = vpop.f32.mrf.mxu0
    %v2548 = vadd.f32 0.0, %v2547
    %v2549 = vpop.f32.mrf.mxu0
    %v2550 = vpop.f32.mrf.mxu0
    %v2551 = vadd.f32 0.0, %v2550
    %v2552 = vpop.f32.mrf.mxu0
    %2553 = vmatprep.mubr.bf16.mxu0 %v2165
    %2554 = vmatmul.mubr.bf16.gmra.mxu0 %v2164
    %v2555 = vpop.f32.mrf.mxu0
    %v2556 = vadd.f32 0.0, %v2555
    %v2557 = vpop.f32.mrf.mxu0
    %v2558 = vpop.f32.mrf.mxu0
    %v2559 = vadd.f32 0.0, %v2558
    %v2560 = vpop.f32.mrf.mxu0
    %2561 = vdwg.mxu0
    %2562 = vmatprep.subr.bf16.mxu0 0
    %2563 = vmatpush1.bf16.msra.mxu0 %v2424
    %2564 = vmatprep.subr.bf16.mxu0 0
    %2565 = vmatpush1.bf16.msra.mxu0 %v2423
    %2566 = vmatprep.subr.bf16.mxu0 0
    %2567 = vmatpush1.bf16.msra.mxu0 %v2422
    %2568 = vmatprep.subr.bf16.mxu0 0
    %2569 = vmatpush1.bf16.msra.mxu0 %v2421
    %2570 = vmatprep.subr.bf16.mxu0 0
    %2571 = vmatpush1.bf16.msra.mxu0 %v2420
    %2572 = vmatprep.subr.bf16.mxu0 0
    %2573 = vmatpush1.bf16.msra.mxu0 %v2419
    %2574 = vmatprep.subr.bf16.mxu0 0
    %2575 = vmatpush1.bf16.msra.mxu0 %v2418
    %2576 = vmatprep.subr.bf16.mxu0 0
    %2577 = vmatpush1.bf16.msra.mxu0 %v2417
    %2578 = vmatprep.subr.bf16.mxu0 0
    %2579 = vmatpush2.bf16.msra.mxu0 %v2432
    %2580 = vmatprep.subr.bf16.mxu0 0
    %2581 = vmatpush2.bf16.msra.mxu0 %v2431
    %2582 = vmatprep.subr.bf16.mxu0 0
    %2583 = vmatpush2.bf16.msra.mxu0 %v2430
    %2584 = vmatprep.subr.bf16.mxu0 0
    %2585 = vmatpush2.bf16.msra.mxu0 %v2429
    %2586 = vmatprep.subr.bf16.mxu0 0
    %2587 = vmatpush2.bf16.msra.mxu0 %v2428
    %2588 = vmatprep.subr.bf16.mxu0 0
    %2589 = vmatpush2.bf16.msra.mxu0 %v2427
    %2590 = vmatprep.subr.bf16.mxu0 0
    %2591 = vmatpush2.bf16.msra.mxu0 %v2426
    %2592 = vmatprep.subr.bf16.mxu0 0
    %2593 = vmatpush2.bf16.msra.mxu0 %v2425
    %2594 = vmatprep.mubr.bf16.mxu0 %v2010
    %2595 = vmatmul.mubr.bf16.gmra.mxu0 %v2009
    %v2596 = vpop.f32.mrf.mxu0
    %v2597 = vadd.f32 %v2532, %v2596
    %v2598 = vpop.f32.mrf.mxu0
    %v2599 = vpop.f32.mrf.mxu0
    %v2600 = vadd.f32 %v2535, %v2599
    %v2601 = vpop.f32.mrf.mxu0
    %2602 = vmatprep.mubr.bf16.mxu0 %v2062
    %2603 = vmatmul.mubr.bf16.gmra.mxu0 %v2061
    %v2604 = vpop.f32.mrf.mxu0
    %v2605 = vadd.f32 %v2540, %v2604
    %v2606 = vpop.f32.mrf.mxu0
    %v2607 = vpop.f32.mrf.mxu0
    %v2608 = vadd.f32 %v2543, %v2607
    %v2609 = vpop.f32.mrf.mxu0
    %2610 = vmatprep.mubr.bf16.mxu0 %v2115
    %2611 = vmatmul.mubr.bf16.gmra.mxu0 %v2114
    %v2612 = vpop.f32.mrf.mxu0
    %v2613 = vadd.f32 %v2548, %v2612
    %v2614 = vpop.f32.mrf.mxu0
    %v2615 = vpop.f32.mrf.mxu0
    %v2616 = vadd.f32 %v2551, %v2615
    %v2617 = vpop.f32.mrf.mxu0
    %2618 = vmatprep.mubr.bf16.mxu0 %v2167
    %2619 = vmatmul.mubr.bf16.gmra.mxu0 %v2166
    %v2620 = vpop.f32.mrf.mxu0
    %v2621 = vadd.f32 %v2556, %v2620
    %v2622 = vpop.f32.mrf.mxu0
    %v2623 = vpop.f32.mrf.mxu0
    %v2624 = vadd.f32 %v2559, %v2623
    %v2625 = vpop.f32.mrf.mxu0
    %2626 = vdwg.mxu0
    %2627 = vmatprep.subr.bf16.mxu0 0
    %2628 = vmatpush1.bf16.msra.mxu0 %v2440
    %2629 = vmatprep.subr.bf16.mxu0 0
    %2630 = vmatpush1.bf16.msra.mxu0 %v2439
    %2631 = vmatprep.subr.bf16.mxu0 0
    %2632 = vmatpush1.bf16.msra.mxu0 %v2438
    %2633 = vmatprep.subr.bf16.mxu0 0
    %2634 = vmatpush1.bf16.msra.mxu0 %v2437
    %2635 = vmatprep.subr.bf16.mxu0 0
    %2636 = vmatpush1.bf16.msra.mxu0 %v2436
    %2637 = vmatprep.subr.bf16.mxu0 0
    %2638 = vmatpush1.bf16.msra.mxu0 %v2435
    %2639 = vmatprep.subr.bf16.mxu0 0
    %2640 = vmatpush1.bf16.msra.mxu0 %v2434
    %2641 = vmatprep.subr.bf16.mxu0 0
    %2642 = vmatpush1.bf16.msra.mxu0 %v2433
    %2643 = vmatprep.subr.bf16.mxu0 0
    %2644 = vmatpush2.bf16.msra.mxu0 %v2448
    %2645 = vmatprep.subr.bf16.mxu0 0
    %2646 = vmatpush2.bf16.msra.mxu0 %v2447
    %2647 = vmatprep.subr.bf16.mxu0 0
    %2648 = vmatpush2.bf16.msra.mxu0 %v2446
    %2649 = vmatprep.subr.bf16.mxu0 0
    %2650 = vmatpush2.bf16.msra.mxu0 %v2445
    %2651 = vmatprep.subr.bf16.mxu0 0
    %2652 = vmatpush2.bf16.msra.mxu0 %v2444
    %2653 = vmatprep.subr.bf16.mxu0 0
    %2654 = vmatpush2.bf16.msra.mxu0 %v2443
    %2655 = vmatprep.subr.bf16.mxu0 0
    %2656 = vmatpush2.bf16.msra.mxu0 %v2442
    %2657 = vmatprep.subr.bf16.mxu0 0
    %2658 = vmatpush2.bf16.msra.mxu0 %v2441
    %2659 = vmatprep.mubr.bf16.mxu0 %v2026
    %2660 = vmatmul.mubr.bf16.gmra.mxu0 %v2025
    %v2661 = vpop.f32.mrf.mxu0
    %v2662 = vadd.f32 %v2597, %v2661
    %v2663 = vpop.f32.mrf.mxu0
    %v2664 = vpop.f32.mrf.mxu0
    %v2665 = vadd.f32 %v2600, %v2664
    %v2666 = vpop.f32.mrf.mxu0
    %2667 = vmatprep.mubr.bf16.mxu0 %v2079
    %2668 = vmatmul.mubr.bf16.gmra.mxu0 %v2078
    %v2669 = vpop.f32.mrf.mxu0
    %v2670 = vadd.f32 %v2605, %v2669
    %v2671 = vpop.f32.mrf.mxu0
    %v2672 = vpop.f32.mrf.mxu0
    %v2673 = vadd.f32 %v2608, %v2672
    %v2674 = vpop.f32.mrf.mxu0
    %2675 = vmatprep.mubr.bf16.mxu0 %v2131
    %2676 = vmatmul.mubr.bf16.gmra.mxu0 %v2130
    %v2677 = vpop.f32.mrf.mxu0
    %v2678 = vadd.f32 %v2613, %v2677
    %v2679 = vpop.f32.mrf.mxu0
    %v2680 = vpop.f32.mrf.mxu0
    %v2681 = vadd.f32 %v2616, %v2680
    %v2682 = vpop.f32.mrf.mxu0
    %2683 = vmatprep.mubr.bf16.mxu0 %v2184
    %2684 = vmatmul.mubr.bf16.gmra.mxu0 %v2183
    %v2685 = vpop.f32.mrf.mxu0
    %v2686 = vadd.f32 %v2621, %v2685
    %v2687 = vpop.f32.mrf.mxu0
    %v2688 = vpop.f32.mrf.mxu0
    %v2689 = vadd.f32 %v2624, %v2688
    %v2690 = vpop.f32.mrf.mxu0
    %2691 = vdwg.mxu0
    %v2692 = vld [vmem:[%s4] sm:$0x1]
    %v2693 = vld [vmem:[%s5] sm:$0x1]
    %v2694 = vadd.f32 %v1760, %v1763
    %v2695 = vadd.f32 %v2694, %v1768
    %v2696 = vadd.f32 %v2695, %v1771
    %v2697 = vadd.f32 %v2696, %v1776
    %v2698 = vadd.f32 %v2697, %v1779
    %v2699 = vadd.f32 %v2698, %v1784
    %v2700 = vadd.f32 %v2699, %v1787
    %v2701 = vrot.slane %v2700, 4
    %v2702 = vadd.f32 %v2700, %v2701
    %v2703 = vrot.slane %v2702, 2
    %v2704 = vadd.f32 %v2702, %v2703
    %v2705 = vrot.slane %v2704, 1
    %v2706 = vadd.f32 %v2704, %v2705
    %v2707 = vmul.f32 %v1760, %v1760
    %v2708 = vmul.f32 %v1763, %v1763
    %v2709 = vmul.f32 %v1768, %v1768
    %v2710 = vmul.f32 %v1771, %v1771
    %v2711 = vmul.f32 %v1776, %v1776
    %v2712 = vmul.f32 %v1779, %v1779
    %v2713 = vmul.f32 %v1784, %v1784
    %v2714 = vmul.f32 %v1787, %v1787
    %v2715 = vadd.f32 %v2707, %v2708
    %v2716 = vadd.f32 %v2715, %v2709
    %v2717 = vadd.f32 %v2716, %v2710
    %v2718 = vadd.f32 %v2717, %v2711
    %v2719 = vadd.f32 %v2718, %v2712
    %v2720 = vadd.f32 %v2719, %v2713
    %v2721 = vadd.f32 %v2720, %v2714
    %v2722 = vrot.slane %v2721, 4
    %v2723 = vadd.f32 %v2721, %v2722
    %v2724 = vrot.slane %v2723, 2
    %v2725 = vadd.f32 %v2723, %v2724
    %v2726 = vrot.slane %v2725, 1
    %v2727 = vadd.f32 %v2725, %v2726
    %v2728 = vadd.f32 %v2662, %v2665
    %v2729 = vadd.f32 %v2728, %v2670
    %v2730 = vadd.f32 %v2729, %v2673
    %v2731 = vadd.f32 %v2730, %v2678
    %v2732 = vadd.f32 %v2731, %v2681
    %v2733 = vadd.f32 %v2732, %v2686
    %v2734 = vadd.f32 %v2733, %v2689
    %v2735 = vrot.slane %v2734, 4
    %v2736 = vadd.f32 %v2734, %v2735
    %v2737 = vrot.slane %v2736, 2
    %v2738 = vadd.f32 %v2736, %v2737
    %v2739 = vrot.slane %v2738, 1
    %v2740 = vadd.f32 %v2738, %v2739
    %v2741 = vadd.f32 %v2706, %v2740
    %v2742 = vmul.f32 %v2662, %v2662
    %v2743 = vmul.f32 %v2665, %v2665
    %v2744 = vmul.f32 %v2670, %v2670
    %v2745 = vmul.f32 %v2673, %v2673
    %v2746 = vmul.f32 %v2678, %v2678
    %v2747 = vmul.f32 %v2681, %v2681
    %v2748 = vmul.f32 %v2686, %v2686
    %v2749 = vmul.f32 %v2689, %v2689
    %v2750 = vadd.f32 %v2742, %v2743
    %v2751 = vadd.f32 %v2750, %v2744
    %v2752 = vadd.f32 %v2751, %v2745
    %v2753 = vadd.f32 %v2752, %v2746
    %v2754 = vadd.f32 %v2753, %v2747
    %v2755 = vadd.f32 %v2754, %v2748
    %v2756 = vadd.f32 %v2755, %v2749
    %v2757 = vrot.slane %v2756, 4
    %v2758 = vadd.f32 %v2756, %v2757
    %v2759 = vrot.slane %v2758, 2
    %v2760 = vadd.f32 %v2758, %v2759
    %v2761 = vrot.slane %v2760, 1
    %v2762 = vadd.f32 %v2760, %v2761
    %v2763 = vadd.f32 %v2727, %v2762
    %v2764 = vmul.f32 %v2741, 0.0078125
    %v2765 = vmul.f32 %v2763, 0.0078125
    %v2766 = vmul.f32 %v2764, %v2764
    %v2767 = vsub.f32 %v2765, %v2766
    %v2768 = vadd.f32 %v2767, 0.8
    %v2769 = vrsqrt.pop %v2768
    %v2770 = vmul.f32 %v2769, %v2692
    %v2771 = vmul.f32 %v2764, %v2770
    %v2772 = vsub.f32 %v2693, %v2771
    %v2773 = vlaneseq
    %v2774 = vshrl.u32 %v2773, 7
    %v2775 = vsub.s32 0, %v2774
    %v2776 = vrot.slane %v2770, %v2775
    %v2777 = vmul.f32 %v1760, %v2776
    %v2778 = vmul.f32 %v1763, %v2776
    %v2779 = vmul.f32 %v1768, %v2776
    %v2780 = vmul.f32 %v1771, %v2776
    %v2781 = vmul.f32 %v1776, %v2776
    %v2782 = vmul.f32 %v1779, %v2776
    %v2783 = vmul.f32 %v1784, %v2776
    %v2784 = vmul.f32 %v1787, %v2776
    %v2786 = vlaneseq
    %v2787 = vshrl.u32 %v2786, 7
    %v2788 = vsub.s32 0, %v2787
    %v2789 = vrot.slane %v2772, %v2788
    %v2791 = vadd.f32 %v2777, %v2789
    %v2792 = vadd.f32 %v2778, %v2789
    %v2793 = vadd.f32 %v2779, %v2789
    %v2794 = vadd.f32 %v2780, %v2789
    %v2795 = vadd.f32 %v2781, %v2789
    %v2796 = vadd.f32 %v2782, %v2789
    %v2797 = vadd.f32 %v2783, %v2789
    %v2798 = vadd.f32 %v2784, %v2789
    %v2799 = vmul.f32 %v2791, 0.2
    %v2800 = vmul.f32 %v2792, 0.2
    %v2801 = vmul.f32 %v2793, 0.2
    %v2802 = vmul.f32 %v2794, 0.2
    %v2803 = vmul.f32 %v2795, 0.2
    %v2804 = vmul.f32 %v2796, 0.2
    %v2805 = vmul.f32 %v2797, 0.2
    %v2806 = vmul.f32 %v2798, 0.2
    %v2807 = vmax.f32 %v2791, %v2799
    %v2808 = vmax.f32 %v2792, %v2800
    %v2809 = vmax.f32 %v2793, %v2801
    %v2810 = vmax.f32 %v2794, %v2802
    %v2811 = vmax.f32 %v2795, %v2803
    %v2812 = vmax.f32 %v2796, %v2804
    %v2813 = vmax.f32 %v2797, %v2805
    %v2814 = vmax.f32 %v2798, %v2806
    %v2815 = vmul.f32 %v2662, %v2776
    %v2816 = vmul.f32 %v2665, %v2776
    %v2817 = vmul.f32 %v2670, %v2776
    %v2818 = vmul.f32 %v2673, %v2776
    %v2819 = vmul.f32 %v2678, %v2776
    %v2820 = vmul.f32 %v2681, %v2776
    %v2821 = vmul.f32 %v2686, %v2776
    %v2822 = vmul.f32 %v2689, %v2776
    %v2823 = vadd.f32 %v2815, %v2789
    %v2824 = vadd.f32 %v2816, %v2789
    %v2825 = vadd.f32 %v2817, %v2789
    %v2826 = vadd.f32 %v2818, %v2789
    %v2827 = vadd.f32 %v2819, %v2789
    %v2828 = vadd.f32 %v2820, %v2789
    %v2829 = vadd.f32 %v2821, %v2789
    %v2830 = vadd.f32 %v2822, %v2789
    %v2831 = vmul.f32 %v2823, 0.2
    %v2832 = vmul.f32 %v2824, 0.2
    %v2833 = vmul.f32 %v2825, 0.2
    %v2834 = vmul.f32 %v2826, 0.2
    %v2835 = vmul.f32 %v2827, 0.2
    %v2836 = vmul.f32 %v2828, 0.2
    %v2837 = vmul.f32 %v2829, 0.2
    %v2838 = vmul.f32 %v2830, 0.2
    %v2839 = vmax.f32 %v2823, %v2831
    %v2840 = vmax.f32 %v2824, %v2832
    %v2841 = vmax.f32 %v2825, %v2833
    %v2842 = vmax.f32 %v2826, %v2834
    %v2843 = vmax.f32 %v2827, %v2835
    %v2844 = vmax.f32 %v2828, %v2836
    %v2845 = vmax.f32 %v2829, %v2837
    %v2846 = vmax.f32 %v2830, %v2838
    %v2855 = vcombine.high %v2807, %v2807
    %v2856 = vcombine.high %v2808, %v2808
    %v2857 = vcombine.high %v2809, %v2809
    %v2858 = vcombine.high %v2810, %v2810
    %v2859 = vcombine.high %v2811, %v2811
    %v2860 = vcombine.high %v2812, %v2812
    %v2861 = vcombine.high %v2813, %v2813
    %v2862 = vcombine.high %v2814, %v2814
    %v2871 = vpack.c.bf16 %v2807, %v2807
    %v2872 = vpack.c.bf16 %v2855, %v2855
    %v2873 = vpack.c.bf16 %v2808, %v2808
    %v2874 = vpack.c.bf16 %v2856, %v2856
    %v2875 = vpack.c.bf16 %v2809, %v2809
    %v2876 = vpack.c.bf16 %v2857, %v2857
    %v2877 = vpack.c.bf16 %v2810, %v2810
    %v2878 = vpack.c.bf16 %v2858, %v2858
    %v2879 = vpack.c.bf16 %v2811, %v2811
    %v2880 = vpack.c.bf16 %v2859, %v2859
    %v2881 = vpack.c.bf16 %v2812, %v2812
    %v2882 = vpack.c.bf16 %v2860, %v2860
    %v2883 = vpack.c.bf16 %v2813, %v2813
    %v2884 = vpack.c.bf16 %v2861, %v2861
    %v2885 = vpack.c.bf16 %v2814, %v2814
    %v2886 = vpack.c.bf16 %v2862, %v2862
    %v2895 = vcombine.high %v2839, %v2839
    %v2896 = vcombine.high %v2840, %v2840
    %v2897 = vcombine.high %v2841, %v2841
    %v2898 = vcombine.high %v2842, %v2842
    %v2899 = vcombine.high %v2843, %v2843
    %v2900 = vcombine.high %v2844, %v2844
    %v2901 = vcombine.high %v2845, %v2845
    %v2902 = vcombine.high %v2846, %v2846
    %v2911 = vpack.c.bf16 %v2839, %v2839
    %v2912 = vpack.c.bf16 %v2895, %v2895
    %v2913 = vpack.c.bf16 %v2840, %v2840
    %v2914 = vpack.c.bf16 %v2896, %v2896
    %v2915 = vpack.c.bf16 %v2841, %v2841
    %v2916 = vpack.c.bf16 %v2897, %v2897
    %v2917 = vpack.c.bf16 %v2842, %v2842
    %v2918 = vpack.c.bf16 %v2898, %v2898
    %v2919 = vpack.c.bf16 %v2843, %v2843
    %v2920 = vpack.c.bf16 %v2899, %v2899
    %v2921 = vpack.c.bf16 %v2844, %v2844
    %v2922 = vpack.c.bf16 %v2900, %v2900
    %v2923 = vpack.c.bf16 %v2845, %v2845
    %v2924 = vpack.c.bf16 %v2901, %v2901
    %v2925 = vpack.c.bf16 %v2846, %v2846
    %v2926 = vpack.c.bf16 %v2902, %v2902
    %v2928 = vshrl.u32 %v2871, 16
    %v2930 = vshll.u32 %v2871, 16
    %v2932 = vrot.slane %v2930, 1
    %v2933 = vor.u32 %v2928, %v2932
    %v2935 = vshrl.u32 %v2872, 16
    %v2937 = vshll.u32 %v2872, 16
    %v2939 = vrot.slane %v2937, 1
    %v2940 = vor.u32 %v2935, %v2939
    %v2942 = vshrl.u32 %v2873, 16
    %v2944 = vshll.u32 %v2873, 16
    %v2946 = vrot.slane %v2944, 1
    %v2947 = vor.u32 %v2942, %v2946
    %v2949 = vshrl.u32 %v2874, 16
    %v2951 = vshll.u32 %v2874, 16
    %v2953 = vrot.slane %v2951, 1
    %v2954 = vor.u32 %v2949, %v2953
    %v2956 = vshrl.u32 %v2875, 16
    %v2958 = vshll.u32 %v2875, 16
    %v2960 = vrot.slane %v2958, 1
    %v2961 = vor.u32 %v2956, %v2960
    %v2963 = vshrl.u32 %v2876, 16
    %v2965 = vshll.u32 %v2876, 16
    %v2967 = vrot.slane %v2965, 1
    %v2968 = vor.u32 %v2963, %v2967
    %v2970 = vshrl.u32 %v2877, 16
    %v2972 = vshll.u32 %v2877, 16
    %v2974 = vrot.slane %v2972, 1
    %v2975 = vor.u32 %v2970, %v2974
    %v2977 = vshrl.u32 %v2878, 16
    %v2979 = vshll.u32 %v2878, 16
    %v2981 = vrot.slane %v2979, 1
    %v2982 = vor.u32 %v2977, %v2981
    %v2984 = vshrl.u32 %v2879, 16
    %v2986 = vshll.u32 %v2879, 16
    %v2988 = vrot.slane %v2986, 1
    %v2989 = vor.u32 %v2984, %v2988
    %v2991 = vshrl.u32 %v2880, 16
    %v2993 = vshll.u32 %v2880, 16
    %v2995 = vrot.slane %v2993, 1
    %v2996 = vor.u32 %v2991, %v2995
    %v2998 = vshrl.u32 %v2881, 16
    %v3000 = vshll.u32 %v2881, 16
    %v3002 = vrot.slane %v3000, 1
    %v3003 = vor.u32 %v2998, %v3002
    %v3005 = vshrl.u32 %v2882, 16
    %v3007 = vshll.u32 %v2882, 16
    %v3009 = vrot.slane %v3007, 1
    %v3010 = vor.u32 %v3005, %v3009
    %v3012 = vshrl.u32 %v2883, 16
    %v3014 = vshll.u32 %v2883, 16
    %v3016 = vrot.slane %v3014, 1
    %v3017 = vor.u32 %v3012, %v3016
    %v3019 = vshrl.u32 %v2884, 16
    %v3021 = vshll.u32 %v2884, 16
    %v3023 = vrot.slane %v3021, 1
    %v3024 = vor.u32 %v3019, %v3023
    %v3026 = vshrl.u32 %v2885, 16
    %v3028 = vshll.u32 %v2885, 16
    %v3030 = vrot.slane %v3028, 1
    %v3031 = vor.u32 %v3026, %v3030
    %v3033 = vshrl.u32 %v2886, 16
    %v3035 = vshll.u32 %v2886, 16
    %v3037 = vrot.slane %v3035, 1
    %v3038 = vor.u32 %v3033, %v3037
    %v3055 = vsel %vm863, %v2933, 0
    %v3056 = vsel %vm863, %v2940, 0
    %v3057 = vsel %vm863, %v2947, 0
    %v3058 = vsel %vm863, %v2954, 0
    %v3059 = vsel %vm863, %v2961, 0
    %v3060 = vsel %vm863, %v2968, 0
    %v3061 = vsel %vm863, %v2975, 0
    %v3062 = vsel %vm863, %v2982, 0
    %v3063 = vsel %vm863, %v2989, 0
    %v3064 = vsel %vm863, %v2996, 0
    %v3065 = vsel %vm863, %v3003, 0
    %v3066 = vsel %vm863, %v3010, 0
    %v3067 = vsel %vm863, %v3017, 0
    %v3068 = vsel %vm863, %v3024, 0
    %v3069 = vsel %vm863, %v3031, 0
    %v3070 = vsel %vm863, %v3038, 0
    %v3072 = vshrl.u32 %v2911, 16
    %v3074 = vrot.slane %v3072, 7
    %v3075 = vshll.u32 %v2911, 16
    %v3077 = vor.u32 %v3074, %v3075
    %v3079 = vshrl.u32 %v2912, 16
    %v3081 = vrot.slane %v3079, 7
    %v3082 = vshll.u32 %v2912, 16
    %v3084 = vor.u32 %v3081, %v3082
    %v3086 = vshrl.u32 %v2913, 16
    %v3088 = vrot.slane %v3086, 7
    %v3089 = vshll.u32 %v2913, 16
    %v3091 = vor.u32 %v3088, %v3089
    %v3093 = vshrl.u32 %v2914, 16
    %v3095 = vrot.slane %v3093, 7
    %v3096 = vshll.u32 %v2914, 16
    %v3098 = vor.u32 %v3095, %v3096
    %v3100 = vshrl.u32 %v2915, 16
    %v3102 = vrot.slane %v3100, 7
    %v3103 = vshll.u32 %v2915, 16
    %v3105 = vor.u32 %v3102, %v3103
    %v3107 = vshrl.u32 %v2916, 16
    %v3109 = vrot.slane %v3107, 7
    %v3110 = vshll.u32 %v2916, 16
    %v3112 = vor.u32 %v3109, %v3110
    %v3114 = vshrl.u32 %v2917, 16
    %v3116 = vrot.slane %v3114, 7
    %v3117 = vshll.u32 %v2917, 16
    %v3119 = vor.u32 %v3116, %v3117
    %v3121 = vshrl.u32 %v2918, 16
    %v3123 = vrot.slane %v3121, 7
    %v3124 = vshll.u32 %v2918, 16
    %v3126 = vor.u32 %v3123, %v3124
    %v3128 = vshrl.u32 %v2919, 16
    %v3130 = vrot.slane %v3128, 7
    %v3131 = vshll.u32 %v2919, 16
    %v3133 = vor.u32 %v3130, %v3131
    %v3135 = vshrl.u32 %v2920, 16
    %v3137 = vrot.slane %v3135, 7
    %v3138 = vshll.u32 %v2920, 16
    %v3140 = vor.u32 %v3137, %v3138
    %v3142 = vshrl.u32 %v2921, 16
    %v3144 = vrot.slane %v3142, 7
    %v3145 = vshll.u32 %v2921, 16
    %v3147 = vor.u32 %v3144, %v3145
    %v3149 = vshrl.u32 %v2922, 16
    %v3151 = vrot.slane %v3149, 7
    %v3152 = vshll.u32 %v2922, 16
    %v3154 = vor.u32 %v3151, %v3152
    %v3156 = vshrl.u32 %v2923, 16
    %v3158 = vrot.slane %v3156, 7
    %v3159 = vshll.u32 %v2923, 16
    %v3161 = vor.u32 %v3158, %v3159
    %v3163 = vshrl.u32 %v2924, 16
    %v3165 = vrot.slane %v3163, 7
    %v3166 = vshll.u32 %v2924, 16
    %v3168 = vor.u32 %v3165, %v3166
    %v3170 = vshrl.u32 %v2925, 16
    %v3172 = vrot.slane %v3170, 7
    %v3173 = vshll.u32 %v2925, 16
    %v3175 = vor.u32 %v3172, %v3173
    %v3177 = vshrl.u32 %v2926, 16
    %v3179 = vrot.slane %v3177, 7
    %v3180 = vshll.u32 %v2926, 16
    %v3182 = vor.u32 %v3179, %v3180
    %v3199 = vsel %vm828, 0, %v3077
    %v3200 = vsel %vm828, 0, %v3084
    %v3201 = vsel %vm828, 0, %v3091
    %v3202 = vsel %vm828, 0, %v3098
    %v3203 = vsel %vm828, 0, %v3105
    %v3204 = vsel %vm828, 0, %v3112
    %v3205 = vsel %vm828, 0, %v3119
    %v3206 = vsel %vm828, 0, %v3126
    %v3207 = vsel %vm828, 0, %v3133
    %v3208 = vsel %vm828, 0, %v3140
    %v3209 = vsel %vm828, 0, %v3147
    %v3210 = vsel %vm828, 0, %v3154
    %v3211 = vsel %vm828, 0, %v3161
    %v3212 = vsel %vm828, 0, %v3168
    %v3213 = vsel %vm828, 0, %v3175
    %v3214 = vsel %vm828, 0, %v3182
    %v3247 = vcombine.low %v2871, %v3199
    %v3249 = vunpack.c.l.s4 1983009808
    %v3250 = vunpack.c.0.s8 %v3249
    %v3251 = vlaneseq
    %v3252 = vshrl.u32 %v3251, 7
    %v3253 = vsub.s32 %v3250, %v3252
    %v3254 = vrot.slane %v3247, %v3253
    %v3255 = vcombine.low %v897, %v3254
    %v3256 = vcombine.low %v3254, %v3254
    %v3257 = vcombine.low %v2872, %v3200
    %v3259 = vunpack.c.l.s4 1983009808
    %v3260 = vunpack.c.0.s8 %v3259
    %v3261 = vlaneseq
    %v3262 = vshrl.u32 %v3261, 7
    %v3263 = vsub.s32 %v3260, %v3262
    %v3264 = vrot.slane %v3257, %v3263
    %v3265 = vcombine.low %v3254, %v3264
    %v3266 = vcombine.low %v3264, %v3264
    %v3267 = vcombine.low %v2873, %v3201
    %v3269 = vunpack.c.l.s4 1983009808
    %v3270 = vunpack.c.0.s8 %v3269
    %v3271 = vlaneseq
    %v3272 = vshrl.u32 %v3271, 7
    %v3273 = vsub.s32 %v3270, %v3272
    %v3274 = vrot.slane %v3267, %v3273
    %v3275 = vcombine.low %v3264, %v3274
    %v3276 = vcombine.low %v3274, %v3274
    %v3277 = vcombine.low %v2874, %v3202
    %v3279 = vunpack.c.l.s4 1983009808
    %v3280 = vunpack.c.0.s8 %v3279
    %v3281 = vlaneseq
    %v3282 = vshrl.u32 %v3281, 7
    %v3283 = vsub.s32 %v3280, %v3282
    %v3284 = vrot.slane %v3277, %v3283
    %v3285 = vcombine.low %v3274, %v3284
    %v3286 = vcombine.low %v3284, %v3284
    %v3287 = vcombine.low %v2875, %v3203
    %v3289 = vunpack.c.l.s4 1983009808
    %v3290 = vunpack.c.0.s8 %v3289
    %v3291 = vlaneseq
    %v3292 = vshrl.u32 %v3291, 7
    %v3293 = vsub.s32 %v3290, %v3292
    %v3294 = vrot.slane %v3287, %v3293
    %v3295 = vcombine.low %v3284, %v3294
    %v3296 = vcombine.low %v3294, %v3294
    %v3297 = vcombine.low %v2876, %v3204
    %v3299 = vunpack.c.l.s4 1983009808
    %v3300 = vunpack.c.0.s8 %v3299
    %v3301 = vlaneseq
    %v3302 = vshrl.u32 %v3301, 7
    %v3303 = vsub.s32 %v3300, %v3302
    %v3304 = vrot.slane %v3297, %v3303
    %v3305 = vcombine.low %v3294, %v3304
    %v3306 = vcombine.low %v3304, %v3304
    %v3307 = vcombine.low %v2877, %v3205
    %v3309 = vunpack.c.l.s4 1983009808
    %v3310 = vunpack.c.0.s8 %v3309
    %v3311 = vlaneseq
    %v3312 = vshrl.u32 %v3311, 7
    %v3313 = vsub.s32 %v3310, %v3312
    %v3314 = vrot.slane %v3307, %v3313
    %v3315 = vcombine.low %v3304, %v3314
    %v3316 = vcombine.low %v3314, %v3314
    %v3317 = vcombine.low %v2878, %v3206
    %v3319 = vunpack.c.l.s4 1983009808
    %v3320 = vunpack.c.0.s8 %v3319
    %v3321 = vlaneseq
    %v3322 = vshrl.u32 %v3321, 7
    %v3323 = vsub.s32 %v3320, %v3322
    %v3324 = vrot.slane %v3317, %v3323
    %v3325 = vcombine.low %v3314, %v3324
    %v3326 = vcombine.low %v3324, %v3324
    %v3327 = vcombine.low %v2879, %v3207
    %v3329 = vunpack.c.l.s4 1983009808
    %v3330 = vunpack.c.0.s8 %v3329
    %v3331 = vlaneseq
    %v3332 = vshrl.u32 %v3331, 7
    %v3333 = vsub.s32 %v3330, %v3332
    %v3334 = vrot.slane %v3327, %v3333
    %v3335 = vcombine.low %v897, %v3334
    %v3336 = vcombine.low %v3334, %v3334
    %v3337 = vcombine.low %v2880, %v3208
    %v3339 = vunpack.c.l.s4 1983009808
    %v3340 = vunpack.c.0.s8 %v3339
    %v3341 = vlaneseq
    %v3342 = vshrl.u32 %v3341, 7
    %v3343 = vsub.s32 %v3340, %v3342
    %v3344 = vrot.slane %v3337, %v3343
    %v3345 = vcombine.low %v3334, %v3344
    %v3346 = vcombine.low %v3344, %v3344
    %v3347 = vcombine.low %v2881, %v3209
    %v3349 = vunpack.c.l.s4 1983009808
    %v3350 = vunpack.c.0.s8 %v3349
    %v3351 = vlaneseq
    %v3352 = vshrl.u32 %v3351, 7
    %v3353 = vsub.s32 %v3350, %v3352
    %v3354 = vrot.slane %v3347, %v3353
    %v3355 = vcombine.low %v3344, %v3354
    %v3356 = vcombine.low %v3354, %v3354
    %v3357 = vcombine.low %v2882, %v3210
    %v3359 = vunpack.c.l.s4 1983009808
    %v3360 = vunpack.c.0.s8 %v3359
    %v3361 = vlaneseq
    %v3362 = vshrl.u32 %v3361, 7
    %v3363 = vsub.s32 %v3360, %v3362
    %v3364 = vrot.slane %v3357, %v3363
    %v3365 = vcombine.low %v3354, %v3364
    %v3366 = vcombine.low %v3364, %v3364
    %v3367 = vcombine.low %v2883, %v3211
    %v3369 = vunpack.c.l.s4 1983009808
    %v3370 = vunpack.c.0.s8 %v3369
    %v3371 = vlaneseq
    %v3372 = vshrl.u32 %v3371, 7
    %v3373 = vsub.s32 %v3370, %v3372
    %v3374 = vrot.slane %v3367, %v3373
    %v3375 = vcombine.low %v3364, %v3374
    %v3376 = vcombine.low %v3374, %v3374
    %v3377 = vcombine.low %v2884, %v3212
    %v3379 = vunpack.c.l.s4 1983009808
    %v3380 = vunpack.c.0.s8 %v3379
    %v3381 = vlaneseq
    %v3382 = vshrl.u32 %v3381, 7
    %v3383 = vsub.s32 %v3380, %v3382
    %v3384 = vrot.slane %v3377, %v3383
    %v3385 = vcombine.low %v3374, %v3384
    %v3386 = vcombine.low %v3384, %v3384
    %v3387 = vcombine.low %v2885, %v3213
    %v3389 = vunpack.c.l.s4 1983009808
    %v3390 = vunpack.c.0.s8 %v3389
    %v3391 = vlaneseq
    %v3392 = vshrl.u32 %v3391, 7
    %v3393 = vsub.s32 %v3390, %v3392
    %v3394 = vrot.slane %v3387, %v3393
    %v3395 = vcombine.low %v3384, %v3394
    %v3396 = vcombine.low %v3394, %v3394
    %v3397 = vcombine.low %v2886, %v3214
    %v3399 = vunpack.c.l.s4 1983009808
    %v3400 = vunpack.c.0.s8 %v3399
    %v3401 = vlaneseq
    %v3402 = vshrl.u32 %v3401, 7
    %v3403 = vsub.s32 %v3400, %v3402
    %v3404 = vrot.slane %v3397, %v3403
    %v3405 = vcombine.low %v3394, %v3404
    %v3406 = vcombine.low %v3404, %v3404
    %v3423 = vcombine.low %v2871, %v2911
    %v3425 = vunpack.c.l.s4 1983009808
    %v3426 = vunpack.c.0.s8 %v3425
    %v3427 = vlaneseq
    %v3428 = vshrl.u32 %v3427, 7
    %v3429 = vsub.s32 %v3426, %v3428
    %v3430 = vrot.slane %v3423, %v3429
    %v3431 = vcombine.low %v897, %v3430
    %v3432 = vcombine.low %v3430, %v3430
    %v3433 = vcombine.low %v2872, %v2912
    %v3435 = vunpack.c.l.s4 1983009808
    %v3436 = vunpack.c.0.s8 %v3435
    %v3437 = vlaneseq
    %v3438 = vshrl.u32 %v3437, 7
    %v3439 = vsub.s32 %v3436, %v3438
    %v3440 = vrot.slane %v3433, %v3439
    %v3441 = vcombine.low %v3430, %v3440
    %v3442 = vcombine.low %v3440, %v3440
    %v3443 = vcombine.low %v2873, %v2913
    %v3445 = vunpack.c.l.s4 1983009808
    %v3446 = vunpack.c.0.s8 %v3445
    %v3447 = vlaneseq
    %v3448 = vshrl.u32 %v3447, 7
    %v3449 = vsub.s32 %v3446, %v3448
    %v3450 = vrot.slane %v3443, %v3449
    %v3451 = vcombine.low %v3440, %v3450
    %v3452 = vcombine.low %v3450, %v3450
    %v3453 = vcombine.low %v2874, %v2914
    %v3455 = vunpack.c.l.s4 1983009808
    %v3456 = vunpack.c.0.s8 %v3455
    %v3457 = vlaneseq
    %v3458 = vshrl.u32 %v3457, 7
    %v3459 = vsub.s32 %v3456, %v3458
    %v3460 = vrot.slane %v3453, %v3459
    %v3461 = vcombine.low %v3450, %v3460
    %v3462 = vcombine.low %v3460, %v3460
    %v3463 = vcombine.low %v2875, %v2915
    %v3465 = vunpack.c.l.s4 1983009808
    %v3466 = vunpack.c.0.s8 %v3465
    %v3467 = vlaneseq
    %v3468 = vshrl.u32 %v3467, 7
    %v3469 = vsub.s32 %v3466, %v3468
    %v3470 = vrot.slane %v3463, %v3469
    %v3471 = vcombine.low %v3460, %v3470
    %v3472 = vcombine.low %v3470, %v3470
    %v3473 = vcombine.low %v2876, %v2916
    %v3475 = vunpack.c.l.s4 1983009808
    %v3476 = vunpack.c.0.s8 %v3475
    %v3477 = vlaneseq
    %v3478 = vshrl.u32 %v3477, 7
    %v3479 = vsub.s32 %v3476, %v3478
    %v3480 = vrot.slane %v3473, %v3479
    %v3481 = vcombine.low %v3470, %v3480
    %v3482 = vcombine.low %v3480, %v3480
    %v3483 = vcombine.low %v2877, %v2917
    %v3485 = vunpack.c.l.s4 1983009808
    %v3486 = vunpack.c.0.s8 %v3485
    %v3487 = vlaneseq
    %v3488 = vshrl.u32 %v3487, 7
    %v3489 = vsub.s32 %v3486, %v3488
    %v3490 = vrot.slane %v3483, %v3489
    %v3491 = vcombine.low %v3480, %v3490
    %v3492 = vcombine.low %v3490, %v3490
    %v3493 = vcombine.low %v2878, %v2918
    %v3495 = vunpack.c.l.s4 1983009808
    %v3496 = vunpack.c.0.s8 %v3495
    %v3497 = vlaneseq
    %v3498 = vshrl.u32 %v3497, 7
    %v3499 = vsub.s32 %v3496, %v3498
    %v3500 = vrot.slane %v3493, %v3499
    %v3501 = vcombine.low %v3490, %v3500
    %v3502 = vcombine.low %v3500, %v3500
    %v3503 = vcombine.low %v2879, %v2919
    %v3505 = vunpack.c.l.s4 1983009808
    %v3506 = vunpack.c.0.s8 %v3505
    %v3507 = vlaneseq
    %v3508 = vshrl.u32 %v3507, 7
    %v3509 = vsub.s32 %v3506, %v3508
    %v3510 = vrot.slane %v3503, %v3509
    %v3511 = vcombine.low %v897, %v3510
    %v3512 = vcombine.low %v3510, %v3510
    %v3513 = vcombine.low %v2880, %v2920
    %v3515 = vunpack.c.l.s4 1983009808
    %v3516 = vunpack.c.0.s8 %v3515
    %v3517 = vlaneseq
    %v3518 = vshrl.u32 %v3517, 7
    %v3519 = vsub.s32 %v3516, %v3518
    %v3520 = vrot.slane %v3513, %v3519
    %v3521 = vcombine.low %v3510, %v3520
    %v3522 = vcombine.low %v3520, %v3520
    %v3523 = vcombine.low %v2881, %v2921
    %v3525 = vunpack.c.l.s4 1983009808
    %v3526 = vunpack.c.0.s8 %v3525
    %v3527 = vlaneseq
    %v3528 = vshrl.u32 %v3527, 7
    %v3529 = vsub.s32 %v3526, %v3528
    %v3530 = vrot.slane %v3523, %v3529
    %v3531 = vcombine.low %v3520, %v3530
    %v3532 = vcombine.low %v3530, %v3530
    %v3533 = vcombine.low %v2882, %v2922
    %v3535 = vunpack.c.l.s4 1983009808
    %v3536 = vunpack.c.0.s8 %v3535
    %v3537 = vlaneseq
    %v3538 = vshrl.u32 %v3537, 7
    %v3539 = vsub.s32 %v3536, %v3538
    %v3540 = vrot.slane %v3533, %v3539
    %v3541 = vcombine.low %v3530, %v3540
    %v3542 = vcombine.low %v3540, %v3540
    %v3543 = vcombine.low %v2883, %v2923
    %v3545 = vunpack.c.l.s4 1983009808
    %v3546 = vunpack.c.0.s8 %v3545
    %v3547 = vlaneseq
    %v3548 = vshrl.u32 %v3547, 7
    %v3549 = vsub.s32 %v3546, %v3548
    %v3550 = vrot.slane %v3543, %v3549
    %v3551 = vcombine.low %v3540, %v3550
    %v3552 = vcombine.low %v3550, %v3550
    %v3553 = vcombine.low %v2884, %v2924
    %v3555 = vunpack.c.l.s4 1983009808
    %v3556 = vunpack.c.0.s8 %v3555
    %v3557 = vlaneseq
    %v3558 = vshrl.u32 %v3557, 7
    %v3559 = vsub.s32 %v3556, %v3558
    %v3560 = vrot.slane %v3553, %v3559
    %v3561 = vcombine.low %v3550, %v3560
    %v3562 = vcombine.low %v3560, %v3560
    %v3563 = vcombine.low %v2885, %v2925
    %v3565 = vunpack.c.l.s4 1983009808
    %v3566 = vunpack.c.0.s8 %v3565
    %v3567 = vlaneseq
    %v3568 = vshrl.u32 %v3567, 7
    %v3569 = vsub.s32 %v3566, %v3568
    %v3570 = vrot.slane %v3563, %v3569
    %v3571 = vcombine.low %v3560, %v3570
    %v3572 = vcombine.low %v3570, %v3570
    %v3573 = vcombine.low %v2886, %v2926
    %v3575 = vunpack.c.l.s4 1983009808
    %v3576 = vunpack.c.0.s8 %v3575
    %v3577 = vlaneseq
    %v3578 = vshrl.u32 %v3577, 7
    %v3579 = vsub.s32 %v3576, %v3578
    %v3580 = vrot.slane %v3573, %v3579
    %v3581 = vcombine.low %v3570, %v3580
    %v3582 = vcombine.low %v3580, %v3580
    %v3599 = vcombine.low %v3055, %v2911
    %v3601 = vunpack.c.l.s4 1983009808
    %v3602 = vunpack.c.0.s8 %v3601
    %v3603 = vlaneseq
    %v3604 = vshrl.u32 %v3603, 7
    %v3605 = vsub.s32 %v3602, %v3604
    %v3606 = vrot.slane %v3599, %v3605
    %v3607 = vcombine.low %v897, %v3606
    %v3608 = vcombine.low %v3606, %v3606
    %v3609 = vcombine.low %v3056, %v2912
    %v3611 = vunpack.c.l.s4 1983009808
    %v3612 = vunpack.c.0.s8 %v3611
    %v3613 = vlaneseq
    %v3614 = vshrl.u32 %v3613, 7
    %v3615 = vsub.s32 %v3612, %v3614
    %v3616 = vrot.slane %v3609, %v3615
    %v3617 = vcombine.low %v3606, %v3616
    %v3618 = vcombine.low %v3616, %v3616
    %v3619 = vcombine.low %v3057, %v2913
    %v3621 = vunpack.c.l.s4 1983009808
    %v3622 = vunpack.c.0.s8 %v3621
    %v3623 = vlaneseq
    %v3624 = vshrl.u32 %v3623, 7
    %v3625 = vsub.s32 %v3622, %v3624
    %v3626 = vrot.slane %v3619, %v3625
    %v3627 = vcombine.low %v3616, %v3626
    %v3628 = vcombine.low %v3626, %v3626
    %v3629 = vcombine.low %v3058, %v2914
    %v3631 = vunpack.c.l.s4 1983009808
    %v3632 = vunpack.c.0.s8 %v3631
    %v3633 = vlaneseq
    %v3634 = vshrl.u32 %v3633, 7
    %v3635 = vsub.s32 %v3632, %v3634
    %v3636 = vrot.slane %v3629, %v3635
    %v3637 = vcombine.low %v3626, %v3636
    %v3638 = vcombine.low %v3636, %v3636
    %v3639 = vcombine.low %v3059, %v2915
    %v3641 = vunpack.c.l.s4 1983009808
    %v3642 = vunpack.c.0.s8 %v3641
    %v3643 = vlaneseq
    %v3644 = vshrl.u32 %v3643, 7
    %v3645 = vsub.s32 %v3642, %v3644
    %v3646 = vrot.slane %v3639, %v3645
    %v3647 = vcombine.low %v3636, %v3646
    %v3648 = vcombine.low %v3646, %v3646
    %v3649 = vcombine.low %v3060, %v2916
    %v3651 = vunpack.c.l.s4 1983009808
    %v3652 = vunpack.c.0.s8 %v3651
    %v3653 = vlaneseq
    %v3654 = vshrl.u32 %v3653, 7
    %v3655 = vsub.s32 %v3652, %v3654
    %v3656 = vrot.slane %v3649, %v3655
    %v3657 = vcombine.low %v3646, %v3656
    %v3658 = vcombine.low %v3656, %v3656
    %v3659 = vcombine.low %v3061, %v2917
    %v3661 = vunpack.c.l.s4 1983009808
    %v3662 = vunpack.c.0.s8 %v3661
    %v3663 = vlaneseq
    %v3664 = vshrl.u32 %v3663, 7
    %v3665 = vsub.s32 %v3662, %v3664
    %v3666 = vrot.slane %v3659, %v3665
    %v3667 = vcombine.low %v3656, %v3666
    %v3668 = vcombine.low %v3666, %v3666
    %v3669 = vcombine.low %v3062, %v2918
    %v3671 = vunpack.c.l.s4 1983009808
    %v3672 = vunpack.c.0.s8 %v3671
    %v3673 = vlaneseq
    %v3674 = vshrl.u32 %v3673, 7
    %v3675 = vsub.s32 %v3672, %v3674
    %v3676 = vrot.slane %v3669, %v3675
    %v3677 = vcombine.low %v3666, %v3676
    %v3678 = vcombine.low %v3676, %v3676
    %v3679 = vcombine.low %v3063, %v2919
    %v3681 = vunpack.c.l.s4 1983009808
    %v3682 = vunpack.c.0.s8 %v3681
    %v3683 = vlaneseq
    %v3684 = vshrl.u32 %v3683, 7
    %v3685 = vsub.s32 %v3682, %v3684
    %v3686 = vrot.slane %v3679, %v3685
    %v3687 = vcombine.low %v897, %v3686
    %v3688 = vcombine.low %v3686, %v3686
    %v3689 = vcombine.low %v3064, %v2920
    %v3691 = vunpack.c.l.s4 1983009808
    %v3692 = vunpack.c.0.s8 %v3691
    %v3693 = vlaneseq
    %v3694 = vshrl.u32 %v3693, 7
    %v3695 = vsub.s32 %v3692, %v3694
    %v3696 = vrot.slane %v3689, %v3695
    %v3697 = vcombine.low %v3686, %v3696
    %v3698 = vcombine.low %v3696, %v3696
    %v3699 = vcombine.low %v3065, %v2921
    %v3701 = vunpack.c.l.s4 1983009808
    %v3702 = vunpack.c.0.s8 %v3701
    %v3703 = vlaneseq
    %v3704 = vshrl.u32 %v3703, 7
    %v3705 = vsub.s32 %v3702, %v3704
    %v3706 = vrot.slane %v3699, %v3705
    %v3707 = vcombine.low %v3696, %v3706
    %v3708 = vcombine.low %v3706, %v3706
    %v3709 = vcombine.low %v3066, %v2922
    %v3711 = vunpack.c.l.s4 1983009808
    %v3712 = vunpack.c.0.s8 %v3711
    %v3713 = vlaneseq
    %v3714 = vshrl.u32 %v3713, 7
    %v3715 = vsub.s32 %v3712, %v3714
    %v3716 = vrot.slane %v3709, %v3715
    %v3717 = vcombine.low %v3706, %v3716
    %v3718 = vcombine.low %v3716, %v3716
    %v3719 = vcombine.low %v3067, %v2923
    %v3721 = vunpack.c.l.s4 1983009808
    %v3722 = vunpack.c.0.s8 %v3721
    %v3723 = vlaneseq
    %v3724 = vshrl.u32 %v3723, 7
    %v3725 = vsub.s32 %v3722, %v3724
    %v3726 = vrot.slane %v3719, %v3725
    %v3727 = vcombine.low %v3716, %v3726
    %v3728 = vcombine.low %v3726, %v3726
    %v3729 = vcombine.low %v3068, %v2924
    %v3731 = vunpack.c.l.s4 1983009808
    %v3732 = vunpack.c.0.s8 %v3731
    %v3733 = vlaneseq
    %v3734 = vshrl.u32 %v3733, 7
    %v3735 = vsub.s32 %v3732, %v3734
    %v3736 = vrot.slane %v3729, %v3735
    %v3737 = vcombine.low %v3726, %v3736
    %v3738 = vcombine.low %v3736, %v3736
    %v3739 = vcombine.low %v3069, %v2925
    %v3741 = vunpack.c.l.s4 1983009808
    %v3742 = vunpack.c.0.s8 %v3741
    %v3743 = vlaneseq
    %v3744 = vshrl.u32 %v3743, 7
    %v3745 = vsub.s32 %v3742, %v3744
    %v3746 = vrot.slane %v3739, %v3745
    %v3747 = vcombine.low %v3736, %v3746
    %v3748 = vcombine.low %v3746, %v3746
    %v3749 = vcombine.low %v3070, %v2926
    %v3751 = vunpack.c.l.s4 1983009808
    %v3752 = vunpack.c.0.s8 %v3751
    %v3753 = vlaneseq
    %v3754 = vshrl.u32 %v3753, 7
    %v3755 = vsub.s32 %v3752, %v3754
    %v3756 = vrot.slane %v3749, %v3755
    %v3757 = vcombine.low %v3746, %v3756
    %v3758 = vcombine.low %v3756, %v3756
    %v3759 = vld [vmem:[%s6] sm:$0xf]
    %v3760 = vld [vmem:[%s6 + $0x4] sm:$0xf]
    %v3761 = vld [vmem:[%s6 + $0x8] sm:$0xf]
    %v3762 = vld [vmem:[%s6 + $0xc] sm:$0xf]
    %v3763 = vld [vmem:[%s6 + $0x10] sm:$0xf]
    %v3764 = vld [vmem:[%s6 + $0x14] sm:$0xf]
    %v3765 = vld [vmem:[%s6 + $0x18] sm:$0xf]
    %v3766 = vld [vmem:[%s6 + $0x1c] sm:$0xf]
    %v3767 = vld [vmem:[%s6 + $0x20] sm:$0xf]
    %v3768 = vld [vmem:[%s6 + $0x24] sm:$0xf]
    %v3769 = vld [vmem:[%s6 + $0x28] sm:$0xf]
    %v3770 = vld [vmem:[%s6 + $0x2c] sm:$0xf]
    %v3771 = vld [vmem:[%s6 + $0x30] sm:$0xf]
    %v3772 = vld [vmem:[%s6 + $0x34] sm:$0xf]
    %v3773 = vld [vmem:[%s6 + $0x38] sm:$0xf]
    %v3774 = vld [vmem:[%s6 + $0x3c] sm:$0xf]
    %v3775 = vld [vmem:[%s6 + $0x40] sm:$0xf]
    %v3776 = vld [vmem:[%s6 + $0x44] sm:$0xf]
    %v3777 = vld [vmem:[%s6 + $0x48] sm:$0xf]
    %v3778 = vld [vmem:[%s6 + $0x4c] sm:$0xf]
    %v3779 = vld [vmem:[%s6 + $0x50] sm:$0xf]
    %v3780 = vld [vmem:[%s6 + $0x54] sm:$0xf]
    %v3781 = vld [vmem:[%s6 + $0x58] sm:$0xf]
    %v3782 = vld [vmem:[%s6 + $0x5c] sm:$0xf]
    %v3783 = vld [vmem:[%s6 + $0x60] sm:$0xf]
    %v3784 = vld [vmem:[%s6 + $0x64] sm:$0xf]
    %v3785 = vld [vmem:[%s6 + $0x68] sm:$0xf]
    %v3786 = vld [vmem:[%s6 + $0x6c] sm:$0xf]
    %v3787 = vld [vmem:[%s6 + $0x70] sm:$0xf]
    %v3788 = vld [vmem:[%s6 + $0x74] sm:$0xf]
    %v3789 = vld [vmem:[%s6 + $0x78] sm:$0xf]
    %v3790 = vld [vmem:[%s6 + $0x7c] sm:$0xf]
    %v3791 = vld [vmem:[%s6 + $0x80] sm:$0xf]
    %v3792 = vld [vmem:[%s6 + $0x84] sm:$0xf]
    %v3793 = vld [vmem:[%s6 + $0x88] sm:$0xf]
    %v3794 = vld [vmem:[%s6 + $0x8c] sm:$0xf]
    %v3795 = vld [vmem:[%s6 + $0x90] sm:$0xf]
    %v3796 = vld [vmem:[%s6 + $0x94] sm:$0xf]
    %v3797 = vld [vmem:[%s6 + $0x98] sm:$0xf]
    %v3798 = vld [vmem:[%s6 + $0x9c] sm:$0xf]
    %v3799 = vld [vmem:[%s6 + $0xa0] sm:$0xf]
    %v3800 = vld [vmem:[%s6 + $0xa4] sm:$0xf]
    %v3801 = vld [vmem:[%s6 + $0xa8] sm:$0xf]
    %v3802 = vld [vmem:[%s6 + $0xac] sm:$0xf]
    %v3803 = vld [vmem:[%s6 + $0xb0] sm:$0xf]
    %v3804 = vld [vmem:[%s6 + $0xb4] sm:$0xf]
    %v3805 = vld [vmem:[%s6 + $0xb8] sm:$0xf]
    %v3806 = vld [vmem:[%s6 + $0xbc] sm:$0xf]
    %v3807 = vld [vmem:[%s6 + $0xc0] sm:$0xf]
    %v3808 = vld [vmem:[%s6 + $0xc4] sm:$0xf]
    %v3809 = vld [vmem:[%s6 + $0xc8] sm:$0xf]
    %v3810 = vld [vmem:[%s6 + $0xcc] sm:$0xf]
    %v3811 = vld [vmem:[%s6 + $0xd0] sm:$0xf]
    %v3812 = vld [vmem:[%s6 + $0xd4] sm:$0xf]
    %v3813 = vld [vmem:[%s6 + $0xd8] sm:$0xf]
    %v3814 = vld [vmem:[%s6 + $0xdc] sm:$0xf]
    %v3815 = vld [vmem:[%s6 + $0xe0] sm:$0xf]
    %v3816 = vld [vmem:[%s6 + $0xe4] sm:$0xf]
    %v3817 = vld [vmem:[%s6 + $0xe8] sm:$0xf]
    %v3818 = vld [vmem:[%s6 + $0xec] sm:$0xf]
    %v3819 = vld [vmem:[%s6 + $0xf0] sm:$0xf]
    %v3820 = vld [vmem:[%s6 + $0xf4] sm:$0xf]
    %v3821 = vld [vmem:[%s6 + $0xf8] sm:$0xf]
    %v3822 = vld [vmem:[%s6 + $0xfc] sm:$0xf]
    %v3823 = vld [vmem:[%s6 + $0x100] sm:$0xf]
    %v3824 = vld [vmem:[%s6 + $0x104] sm:$0xf]
    %v3825 = vld [vmem:[%s6 + $0x108] sm:$0xf]
    %v3826 = vld [vmem:[%s6 + $0x10c] sm:$0xf]
    %v3827 = vld [vmem:[%s6 + $0x110] sm:$0xf]
    %v3828 = vld [vmem:[%s6 + $0x114] sm:$0xf]
    %v3829 = vld [vmem:[%s6 + $0x118] sm:$0xf]
    %v3830 = vld [vmem:[%s6 + $0x11c] sm:$0xf]
    %v3831 = vld [vmem:[%s6 + $0x120] sm:$0xf]
    %v3832 = vld [vmem:[%s6 + $0x124] sm:$0xf]
    %v3833 = vld [vmem:[%s6 + $0x128] sm:$0xf]
    %v3834 = vld [vmem:[%s6 + $0x12c] sm:$0xf]
    %v3835 = vld [vmem:[%s6 + $0x130] sm:$0xf]
    %v3836 = vld [vmem:[%s6 + $0x134] sm:$0xf]
    %v3837 = vld [vmem:[%s6 + $0x138] sm:$0xf]
    %v3838 = vld [vmem:[%s6 + $0x13c] sm:$0xf]
    %v3839 = vld [vmem:[%s6 + $0x140] sm:$0xf]
    %v3840 = vld [vmem:[%s6 + $0x144] sm:$0xf]
    %v3841 = vld [vmem:[%s6 + $0x148] sm:$0xf]
    %v3842 = vld [vmem:[%s6 + $0x14c] sm:$0xf]
    %v3843 = vld [vmem:[%s6 + $0x150] sm:$0xf]
    %v3844 = vld [vmem:[%s6 + $0x154] sm:$0xf]
    %v3845 = vld [vmem:[%s6 + $0x158] sm:$0xf]
    %v3846 = vld [vmem:[%s6 + $0x15c] sm:$0xf]
    %v3847 = vld [vmem:[%s6 + $0x160] sm:$0xf]
    %v3848 = vld [vmem:[%s6 + $0x164] sm:$0xf]
    %v3849 = vld [vmem:[%s6 + $0x168] sm:$0xf]
    %v3850 = vld [vmem:[%s6 + $0x16c] sm:$0xf]
    %v3851 = vld [vmem:[%s6 + $0x170] sm:$0xf]
    %v3852 = vld [vmem:[%s6 + $0x174] sm:$0xf]
    %v3853 = vld [vmem:[%s6 + $0x178] sm:$0xf]
    %v3854 = vld [vmem:[%s6 + $0x17c] sm:$0xf]
    %v3855 = vcombine.low %v3255, %v3256
    %v3856 = vcombine.high %v3255, %v3256
    %v3857 = vcombine.low %v3265, %v3266
    %v3858 = vcombine.high %v3265, %v3266
    %v3860 = vunpack.c.l.s4 1983009808
    %v3861 = vunpack.c.0.s8 %v3860
    %v3862 = vlaneseq
    %v3863 = vshrl.u32 %v3862, 7
    %v3864 = vsub.s32 %v3861, %v3863
    %v3865 = vrot.slane %v3855, %v3864
    %v3867 = vunpack.c.l.s4 1983009808
    %v3868 = vunpack.c.0.s8 %v3867
    %v3869 = vlaneseq
    %v3870 = vshrl.u32 %v3869, 7
    %v3871 = vsub.s32 %v3868, %v3870
    %v3872 = vrot.slane %v3856, %v3871
    %v3874 = vunpack.c.l.s4 1983009808
    %v3875 = vunpack.c.0.s8 %v3874
    %v3876 = vlaneseq
    %v3877 = vshrl.u32 %v3876, 7
    %v3878 = vsub.s32 %v3875, %v3877
    %v3879 = vrot.slane %v3857, %v3878
    %v3881 = vunpack.c.l.s4 1983009808
    %v3882 = vunpack.c.0.s8 %v3881
    %v3883 = vlaneseq
    %v3884 = vshrl.u32 %v3883, 7
    %v3885 = vsub.s32 %v3882, %v3884
    %v3886 = vrot.slane %v3858, %v3885
    %v3887 = vcombine.low %v3865, %v3879
    %v3888 = vcombine.high %v3865, %v3879
    %v3889 = vcombine.low %v3872, %v3886
    %v3890 = vcombine.high %v3872, %v3886
    %v3892 = vunpack.c.l.s4 1983009808
    %v3893 = vunpack.c.0.s8 %v3892
    %v3894 = vlaneseq
    %v3895 = vshrl.u32 %v3894, 7
    %v3896 = vsub.s32 %v3893, %v3895
    %v3897 = vrot.slane %v3265, %v3896
    %v3899 = vunpack.c.l.s4 1983009808
    %v3900 = vunpack.c.0.s8 %v3899
    %v3901 = vlaneseq
    %v3902 = vshrl.u32 %v3901, 7
    %v3903 = vsub.s32 %v3900, %v3902
    %v3904 = vrot.slane %v3275, %v3903
    %v3905 = vcombine.low %v3897, %v3904
    %v3906 = vcombine.high %v3897, %v3904
    %v3907 = vcombine.low %v3275, %v3276
    %v3908 = vcombine.high %v3275, %v3276
    %v3909 = vcombine.low %v3285, %v3286
    %v3910 = vcombine.high %v3285, %v3286
    %v3912 = vunpack.c.l.s4 1983009808
    %v3913 = vunpack.c.0.s8 %v3912
    %v3914 = vlaneseq
    %v3915 = vshrl.u32 %v3914, 7
    %v3916 = vsub.s32 %v3913, %v3915
    %v3917 = vrot.slane %v3907, %v3916
    %v3919 = vunpack.c.l.s4 1983009808
    %v3920 = vunpack.c.0.s8 %v3919
    %v3921 = vlaneseq
    %v3922 = vshrl.u32 %v3921, 7
    %v3923 = vsub.s32 %v3920, %v3922
    %v3924 = vrot.slane %v3908, %v3923
    %v3926 = vunpack.c.l.s4 1983009808
    %v3927 = vunpack.c.0.s8 %v3926
    %v3928 = vlaneseq
    %v3929 = vshrl.u32 %v3928, 7
    %v3930 = vsub.s32 %v3927, %v3929
    %v3931 = vrot.slane %v3909, %v3930
    %v3933 = vunpack.c.l.s4 1983009808
    %v3934 = vunpack.c.0.s8 %v3933
    %v3935 = vlaneseq
    %v3936 = vshrl.u32 %v3935, 7
    %v3937 = vsub.s32 %v3934, %v3936
    %v3938 = vrot.slane %v3910, %v3937
    %v3939 = vcombine.low %v3917, %v3931
    %v3940 = vcombine.high %v3917, %v3931
    %v3941 = vcombine.low %v3924, %v3938
    %v3942 = vcombine.high %v3924, %v3938
    %v3944 = vunpack.c.l.s4 1983009808
    %v3945 = vunpack.c.0.s8 %v3944
    %v3946 = vlaneseq
    %v3947 = vshrl.u32 %v3946, 7
    %v3948 = vsub.s32 %v3945, %v3947
    %v3949 = vrot.slane %v3285, %v3948
    %v3951 = vunpack.c.l.s4 1983009808
    %v3952 = vunpack.c.0.s8 %v3951
    %v3953 = vlaneseq
    %v3954 = vshrl.u32 %v3953, 7
    %v3955 = vsub.s32 %v3952, %v3954
    %v3956 = vrot.slane %v3295, %v3955
    %v3957 = vcombine.low %v3949, %v3956
    %v3958 = vcombine.high %v3949, %v3956
    %v3959 = vcombine.low %v3295, %v3296
    %v3960 = vcombine.high %v3295, %v3296
    %v3961 = vcombine.low %v3305, %v3306
    %v3962 = vcombine.high %v3305, %v3306
    %v3964 = vunpack.c.l.s4 1983009808
    %v3965 = vunpack.c.0.s8 %v3964
    %v3966 = vlaneseq
    %v3967 = vshrl.u32 %v3966, 7
    %v3968 = vsub.s32 %v3965, %v3967
    %v3969 = vrot.slane %v3959, %v3968
    %v3971 = vunpack.c.l.s4 1983009808
    %v3972 = vunpack.c.0.s8 %v3971
    %v3973 = vlaneseq
    %v3974 = vshrl.u32 %v3973, 7
    %v3975 = vsub.s32 %v3972, %v3974
    %v3976 = vrot.slane %v3960, %v3975
    %v3978 = vunpack.c.l.s4 1983009808
    %v3979 = vunpack.c.0.s8 %v3978
    %v3980 = vlaneseq
    %v3981 = vshrl.u32 %v3980, 7
    %v3982 = vsub.s32 %v3979, %v3981
    %v3983 = vrot.slane %v3961, %v3982
    %v3985 = vunpack.c.l.s4 1983009808
    %v3986 = vunpack.c.0.s8 %v3985
    %v3987 = vlaneseq
    %v3988 = vshrl.u32 %v3987, 7
    %v3989 = vsub.s32 %v3986, %v3988
    %v3990 = vrot.slane %v3962, %v3989
    %v3991 = vcombine.low %v3969, %v3983
    %v3992 = vcombine.high %v3969, %v3983
    %v3993 = vcombine.low %v3976, %v3990
    %v3994 = vcombine.high %v3976, %v3990
    %v3996 = vunpack.c.l.s4 1983009808
    %v3997 = vunpack.c.0.s8 %v3996
    %v3998 = vlaneseq
    %v3999 = vshrl.u32 %v3998, 7
    %v4000 = vsub.s32 %v3997, %v3999
    %v4001 = vrot.slane %v3305, %v4000
    %v4003 = vunpack.c.l.s4 1983009808
    %v4004 = vunpack.c.0.s8 %v4003
    %v4005 = vlaneseq
    %v4006 = vshrl.u32 %v4005, 7
    %v4007 = vsub.s32 %v4004, %v4006
    %v4008 = vrot.slane %v3315, %v4007
    %v4009 = vcombine.low %v4001, %v4008
    %v4010 = vcombine.high %v4001, %v4008
    %v4011 = vcombine.low %v3315, %v3316
    %v4012 = vcombine.high %v3315, %v3316
    %v4013 = vcombine.low %v3325, %v3326
    %v4014 = vcombine.high %v3325, %v3326
    %v4016 = vunpack.c.l.s4 1983009808
    %v4017 = vunpack.c.0.s8 %v4016
    %v4018 = vlaneseq
    %v4019 = vshrl.u32 %v4018, 7
    %v4020 = vsub.s32 %v4017, %v4019
    %v4021 = vrot.slane %v4011, %v4020
    %v4023 = vunpack.c.l.s4 1983009808
    %v4024 = vunpack.c.0.s8 %v4023
    %v4025 = vlaneseq
    %v4026 = vshrl.u32 %v4025, 7
    %v4027 = vsub.s32 %v4024, %v4026
    %v4028 = vrot.slane %v4012, %v4027
    %v4030 = vunpack.c.l.s4 1983009808
    %v4031 = vunpack.c.0.s8 %v4030
    %v4032 = vlaneseq
    %v4033 = vshrl.u32 %v4032, 7
    %v4034 = vsub.s32 %v4031, %v4033
    %v4035 = vrot.slane %v4013, %v4034
    %v4037 = vunpack.c.l.s4 1983009808
    %v4038 = vunpack.c.0.s8 %v4037
    %v4039 = vlaneseq
    %v4040 = vshrl.u32 %v4039, 7
    %v4041 = vsub.s32 %v4038, %v4040
    %v4042 = vrot.slane %v4014, %v4041
    %v4043 = vcombine.low %v4021, %v4035
    %v4044 = vcombine.high %v4021, %v4035
    %v4045 = vcombine.low %v4028, %v4042
    %v4046 = vcombine.high %v4028, %v4042
    %v4047 = vcombine.low %v3324, %v897
    %v4049 = vunpack.c.l.s4 1983009808
    %v4050 = vunpack.c.0.s8 %v4049
    %v4051 = vlaneseq
    %v4052 = vshrl.u32 %v4051, 7
    %v4053 = vsub.s32 %v4050, %v4052
    %v4054 = vrot.slane %v3325, %v4053
    %v4056 = vunpack.c.l.s4 1983009808
    %v4057 = vunpack.c.0.s8 %v4056
    %v4058 = vlaneseq
    %v4059 = vshrl.u32 %v4058, 7
    %v4060 = vsub.s32 %v4057, %v4059
    %v4061 = vrot.slane %v4047, %v4060
    %v4062 = vcombine.low %v4054, %v4061
    %v4063 = vcombine.high %v4054, %v4061
    %v4064 = vcombine.low %v3335, %v3336
    %v4065 = vcombine.high %v3335, %v3336
    %v4066 = vcombine.low %v3345, %v3346
    %v4067 = vcombine.high %v3345, %v3346
    %v4069 = vunpack.c.l.s4 1983009808
    %v4070 = vunpack.c.0.s8 %v4069
    %v4071 = vlaneseq
    %v4072 = vshrl.u32 %v4071, 7
    %v4073 = vsub.s32 %v4070, %v4072
    %v4074 = vrot.slane %v4064, %v4073
    %v4076 = vunpack.c.l.s4 1983009808
    %v4077 = vunpack.c.0.s8 %v4076
    %v4078 = vlaneseq
    %v4079 = vshrl.u32 %v4078, 7
    %v4080 = vsub.s32 %v4077, %v4079
    %v4081 = vrot.slane %v4065, %v4080
    %v4083 = vunpack.c.l.s4 1983009808
    %v4084 = vunpack.c.0.s8 %v4083
    %v4085 = vlaneseq
    %v4086 = vshrl.u32 %v4085, 7
    %v4087 = vsub.s32 %v4084, %v4086
    %v4088 = vrot.slane %v4066, %v4087
    %v4090 = vunpack.c.l.s4 1983009808
    %v4091 = vunpack.c.0.s8 %v4090
    %v4092 = vlaneseq
    %v4093 = vshrl.u32 %v4092, 7
    %v4094 = vsub.s32 %v4091, %v4093
    %v4095 = vrot.slane %v4067, %v4094
    %v4096 = vcombine.low %v4074, %v4088
    %v4097 = vcombine.high %v4074, %v4088
    %v4098 = vcombine.low %v4081, %v4095
    %v4099 = vcombine.high %v4081, %v4095
    %v4101 = vunpack.c.l.s4 1983009808
    %v4102 = vunpack.c.0.s8 %v4101
    %v4103 = vlaneseq
    %v4104 = vshrl.u32 %v4103, 7
    %v4105 = vsub.s32 %v4102, %v4104
    %v4106 = vrot.slane %v3345, %v4105
    %v4108 = vunpack.c.l.s4 1983009808
    %v4109 = vunpack.c.0.s8 %v4108
    %v4110 = vlaneseq
    %v4111 = vshrl.u32 %v4110, 7
    %v4112 = vsub.s32 %v4109, %v4111
    %v4113 = vrot.slane %v3355, %v4112
    %v4114 = vcombine.low %v4106, %v4113
    %v4115 = vcombine.high %v4106, %v4113
    %v4116 = vcombine.low %v3355, %v3356
    %v4117 = vcombine.high %v3355, %v3356
    %v4118 = vcombine.low %v3365, %v3366
    %v4119 = vcombine.high %v3365, %v3366
    %v4121 = vunpack.c.l.s4 1983009808
    %v4122 = vunpack.c.0.s8 %v4121
    %v4123 = vlaneseq
    %v4124 = vshrl.u32 %v4123, 7
    %v4125 = vsub.s32 %v4122, %v4124
    %v4126 = vrot.slane %v4116, %v4125
    %v4128 = vunpack.c.l.s4 1983009808
    %v4129 = vunpack.c.0.s8 %v4128
    %v4130 = vlaneseq
    %v4131 = vshrl.u32 %v4130, 7
    %v4132 = vsub.s32 %v4129, %v4131
    %v4133 = vrot.slane %v4117, %v4132
    %v4135 = vunpack.c.l.s4 1983009808
    %v4136 = vunpack.c.0.s8 %v4135
    %v4137 = vlaneseq
    %v4138 = vshrl.u32 %v4137, 7
    %v4139 = vsub.s32 %v4136, %v4138
    %v4140 = vrot.slane %v4118, %v4139
    %v4142 = vunpack.c.l.s4 1983009808
    %v4143 = vunpack.c.0.s8 %v4142
    %v4144 = vlaneseq
    %v4145 = vshrl.u32 %v4144, 7
    %v4146 = vsub.s32 %v4143, %v4145
    %v4147 = vrot.slane %v4119, %v4146
    %v4148 = vcombine.low %v4126, %v4140
    %v4149 = vcombine.high %v4126, %v4140
    %v4150 = vcombine.low %v4133, %v4147
    %v4151 = vcombine.high %v4133, %v4147
    %v4153 = vunpack.c.l.s4 1983009808
    %v4154 = vunpack.c.0.s8 %v4153
    %v4155 = vlaneseq
    %v4156 = vshrl.u32 %v4155, 7
    %v4157 = vsub.s32 %v4154, %v4156
    %v4158 = vrot.slane %v3365, %v4157
    %v4160 = vunpack.c.l.s4 1983009808
    %v4161 = vunpack.c.0.s8 %v4160
    %v4162 = vlaneseq
    %v4163 = vshrl.u32 %v4162, 7
    %v4164 = vsub.s32 %v4161, %v4163
    %v4165 = vrot.slane %v3375, %v4164
    %v4166 = vcombine.low %v4158, %v4165
    %v4167 = vcombine.high %v4158, %v4165
    %v4168 = vcombine.low %v3375, %v3376
    %v4169 = vcombine.high %v3375, %v3376
    %v4170 = vcombine.low %v3385, %v3386
    %v4171 = vcombine.high %v3385, %v3386
    %v4173 = vunpack.c.l.s4 1983009808
    %v4174 = vunpack.c.0.s8 %v4173
    %v4175 = vlaneseq
    %v4176 = vshrl.u32 %v4175, 7
    %v4177 = vsub.s32 %v4174, %v4176
    %v4178 = vrot.slane %v4168, %v4177
    %v4180 = vunpack.c.l.s4 1983009808
    %v4181 = vunpack.c.0.s8 %v4180
    %v4182 = vlaneseq
    %v4183 = vshrl.u32 %v4182, 7
    %v4184 = vsub.s32 %v4181, %v4183
    %v4185 = vrot.slane %v4169, %v4184
    %v4187 = vunpack.c.l.s4 1983009808
    %v4188 = vunpack.c.0.s8 %v4187
    %v4189 = vlaneseq
    %v4190 = vshrl.u32 %v4189, 7
    %v4191 = vsub.s32 %v4188, %v4190
    %v4192 = vrot.slane %v4170, %v4191
    %v4194 = vunpack.c.l.s4 1983009808
    %v4195 = vunpack.c.0.s8 %v4194
    %v4196 = vlaneseq
    %v4197 = vshrl.u32 %v4196, 7
    %v4198 = vsub.s32 %v4195, %v4197
    %v4199 = vrot.slane %v4171, %v4198
    %v4200 = vcombine.low %v4178, %v4192
    %v4201 = vcombine.high %v4178, %v4192
    %v4202 = vcombine.low %v4185, %v4199
    %v4203 = vcombine.high %v4185, %v4199
    %v4205 = vunpack.c.l.s4 1983009808
    %v4206 = vunpack.c.0.s8 %v4205
    %v4207 = vlaneseq
    %v4208 = vshrl.u32 %v4207, 7
    %v4209 = vsub.s32 %v4206, %v4208
    %v4210 = vrot.slane %v3385, %v4209
    %v4212 = vunpack.c.l.s4 1983009808
    %v4213 = vunpack.c.0.s8 %v4212
    %v4214 = vlaneseq
    %v4215 = vshrl.u32 %v4214, 7
    %v4216 = vsub.s32 %v4213, %v4215
    %v4217 = vrot.slane %v3395, %v4216
    %v4218 = vcombine.low %v4210, %v4217
    %v4219 = vcombine.high %v4210, %v4217
    %v4220 = vcombine.low %v3395, %v3396
    %v4221 = vcombine.high %v3395, %v3396
    %v4222 = vcombine.low %v3405, %v3406
    %v4223 = vcombine.high %v3405, %v3406
    %v4225 = vunpack.c.l.s4 1983009808
    %v4226 = vunpack.c.0.s8 %v4225
    %v4227 = vlaneseq
    %v4228 = vshrl.u32 %v4227, 7
    %v4229 = vsub.s32 %v4226, %v4228
    %v4230 = vrot.slane %v4220, %v4229
    %v4232 = vunpack.c.l.s4 1983009808
    %v4233 = vunpack.c.0.s8 %v4232
    %v4234 = vlaneseq
    %v4235 = vshrl.u32 %v4234, 7
    %v4236 = vsub.s32 %v4233, %v4235
    %v4237 = vrot.slane %v4221, %v4236
    %v4239 = vunpack.c.l.s4 1983009808
    %v4240 = vunpack.c.0.s8 %v4239
    %v4241 = vlaneseq
    %v4242 = vshrl.u32 %v4241, 7
    %v4243 = vsub.s32 %v4240, %v4242
    %v4244 = vrot.slane %v4222, %v4243
    %v4246 = vunpack.c.l.s4 1983009808
    %v4247 = vunpack.c.0.s8 %v4246
    %v4248 = vlaneseq
    %v4249 = vshrl.u32 %v4248, 7
    %v4250 = vsub.s32 %v4247, %v4249
    %v4251 = vrot.slane %v4223, %v4250
    %v4252 = vcombine.low %v4230, %v4244
    %v4253 = vcombine.high %v4230, %v4244
    %v4254 = vcombine.low %v4237, %v4251
    %v4255 = vcombine.high %v4237, %v4251
    %v4256 = vcombine.low %v3404, %v897
    %v4258 = vunpack.c.l.s4 1983009808
    %v4259 = vunpack.c.0.s8 %v4258
    %v4260 = vlaneseq
    %v4261 = vshrl.u32 %v4260, 7
    %v4262 = vsub.s32 %v4259, %v4261
    %v4263 = vrot.slane %v3405, %v4262
    %v4265 = vunpack.c.l.s4 1983009808
    %v4266 = vunpack.c.0.s8 %v4265
    %v4267 = vlaneseq
    %v4268 = vshrl.u32 %v4267, 7
    %v4269 = vsub.s32 %v4266, %v4268
    %v4270 = vrot.slane %v4256, %v4269
    %v4271 = vcombine.low %v4263, %v4270
    %v4272 = vcombine.high %v4263, %v4270
    %v4417 = vunpack.c.l.b16 %v3759
    %v4418 = vunpack.c.l.b16 %v3760
    %v4419 = vunpack.c.l.b16 %v3761
    %v4420 = vunpack.c.l.b16 %v3762
    %v4421 = vunpack.c.l.b16 %v3763
    %v4422 = vunpack.c.l.b16 %v3764
    %v4423 = vunpack.c.l.b16 %v3765
    %v4424 = vunpack.c.l.b16 %v3766
    %v4425 = vunpack.c.l.b16 %v3767
    %v4426 = vunpack.c.l.b16 %v3768
    %v4427 = vunpack.c.l.b16 %v3769
    %v4428 = vunpack.c.l.b16 %v3770
    %v4429 = vunpack.c.l.b16 %v3771
    %v4430 = vunpack.c.l.b16 %v3772
    %v4431 = vunpack.c.l.b16 %v3773
    %v4432 = vunpack.c.l.b16 %v3774
    %v4433 = vunpack.c.l.b16 %v3775
    %v4434 = vunpack.c.l.b16 %v3776
    %v4435 = vunpack.c.l.b16 %v3777
    %v4436 = vunpack.c.l.b16 %v3778
    %v4437 = vunpack.c.l.b16 %v3779
    %v4438 = vunpack.c.l.b16 %v3780
    %v4439 = vunpack.c.l.b16 %v3781
    %v4440 = vunpack.c.l.b16 %v3782
    %v4441 = vunpack.c.l.b16 %v3783
    %v4442 = vunpack.c.l.b16 %v3784
    %v4443 = vunpack.c.l.b16 %v3785
    %v4444 = vunpack.c.l.b16 %v3786
    %v4445 = vunpack.c.l.b16 %v3787
    %v4446 = vunpack.c.l.b16 %v3788
    %v4447 = vunpack.c.l.b16 %v3789
    %v4448 = vunpack.c.l.b16 %v3790
    %v4449 = vunpack.c.l.b16 %v3791
    %v4450 = vunpack.c.l.b16 %v3792
    %v4451 = vunpack.c.l.b16 %v3793
    %v4452 = vunpack.c.l.b16 %v3794
    %v4453 = vunpack.c.l.b16 %v3795
    %v4454 = vunpack.c.l.b16 %v3796
    %v4455 = vunpack.c.l.b16 %v3797
    %v4456 = vunpack.c.l.b16 %v3798
    %v4457 = vunpack.c.l.b16 %v3799
    %v4458 = vunpack.c.l.b16 %v3800
    %v4459 = vunpack.c.l.b16 %v3801
    %v4460 = vunpack.c.l.b16 %v3802
    %v4461 = vunpack.c.l.b16 %v3803
    %v4462 = vunpack.c.l.b16 %v3804
    %v4463 = vunpack.c.l.b16 %v3805
    %v4464 = vunpack.c.l.b16 %v3806
    %v4465 = vunpack.c.l.b16 %v3807
    %v4466 = vunpack.c.l.b16 %v3808
    %v4467 = vunpack.c.l.b16 %v3809
    %v4468 = vunpack.c.l.b16 %v3810
    %v4469 = vunpack.c.l.b16 %v3811
    %v4470 = vunpack.c.l.b16 %v3812
    %v4471 = vunpack.c.l.b16 %v3813
    %v4472 = vunpack.c.l.b16 %v3814
    %v4473 = vunpack.c.l.b16 %v3815
    %v4474 = vunpack.c.l.b16 %v3816
    %v4475 = vunpack.c.l.b16 %v3817
    %v4476 = vunpack.c.l.b16 %v3818
    %v4477 = vunpack.c.l.b16 %v3819
    %v4478 = vunpack.c.l.b16 %v3820
    %v4479 = vunpack.c.l.b16 %v3821
    %v4480 = vunpack.c.l.b16 %v3822
    %v4481 = vunpack.c.l.b16 %v3823
    %v4482 = vunpack.c.l.b16 %v3824
    %v4483 = vunpack.c.l.b16 %v3825
    %v4484 = vunpack.c.l.b16 %v3826
    %v4485 = vunpack.c.l.b16 %v3827
    %v4486 = vunpack.c.l.b16 %v3828
    %v4487 = vunpack.c.l.b16 %v3829
    %v4488 = vunpack.c.l.b16 %v3830
    %v4489 = vunpack.c.l.b16 %v3831
    %v4490 = vunpack.c.l.b16 %v3832
    %v4491 = vunpack.c.l.b16 %v3833
    %v4492 = vunpack.c.l.b16 %v3834
    %v4493 = vunpack.c.l.b16 %v3835
    %v4494 = vunpack.c.l.b16 %v3836
    %v4495 = vunpack.c.l.b16 %v3837
    %v4496 = vunpack.c.l.b16 %v3838
    %v4497 = vunpack.c.l.b16 %v3839
    %v4498 = vunpack.c.l.b16 %v3840
    %v4499 = vunpack.c.l.b16 %v3841
    %v4500 = vunpack.c.l.b16 %v3842
    %v4501 = vunpack.c.l.b16 %v3843
    %v4502 = vunpack.c.l.b16 %v3844
    %v4503 = vunpack.c.l.b16 %v3845
    %v4504 = vunpack.c.l.b16 %v3846
    %v4505 = vunpack.c.l.b16 %v3847
    %v4506 = vunpack.c.l.b16 %v3848
    %v4507 = vunpack.c.l.b16 %v3849
    %v4508 = vunpack.c.l.b16 %v3850
    %v4509 = vunpack.c.l.b16 %v3851
    %v4510 = vunpack.c.l.b16 %v3852
    %v4511 = vunpack.c.l.b16 %v3853
    %v4512 = vunpack.c.l.b16 %v3854
    %v4513 = vpack.c.b16 %v4418, %v4417
    %v4514 = vpack.c.b16 %v4420, %v4419
    %v4515 = vpack.c.b16 %v4422, %v4421
    %v4516 = vpack.c.b16 %v4424, %v4423
    %v4517 = vpack.c.b16 %v4426, %v4425
    %v4518 = vpack.c.b16 %v4428, %v4427
    %v4519 = vpack.c.b16 %v4430, %v4429
    %v4520 = vpack.c.b16 %v4432, %v4431
    %v4521 = vpack.c.b16 %v4434, %v4433
    %v4522 = vpack.c.b16 %v4436, %v4435
    %v4523 = vpack.c.b16 %v4438, %v4437
    %v4524 = vpack.c.b16 %v4440, %v4439
    %v4525 = vpack.c.b16 %v4442, %v4441
    %v4526 = vpack.c.b16 %v4444, %v4443
    %v4527 = vpack.c.b16 %v4446, %v4445
    %v4528 = vpack.c.b16 %v4448, %v4447
    %v4529 = vpack.c.b16 %v4450, %v4449
    %v4530 = vpack.c.b16 %v4452, %v4451
    %v4531 = vpack.c.b16 %v4454, %v4453
    %v4532 = vpack.c.b16 %v4456, %v4455
    %v4533 = vpack.c.b16 %v4458, %v4457
    %v4534 = vpack.c.b16 %v4460, %v4459
    %v4535 = vpack.c.b16 %v4462, %v4461
    %v4536 = vpack.c.b16 %v4464, %v4463
    %v4537 = vpack.c.b16 %v4466, %v4465
    %v4538 = vpack.c.b16 %v4468, %v4467
    %v4539 = vpack.c.b16 %v4470, %v4469
    %v4540 = vpack.c.b16 %v4472, %v4471
    %v4541 = vpack.c.b16 %v4474, %v4473
    %v4542 = vpack.c.b16 %v4476, %v4475
    %v4543 = vpack.c.b16 %v4478, %v4477
    %v4544 = vpack.c.b16 %v4480, %v4479
    %v4545 = vpack.c.b16 %v4482, %v4481
    %v4546 = vpack.c.b16 %v4484, %v4483
    %v4547 = vpack.c.b16 %v4486, %v4485
    %v4548 = vpack.c.b16 %v4488, %v4487
    %v4549 = vpack.c.b16 %v4490, %v4489
    %v4550 = vpack.c.b16 %v4492, %v4491
    %v4551 = vpack.c.b16 %v4494, %v4493
    %v4552 = vpack.c.b16 %v4496, %v4495
    %v4553 = vpack.c.b16 %v4498, %v4497
    %v4554 = vpack.c.b16 %v4500, %v4499
    %v4555 = vpack.c.b16 %v4502, %v4501
    %v4556 = vpack.c.b16 %v4504, %v4503
    %v4557 = vpack.c.b16 %v4506, %v4505
    %v4558 = vpack.c.b16 %v4508, %v4507
    %v4559 = vpack.c.b16 %v4510, %v4509
    %v4560 = vpack.c.b16 %v4512, %v4511
    %4609 = vmatprep.subr.bf16.mxu0 0
    %4610 = vmatpush1.bf16.msra.mxu0 %v4520
    %4611 = vmatprep.subr.bf16.mxu0 0
    %4612 = vmatpush1.bf16.msra.mxu0 %v4519
    %4613 = vmatprep.subr.bf16.mxu0 0
    %4614 = vmatpush1.bf16.msra.mxu0 %v4518
    %4615 = vmatprep.subr.bf16.mxu0 0
    %4616 = vmatpush1.bf16.msra.mxu0 %v4517
    %4617 = vmatprep.subr.bf16.mxu0 0
    %4618 = vmatpush1.bf16.msra.mxu0 %v4516
    %4619 = vmatprep.subr.bf16.mxu0 0
    %4620 = vmatpush1.bf16.msra.mxu0 %v4515
    %4621 = vmatprep.subr.bf16.mxu0 0
    %4622 = vmatpush1.bf16.msra.mxu0 %v4514
    %4623 = vmatprep.subr.bf16.mxu0 0
    %4624 = vmatpush1.bf16.msra.mxu0 %v4513
    %4625 = vmatprep.subr.bf16.mxu0 0
    %4626 = vmatpush2.bf16.msra.mxu0 %v4528
    %4627 = vmatprep.subr.bf16.mxu0 0
    %4628 = vmatpush2.bf16.msra.mxu0 %v4527
    %4629 = vmatprep.subr.bf16.mxu0 0
    %4630 = vmatpush2.bf16.msra.mxu0 %v4526
    %4631 = vmatprep.subr.bf16.mxu0 0
    %4632 = vmatpush2.bf16.msra.mxu0 %v4525
    %4633 = vmatprep.subr.bf16.mxu0 0
    %4634 = vmatpush2.bf16.msra.mxu0 %v4524
    %4635 = vmatprep.subr.bf16.mxu0 0
    %4636 = vmatpush2.bf16.msra.mxu0 %v4523
    %4637 = vmatprep.subr.bf16.mxu0 0
    %4638 = vmatpush2.bf16.msra.mxu0 %v4522
    %4639 = vmatprep.subr.bf16.mxu0 0
    %4640 = vmatpush2.bf16.msra.mxu0 %v4521
    %4641 = vmatprep.mubr.bf16.mxu0 %v3888
    %4642 = vmatmul.mubr.bf16.gmra.mxu0 %v3887
    %v4643 = vpop.f32.mrf.mxu0
    %v4644 = vadd.f32 0.0, %v4643
    %v4645 = vpop.f32.mrf.mxu0
    %v4646 = vpop.f32.mrf.mxu0
    %v4647 = vadd.f32 0.0, %v4646
    %v4648 = vpop.f32.mrf.mxu0
    %4649 = vmatprep.mubr.bf16.mxu0 %v3940
    %4650 = vmatmul.mubr.bf16.gmra.mxu0 %v3939
    %v4651 = vpop.f32.mrf.mxu0
    %v4652 = vadd.f32 0.0, %v4651
    %v4653 = vpop.f32.mrf.mxu0
    %v4654 = vpop.f32.mrf.mxu0
    %v4655 = vadd.f32 0.0, %v4654
    %v4656 = vpop.f32.mrf.mxu0
    %4657 = vmatprep.mubr.bf16.mxu0 %v3992
    %4658 = vmatmul.mubr.bf16.gmra.mxu0 %v3991
    %v4659 = vpop.f32.mrf.mxu0
    %v4660 = vadd.f32 0.0, %v4659
    %v4661 = vpop.f32.mrf.mxu0
    %v4662 = vpop.f32.mrf.mxu0
    %v4663 = vadd.f32 0.0, %v4662
    %v4664 = vpop.f32.mrf.mxu0
    %4665 = vmatprep.mubr.bf16.mxu0 %v4044
    %4666 = vmatmul.mubr.bf16.gmra.mxu0 %v4043
    %v4667 = vpop.f32.mrf.mxu0
    %v4668 = vadd.f32 0.0, %v4667
    %v4669 = vpop.f32.mrf.mxu0
    %v4670 = vpop.f32.mrf.mxu0
    %v4671 = vadd.f32 0.0, %v4670
    %v4672 = vpop.f32.mrf.mxu0
    %4673 = vmatprep.mubr.bf16.mxu0 %v4097
    %4674 = vmatmul.mubr.bf16.gmra.mxu0 %v4096
    %v4675 = vpop.f32.mrf.mxu0
    %v4676 = vadd.f32 0.0, %v4675
    %v4677 = vpop.f32.mrf.mxu0
    %v4678 = vpop.f32.mrf.mxu0
    %v4679 = vadd.f32 0.0, %v4678
    %v4680 = vpop.f32.mrf.mxu0
    %4681 = vmatprep.mubr.bf16.mxu0 %v4149
    %4682 = vmatmul.mubr.bf16.gmra.mxu0 %v4148
    %v4683 = vpop.f32.mrf.mxu0
    %v4684 = vadd.f32 0.0, %v4683
    %v4685 = vpop.f32.mrf.mxu0
    %v4686 = vpop.f32.mrf.mxu0
    %v4687 = vadd.f32 0.0, %v4686
    %v4688 = vpop.f32.mrf.mxu0
    %4689 = vmatprep.mubr.bf16.mxu0 %v4201
    %4690 = vmatmul.mubr.bf16.gmra.mxu0 %v4200
    %v4691 = vpop.f32.mrf.mxu0
    %v4692 = vadd.f32 0.0, %v4691
    %v4693 = vpop.f32.mrf.mxu0
    %v4694 = vpop.f32.mrf.mxu0
    %v4695 = vadd.f32 0.0, %v4694
    %v4696 = vpop.f32.mrf.mxu0
    %4697 = vmatprep.mubr.bf16.mxu0 %v4253
    %4698 = vmatmul.mubr.bf16.gmra.mxu0 %v4252
    %v4699 = vpop.f32.mrf.mxu0
    %v4700 = vadd.f32 0.0, %v4699
    %v4701 = vpop.f32.mrf.mxu0
    %v4702 = vpop.f32.mrf.mxu0
    %v4703 = vadd.f32 0.0, %v4702
    %v4704 = vpop.f32.mrf.mxu0
    %4705 = vdwg.mxu0
    %4706 = vmatprep.subr.bf16.mxu0 0
    %4707 = vmatpush1.bf16.msra.mxu0 %v4536
    %4708 = vmatprep.subr.bf16.mxu0 0
    %4709 = vmatpush1.bf16.msra.mxu0 %v4535
    %4710 = vmatprep.subr.bf16.mxu0 0
    %4711 = vmatpush1.bf16.msra.mxu0 %v4534
    %4712 = vmatprep.subr.bf16.mxu0 0
    %4713 = vmatpush1.bf16.msra.mxu0 %v4533
    %4714 = vmatprep.subr.bf16.mxu0 0
    %4715 = vmatpush1.bf16.msra.mxu0 %v4532
    %4716 = vmatprep.subr.bf16.mxu0 0
    %4717 = vmatpush1.bf16.msra.mxu0 %v4531
    %4718 = vmatprep.subr.bf16.mxu0 0
    %4719 = vmatpush1.bf16.msra.mxu0 %v4530
    %4720 = vmatprep.subr.bf16.mxu0 0
    %4721 = vmatpush1.bf16.msra.mxu0 %v4529
    %4722 = vmatprep.subr.bf16.mxu0 0
    %4723 = vmatpush2.bf16.msra.mxu0 %v4544
    %4724 = vmatprep.subr.bf16.mxu0 0
    %4725 = vmatpush2.bf16.msra.mxu0 %v4543
    %4726 = vmatprep.subr.bf16.mxu0 0
    %4727 = vmatpush2.bf16.msra.mxu0 %v4542
    %4728 = vmatprep.subr.bf16.mxu0 0
    %4729 = vmatpush2.bf16.msra.mxu0 %v4541
    %4730 = vmatprep.subr.bf16.mxu0 0
    %4731 = vmatpush2.bf16.msra.mxu0 %v4540
    %4732 = vmatprep.subr.bf16.mxu0 0
    %4733 = vmatpush2.bf16.msra.mxu0 %v4539
    %4734 = vmatprep.subr.bf16.mxu0 0
    %4735 = vmatpush2.bf16.msra.mxu0 %v4538
    %4736 = vmatprep.subr.bf16.mxu0 0
    %4737 = vmatpush2.bf16.msra.mxu0 %v4537
    %4738 = vmatprep.mubr.bf16.mxu0 %v3890
    %4739 = vmatmul.mubr.bf16.gmra.mxu0 %v3889
    %v4740 = vpop.f32.mrf.mxu0
    %v4741 = vadd.f32 %v4644, %v4740
    %v4742 = vpop.f32.mrf.mxu0
    %v4743 = vpop.f32.mrf.mxu0
    %v4744 = vadd.f32 %v4647, %v4743
    %v4745 = vpop.f32.mrf.mxu0
    %4746 = vmatprep.mubr.bf16.mxu0 %v3942
    %4747 = vmatmul.mubr.bf16.gmra.mxu0 %v3941
    %v4748 = vpop.f32.mrf.mxu0
    %v4749 = vadd.f32 %v4652, %v4748
    %v4750 = vpop.f32.mrf.mxu0
    %v4751 = vpop.f32.mrf.mxu0
    %v4752 = vadd.f32 %v4655, %v4751
    %v4753 = vpop.f32.mrf.mxu0
    %4754 = vmatprep.mubr.bf16.mxu0 %v3994
    %4755 = vmatmul.mubr.bf16.gmra.mxu0 %v3993
    %v4756 = vpop.f32.mrf.mxu0
    %v4757 = vadd.f32 %v4660, %v4756
    %v4758 = vpop.f32.mrf.mxu0
    %v4759 = vpop.f32.mrf.mxu0
    %v4760 = vadd.f32 %v4663, %v4759
    %v4761 = vpop.f32.mrf.mxu0
    %4762 = vmatprep.mubr.bf16.mxu0 %v4046
    %4763 = vmatmul.mubr.bf16.gmra.mxu0 %v4045
    %v4764 = vpop.f32.mrf.mxu0
    %v4765 = vadd.f32 %v4668, %v4764
    %v4766 = vpop.f32.mrf.mxu0
    %v4767 = vpop.f32.mrf.mxu0
    %v4768 = vadd.f32 %v4671, %v4767
    %v4769 = vpop.f32.mrf.mxu0
    %4770 = vmatprep.mubr.bf16.mxu0 %v4099
    %4771 = vmatmul.mubr.bf16.gmra.mxu0 %v4098
    %v4772 = vpop.f32.mrf.mxu0
    %v4773 = vadd.f32 %v4676, %v4772
    %v4774 = vpop.f32.mrf.mxu0
    %v4775 = vpop.f32.mrf.mxu0
    %v4776 = vadd.f32 %v4679, %v4775
    %v4777 = vpop.f32.mrf.mxu0
    %4778 = vmatprep.mubr.bf16.mxu0 %v4151
    %4779 = vmatmul.mubr.bf16.gmra.mxu0 %v4150
    %v4780 = vpop.f32.mrf.mxu0
    %v4781 = vadd.f32 %v4684, %v4780
    %v4782 = vpop.f32.mrf.mxu0
    %v4783 = vpop.f32.mrf.mxu0
    %v4784 = vadd.f32 %v4687, %v4783
    %v4785 = vpop.f32.mrf.mxu0
    %4786 = vmatprep.mubr.bf16.mxu0 %v4203
    %4787 = vmatmul.mubr.bf16.gmra.mxu0 %v4202
    %v4788 = vpop.f32.mrf.mxu0
    %v4789 = vadd.f32 %v4692, %v4788
    %v4790 = vpop.f32.mrf.mxu0
    %v4791 = vpop.f32.mrf.mxu0
    %v4792 = vadd.f32 %v4695, %v4791
    %v4793 = vpop.f32.mrf.mxu0
    %4794 = vmatprep.mubr.bf16.mxu0 %v4255
    %4795 = vmatmul.mubr.bf16.gmra.mxu0 %v4254
    %v4796 = vpop.f32.mrf.mxu0
    %v4797 = vadd.f32 %v4700, %v4796
    %v4798 = vpop.f32.mrf.mxu0
    %v4799 = vpop.f32.mrf.mxu0
    %v4800 = vadd.f32 %v4703, %v4799
    %v4801 = vpop.f32.mrf.mxu0
    %4802 = vdwg.mxu0
    %4803 = vmatprep.subr.bf16.mxu0 0
    %4804 = vmatpush1.bf16.msra.mxu0 %v4552
    %4805 = vmatprep.subr.bf16.mxu0 0
    %4806 = vmatpush1.bf16.msra.mxu0 %v4551
    %4807 = vmatprep.subr.bf16.mxu0 0
    %4808 = vmatpush1.bf16.msra.mxu0 %v4550
    %4809 = vmatprep.subr.bf16.mxu0 0
    %4810 = vmatpush1.bf16.msra.mxu0 %v4549
    %4811 = vmatprep.subr.bf16.mxu0 0
    %4812 = vmatpush1.bf16.msra.mxu0 %v4548
    %4813 = vmatprep.subr.bf16.mxu0 0
    %4814 = vmatpush1.bf16.msra.mxu0 %v4547
    %4815 = vmatprep.subr.bf16.mxu0 0
    %4816 = vmatpush1.bf16.msra.mxu0 %v4546
    %4817 = vmatprep.subr.bf16.mxu0 0
    %4818 = vmatpush1.bf16.msra.mxu0 %v4545
    %4819 = vmatprep.subr.bf16.mxu0 0
    %4820 = vmatpush2.bf16.msra.mxu0 %v4560
    %4821 = vmatprep.subr.bf16.mxu0 0
    %4822 = vmatpush2.bf16.msra.mxu0 %v4559
    %4823 = vmatprep.subr.bf16.mxu0 0
    %4824 = vmatpush2.bf16.msra.mxu0 %v4558
    %4825 = vmatprep.subr.bf16.mxu0 0
    %4826 = vmatpush2.bf16.msra.mxu0 %v4557
    %4827 = vmatprep.subr.bf16.mxu0 0
    %4828 = vmatpush2.bf16.msra.mxu0 %v4556
    %4829 = vmatprep.subr.bf16.mxu0 0
    %4830 = vmatpush2.bf16.msra.mxu0 %v4555
    %4831 = vmatprep.subr.bf16.mxu0 0
    %4832 = vmatpush2.bf16.msra.mxu0 %v4554
    %4833 = vmatprep.subr.bf16.mxu0 0
    %4834 = vmatpush2.bf16.msra.mxu0 %v4553
    %4835 = vmatprep.mubr.bf16.mxu0 %v3906
    %4836 = vmatmul.mubr.bf16.gmra.mxu0 %v3905
    %v4837 = vpop.f32.mrf.mxu0
    %v4838 = vadd.f32 %v4741, %v4837
    %v4839 = vpop.f32.mrf.mxu0
    %v4840 = vpop.f32.mrf.mxu0
    %v4841 = vadd.f32 %v4744, %v4840
    %v4842 = vpop.f32.mrf.mxu0
    %4843 = vmatprep.mubr.bf16.mxu0 %v3958
    %4844 = vmatmul.mubr.bf16.gmra.mxu0 %v3957
    %v4845 = vpop.f32.mrf.mxu0
    %v4846 = vadd.f32 %v4749, %v4845
    %v4847 = vpop.f32.mrf.mxu0
    %v4848 = vpop.f32.mrf.mxu0
    %v4849 = vadd.f32 %v4752, %v4848
    %v4850 = vpop.f32.mrf.mxu0
    %4851 = vmatprep.mubr.bf16.mxu0 %v4010
    %4852 = vmatmul.mubr.bf16.gmra.mxu0 %v4009
    %v4853 = vpop.f32.mrf.mxu0
    %v4854 = vadd.f32 %v4757, %v4853
    %v4855 = vpop.f32.mrf.mxu0
    %v4856 = vpop.f32.mrf.mxu0
    %v4857 = vadd.f32 %v4760, %v4856
    %v4858 = vpop.f32.mrf.mxu0
    %4859 = vmatprep.mubr.bf16.mxu0 %v4063
    %4860 = vmatmul.mubr.bf16.gmra.mxu0 %v4062
    %v4861 = vpop.f32.mrf.mxu0
    %v4862 = vadd.f32 %v4765, %v4861
    %v4863 = vpop.f32.mrf.mxu0
    %v4864 = vpop.f32.mrf.mxu0
    %v4865 = vadd.f32 %v4768, %v4864
    %v4866 = vpop.f32.mrf.mxu0
    %4867 = vmatprep.mubr.bf16.mxu0 %v4115
    %4868 = vmatmul.mubr.bf16.gmra.mxu0 %v4114
    %v4869 = vpop.f32.mrf.mxu0
    %v4870 = vadd.f32 %v4773, %v4869
    %v4871 = vpop.f32.mrf.mxu0
    %v4872 = vpop.f32.mrf.mxu0
    %v4873 = vadd.f32 %v4776, %v4872
    %v4874 = vpop.f32.mrf.mxu0
    %4875 = vmatprep.mubr.bf16.mxu0 %v4167
    %4876 = vmatmul.mubr.bf16.gmra.mxu0 %v4166
    %v4877 = vpop.f32.mrf.mxu0
    %v4878 = vadd.f32 %v4781, %v4877
    %v4879 = vpop.f32.mrf.mxu0
    %v4880 = vpop.f32.mrf.mxu0
    %v4881 = vadd.f32 %v4784, %v4880
    %v4882 = vpop.f32.mrf.mxu0
    %4883 = vmatprep.mubr.bf16.mxu0 %v4219
    %4884 = vmatmul.mubr.bf16.gmra.mxu0 %v4218
    %v4885 = vpop.f32.mrf.mxu0
    %v4886 = vadd.f32 %v4789, %v4885
    %v4887 = vpop.f32.mrf.mxu0
    %v4888 = vpop.f32.mrf.mxu0
    %v4889 = vadd.f32 %v4792, %v4888
    %v4890 = vpop.f32.mrf.mxu0
    %4891 = vmatprep.mubr.bf16.mxu0 %v4272
    %4892 = vmatmul.mubr.bf16.gmra.mxu0 %v4271
    %v4893 = vpop.f32.mrf.mxu0
    %v4894 = vadd.f32 %v4797, %v4893
    %v4895 = vpop.f32.mrf.mxu0
    %v4896 = vpop.f32.mrf.mxu0
    %v4897 = vadd.f32 %v4800, %v4896
    %v4898 = vpop.f32.mrf.mxu0
    %4899 = vdwg.mxu0
    %v4900 = vld [vmem:[%s7] sm:$0xf]
    %v4901 = vld [vmem:[%s7 + $0x4] sm:$0xf]
    %v4902 = vld [vmem:[%s7 + $0x8] sm:$0xf]
    %v4903 = vld [vmem:[%s7 + $0xc] sm:$0xf]
    %v4904 = vld [vmem:[%s7 + $0x10] sm:$0xf]
    %v4905 = vld [vmem:[%s7 + $0x14] sm:$0xf]
    %v4906 = vld [vmem:[%s7 + $0x18] sm:$0xf]
    %v4907 = vld [vmem:[%s7 + $0x1c] sm:$0xf]
    %v4908 = vld [vmem:[%s7 + $0x20] sm:$0xf]
    %v4909 = vld [vmem:[%s7 + $0x24] sm:$0xf]
    %v4910 = vld [vmem:[%s7 + $0x28] sm:$0xf]
    %v4911 = vld [vmem:[%s7 + $0x2c] sm:$0xf]
    %v4912 = vld [vmem:[%s7 + $0x30] sm:$0xf]
    %v4913 = vld [vmem:[%s7 + $0x34] sm:$0xf]
    %v4914 = vld [vmem:[%s7 + $0x38] sm:$0xf]
    %v4915 = vld [vmem:[%s7 + $0x3c] sm:$0xf]
    %v4916 = vld [vmem:[%s7 + $0x40] sm:$0xf]
    %v4917 = vld [vmem:[%s7 + $0x44] sm:$0xf]
    %v4918 = vld [vmem:[%s7 + $0x48] sm:$0xf]
    %v4919 = vld [vmem:[%s7 + $0x4c] sm:$0xf]
    %v4920 = vld [vmem:[%s7 + $0x50] sm:$0xf]
    %v4921 = vld [vmem:[%s7 + $0x54] sm:$0xf]
    %v4922 = vld [vmem:[%s7 + $0x58] sm:$0xf]
    %v4923 = vld [vmem:[%s7 + $0x5c] sm:$0xf]
    %v4924 = vld [vmem:[%s7 + $0x60] sm:$0xf]
    %v4925 = vld [vmem:[%s7 + $0x64] sm:$0xf]
    %v4926 = vld [vmem:[%s7 + $0x68] sm:$0xf]
    %v4927 = vld [vmem:[%s7 + $0x6c] sm:$0xf]
    %v4928 = vld [vmem:[%s7 + $0x70] sm:$0xf]
    %v4929 = vld [vmem:[%s7 + $0x74] sm:$0xf]
    %v4930 = vld [vmem:[%s7 + $0x78] sm:$0xf]
    %v4931 = vld [vmem:[%s7 + $0x7c] sm:$0xf]
    %v4932 = vld [vmem:[%s7 + $0x80] sm:$0xf]
    %v4933 = vld [vmem:[%s7 + $0x84] sm:$0xf]
    %v4934 = vld [vmem:[%s7 + $0x88] sm:$0xf]
    %v4935 = vld [vmem:[%s7 + $0x8c] sm:$0xf]
    %v4936 = vld [vmem:[%s7 + $0x90] sm:$0xf]
    %v4937 = vld [vmem:[%s7 + $0x94] sm:$0xf]
    %v4938 = vld [vmem:[%s7 + $0x98] sm:$0xf]
    %v4939 = vld [vmem:[%s7 + $0x9c] sm:$0xf]
    %v4940 = vld [vmem:[%s7 + $0xa0] sm:$0xf]
    %v4941 = vld [vmem:[%s7 + $0xa4] sm:$0xf]
    %v4942 = vld [vmem:[%s7 + $0xa8] sm:$0xf]
    %v4943 = vld [vmem:[%s7 + $0xac] sm:$0xf]
    %v4944 = vld [vmem:[%s7 + $0xb0] sm:$0xf]
    %v4945 = vld [vmem:[%s7 + $0xb4] sm:$0xf]
    %v4946 = vld [vmem:[%s7 + $0xb8] sm:$0xf]
    %v4947 = vld [vmem:[%s7 + $0xbc] sm:$0xf]
    %v4948 = vld [vmem:[%s7 + $0xc0] sm:$0xf]
    %v4949 = vld [vmem:[%s7 + $0xc4] sm:$0xf]
    %v4950 = vld [vmem:[%s7 + $0xc8] sm:$0xf]
    %v4951 = vld [vmem:[%s7 + $0xcc] sm:$0xf]
    %v4952 = vld [vmem:[%s7 + $0xd0] sm:$0xf]
    %v4953 = vld [vmem:[%s7 + $0xd4] sm:$0xf]
    %v4954 = vld [vmem:[%s7 + $0xd8] sm:$0xf]
    %v4955 = vld [vmem:[%s7 + $0xdc] sm:$0xf]
    %v4956 = vld [vmem:[%s7 + $0xe0] sm:$0xf]
    %v4957 = vld [vmem:[%s7 + $0xe4] sm:$0xf]
    %v4958 = vld [vmem:[%s7 + $0xe8] sm:$0xf]
    %v4959 = vld [vmem:[%s7 + $0xec] sm:$0xf]
    %v4960 = vld [vmem:[%s7 + $0xf0] sm:$0xf]
    %v4961 = vld [vmem:[%s7 + $0xf4] sm:$0xf]
    %v4962 = vld [vmem:[%s7 + $0xf8] sm:$0xf]
    %v4963 = vld [vmem:[%s7 + $0xfc] sm:$0xf]
    %v4964 = vld [vmem:[%s7 + $0x100] sm:$0xf]
    %v4965 = vld [vmem:[%s7 + $0x104] sm:$0xf]
    %v4966 = vld [vmem:[%s7 + $0x108] sm:$0xf]
    %v4967 = vld [vmem:[%s7 + $0x10c] sm:$0xf]
    %v4968 = vld [vmem:[%s7 + $0x110] sm:$0xf]
    %v4969 = vld [vmem:[%s7 + $0x114] sm:$0xf]
    %v4970 = vld [vmem:[%s7 + $0x118] sm:$0xf]
    %v4971 = vld [vmem:[%s7 + $0x11c] sm:$0xf]
    %v4972 = vld [vmem:[%s7 + $0x120] sm:$0xf]
    %v4973 = vld [vmem:[%s7 + $0x124] sm:$0xf]
    %v4974 = vld [vmem:[%s7 + $0x128] sm:$0xf]
    %v4975 = vld [vmem:[%s7 + $0x12c] sm:$0xf]
    %v4976 = vld [vmem:[%s7 + $0x130] sm:$0xf]
    %v4977 = vld [vmem:[%s7 + $0x134] sm:$0xf]
    %v4978 = vld [vmem:[%s7 + $0x138] sm:$0xf]
    %v4979 = vld [vmem:[%s7 + $0x13c] sm:$0xf]
    %v4980 = vld [vmem:[%s7 + $0x140] sm:$0xf]
    %v4981 = vld [vmem:[%s7 + $0x144] sm:$0xf]
    %v4982 = vld [vmem:[%s7 + $0x148] sm:$0xf]
    %v4983 = vld [vmem:[%s7 + $0x14c] sm:$0xf]
    %v4984 = vld [vmem:[%s7 + $0x150] sm:$0xf]
    %v4985 = vld [vmem:[%s7 + $0x154] sm:$0xf]
    %v4986 = vld [vmem:[%s7 + $0x158] sm:$0xf]
    %v4987 = vld [vmem:[%s7 + $0x15c] sm:$0xf]
    %v4988 = vld [vmem:[%s7 + $0x160] sm:$0xf]
    %v4989 = vld [vmem:[%s7 + $0x164] sm:$0xf]
    %v4990 = vld [vmem:[%s7 + $0x168] sm:$0xf]
    %v4991 = vld [vmem:[%s7 + $0x16c] sm:$0xf]
    %v4992 = vld [vmem:[%s7 + $0x170] sm:$0xf]
    %v4993 = vld [vmem:[%s7 + $0x174] sm:$0xf]
    %v4994 = vld [vmem:[%s7 + $0x178] sm:$0xf]
    %v4995 = vld [vmem:[%s7 + $0x17c] sm:$0xf]
    %v4996 = vcombine.low %v3431, %v3432
    %v4997 = vcombine.high %v3431, %v3432
    %v4998 = vcombine.low %v3441, %v3442
    %v4999 = vcombine.high %v3441, %v3442
    %v5001 = vunpack.c.l.s4 1983009808
    %v5002 = vunpack.c.0.s8 %v5001
    %v5003 = vlaneseq
    %v5004 = vshrl.u32 %v5003, 7
    %v5005 = vsub.s32 %v5002, %v5004
    %v5006 = vrot.slane %v4996, %v5005
    %v5008 = vunpack.c.l.s4 1983009808
    %v5009 = vunpack.c.0.s8 %v5008
    %v5010 = vlaneseq
    %v5011 = vshrl.u32 %v5010, 7
    %v5012 = vsub.s32 %v5009, %v5011
    %v5013 = vrot.slane %v4997, %v5012
    %v5015 = vunpack.c.l.s4 1983009808
    %v5016 = vunpack.c.0.s8 %v5015
    %v5017 = vlaneseq
    %v5018 = vshrl.u32 %v5017, 7
    %v5019 = vsub.s32 %v5016, %v5018
    %v5020 = vrot.slane %v4998, %v5019
    %v5022 = vunpack.c.l.s4 1983009808
    %v5023 = vunpack.c.0.s8 %v5022
    %v5024 = vlaneseq
    %v5025 = vshrl.u32 %v5024, 7
    %v5026 = vsub.s32 %v5023, %v5025
    %v5027 = vrot.slane %v4999, %v5026
    %v5028 = vcombine.low %v5006, %v5020
    %v5029 = vcombine.high %v5006, %v5020
    %v5030 = vcombine.low %v5013, %v5027
    %v5031 = vcombine.high %v5013, %v5027
    %v5033 = vunpack.c.l.s4 1983009808
    %v5034 = vunpack.c.0.s8 %v5033
    %v5035 = vlaneseq
    %v5036 = vshrl.u32 %v5035, 7
    %v5037 = vsub.s32 %v5034, %v5036
    %v5038 = vrot.slane %v3441, %v5037
    %v5040 = vunpack.c.l.s4 1983009808
    %v5041 = vunpack.c.0.s8 %v5040
    %v5042 = vlaneseq
    %v5043 = vshrl.u32 %v5042, 7
    %v5044 = vsub.s32 %v5041, %v5043
    %v5045 = vrot.slane %v3451, %v5044
    %v5046 = vcombine.low %v5038, %v5045
    %v5047 = vcombine.high %v5038, %v5045
    %v5048 = vcombine.low %v3451, %v3452
    %v5049 = vcombine.high %v3451, %v3452
    %v5050 = vcombine.low %v3461, %v3462
    %v5051 = vcombine.high %v3461, %v3462
    %v5053 = vunpack.c.l.s4 1983009808
    %v5054 = vunpack.c.0.s8 %v5053
    %v5055 = vlaneseq
    %v5056 = vshrl.u32 %v5055, 7
    %v5057 = vsub.s32 %v5054, %v5056
    %v5058 = vrot.slane %v5048, %v5057
    %v5060 = vunpack.c.l.s4 1983009808
    %v5061 = vunpack.c.0.s8 %v5060
    %v5062 = vlaneseq
    %v5063 = vshrl.u32 %v5062, 7
    %v5064 = vsub.s32 %v5061, %v5063
    %v5065 = vrot.slane %v5049, %v5064
    %v5067 = vunpack.c.l.s4 1983009808
    %v5068 = vunpack.c.0.s8 %v5067
    %v5069 = vlaneseq
    %v5070 = vshrl.u32 %v5069, 7
    %v5071 = vsub.s32 %v5068, %v5070
    %v5072 = vrot.slane %v5050, %v5071
    %v5074 = vunpack.c.l.s4 1983009808
    %v5075 = vunpack.c.0.s8 %v5074
    %v5076 = vlaneseq
    %v5077 = vshrl.u32 %v5076, 7
    %v5078 = vsub.s32 %v5075, %v5077
    %v5079 = vrot.slane %v5051, %v5078
    %v5080 = vcombine.low %v5058, %v5072
    %v5081 = vcombine.high %v5058, %v5072
    %v5082 = vcombine.low %v5065, %v5079
    %v5083 = vcombine.high %v5065, %v5079
    %v5085 = vunpack.c.l.s4 1983009808
    %v5086 = vunpack.c.0.s8 %v5085
    %v5087 = vlaneseq
    %v5088 = vshrl.u32 %v5087, 7
    %v5089 = vsub.s32 %v5086, %v5088
    %v5090 = vrot.slane %v3461, %v5089
    %v5092 = vunpack.c.l.s4 1983009808
    %v5093 = vunpack.c.0.s8 %v5092
    %v5094 = vlaneseq
    %v5095 = vshrl.u32 %v5094, 7
    %v5096 = vsub.s32 %v5093, %v5095
    %v5097 = vrot.slane %v3471, %v5096
    %v5098 = vcombine.low %v5090, %v5097
    %v5099 = vcombine.high %v5090, %v5097
    %v5100 = vcombine.low %v3471, %v3472
    %v5101 = vcombine.high %v3471, %v3472
    %v5102 = vcombine.low %v3481, %v3482
    %v5103 = vcombine.high %v3481, %v3482
    %v5105 = vunpack.c.l.s4 1983009808
    %v5106 = vunpack.c.0.s8 %v5105
    %v5107 = vlaneseq
    %v5108 = vshrl.u32 %v5107, 7
    %v5109 = vsub.s32 %v5106, %v5108
    %v5110 = vrot.slane %v5100, %v5109
    %v5112 = vunpack.c.l.s4 1983009808
    %v5113 = vunpack.c.0.s8 %v5112
    %v5114 = vlaneseq
    %v5115 = vshrl.u32 %v5114, 7
    %v5116 = vsub.s32 %v5113, %v5115
    %v5117 = vrot.slane %v5101, %v5116
    %v5119 = vunpack.c.l.s4 1983009808
    %v5120 = vunpack.c.0.s8 %v5119
    %v5121 = vlaneseq
    %v5122 = vshrl.u32 %v5121, 7
    %v5123 = vsub.s32 %v5120, %v5122
    %v5124 = vrot.slane %v5102, %v5123
    %v5126 = vunpack.c.l.s4 1983009808
    %v5127 = vunpack.c.0.s8 %v5126
    %v5128 = vlaneseq
    %v5129 = vshrl.u32 %v5128, 7
    %v5130 = vsub.s32 %v5127, %v5129
    %v5131 = vrot.slane %v5103, %v5130
    %v5132 = vcombine.low %v5110, %v5124
    %v5133 = vcombine.high %v5110, %v5124
    %v5134 = vcombine.low %v5117, %v5131
    %v5135 = vcombine.high %v5117, %v5131
    %v5137 = vunpack.c.l.s4 1983009808
    %v5138 = vunpack.c.0.s8 %v5137
    %v5139 = vlaneseq
    %v5140 = vshrl.u32 %v5139, 7
    %v5141 = vsub.s32 %v5138, %v5140
    %v5142 = vrot.slane %v3481, %v5141
    %v5144 = vunpack.c.l.s4 1983009808
    %v5145 = vunpack.c.0.s8 %v5144
    %v5146 = vlaneseq
    %v5147 = vshrl.u32 %v5146, 7
    %v5148 = vsub.s32 %v5145, %v5147
    %v5149 = vrot.slane %v3491, %v5148
    %v5150 = vcombine.low %v5142, %v5149
    %v5151 = vcombine.high %v5142, %v5149
    %v5152 = vcombine.low %v3491, %v3492
    %v5153 = vcombine.high %v3491, %v3492
    %v5154 = vcombine.low %v3501, %v3502
    %v5155 = vcombine.high %v3501, %v3502
    %v5157 = vunpack.c.l.s4 1983009808
    %v5158 = vunpack.c.0.s8 %v5157
    %v5159 = vlaneseq
    %v5160 = vshrl.u32 %v5159, 7
    %v5161 = vsub.s32 %v5158, %v5160
    %v5162 = vrot.slane %v5152, %v5161
    %v5164 = vunpack.c.l.s4 1983009808
    %v5165 = vunpack.c.0.s8 %v5164
    %v5166 = vlaneseq
    %v5167 = vshrl.u32 %v5166, 7
    %v5168 = vsub.s32 %v5165, %v5167
    %v5169 = vrot.slane %v5153, %v5168
    %v5171 = vunpack.c.l.s4 1983009808
    %v5172 = vunpack.c.0.s8 %v5171
    %v5173 = vlaneseq
    %v5174 = vshrl.u32 %v5173, 7
    %v5175 = vsub.s32 %v5172, %v5174
    %v5176 = vrot.slane %v5154, %v5175
    %v5178 = vunpack.c.l.s4 1983009808
    %v5179 = vunpack.c.0.s8 %v5178
    %v5180 = vlaneseq
    %v5181 = vshrl.u32 %v5180, 7
    %v5182 = vsub.s32 %v5179, %v5181
    %v5183 = vrot.slane %v5155, %v5182
    %v5184 = vcombine.low %v5162, %v5176
    %v5185 = vcombine.high %v5162, %v5176
    %v5186 = vcombine.low %v5169, %v5183
    %v5187 = vcombine.high %v5169, %v5183
    %v5188 = vcombine.low %v3500, %v897
    %v5190 = vunpack.c.l.s4 1983009808
    %v5191 = vunpack.c.0.s8 %v5190
    %v5192 = vlaneseq
    %v5193 = vshrl.u32 %v5192, 7
    %v5194 = vsub.s32 %v5191, %v5193
    %v5195 = vrot.slane %v3501, %v5194
    %v5197 = vunpack.c.l.s4 1983009808
    %v5198 = vunpack.c.0.s8 %v5197
    %v5199 = vlaneseq
    %v5200 = vshrl.u32 %v5199, 7
    %v5201 = vsub.s32 %v5198, %v5200
    %v5202 = vrot.slane %v5188, %v5201
    %v5203 = vcombine.low %v5195, %v5202
    %v5204 = vcombine.high %v5195, %v5202
    %v5205 = vcombine.low %v3511, %v3512
    %v5206 = vcombine.high %v3511, %v3512
    %v5207 = vcombine.low %v3521, %v3522
    %v5208 = vcombine.high %v3521, %v3522
    %v5210 = vunpack.c.l.s4 1983009808
    %v5211 = vunpack.c.0.s8 %v5210
    %v5212 = vlaneseq
    %v5213 = vshrl.u32 %v5212, 7
    %v5214 = vsub.s32 %v5211, %v5213
    %v5215 = vrot.slane %v5205, %v5214
    %v5217 = vunpack.c.l.s4 1983009808
    %v5218 = vunpack.c.0.s8 %v5217
    %v5219 = vlaneseq
    %v5220 = vshrl.u32 %v5219, 7
    %v5221 = vsub.s32 %v5218, %v5220
    %v5222 = vrot.slane %v5206, %v5221
    %v5224 = vunpack.c.l.s4 1983009808
    %v5225 = vunpack.c.0.s8 %v5224
    %v5226 = vlaneseq
    %v5227 = vshrl.u32 %v5226, 7
    %v5228 = vsub.s32 %v5225, %v5227
    %v5229 = vrot.slane %v5207, %v5228
    %v5231 = vunpack.c.l.s4 1983009808
    %v5232 = vunpack.c.0.s8 %v5231
    %v5233 = vlaneseq
    %v5234 = vshrl.u32 %v5233, 7
    %v5235 = vsub.s32 %v5232, %v5234
    %v5236 = vrot.slane %v5208, %v5235
    %v5237 = vcombine.low %v5215, %v5229
    %v5238 = vcombine.high %v5215, %v5229
    %v5239 = vcombine.low %v5222, %v5236
    %v5240 = vcombine.high %v5222, %v5236
    %v5242 = vunpack.c.l.s4 1983009808
    %v5243 = vunpack.c.0.s8 %v5242
    %v5244 = vlaneseq
    %v5245 = vshrl.u32 %v5244, 7
    %v5246 = vsub.s32 %v5243, %v5245
    %v5247 = vrot.slane %v3521, %v5246
    %v5249 = vunpack.c.l.s4 1983009808
    %v5250 = vunpack.c.0.s8 %v5249
    %v5251 = vlaneseq
    %v5252 = vshrl.u32 %v5251, 7
    %v5253 = vsub.s32 %v5250, %v5252
    %v5254 = vrot.slane %v3531, %v5253
    %v5255 = vcombine.low %v5247, %v5254
    %v5256 = vcombine.high %v5247, %v5254
    %v5257 = vcombine.low %v3531, %v3532
    %v5258 = vcombine.high %v3531, %v3532
    %v5259 = vcombine.low %v3541, %v3542
    %v5260 = vcombine.high %v3541, %v3542
    %v5262 = vunpack.c.l.s4 1983009808
    %v5263 = vunpack.c.0.s8 %v5262
    %v5264 = vlaneseq
    %v5265 = vshrl.u32 %v5264, 7
    %v5266 = vsub.s32 %v5263, %v5265
    %v5267 = vrot.slane %v5257, %v5266
    %v5269 = vunpack.c.l.s4 1983009808
    %v5270 = vunpack.c.0.s8 %v5269
    %v5271 = vlaneseq
    %v5272 = vshrl.u32 %v5271, 7
    %v5273 = vsub.s32 %v5270, %v5272
    %v5274 = vrot.slane %v5258, %v5273
    %v5276 = vunpack.c.l.s4 1983009808
    %v5277 = vunpack.c.0.s8 %v5276
    %v5278 = vlaneseq
    %v5279 = vshrl.u32 %v5278, 7
    %v5280 = vsub.s32 %v5277, %v5279
    %v5281 = vrot.slane %v5259, %v5280
    %v5283 = vunpack.c.l.s4 1983009808
    %v5284 = vunpack.c.0.s8 %v5283
    %v5285 = vlaneseq
    %v5286 = vshrl.u32 %v5285, 7
    %v5287 = vsub.s32 %v5284, %v5286
    %v5288 = vrot.slane %v5260, %v5287
    %v5289 = vcombine.low %v5267, %v5281
    %v5290 = vcombine.high %v5267, %v5281
    %v5291 = vcombine.low %v5274, %v5288
    %v5292 = vcombine.high %v5274, %v5288
    %v5294 = vunpack.c.l.s4 1983009808
    %v5295 = vunpack.c.0.s8 %v5294
    %v5296 = vlaneseq
    %v5297 = vshrl.u32 %v5296, 7
    %v5298 = vsub.s32 %v5295, %v5297
    %v5299 = vrot.slane %v3541, %v5298
    %v5301 = vunpack.c.l.s4 1983009808
    %v5302 = vunpack.c.0.s8 %v5301
    %v5303 = vlaneseq
    %v5304 = vshrl.u32 %v5303, 7
    %v5305 = vsub.s32 %v5302, %v5304
    %v5306 = vrot.slane %v3551, %v5305
    %v5307 = vcombine.low %v5299, %v5306
    %v5308 = vcombine.high %v5299, %v5306
    %v5309 = vcombine.low %v3551, %v3552
    %v5310 = vcombine.high %v3551, %v3552
    %v5311 = vcombine.low %v3561, %v3562
    %v5312 = vcombine.high %v3561, %v3562
    %v5314 = vunpack.c.l.s4 1983009808
    %v5315 = vunpack.c.0.s8 %v5314
    %v5316 = vlaneseq
    %v5317 = vshrl.u32 %v5316, 7
    %v5318 = vsub.s32 %v5315, %v5317
    %v5319 = vrot.slane %v5309, %v5318
    %v5321 = vunpack.c.l.s4 1983009808
    %v5322 = vunpack.c.0.s8 %v5321
    %v5323 = vlaneseq
    %v5324 = vshrl.u32 %v5323, 7
    %v5325 = vsub.s32 %v5322, %v5324
    %v5326 = vrot.slane %v5310, %v5325
    %v5328 = vunpack.c.l.s4 1983009808
    %v5329 = vunpack.c.0.s8 %v5328
    %v5330 = vlaneseq
    %v5331 = vshrl.u32 %v5330, 7
    %v5332 = vsub.s32 %v5329, %v5331
    %v5333 = vrot.slane %v5311, %v5332
    %v5335 = vunpack.c.l.s4 1983009808
    %v5336 = vunpack.c.0.s8 %v5335
    %v5337 = vlaneseq
    %v5338 = vshrl.u32 %v5337, 7
    %v5339 = vsub.s32 %v5336, %v5338
    %v5340 = vrot.slane %v5312, %v5339
    %v5341 = vcombine.low %v5319, %v5333
    %v5342 = vcombine.high %v5319, %v5333
    %v5343 = vcombine.low %v5326, %v5340
    %v5344 = vcombine.high %v5326, %v5340
    %v5346 = vunpack.c.l.s4 1983009808
    %v5347 = vunpack.c.0.s8 %v5346
    %v5348 = vlaneseq
    %v5349 = vshrl.u32 %v5348, 7
    %v5350 = vsub.s32 %v5347, %v5349
    %v5351 = vrot.slane %v3561, %v5350
    %v5353 = vunpack.c.l.s4 1983009808
    %v5354 = vunpack.c.0.s8 %v5353
    %v5355 = vlaneseq
    %v5356 = vshrl.u32 %v5355, 7
    %v5357 = vsub.s32 %v5354, %v5356
    %v5358 = vrot.slane %v3571, %v5357
    %v5359 = vcombine.low %v5351, %v5358
    %v5360 = vcombine.high %v5351, %v5358
    %v5361 = vcombine.low %v3571, %v3572
    %v5362 = vcombine.high %v3571, %v3572
    %v5363 = vcombine.low %v3581, %v3582
    %v5364 = vcombine.high %v3581, %v3582
    %v5366 = vunpack.c.l.s4 1983009808
    %v5367 = vunpack.c.0.s8 %v5366
    %v5368 = vlaneseq
    %v5369 = vshrl.u32 %v5368, 7
    %v5370 = vsub.s32 %v5367, %v5369
    %v5371 = vrot.slane %v5361, %v5370
    %v5373 = vunpack.c.l.s4 1983009808
    %v5374 = vunpack.c.0.s8 %v5373
    %v5375 = vlaneseq
    %v5376 = vshrl.u32 %v5375, 7
    %v5377 = vsub.s32 %v5374, %v5376
    %v5378 = vrot.slane %v5362, %v5377
    %v5380 = vunpack.c.l.s4 1983009808
    %v5381 = vunpack.c.0.s8 %v5380
    %v5382 = vlaneseq
    %v5383 = vshrl.u32 %v5382, 7
    %v5384 = vsub.s32 %v5381, %v5383
    %v5385 = vrot.slane %v5363, %v5384
    %v5387 = vunpack.c.l.s4 1983009808
    %v5388 = vunpack.c.0.s8 %v5387
    %v5389 = vlaneseq
    %v5390 = vshrl.u32 %v5389, 7
    %v5391 = vsub.s32 %v5388, %v5390
    %v5392 = vrot.slane %v5364, %v5391
    %v5393 = vcombine.low %v5371, %v5385
    %v5394 = vcombine.high %v5371, %v5385
    %v5395 = vcombine.low %v5378, %v5392
    %v5396 = vcombine.high %v5378, %v5392
    %v5397 = vcombine.low %v3580, %v897
    %v5399 = vunpack.c.l.s4 1983009808
    %v5400 = vunpack.c.0.s8 %v5399
    %v5401 = vlaneseq
    %v5402 = vshrl.u32 %v5401, 7
    %v5403 = vsub.s32 %v5400, %v5402
    %v5404 = vrot.slane %v3581, %v5403
    %v5406 = vunpack.c.l.s4 1983009808
    %v5407 = vunpack.c.0.s8 %v5406
    %v5408 = vlaneseq
    %v5409 = vshrl.u32 %v5408, 7
    %v5410 = vsub.s32 %v5407, %v5409
    %v5411 = vrot.slane %v5397, %v5410
    %v5412 = vcombine.low %v5404, %v5411
    %v5413 = vcombine.high %v5404, %v5411
    %v5558 = vunpack.c.l.b16 %v4900
    %v5559 = vunpack.c.l.b16 %v4901
    %v5560 = vunpack.c.l.b16 %v4902
    %v5561 = vunpack.c.l.b16 %v4903
    %v5562 = vunpack.c.l.b16 %v4904
    %v5563 = vunpack.c.l.b16 %v4905
    %v5564 = vunpack.c.l.b16 %v4906
    %v5565 = vunpack.c.l.b16 %v4907
    %v5566 = vunpack.c.l.b16 %v4908
    %v5567 = vunpack.c.l.b16 %v4909
    %v5568 = vunpack.c.l.b16 %v4910
    %v5569 = vunpack.c.l.b16 %v4911
    %v5570 = vunpack.c.l.b16 %v4912
    %v5571 = vunpack.c.l.b16 %v4913
    %v5572 = vunpack.c.l.b16 %v4914
    %v5573 = vunpack.c.l.b16 %v4915
    %v5574 = vunpack.c.l.b16 %v4916
    %v5575 = vunpack.c.l.b16 %v4917
    %v5576 = vunpack.c.l.b16 %v4918
    %v5577 = vunpack.c.l.b16 %v4919
    %v5578 = vunpack.c.l.b16 %v4920
    %v5579 = vunpack.c.l.b16 %v4921
    %v5580 = vunpack.c.l.b16 %v4922
    %v5581 = vunpack.c.l.b16 %v4923
    %v5582 = vunpack.c.l.b16 %v4924
    %v5583 = vunpack.c.l.b16 %v4925
    %v5584 = vunpack.c.l.b16 %v4926
    %v5585 = vunpack.c.l.b16 %v4927
    %v5586 = vunpack.c.l.b16 %v4928
    %v5587 = vunpack.c.l.b16 %v4929
    %v5588 = vunpack.c.l.b16 %v4930
    %v5589 = vunpack.c.l.b16 %v4931
    %v5590 = vunpack.c.l.b16 %v4932
    %v5591 = vunpack.c.l.b16 %v4933
    %v5592 = vunpack.c.l.b16 %v4934
    %v5593 = vunpack.c.l.b16 %v4935
    %v5594 = vunpack.c.l.b16 %v4936
    %v5595 = vunpack.c.l.b16 %v4937
    %v5596 = vunpack.c.l.b16 %v4938
    %v5597 = vunpack.c.l.b16 %v4939
    %v5598 = vunpack.c.l.b16 %v4940
    %v5599 = vunpack.c.l.b16 %v4941
    %v5600 = vunpack.c.l.b16 %v4942
    %v5601 = vunpack.c.l.b16 %v4943
    %v5602 = vunpack.c.l.b16 %v4944
    %v5603 = vunpack.c.l.b16 %v4945
    %v5604 = vunpack.c.l.b16 %v4946
    %v5605 = vunpack.c.l.b16 %v4947
    %v5606 = vunpack.c.l.b16 %v4948
    %v5607 = vunpack.c.l.b16 %v4949
    %v5608 = vunpack.c.l.b16 %v4950
    %v5609 = vunpack.c.l.b16 %v4951
    %v5610 = vunpack.c.l.b16 %v4952
    %v5611 = vunpack.c.l.b16 %v4953
    %v5612 = vunpack.c.l.b16 %v4954
    %v5613 = vunpack.c.l.b16 %v4955
    %v5614 = vunpack.c.l.b16 %v4956
    %v5615 = vunpack.c.l.b16 %v4957
    %v5616 = vunpack.c.l.b16 %v4958
    %v5617 = vunpack.c.l.b16 %v4959
    %v5618 = vunpack.c.l.b16 %v4960
    %v5619 = vunpack.c.l.b16 %v4961
    %v5620 = vunpack.c.l.b16 %v4962
    %v5621 = vunpack.c.l.b16 %v4963
    %v5622 = vunpack.c.l.b16 %v4964
    %v5623 = vunpack.c.l.b16 %v4965
    %v5624 = vunpack.c.l.b16 %v4966
    %v5625 = vunpack.c.l.b16 %v4967
    %v5626 = vunpack.c.l.b16 %v4968
    %v5627 = vunpack.c.l.b16 %v4969
    %v5628 = vunpack.c.l.b16 %v4970
    %v5629 = vunpack.c.l.b16 %v4971
    %v5630 = vunpack.c.l.b16 %v4972
    %v5631 = vunpack.c.l.b16 %v4973
    %v5632 = vunpack.c.l.b16 %v4974
    %v5633 = vunpack.c.l.b16 %v4975
    %v5634 = vunpack.c.l.b16 %v4976
    %v5635 = vunpack.c.l.b16 %v4977
    %v5636 = vunpack.c.l.b16 %v4978
    %v5637 = vunpack.c.l.b16 %v4979
    %v5638 = vunpack.c.l.b16 %v4980
    %v5639 = vunpack.c.l.b16 %v4981
    %v5640 = vunpack.c.l.b16 %v4982
    %v5641 = vunpack.c.l.b16 %v4983
    %v5642 = vunpack.c.l.b16 %v4984
    %v5643 = vunpack.c.l.b16 %v4985
    %v5644 = vunpack.c.l.b16 %v4986
    %v5645 = vunpack.c.l.b16 %v4987
    %v5646 = vunpack.c.l.b16 %v4988
    %v5647 = vunpack.c.l.b16 %v4989
    %v5648 = vunpack.c.l.b16 %v4990
    %v5649 = vunpack.c.l.b16 %v4991
    %v5650 = vunpack.c.l.b16 %v4992
    %v5651 = vunpack.c.l.b16 %v4993
    %v5652 = vunpack.c.l.b16 %v4994
    %v5653 = vunpack.c.l.b16 %v4995
    %v5654 = vpack.c.b16 %v5559, %v5558
    %v5655 = vpack.c.b16 %v5561, %v5560
    %v5656 = vpack.c.b16 %v5563, %v5562
    %v5657 = vpack.c.b16 %v5565, %v5564
    %v5658 = vpack.c.b16 %v5567, %v5566
    %v5659 = vpack.c.b16 %v5569, %v5568
    %v5660 = vpack.c.b16 %v5571, %v5570
    %v5661 = vpack.c.b16 %v5573, %v5572
    %v5662 = vpack.c.b16 %v5575, %v5574
    %v5663 = vpack.c.b16 %v5577, %v5576
    %v5664 = vpack.c.b16 %v5579, %v5578
    %v5665 = vpack.c.b16 %v5581, %v5580
    %v5666 = vpack.c.b16 %v5583, %v5582
    %v5667 = vpack.c.b16 %v5585, %v5584
    %v5668 = vpack.c.b16 %v5587, %v5586
    %v5669 = vpack.c.b16 %v5589, %v5588
    %v5670 = vpack.c.b16 %v5591, %v5590
    %v5671 = vpack.c.b16 %v5593, %v5592
    %v5672 = vpack.c.b16 %v5595, %v5594
    %v5673 = vpack.c.b16 %v5597, %v5596
    %v5674 = vpack.c.b16 %v5599, %v5598
    %v5675 = vpack.c.b16 %v5601, %v5600
    %v5676 = vpack.c.b16 %v5603, %v5602
    %v5677 = vpack.c.b16 %v5605, %v5604
    %v5678 = vpack.c.b16 %v5607, %v5606
    %v5679 = vpack.c.b16 %v5609, %v5608
    %v5680 = vpack.c.b16 %v5611, %v5610
    %v5681 = vpack.c.b16 %v5613, %v5612
    %v5682 = vpack.c.b16 %v5615, %v5614
    %v5683 = vpack.c.b16 %v5617, %v5616
    %v5684 = vpack.c.b16 %v5619, %v5618
    %v5685 = vpack.c.b16 %v5621, %v5620
    %v5686 = vpack.c.b16 %v5623, %v5622
    %v5687 = vpack.c.b16 %v5625, %v5624
    %v5688 = vpack.c.b16 %v5627, %v5626
    %v5689 = vpack.c.b16 %v5629, %v5628
    %v5690 = vpack.c.b16 %v5631, %v5630
    %v5691 = vpack.c.b16 %v5633, %v5632
    %v5692 = vpack.c.b16 %v5635, %v5634
    %v5693 = vpack.c.b16 %v5637, %v5636
    %v5694 = vpack.c.b16 %v5639, %v5638
    %v5695 = vpack.c.b16 %v5641, %v5640
    %v5696 = vpack.c.b16 %v5643, %v5642
    %v5697 = vpack.c.b16 %v5645, %v5644
    %v5698 = vpack.c.b16 %v5647, %v5646
    %v5699 = vpack.c.b16 %v5649, %v5648
    %v5700 = vpack.c.b16 %v5651, %v5650
    %v5701 = vpack.c.b16 %v5653, %v5652
    %5750 = vmatprep.subr.bf16.mxu0 0
    %5751 = vmatpush1.bf16.msra.mxu0 %v5661
    %5752 = vmatprep.subr.bf16.mxu0 0
    %5753 = vmatpush1.bf16.msra.mxu0 %v5660
    %5754 = vmatprep.subr.bf16.mxu0 0
    %5755 = vmatpush1.bf16.msra.mxu0 %v5659
    %5756 = vmatprep.subr.bf16.mxu0 0
    %5757 = vmatpush1.bf16.msra.mxu0 %v5658
    %5758 = vmatprep.subr.bf16.mxu0 0
    %5759 = vmatpush1.bf16.msra.mxu0 %v5657
    %5760 = vmatprep.subr.bf16.mxu0 0
    %5761 = vmatpush1.bf16.msra.mxu0 %v5656
    %5762 = vmatprep.subr.bf16.mxu0 0
    %5763 = vmatpush1.bf16.msra.mxu0 %v5655
    %5764 = vmatprep.subr.bf16.mxu0 0
    %5765 = vmatpush1.bf16.msra.mxu0 %v5654
    %5766 = vmatprep.subr.bf16.mxu0 0
    %5767 = vmatpush2.bf16.msra.mxu0 %v5669
    %5768 = vmatprep.subr.bf16.mxu0 0
    %5769 = vmatpush2.bf16.msra.mxu0 %v5668
    %5770 = vmatprep.subr.bf16.mxu0 0
    %5771 = vmatpush2.bf16.msra.mxu0 %v5667
    %5772 = vmatprep.subr.bf16.mxu0 0
    %5773 = vmatpush2.bf16.msra.mxu0 %v5666
    %5774 = vmatprep.subr.bf16.mxu0 0
    %5775 = vmatpush2.bf16.msra.mxu0 %v5665
    %5776 = vmatprep.subr.bf16.mxu0 0
    %5777 = vmatpush2.bf16.msra.mxu0 %v5664
    %5778 = vmatprep.subr.bf16.mxu0 0
    %5779 = vmatpush2.bf16.msra.mxu0 %v5663
    %5780 = vmatprep.subr.bf16.mxu0 0
    %5781 = vmatpush2.bf16.msra.mxu0 %v5662
    %5782 = vmatprep.mubr.bf16.mxu0 %v5029
    %5783 = vmatmul.mubr.bf16.gmra.mxu0 %v5028
    %v5784 = vpop.f32.mrf.mxu0
    %v5785 = vadd.f32 0.0, %v5784
    %v5786 = vpop.f32.mrf.mxu0
    %v5787 = vpop.f32.mrf.mxu0
    %v5788 = vadd.f32 0.0, %v5787
    %v5789 = vpop.f32.mrf.mxu0
    %5790 = vmatprep.mubr.bf16.mxu0 %v5081
    %5791 = vmatmul.mubr.bf16.gmra.mxu0 %v5080
    %v5792 = vpop.f32.mrf.mxu0
    %v5793 = vadd.f32 0.0, %v5792
    %v5794 = vpop.f32.mrf.mxu0
    %v5795 = vpop.f32.mrf.mxu0
    %v5796 = vadd.f32 0.0, %v5795
    %v5797 = vpop.f32.mrf.mxu0
    %5798 = vmatprep.mubr.bf16.mxu0 %v5133
    %5799 = vmatmul.mubr.bf16.gmra.mxu0 %v5132
    %v5800 = vpop.f32.mrf.mxu0
    %v5801 = vadd.f32 0.0, %v5800
    %v5802 = vpop.f32.mrf.mxu0
    %v5803 = vpop.f32.mrf.mxu0
    %v5804 = vadd.f32 0.0, %v5803
    %v5805 = vpop.f32.mrf.mxu0
    %5806 = vmatprep.mubr.bf16.mxu0 %v5185
    %5807 = vmatmul.mubr.bf16.gmra.mxu0 %v5184
    %v5808 = vpop.f32.mrf.mxu0
    %v5809 = vadd.f32 0.0, %v5808
    %v5810 = vpop.f32.mrf.mxu0
    %v5811 = vpop.f32.mrf.mxu0
    %v5812 = vadd.f32 0.0, %v5811
    %v5813 = vpop.f32.mrf.mxu0
    %5814 = vmatprep.mubr.bf16.mxu0 %v5238
    %5815 = vmatmul.mubr.bf16.gmra.mxu0 %v5237
    %v5816 = vpop.f32.mrf.mxu0
    %v5817 = vadd.f32 0.0, %v5816
    %v5818 = vpop.f32.mrf.mxu0
    %v5819 = vpop.f32.mrf.mxu0
    %v5820 = vadd.f32 0.0, %v5819
    %v5821 = vpop.f32.mrf.mxu0
    %5822 = vmatprep.mubr.bf16.mxu0 %v5290
    %5823 = vmatmul.mubr.bf16.gmra.mxu0 %v5289
    %v5824 = vpop.f32.mrf.mxu0
    %v5825 = vadd.f32 0.0, %v5824
    %v5826 = vpop.f32.mrf.mxu0
    %v5827 = vpop.f32.mrf.mxu0
    %v5828 = vadd.f32 0.0, %v5827
    %v5829 = vpop.f32.mrf.mxu0
    %5830 = vmatprep.mubr.bf16.mxu0 %v5342
    %5831 = vmatmul.mubr.bf16.gmra.mxu0 %v5341
    %v5832 = vpop.f32.mrf.mxu0
    %v5833 = vadd.f32 0.0, %v5832
    %v5834 = vpop.f32.mrf.mxu0
    %v5835 = vpop.f32.mrf.mxu0
    %v5836 = vadd.f32 0.0, %v5835
    %v5837 = vpop.f32.mrf.mxu0
    %5838 = vmatprep.mubr.bf16.mxu0 %v5394
    %5839 = vmatmul.mubr.bf16.gmra.mxu0 %v5393
    %v5840 = vpop.f32.mrf.mxu0
    %v5841 = vadd.f32 0.0, %v5840
    %v5842 = vpop.f32.mrf.mxu0
    %v5843 = vpop.f32.mrf.mxu0
    %v5844 = vadd.f32 0.0, %v5843
    %v5845 = vpop.f32.mrf.mxu0
    %5846 = vdwg.mxu0
    %5847 = vmatprep.subr.bf16.mxu0 0
    %5848 = vmatpush1.bf16.msra.mxu0 %v5677
    %5849 = vmatprep.subr.bf16.mxu0 0
    %5850 = vmatpush1.bf16.msra.mxu0 %v5676
    %5851 = vmatprep.subr.bf16.mxu0 0
    %5852 = vmatpush1.bf16.msra.mxu0 %v5675
    %5853 = vmatprep.subr.bf16.mxu0 0
    %5854 = vmatpush1.bf16.msra.mxu0 %v5674
    %5855 = vmatprep.subr.bf16.mxu0 0
    %5856 = vmatpush1.bf16.msra.mxu0 %v5673
    %5857 = vmatprep.subr.bf16.mxu0 0
    %5858 = vmatpush1.bf16.msra.mxu0 %v5672
    %5859 = vmatprep.subr.bf16.mxu0 0
    %5860 = vmatpush1.bf16.msra.mxu0 %v5671
    %5861 = vmatprep.subr.bf16.mxu0 0
    %5862 = vmatpush1.bf16.msra.mxu0 %v5670
    %5863 = vmatprep.subr.bf16.mxu0 0
    %5864 = vmatpush2.bf16.msra.mxu0 %v5685
    %5865 = vmatprep.subr.bf16.mxu0 0
    %5866 = vmatpush2.bf16.msra.mxu0 %v5684
    %5867 = vmatprep.subr.bf16.mxu0 0
    %5868 = vmatpush2.bf16.msra.mxu0 %v5683
    %5869 = vmatprep.subr.bf16.mxu0 0
    %5870 = vmatpush2.bf16.msra.mxu0 %v5682
    %5871 = vmatprep.subr.bf16.mxu0 0
    %5872 = vmatpush2.bf16.msra.mxu0 %v5681
    %5873 = vmatprep.subr.bf16.mxu0 0
    %5874 = vmatpush2.bf16.msra.mxu0 %v5680
    %5875 = vmatprep.subr.bf16.mxu0 0
    %5876 = vmatpush2.bf16.msra.mxu0 %v5679
    %5877 = vmatprep.subr.bf16.mxu0 0
    %5878 = vmatpush2.bf16.msra.mxu0 %v5678
    %5879 = vmatprep.mubr.bf16.mxu0 %v5031
    %5880 = vmatmul.mubr.bf16.gmra.mxu0 %v5030
    %v5881 = vpop.f32.mrf.mxu0
    %v5882 = vadd.f32 %v5785, %v5881
    %v5883 = vpop.f32.mrf.mxu0
    %v5884 = vpop.f32.mrf.mxu0
    %v5885 = vadd.f32 %v5788, %v5884
    %v5886 = vpop.f32.mrf.mxu0
    %5887 = vmatprep.mubr.bf16.mxu0 %v5083
    %5888 = vmatmul.mubr.bf16.gmra.mxu0 %v5082
    %v5889 = vpop.f32.mrf.mxu0
    %v5890 = vadd.f32 %v5793, %v5889
    %v5891 = vpop.f32.mrf.mxu0
    %v5892 = vpop.f32.mrf.mxu0
    %v5893 = vadd.f32 %v5796, %v5892
    %v5894 = vpop.f32.mrf.mxu0
    %5895 = vmatprep.mubr.bf16.mxu0 %v5135
    %5896 = vmatmul.mubr.bf16.gmra.mxu0 %v5134
    %v5897 = vpop.f32.mrf.mxu0
    %v5898 = vadd.f32 %v5801, %v5897
    %v5899 = vpop.f32.mrf.mxu0
    %v5900 = vpop.f32.mrf.mxu0
    %v5901 = vadd.f32 %v5804, %v5900
    %v5902 = vpop.f32.mrf.mxu0
    %5903 = vmatprep.mubr.bf16.mxu0 %v5187
    %5904 = vmatmul.mubr.bf16.gmra.mxu0 %v5186
    %v5905 = vpop.f32.mrf.mxu0
    %v5906 = vadd.f32 %v5809, %v5905
    %v5907 = vpop.f32.mrf.mxu0
    %v5908 = vpop.f32.mrf.mxu0
    %v5909 = vadd.f32 %v5812, %v5908
    %v5910 = vpop.f32.mrf.mxu0
    %5911 = vmatprep.mubr.bf16.mxu0 %v5240
    %5912 = vmatmul.mubr.bf16.gmra.mxu0 %v5239
    %v5913 = vpop.f32.mrf.mxu0
    %v5914 = vadd.f32 %v5817, %v5913
    %v5915 = vpop.f32.mrf.mxu0
    %v5916 = vpop.f32.mrf.mxu0
    %v5917 = vadd.f32 %v5820, %v5916
    %v5918 = vpop.f32.mrf.mxu0
    %5919 = vmatprep.mubr.bf16.mxu0 %v5292
    %5920 = vmatmul.mubr.bf16.gmra.mxu0 %v5291
    %v5921 = vpop.f32.mrf.mxu0
    %v5922 = vadd.f32 %v5825, %v5921
    %v5923 = vpop.f32.mrf.mxu0
    %v5924 = vpop.f32.mrf.mxu0
    %v5925 = vadd.f32 %v5828, %v5924
    %v5926 = vpop.f32.mrf.mxu0
    %5927 = vmatprep.mubr.bf16.mxu0 %v5344
    %5928 = vmatmul.mubr.bf16.gmra.mxu0 %v5343
    %v5929 = vpop.f32.mrf.mxu0
    %v5930 = vadd.f32 %v5833, %v5929
    %v5931 = vpop.f32.mrf.mxu0
    %v5932 = vpop.f32.mrf.mxu0
    %v5933 = vadd.f32 %v5836, %v5932
    %v5934 = vpop.f32.mrf.mxu0
    %5935 = vmatprep.mubr.bf16.mxu0 %v5396
    %5936 = vmatmul.mubr.bf16.gmra.mxu0 %v5395
    %v5937 = vpop.f32.mrf.mxu0
    %v5938 = vadd.f32 %v5841, %v5937
    %v5939 = vpop.f32.mrf.mxu0
    %v5940 = vpop.f32.mrf.mxu0
    %v5941 = vadd.f32 %v5844, %v5940
    %v5942 = vpop.f32.mrf.mxu0
    %5943 = vdwg.mxu0
    %5944 = vmatprep.subr.bf16.mxu0 0
    %5945 = vmatpush1.bf16.msra.mxu0 %v5693
    %5946 = vmatprep.subr.bf16.mxu0 0
    %5947 = vmatpush1.bf16.msra.mxu0 %v5692
    %5948 = vmatprep.subr.bf16.mxu0 0
    %5949 = vmatpush1.bf16.msra.mxu0 %v5691
    %5950 = vmatprep.subr.bf16.mxu0 0
    %5951 = vmatpush1.bf16.msra.mxu0 %v5690
    %5952 = vmatprep.subr.bf16.mxu0 0
    %5953 = vmatpush1.bf16.msra.mxu0 %v5689
    %5954 = vmatprep.subr.bf16.mxu0 0
    %5955 = vmatpush1.bf16.msra.mxu0 %v5688
    %5956 = vmatprep.subr.bf16.mxu0 0
    %5957 = vmatpush1.bf16.msra.mxu0 %v5687
    %5958 = vmatprep.subr.bf16.mxu0 0
    %5959 = vmatpush1.bf16.msra.mxu0 %v5686
    %5960 = vmatprep.subr.bf16.mxu0 0
    %5961 = vmatpush2.bf16.msra.mxu0 %v5701
    %5962 = vmatprep.subr.bf16.mxu0 0
    %5963 = vmatpush2.bf16.msra.mxu0 %v5700
    %5964 = vmatprep.subr.bf16.mxu0 0
    %5965 = vmatpush2.bf16.msra.mxu0 %v5699
    %5966 = vmatprep.subr.bf16.mxu0 0
    %5967 = vmatpush2.bf16.msra.mxu0 %v5698
    %5968 = vmatprep.subr.bf16.mxu0 0
    %5969 = vmatpush2.bf16.msra.mxu0 %v5697
    %5970 = vmatprep.subr.bf16.mxu0 0
    %5971 = vmatpush2.bf16.msra.mxu0 %v5696
    %5972 = vmatprep.subr.bf16.mxu0 0
    %5973 = vmatpush2.bf16.msra.mxu0 %v5695
    %5974 = vmatprep.subr.bf16.mxu0 0
    %5975 = vmatpush2.bf16.msra.mxu0 %v5694
    %5976 = vmatprep.mubr.bf16.mxu0 %v5047
    %5977 = vmatmul.mubr.bf16.gmra.mxu0 %v5046
    %v5978 = vpop.f32.mrf.mxu0
    %v5979 = vadd.f32 %v5882, %v5978
    %v5980 = vpop.f32.mrf.mxu0
    %v5981 = vpop.f32.mrf.mxu0
    %v5982 = vadd.f32 %v5885, %v5981
    %v5983 = vpop.f32.mrf.mxu0
    %5984 = vmatprep.mubr.bf16.mxu0 %v5099
    %5985 = vmatmul.mubr.bf16.gmra.mxu0 %v5098
    %v5986 = vpop.f32.mrf.mxu0
    %v5987 = vadd.f32 %v5890, %v5986
    %v5988 = vpop.f32.mrf.mxu0
    %v5989 = vpop.f32.mrf.mxu0
    %v5990 = vadd.f32 %v5893, %v5989
    %v5991 = vpop.f32.mrf.mxu0
    %5992 = vmatprep.mubr.bf16.mxu0 %v5151
    %5993 = vmatmul.mubr.bf16.gmra.mxu0 %v5150
    %v5994 = vpop.f32.mrf.mxu0
    %v5995 = vadd.f32 %v5898, %v5994
    %v5996 = vpop.f32.mrf.mxu0
    %v5997 = vpop.f32.mrf.mxu0
    %v5998 = vadd.f32 %v5901, %v5997
    %v5999 = vpop.f32.mrf.mxu0
    %6000 = vmatprep.mubr.bf16.mxu0 %v5204
    %6001 = vmatmul.mubr.bf16.gmra.mxu0 %v5203
    %v6002 = vpop.f32.mrf.mxu0
    %v6003 = vadd.f32 %v5906, %v6002
    %v6004 = vpop.f32.mrf.mxu0
    %v6005 = vpop.f32.mrf.mxu0
    %v6006 = vadd.f32 %v5909, %v6005
    %v6007 = vpop.f32.mrf.mxu0
    %6008 = vmatprep.mubr.bf16.mxu0 %v5256
    %6009 = vmatmul.mubr.bf16.gmra.mxu0 %v5255
    %v6010 = vpop.f32.mrf.mxu0
    %v6011 = vadd.f32 %v5914, %v6010
    %v6012 = vpop.f32.mrf.mxu0
    %v6013 = vpop.f32.mrf.mxu0
    %v6014 = vadd.f32 %v5917, %v6013
    %v6015 = vpop.f32.mrf.mxu0
    %6016 = vmatprep.mubr.bf16.mxu0 %v5308
    %6017 = vmatmul.mubr.bf16.gmra.mxu0 %v5307
    %v6018 = vpop.f32.mrf.mxu0
    %v6019 = vadd.f32 %v5922, %v6018
    %v6020 = vpop.f32.mrf.mxu0
    %v6021 = vpop.f32.mrf.mxu0
    %v6022 = vadd.f32 %v5925, %v6021
    %v6023 = vpop.f32.mrf.mxu0
    %6024 = vmatprep.mubr.bf16.mxu0 %v5360
    %6025 = vmatmul.mubr.bf16.gmra.mxu0 %v5359
    %v6026 = vpop.f32.mrf.mxu0
    %v6027 = vadd.f32 %v5930, %v6026
    %v6028 = vpop.f32.mrf.mxu0
    %v6029 = vpop.f32.mrf.mxu0
    %v6030 = vadd.f32 %v5933, %v6029
    %v6031 = vpop.f32.mrf.mxu0
    %6032 = vmatprep.mubr.bf16.mxu0 %v5413
    %6033 = vmatmul.mubr.bf16.gmra.mxu0 %v5412
    %v6034 = vpop.f32.mrf.mxu0
    %v6035 = vadd.f32 %v5938, %v6034
    %v6036 = vpop.f32.mrf.mxu0
    %v6037 = vpop.f32.mrf.mxu0
    %v6038 = vadd.f32 %v5941, %v6037
    %v6039 = vpop.f32.mrf.mxu0
    %6040 = vdwg.mxu0
    %v6041 = vld [vmem:[%s8] sm:$0xf]
    %v6042 = vld [vmem:[%s8 + $0x4] sm:$0xf]
    %v6043 = vld [vmem:[%s8 + $0x8] sm:$0xf]
    %v6044 = vld [vmem:[%s8 + $0xc] sm:$0xf]
    %v6045 = vld [vmem:[%s8 + $0x10] sm:$0xf]
    %v6046 = vld [vmem:[%s8 + $0x14] sm:$0xf]
    %v6047 = vld [vmem:[%s8 + $0x18] sm:$0xf]
    %v6048 = vld [vmem:[%s8 + $0x1c] sm:$0xf]
    %v6049 = vld [vmem:[%s8 + $0x20] sm:$0xf]
    %v6050 = vld [vmem:[%s8 + $0x24] sm:$0xf]
    %v6051 = vld [vmem:[%s8 + $0x28] sm:$0xf]
    %v6052 = vld [vmem:[%s8 + $0x2c] sm:$0xf]
    %v6053 = vld [vmem:[%s8 + $0x30] sm:$0xf]
    %v6054 = vld [vmem:[%s8 + $0x34] sm:$0xf]
    %v6055 = vld [vmem:[%s8 + $0x38] sm:$0xf]
    %v6056 = vld [vmem:[%s8 + $0x3c] sm:$0xf]
    %v6057 = vld [vmem:[%s8 + $0x40] sm:$0xf]
    %v6058 = vld [vmem:[%s8 + $0x44] sm:$0xf]
    %v6059 = vld [vmem:[%s8 + $0x48] sm:$0xf]
    %v6060 = vld [vmem:[%s8 + $0x4c] sm:$0xf]
    %v6061 = vld [vmem:[%s8 + $0x50] sm:$0xf]
    %v6062 = vld [vmem:[%s8 + $0x54] sm:$0xf]
    %v6063 = vld [vmem:[%s8 + $0x58] sm:$0xf]
    %v6064 = vld [vmem:[%s8 + $0x5c] sm:$0xf]
    %v6065 = vld [vmem:[%s8 + $0x60] sm:$0xf]
    %v6066 = vld [vmem:[%s8 + $0x64] sm:$0xf]
    %v6067 = vld [vmem:[%s8 + $0x68] sm:$0xf]
    %v6068 = vld [vmem:[%s8 + $0x6c] sm:$0xf]
    %v6069 = vld [vmem:[%s8 + $0x70] sm:$0xf]
    %v6070 = vld [vmem:[%s8 + $0x74] sm:$0xf]
    %v6071 = vld [vmem:[%s8 + $0x78] sm:$0xf]
    %v6072 = vld [vmem:[%s8 + $0x7c] sm:$0xf]
    %v6073 = vld [vmem:[%s8 + $0x80] sm:$0xf]
    %v6074 = vld [vmem:[%s8 + $0x84] sm:$0xf]
    %v6075 = vld [vmem:[%s8 + $0x88] sm:$0xf]
    %v6076 = vld [vmem:[%s8 + $0x8c] sm:$0xf]
    %v6077 = vld [vmem:[%s8 + $0x90] sm:$0xf]
    %v6078 = vld [vmem:[%s8 + $0x94] sm:$0xf]
    %v6079 = vld [vmem:[%s8 + $0x98] sm:$0xf]
    %v6080 = vld [vmem:[%s8 + $0x9c] sm:$0xf]
    %v6081 = vld [vmem:[%s8 + $0xa0] sm:$0xf]
    %v6082 = vld [vmem:[%s8 + $0xa4] sm:$0xf]
    %v6083 = vld [vmem:[%s8 + $0xa8] sm:$0xf]
    %v6084 = vld [vmem:[%s8 + $0xac] sm:$0xf]
    %v6085 = vld [vmem:[%s8 + $0xb0] sm:$0xf]
    %v6086 = vld [vmem:[%s8 + $0xb4] sm:$0xf]
    %v6087 = vld [vmem:[%s8 + $0xb8] sm:$0xf]
    %v6088 = vld [vmem:[%s8 + $0xbc] sm:$0xf]
    %v6089 = vld [vmem:[%s8 + $0xc0] sm:$0xf]
    %v6090 = vld [vmem:[%s8 + $0xc4] sm:$0xf]
    %v6091 = vld [vmem:[%s8 + $0xc8] sm:$0xf]
    %v6092 = vld [vmem:[%s8 + $0xcc] sm:$0xf]
    %v6093 = vld [vmem:[%s8 + $0xd0] sm:$0xf]
    %v6094 = vld [vmem:[%s8 + $0xd4] sm:$0xf]
    %v6095 = vld [vmem:[%s8 + $0xd8] sm:$0xf]
    %v6096 = vld [vmem:[%s8 + $0xdc] sm:$0xf]
    %v6097 = vld [vmem:[%s8 + $0xe0] sm:$0xf]
    %v6098 = vld [vmem:[%s8 + $0xe4] sm:$0xf]
    %v6099 = vld [vmem:[%s8 + $0xe8] sm:$0xf]
    %v6100 = vld [vmem:[%s8 + $0xec] sm:$0xf]
    %v6101 = vld [vmem:[%s8 + $0xf0] sm:$0xf]
    %v6102 = vld [vmem:[%s8 + $0xf4] sm:$0xf]
    %v6103 = vld [vmem:[%s8 + $0xf8] sm:$0xf]
    %v6104 = vld [vmem:[%s8 + $0xfc] sm:$0xf]
    %v6105 = vld [vmem:[%s8 + $0x100] sm:$0xf]
    %v6106 = vld [vmem:[%s8 + $0x104] sm:$0xf]
    %v6107 = vld [vmem:[%s8 + $0x108] sm:$0xf]
    %v6108 = vld [vmem:[%s8 + $0x10c] sm:$0xf]
    %v6109 = vld [vmem:[%s8 + $0x110] sm:$0xf]
    %v6110 = vld [vmem:[%s8 + $0x114] sm:$0xf]
    %v6111 = vld [vmem:[%s8 + $0x118] sm:$0xf]
    %v6112 = vld [vmem:[%s8 + $0x11c] sm:$0xf]
    %v6113 = vld [vmem:[%s8 + $0x120] sm:$0xf]
    %v6114 = vld [vmem:[%s8 + $0x124] sm:$0xf]
    %v6115 = vld [vmem:[%s8 + $0x128] sm:$0xf]
    %v6116 = vld [vmem:[%s8 + $0x12c] sm:$0xf]
    %v6117 = vld [vmem:[%s8 + $0x130] sm:$0xf]
    %v6118 = vld [vmem:[%s8 + $0x134] sm:$0xf]
    %v6119 = vld [vmem:[%s8 + $0x138] sm:$0xf]
    %v6120 = vld [vmem:[%s8 + $0x13c] sm:$0xf]
    %v6121 = vld [vmem:[%s8 + $0x140] sm:$0xf]
    %v6122 = vld [vmem:[%s8 + $0x144] sm:$0xf]
    %v6123 = vld [vmem:[%s8 + $0x148] sm:$0xf]
    %v6124 = vld [vmem:[%s8 + $0x14c] sm:$0xf]
    %v6125 = vld [vmem:[%s8 + $0x150] sm:$0xf]
    %v6126 = vld [vmem:[%s8 + $0x154] sm:$0xf]
    %v6127 = vld [vmem:[%s8 + $0x158] sm:$0xf]
    %v6128 = vld [vmem:[%s8 + $0x15c] sm:$0xf]
    %v6129 = vld [vmem:[%s8 + $0x160] sm:$0xf]
    %v6130 = vld [vmem:[%s8 + $0x164] sm:$0xf]
    %v6131 = vld [vmem:[%s8 + $0x168] sm:$0xf]
    %v6132 = vld [vmem:[%s8 + $0x16c] sm:$0xf]
    %v6133 = vld [vmem:[%s8 + $0x170] sm:$0xf]
    %v6134 = vld [vmem:[%s8 + $0x174] sm:$0xf]
    %v6135 = vld [vmem:[%s8 + $0x178] sm:$0xf]
    %v6136 = vld [vmem:[%s8 + $0x17c] sm:$0xf]
    %v6137 = vcombine.low %v3607, %v3608
    %v6138 = vcombine.high %v3607, %v3608
    %v6139 = vcombine.low %v3617, %v3618
    %v6140 = vcombine.high %v3617, %v3618
    %v6142 = vunpack.c.l.s4 1983009808
    %v6143 = vunpack.c.0.s8 %v6142
    %v6144 = vlaneseq
    %v6145 = vshrl.u32 %v6144, 7
    %v6146 = vsub.s32 %v6143, %v6145
    %v6147 = vrot.slane %v6137, %v6146
    %v6149 = vunpack.c.l.s4 1983009808
    %v6150 = vunpack.c.0.s8 %v6149
    %v6151 = vlaneseq
    %v6152 = vshrl.u32 %v6151, 7
    %v6153 = vsub.s32 %v6150, %v6152
    %v6154 = vrot.slane %v6138, %v6153
    %v6156 = vunpack.c.l.s4 1983009808
    %v6157 = vunpack.c.0.s8 %v6156
    %v6158 = vlaneseq
    %v6159 = vshrl.u32 %v6158, 7
    %v6160 = vsub.s32 %v6157, %v6159
    %v6161 = vrot.slane %v6139, %v6160
    %v6163 = vunpack.c.l.s4 1983009808
    %v6164 = vunpack.c.0.s8 %v6163
    %v6165 = vlaneseq
    %v6166 = vshrl.u32 %v6165, 7
    %v6167 = vsub.s32 %v6164, %v6166
    %v6168 = vrot.slane %v6140, %v6167
    %v6169 = vcombine.low %v6147, %v6161
    %v6170 = vcombine.high %v6147, %v6161
    %v6171 = vcombine.low %v6154, %v6168
    %v6172 = vcombine.high %v6154, %v6168
    %v6174 = vunpack.c.l.s4 1983009808
    %v6175 = vunpack.c.0.s8 %v6174
    %v6176 = vlaneseq
    %v6177 = vshrl.u32 %v6176, 7
    %v6178 = vsub.s32 %v6175, %v6177
    %v6179 = vrot.slane %v3617, %v6178
    %v6181 = vunpack.c.l.s4 1983009808
    %v6182 = vunpack.c.0.s8 %v6181
    %v6183 = vlaneseq
    %v6184 = vshrl.u32 %v6183, 7
    %v6185 = vsub.s32 %v6182, %v6184
    %v6186 = vrot.slane %v3627, %v6185
    %v6187 = vcombine.low %v6179, %v6186
    %v6188 = vcombine.high %v6179, %v6186
    %v6189 = vcombine.low %v3627, %v3628
    %v6190 = vcombine.high %v3627, %v3628
    %v6191 = vcombine.low %v3637, %v3638
    %v6192 = vcombine.high %v3637, %v3638
    %v6194 = vunpack.c.l.s4 1983009808
    %v6195 = vunpack.c.0.s8 %v6194
    %v6196 = vlaneseq
    %v6197 = vshrl.u32 %v6196, 7
    %v6198 = vsub.s32 %v6195, %v6197
    %v6199 = vrot.slane %v6189, %v6198
    %v6201 = vunpack.c.l.s4 1983009808
    %v6202 = vunpack.c.0.s8 %v6201
    %v6203 = vlaneseq
    %v6204 = vshrl.u32 %v6203, 7
    %v6205 = vsub.s32 %v6202, %v6204
    %v6206 = vrot.slane %v6190, %v6205
    %v6208 = vunpack.c.l.s4 1983009808
    %v6209 = vunpack.c.0.s8 %v6208
    %v6210 = vlaneseq
    %v6211 = vshrl.u32 %v6210, 7
    %v6212 = vsub.s32 %v6209, %v6211
    %v6213 = vrot.slane %v6191, %v6212
    %v6215 = vunpack.c.l.s4 1983009808
    %v6216 = vunpack.c.0.s8 %v6215
    %v6217 = vlaneseq
    %v6218 = vshrl.u32 %v6217, 7
    %v6219 = vsub.s32 %v6216, %v6218
    %v6220 = vrot.slane %v6192, %v6219
    %v6221 = vcombine.low %v6199, %v6213
    %v6222 = vcombine.high %v6199, %v6213
    %v6223 = vcombine.low %v6206, %v6220
    %v6224 = vcombine.high %v6206, %v6220
    %v6226 = vunpack.c.l.s4 1983009808
    %v6227 = vunpack.c.0.s8 %v6226
    %v6228 = vlaneseq
    %v6229 = vshrl.u32 %v6228, 7
    %v6230 = vsub.s32 %v6227, %v6229
    %v6231 = vrot.slane %v3637, %v6230
    %v6233 = vunpack.c.l.s4 1983009808
    %v6234 = vunpack.c.0.s8 %v6233
    %v6235 = vlaneseq
    %v6236 = vshrl.u32 %v6235, 7
    %v6237 = vsub.s32 %v6234, %v6236
    %v6238 = vrot.slane %v3647, %v6237
    %v6239 = vcombine.low %v6231, %v6238
    %v6240 = vcombine.high %v6231, %v6238
    %v6241 = vcombine.low %v3647, %v3648
    %v6242 = vcombine.high %v3647, %v3648
    %v6243 = vcombine.low %v3657, %v3658
    %v6244 = vcombine.high %v3657, %v3658
    %v6246 = vunpack.c.l.s4 1983009808
    %v6247 = vunpack.c.0.s8 %v6246
    %v6248 = vlaneseq
    %v6249 = vshrl.u32 %v6248, 7
    %v6250 = vsub.s32 %v6247, %v6249
    %v6251 = vrot.slane %v6241, %v6250
    %v6253 = vunpack.c.l.s4 1983009808
    %v6254 = vunpack.c.0.s8 %v6253
    %v6255 = vlaneseq
    %v6256 = vshrl.u32 %v6255, 7
    %v6257 = vsub.s32 %v6254, %v6256
    %v6258 = vrot.slane %v6242, %v6257
    %v6260 = vunpack.c.l.s4 1983009808
    %v6261 = vunpack.c.0.s8 %v6260
    %v6262 = vlaneseq
    %v6263 = vshrl.u32 %v6262, 7
    %v6264 = vsub.s32 %v6261, %v6263
    %v6265 = vrot.slane %v6243, %v6264
    %v6267 = vunpack.c.l.s4 1983009808
    %v6268 = vunpack.c.0.s8 %v6267
    %v6269 = vlaneseq
    %v6270 = vshrl.u32 %v6269, 7
    %v6271 = vsub.s32 %v6268, %v6270
    %v6272 = vrot.slane %v6244, %v6271
    %v6273 = vcombine.low %v6251, %v6265
    %v6274 = vcombine.high %v6251, %v6265
    %v6275 = vcombine.low %v6258, %v6272
    %v6276 = vcombine.high %v6258, %v6272
    %v6278 = vunpack.c.l.s4 1983009808
    %v6279 = vunpack.c.0.s8 %v6278
    %v6280 = vlaneseq
    %v6281 = vshrl.u32 %v6280, 7
    %v6282 = vsub.s32 %v6279, %v6281
    %v6283 = vrot.slane %v3657, %v6282
    %v6285 = vunpack.c.l.s4 1983009808
    %v6286 = vunpack.c.0.s8 %v6285
    %v6287 = vlaneseq
    %v6288 = vshrl.u32 %v6287, 7
    %v6289 = vsub.s32 %v6286, %v6288
    %v6290 = vrot.slane %v3667, %v6289
    %v6291 = vcombine.low %v6283, %v6290
    %v6292 = vcombine.high %v6283, %v6290
    %v6293 = vcombine.low %v3667, %v3668
    %v6294 = vcombine.high %v3667, %v3668
    %v6295 = vcombine.low %v3677, %v3678
    %v6296 = vcombine.high %v3677, %v3678
    %v6298 = vunpack.c.l.s4 1983009808
    %v6299 = vunpack.c.0.s8 %v6298
    %v6300 = vlaneseq
    %v6301 = vshrl.u32 %v6300, 7
    %v6302 = vsub.s32 %v6299, %v6301
    %v6303 = vrot.slane %v6293, %v6302
    %v6305 = vunpack.c.l.s4 1983009808
    %v6306 = vunpack.c.0.s8 %v6305
    %v6307 = vlaneseq
    %v6308 = vshrl.u32 %v6307, 7
    %v6309 = vsub.s32 %v6306, %v6308
    %v6310 = vrot.slane %v6294, %v6309
    %v6312 = vunpack.c.l.s4 1983009808
    %v6313 = vunpack.c.0.s8 %v6312
    %v6314 = vlaneseq
    %v6315 = vshrl.u32 %v6314, 7
    %v6316 = vsub.s32 %v6313, %v6315
    %v6317 = vrot.slane %v6295, %v6316
    %v6319 = vunpack.c.l.s4 1983009808
    %v6320 = vunpack.c.0.s8 %v6319
    %v6321 = vlaneseq
    %v6322 = vshrl.u32 %v6321, 7
    %v6323 = vsub.s32 %v6320, %v6322
    %v6324 = vrot.slane %v6296, %v6323
    %v6325 = vcombine.low %v6303, %v6317
    %v6326 = vcombine.high %v6303, %v6317
    %v6327 = vcombine.low %v6310, %v6324
    %v6328 = vcombine.high %v6310, %v6324
    %v6329 = vcombine.low %v3676, %v897
    %v6331 = vunpack.c.l.s4 1983009808
    %v6332 = vunpack.c.0.s8 %v6331
    %v6333 = vlaneseq
    %v6334 = vshrl.u32 %v6333, 7
    %v6335 = vsub.s32 %v6332, %v6334
    %v6336 = vrot.slane %v3677, %v6335
    %v6338 = vunpack.c.l.s4 1983009808
    %v6339 = vunpack.c.0.s8 %v6338
    %v6340 = vlaneseq
    %v6341 = vshrl.u32 %v6340, 7
    %v6342 = vsub.s32 %v6339, %v6341
    %v6343 = vrot.slane %v6329, %v6342
    %v6344 = vcombine.low %v6336, %v6343
    %v6345 = vcombine.high %v6336, %v6343
    %v6346 = vcombine.low %v3687, %v3688
    %v6347 = vcombine.high %v3687, %v3688
    %v6348 = vcombine.low %v3697, %v3698
    %v6349 = vcombine.high %v3697, %v3698
    %v6351 = vunpack.c.l.s4 1983009808
    %v6352 = vunpack.c.0.s8 %v6351
    %v6353 = vlaneseq
    %v6354 = vshrl.u32 %v6353, 7
    %v6355 = vsub.s32 %v6352, %v6354
    %v6356 = vrot.slane %v6346, %v6355
    %v6358 = vunpack.c.l.s4 1983009808
    %v6359 = vunpack.c.0.s8 %v6358
    %v6360 = vlaneseq
    %v6361 = vshrl.u32 %v6360, 7
    %v6362 = vsub.s32 %v6359, %v6361
    %v6363 = vrot.slane %v6347, %v6362
    %v6365 = vunpack.c.l.s4 1983009808
    %v6366 = vunpack.c.0.s8 %v6365
    %v6367 = vlaneseq
    %v6368 = vshrl.u32 %v6367, 7
    %v6369 = vsub.s32 %v6366, %v6368
    %v6370 = vrot.slane %v6348, %v6369
    %v6372 = vunpack.c.l.s4 1983009808
    %v6373 = vunpack.c.0.s8 %v6372
    %v6374 = vlaneseq
    %v6375 = vshrl.u32 %v6374, 7
    %v6376 = vsub.s32 %v6373, %v6375
    %v6377 = vrot.slane %v6349, %v6376
    %v6378 = vcombine.low %v6356, %v6370
    %v6379 = vcombine.high %v6356, %v6370
    %v6380 = vcombine.low %v6363, %v6377
    %v6381 = vcombine.high %v6363, %v6377
    %v6383 = vunpack.c.l.s4 1983009808
    %v6384 = vunpack.c.0.s8 %v6383
    %v6385 = vlaneseq
    %v6386 = vshrl.u32 %v6385, 7
    %v6387 = vsub.s32 %v6384, %v6386
    %v6388 = vrot.slane %v3697, %v6387
    %v6390 = vunpack.c.l.s4 1983009808
    %v6391 = vunpack.c.0.s8 %v6390
    %v6392 = vlaneseq
    %v6393 = vshrl.u32 %v6392, 7
    %v6394 = vsub.s32 %v6391, %v6393
    %v6395 = vrot.slane %v3707, %v6394
    %v6396 = vcombine.low %v6388, %v6395
    %v6397 = vcombine.high %v6388, %v6395
    %v6398 = vcombine.low %v3707, %v3708
    %v6399 = vcombine.high %v3707, %v3708
    %v6400 = vcombine.low %v3717, %v3718
    %v6401 = vcombine.high %v3717, %v3718
    %v6403 = vunpack.c.l.s4 1983009808
    %v6404 = vunpack.c.0.s8 %v6403
    %v6405 = vlaneseq
    %v6406 = vshrl.u32 %v6405, 7
    %v6407 = vsub.s32 %v6404, %v6406
    %v6408 = vrot.slane %v6398, %v6407
    %v6410 = vunpack.c.l.s4 1983009808
    %v6411 = vunpack.c.0.s8 %v6410
    %v6412 = vlaneseq
    %v6413 = vshrl.u32 %v6412, 7
    %v6414 = vsub.s32 %v6411, %v6413
    %v6415 = vrot.slane %v6399, %v6414
    %v6417 = vunpack.c.l.s4 1983009808
    %v6418 = vunpack.c.0.s8 %v6417
    %v6419 = vlaneseq
    %v6420 = vshrl.u32 %v6419, 7
    %v6421 = vsub.s32 %v6418, %v6420
    %v6422 = vrot.slane %v6400, %v6421
    %v6424 = vunpack.c.l.s4 1983009808
    %v6425 = vunpack.c.0.s8 %v6424
    %v6426 = vlaneseq
    %v6427 = vshrl.u32 %v6426, 7
    %v6428 = vsub.s32 %v6425, %v6427
    %v6429 = vrot.slane %v6401, %v6428
    %v6430 = vcombine.low %v6408, %v6422
    %v6431 = vcombine.high %v6408, %v6422
    %v6432 = vcombine.low %v6415, %v6429
    %v6433 = vcombine.high %v6415, %v6429
    %v6435 = vunpack.c.l.s4 1983009808
    %v6436 = vunpack.c.0.s8 %v6435
    %v6437 = vlaneseq
    %v6438 = vshrl.u32 %v6437, 7
    %v6439 = vsub.s32 %v6436, %v6438
    %v6440 = vrot.slane %v3717, %v6439
    %v6442 = vunpack.c.l.s4 1983009808
    %v6443 = vunpack.c.0.s8 %v6442
    %v6444 = vlaneseq
    %v6445 = vshrl.u32 %v6444, 7
    %v6446 = vsub.s32 %v6443, %v6445
    %v6447 = vrot.slane %v3727, %v6446
    %v6448 = vcombine.low %v6440, %v6447
    %v6449 = vcombine.high %v6440, %v6447
    %v6450 = vcombine.low %v3727, %v3728
    %v6451 = vcombine.high %v3727, %v3728
    %v6452 = vcombine.low %v3737, %v3738
    %v6453 = vcombine.high %v3737, %v3738
    %v6455 = vunpack.c.l.s4 1983009808
    %v6456 = vunpack.c.0.s8 %v6455
    %v6457 = vlaneseq
    %v6458 = vshrl.u32 %v6457, 7
    %v6459 = vsub.s32 %v6456, %v6458
    %v6460 = vrot.slane %v6450, %v6459
    %v6462 = vunpack.c.l.s4 1983009808
    %v6463 = vunpack.c.0.s8 %v6462
    %v6464 = vlaneseq
    %v6465 = vshrl.u32 %v6464, 7
    %v6466 = vsub.s32 %v6463, %v6465
    %v6467 = vrot.slane %v6451, %v6466
    %v6469 = vunpack.c.l.s4 1983009808
    %v6470 = vunpack.c.0.s8 %v6469
    %v6471 = vlaneseq
    %v6472 = vshrl.u32 %v6471, 7
    %v6473 = vsub.s32 %v6470, %v6472
    %v6474 = vrot.slane %v6452, %v6473
    %v6476 = vunpack.c.l.s4 1983009808
    %v6477 = vunpack.c.0.s8 %v6476
    %v6478 = vlaneseq
    %v6479 = vshrl.u32 %v6478, 7
    %v6480 = vsub.s32 %v6477, %v6479
    %v6481 = vrot.slane %v6453, %v6480
    %v6482 = vcombine.low %v6460, %v6474
    %v6483 = vcombine.high %v6460, %v6474
    %v6484 = vcombine.low %v6467, %v6481
    %v6485 = vcombine.high %v6467, %v6481
    %v6487 = vunpack.c.l.s4 1983009808
    %v6488 = vunpack.c.0.s8 %v6487
    %v6489 = vlaneseq
    %v6490 = vshrl.u32 %v6489, 7
    %v6491 = vsub.s32 %v6488, %v6490
    %v6492 = vrot.slane %v3737, %v6491
    %v6494 = vunpack.c.l.s4 1983009808
    %v6495 = vunpack.c.0.s8 %v6494
    %v6496 = vlaneseq
    %v6497 = vshrl.u32 %v6496, 7
    %v6498 = vsub.s32 %v6495, %v6497
    %v6499 = vrot.slane %v3747, %v6498
    %v6500 = vcombine.low %v6492, %v6499
    %v6501 = vcombine.high %v6492, %v6499
    %v6502 = vcombine.low %v3747, %v3748
    %v6503 = vcombine.high %v3747, %v3748
    %v6504 = vcombine.low %v3757, %v3758
    %v6505 = vcombine.high %v3757, %v3758
    %v6507 = vunpack.c.l.s4 1983009808
    %v6508 = vunpack.c.0.s8 %v6507
    %v6509 = vlaneseq
    %v6510 = vshrl.u32 %v6509, 7
    %v6511 = vsub.s32 %v6508, %v6510
    %v6512 = vrot.slane %v6502, %v6511
    %v6514 = vunpack.c.l.s4 1983009808
    %v6515 = vunpack.c.0.s8 %v6514
    %v6516 = vlaneseq
    %v6517 = vshrl.u32 %v6516, 7
    %v6518 = vsub.s32 %v6515, %v6517
    %v6519 = vrot.slane %v6503, %v6518
    %v6521 = vunpack.c.l.s4 1983009808
    %v6522 = vunpack.c.0.s8 %v6521
    %v6523 = vlaneseq
    %v6524 = vshrl.u32 %v6523, 7
    %v6525 = vsub.s32 %v6522, %v6524
    %v6526 = vrot.slane %v6504, %v6525
    %v6528 = vunpack.c.l.s4 1983009808
    %v6529 = vunpack.c.0.s8 %v6528
    %v6530 = vlaneseq
    %v6531 = vshrl.u32 %v6530, 7
    %v6532 = vsub.s32 %v6529, %v6531
    %v6533 = vrot.slane %v6505, %v6532
    %v6534 = vcombine.low %v6512, %v6526
    %v6535 = vcombine.high %v6512, %v6526
    %v6536 = vcombine.low %v6519, %v6533
    %v6537 = vcombine.high %v6519, %v6533
    %v6538 = vcombine.low %v3756, %v897
    %v6540 = vunpack.c.l.s4 1983009808
    %v6541 = vunpack.c.0.s8 %v6540
    %v6542 = vlaneseq
    %v6543 = vshrl.u32 %v6542, 7
    %v6544 = vsub.s32 %v6541, %v6543
    %v6545 = vrot.slane %v3757, %v6544
    %v6547 = vunpack.c.l.s4 1983009808
    %v6548 = vunpack.c.0.s8 %v6547
    %v6549 = vlaneseq
    %v6550 = vshrl.u32 %v6549, 7
    %v6551 = vsub.s32 %v6548, %v6550
    %v6552 = vrot.slane %v6538, %v6551
    %v6553 = vcombine.low %v6545, %v6552
    %v6554 = vcombine.high %v6545, %v6552
    %v6699 = vunpack.c.l.b16 %v6041
    %v6700 = vunpack.c.l.b16 %v6042
    %v6701 = vunpack.c.l.b16 %v6043
    %v6702 = vunpack.c.l.b16 %v6044
    %v6703 = vunpack.c.l.b16 %v6045
    %v6704 = vunpack.c.l.b16 %v6046
    %v6705 = vunpack.c.l.b16 %v6047
    %v6706 = vunpack.c.l.b16 %v6048
    %v6707 = vunpack.c.l.b16 %v6049
    %v6708 = vunpack.c.l.b16 %v6050
    %v6709 = vunpack.c.l.b16 %v6051
    %v6710 = vunpack.c.l.b16 %v6052
    %v6711 = vunpack.c.l.b16 %v6053
    %v6712 = vunpack.c.l.b16 %v6054
    %v6713 = vunpack.c.l.b16 %v6055
    %v6714 = vunpack.c.l.b16 %v6056
    %v6715 = vunpack.c.l.b16 %v6057
    %v6716 = vunpack.c.l.b16 %v6058
    %v6717 = vunpack.c.l.b16 %v6059
    %v6718 = vunpack.c.l.b16 %v6060
    %v6719 = vunpack.c.l.b16 %v6061
    %v6720 = vunpack.c.l.b16 %v6062
    %v6721 = vunpack.c.l.b16 %v6063
    %v6722 = vunpack.c.l.b16 %v6064
    %v6723 = vunpack.c.l.b16 %v6065
    %v6724 = vunpack.c.l.b16 %v6066
    %v6725 = vunpack.c.l.b16 %v6067
    %v6726 = vunpack.c.l.b16 %v6068
    %v6727 = vunpack.c.l.b16 %v6069
    %v6728 = vunpack.c.l.b16 %v6070
    %v6729 = vunpack.c.l.b16 %v6071
    %v6730 = vunpack.c.l.b16 %v6072
    %v6731 = vunpack.c.l.b16 %v6073
    %v6732 = vunpack.c.l.b16 %v6074
    %v6733 = vunpack.c.l.b16 %v6075
    %v6734 = vunpack.c.l.b16 %v6076
    %v6735 = vunpack.c.l.b16 %v6077
    %v6736 = vunpack.c.l.b16 %v6078
    %v6737 = vunpack.c.l.b16 %v6079
    %v6738 = vunpack.c.l.b16 %v6080
    %v6739 = vunpack.c.l.b16 %v6081
    %v6740 = vunpack.c.l.b16 %v6082
    %v6741 = vunpack.c.l.b16 %v6083
    %v6742 = vunpack.c.l.b16 %v6084
    %v6743 = vunpack.c.l.b16 %v6085
    %v6744 = vunpack.c.l.b16 %v6086
    %v6745 = vunpack.c.l.b16 %v6087
    %v6746 = vunpack.c.l.b16 %v6088
    %v6747 = vunpack.c.l.b16 %v6089
    %v6748 = vunpack.c.l.b16 %v6090
    %v6749 = vunpack.c.l.b16 %v6091
    %v6750 = vunpack.c.l.b16 %v6092
    %v6751 = vunpack.c.l.b16 %v6093
    %v6752 = vunpack.c.l.b16 %v6094
    %v6753 = vunpack.c.l.b16 %v6095
    %v6754 = vunpack.c.l.b16 %v6096
    %v6755 = vunpack.c.l.b16 %v6097
    %v6756 = vunpack.c.l.b16 %v6098
    %v6757 = vunpack.c.l.b16 %v6099
    %v6758 = vunpack.c.l.b16 %v6100
    %v6759 = vunpack.c.l.b16 %v6101
    %v6760 = vunpack.c.l.b16 %v6102
    %v6761 = vunpack.c.l.b16 %v6103
    %v6762 = vunpack.c.l.b16 %v6104
    %v6763 = vunpack.c.l.b16 %v6105
    %v6764 = vunpack.c.l.b16 %v6106
    %v6765 = vunpack.c.l.b16 %v6107
    %v6766 = vunpack.c.l.b16 %v6108
    %v6767 = vunpack.c.l.b16 %v6109
    %v6768 = vunpack.c.l.b16 %v6110
    %v6769 = vunpack.c.l.b16 %v6111
    %v6770 = vunpack.c.l.b16 %v6112
    %v6771 = vunpack.c.l.b16 %v6113
    %v6772 = vunpack.c.l.b16 %v6114
    %v6773 = vunpack.c.l.b16 %v6115
    %v6774 = vunpack.c.l.b16 %v6116
    %v6775 = vunpack.c.l.b16 %v6117
    %v6776 = vunpack.c.l.b16 %v6118
    %v6777 = vunpack.c.l.b16 %v6119
    %v6778 = vunpack.c.l.b16 %v6120
    %v6779 = vunpack.c.l.b16 %v6121
    %v6780 = vunpack.c.l.b16 %v6122
    %v6781 = vunpack.c.l.b16 %v6123
    %v6782 = vunpack.c.l.b16 %v6124
    %v6783 = vunpack.c.l.b16 %v6125
    %v6784 = vunpack.c.l.b16 %v6126
    %v6785 = vunpack.c.l.b16 %v6127
    %v6786 = vunpack.c.l.b16 %v6128
    %v6787 = vunpack.c.l.b16 %v6129
    %v6788 = vunpack.c.l.b16 %v6130
    %v6789 = vunpack.c.l.b16 %v6131
    %v6790 = vunpack.c.l.b16 %v6132
    %v6791 = vunpack.c.l.b16 %v6133
    %v6792 = vunpack.c.l.b16 %v6134
    %v6793 = vunpack.c.l.b16 %v6135
    %v6794 = vunpack.c.l.b16 %v6136
    %v6795 = vpack.c.b16 %v6700, %v6699
    %v6796 = vpack.c.b16 %v6702, %v6701
    %v6797 = vpack.c.b16 %v6704, %v6703
    %v6798 = vpack.c.b16 %v6706, %v6705
    %v6799 = vpack.c.b16 %v6708, %v6707
    %v6800 = vpack.c.b16 %v6710, %v6709
    %v6801 = vpack.c.b16 %v6712, %v6711
    %v6802 = vpack.c.b16 %v6714, %v6713
    %v6803 = vpack.c.b16 %v6716, %v6715
    %v6804 = vpack.c.b16 %v6718, %v6717
    %v6805 = vpack.c.b16 %v6720, %v6719
    %v6806 = vpack.c.b16 %v6722, %v6721
    %v6807 = vpack.c.b16 %v6724, %v6723
    %v6808 = vpack.c.b16 %v6726, %v6725
    %v6809 = vpack.c.b16 %v6728, %v6727
    %v6810 = vpack.c.b16 %v6730, %v6729
    %v6811 = vpack.c.b16 %v6732, %v6731
    %v6812 = vpack.c.b16 %v6734, %v6733
    %v6813 = vpack.c.b16 %v6736, %v6735
    %v6814 = vpack.c.b16 %v6738, %v6737
    %v6815 = vpack.c.b16 %v6740, %v6739
    %v6816 = vpack.c.b16 %v6742, %v6741
    %v6817 = vpack.c.b16 %v6744, %v6743
    %v6818 = vpack.c.b16 %v6746, %v6745
    %v6819 = vpack.c.b16 %v6748, %v6747
    %v6820 = vpack.c.b16 %v6750, %v6749
    %v6821 = vpack.c.b16 %v6752, %v6751
    %v6822 = vpack.c.b16 %v6754, %v6753
    %v6823 = vpack.c.b16 %v6756, %v6755
    %v6824 = vpack.c.b16 %v6758, %v6757
    %v6825 = vpack.c.b16 %v6760, %v6759
    %v6826 = vpack.c.b16 %v6762, %v6761
    %v6827 = vpack.c.b16 %v6764, %v6763
    %v6828 = vpack.c.b16 %v6766, %v6765
    %v6829 = vpack.c.b16 %v6768, %v6767
    %v6830 = vpack.c.b16 %v6770, %v6769
    %v6831 = vpack.c.b16 %v6772, %v6771
    %v6832 = vpack.c.b16 %v6774, %v6773
    %v6833 = vpack.c.b16 %v6776, %v6775
    %v6834 = vpack.c.b16 %v6778, %v6777
    %v6835 = vpack.c.b16 %v6780, %v6779
    %v6836 = vpack.c.b16 %v6782, %v6781
    %v6837 = vpack.c.b16 %v6784, %v6783
    %v6838 = vpack.c.b16 %v6786, %v6785
    %v6839 = vpack.c.b16 %v6788, %v6787
    %v6840 = vpack.c.b16 %v6790, %v6789
    %v6841 = vpack.c.b16 %v6792, %v6791
    %v6842 = vpack.c.b16 %v6794, %v6793
    %6891 = vmatprep.subr.bf16.mxu0 0
    %6892 = vmatpush1.bf16.msra.mxu0 %v6802
    %6893 = vmatprep.subr.bf16.mxu0 0
    %6894 = vmatpush1.bf16.msra.mxu0 %v6801
    %6895 = vmatprep.subr.bf16.mxu0 0
    %6896 = vmatpush1.bf16.msra.mxu0 %v6800
    %6897 = vmatprep.subr.bf16.mxu0 0
    %6898 = vmatpush1.bf16.msra.mxu0 %v6799
    %6899 = vmatprep.subr.bf16.mxu0 0
    %6900 = vmatpush1.bf16.msra.mxu0 %v6798
    %6901 = vmatprep.subr.bf16.mxu0 0
    %6902 = vmatpush1.bf16.msra.mxu0 %v6797
    %6903 = vmatprep.subr.bf16.mxu0 0
    %6904 = vmatpush1.bf16.msra.mxu0 %v6796
    %6905 = vmatprep.subr.bf16.mxu0 0
    %6906 = vmatpush1.bf16.msra.mxu0 %v6795
    %6907 = vmatprep.subr.bf16.mxu0 0
    %6908 = vmatpush2.bf16.msra.mxu0 %v6810
    %6909 = vmatprep.subr.bf16.mxu0 0
    %6910 = vmatpush2.bf16.msra.mxu0 %v6809
    %6911 = vmatprep.subr.bf16.mxu0 0
    %6912 = vmatpush2.bf16.msra.mxu0 %v6808
    %6913 = vmatprep.subr.bf16.mxu0 0
    %6914 = vmatpush2.bf16.msra.mxu0 %v6807
    %6915 = vmatprep.subr.bf16.mxu0 0
    %6916 = vmatpush2.bf16.msra.mxu0 %v6806
    %6917 = vmatprep.subr.bf16.mxu0 0
    %6918 = vmatpush2.bf16.msra.mxu0 %v6805
    %6919 = vmatprep.subr.bf16.mxu0 0
    %6920 = vmatpush2.bf16.msra.mxu0 %v6804
    %6921 = vmatprep.subr.bf16.mxu0 0
    %6922 = vmatpush2.bf16.msra.mxu0 %v6803
    %6923 = vmatprep.mubr.bf16.mxu0 %v6170
    %6924 = vmatmul.mubr.bf16.gmra.mxu0 %v6169
    %v6925 = vpop.f32.mrf.mxu0
    %v6926 = vadd.f32 0.0, %v6925
    %v6927 = vpop.f32.mrf.mxu0
    %v6928 = vpop.f32.mrf.mxu0
    %v6929 = vadd.f32 0.0, %v6928
    %v6930 = vpop.f32.mrf.mxu0
    %6931 = vmatprep.mubr.bf16.mxu0 %v6222
    %6932 = vmatmul.mubr.bf16.gmra.mxu0 %v6221
    %v6933 = vpop.f32.mrf.mxu0
    %v6934 = vadd.f32 0.0, %v6933
    %v6935 = vpop.f32.mrf.mxu0
    %v6936 = vpop.f32.mrf.mxu0
    %v6937 = vadd.f32 0.0, %v6936
    %v6938 = vpop.f32.mrf.mxu0
    %6939 = vmatprep.mubr.bf16.mxu0 %v6274
    %6940 = vmatmul.mubr.bf16.gmra.mxu0 %v6273
    %v6941 = vpop.f32.mrf.mxu0
    %v6942 = vadd.f32 0.0, %v6941
    %v6943 = vpop.f32.mrf.mxu0
    %v6944 = vpop.f32.mrf.mxu0
    %v6945 = vadd.f32 0.0, %v6944
    %v6946 = vpop.f32.mrf.mxu0
    %6947 = vmatprep.mubr.bf16.mxu0 %v6326
    %6948 = vmatmul.mubr.bf16.gmra.mxu0 %v6325
    %v6949 = vpop.f32.mrf.mxu0
    %v6950 = vadd.f32 0.0, %v6949
    %v6951 = vpop.f32.mrf.mxu0
    %v6952 = vpop.f32.mrf.mxu0
    %v6953 = vadd.f32 0.0, %v6952
    %v6954 = vpop.f32.mrf.mxu0
    %6955 = vmatprep.mubr.bf16.mxu0 %v6379
    %6956 = vmatmul.mubr.bf16.gmra.mxu0 %v6378
    %v6957 = vpop.f32.mrf.mxu0
    %v6958 = vadd.f32 0.0, %v6957
    %v6959 = vpop.f32.mrf.mxu0
    %v6960 = vpop.f32.mrf.mxu0
    %v6961 = vadd.f32 0.0, %v6960
    %v6962 = vpop.f32.mrf.mxu0
    %6963 = vmatprep.mubr.bf16.mxu0 %v6431
    %6964 = vmatmul.mubr.bf16.gmra.mxu0 %v6430
    %v6965 = vpop.f32.mrf.mxu0
    %v6966 = vadd.f32 0.0, %v6965
    %v6967 = vpop.f32.mrf.mxu0
    %v6968 = vpop.f32.mrf.mxu0
    %v6969 = vadd.f32 0.0, %v6968
    %v6970 = vpop.f32.mrf.mxu0
    %6971 = vmatprep.mubr.bf16.mxu0 %v6483
    %6972 = vmatmul.mubr.bf16.gmra.mxu0 %v6482
    %v6973 = vpop.f32.mrf.mxu0
    %v6974 = vadd.f32 0.0, %v6973
    %v6975 = vpop.f32.mrf.mxu0
    %v6976 = vpop.f32.mrf.mxu0
    %v6977 = vadd.f32 0.0, %v6976
    %v6978 = vpop.f32.mrf.mxu0
    %6979 = vmatprep.mubr.bf16.mxu0 %v6535
    %6980 = vmatmul.mubr.bf16.gmra.mxu0 %v6534
    %v6981 = vpop.f32.mrf.mxu0
    %v6982 = vadd.f32 0.0, %v6981
    %v6983 = vpop.f32.mrf.mxu0
    %v6984 = vpop.f32.mrf.mxu0
    %v6985 = vadd.f32 0.0, %v6984
    %v6986 = vpop.f32.mrf.mxu0
    %6987 = vdwg.mxu0
    %6988 = vmatprep.subr.bf16.mxu0 0
    %6989 = vmatpush1.bf16.msra.mxu0 %v6818
    %6990 = vmatprep.subr.bf16.mxu0 0
    %6991 = vmatpush1.bf16.msra.mxu0 %v6817
    %6992 = vmatprep.subr.bf16.mxu0 0
    %6993 = vmatpush1.bf16.msra.mxu0 %v6816
    %6994 = vmatprep.subr.bf16.mxu0 0
    %6995 = vmatpush1.bf16.msra.mxu0 %v6815
    %6996 = vmatprep.subr.bf16.mxu0 0
    %6997 = vmatpush1.bf16.msra.mxu0 %v6814
    %6998 = vmatprep.subr.bf16.mxu0 0
    %6999 = vmatpush1.bf16.msra.mxu0 %v6813
    %7000 = vmatprep.subr.bf16.mxu0 0
    %7001 = vmatpush1.bf16.msra.mxu0 %v6812
    %7002 = vmatprep.subr.bf16.mxu0 0
    %7003 = vmatpush1.bf16.msra.mxu0 %v6811
    %7004 = vmatprep.subr.bf16.mxu0 0
    %7005 = vmatpush2.bf16.msra.mxu0 %v6826
    %7006 = vmatprep.subr.bf16.mxu0 0
    %7007 = vmatpush2.bf16.msra.mxu0 %v6825
    %7008 = vmatprep.subr.bf16.mxu0 0
    %7009 = vmatpush2.bf16.msra.mxu0 %v6824
    %7010 = vmatprep.subr.bf16.mxu0 0
    %7011 = vmatpush2.bf16.msra.mxu0 %v6823
    %7012 = vmatprep.subr.bf16.mxu0 0
    %7013 = vmatpush2.bf16.msra.mxu0 %v6822
    %7014 = vmatprep.subr.bf16.mxu0 0
    %7015 = vmatpush2.bf16.msra.mxu0 %v6821
    %7016 = vmatprep.subr.bf16.mxu0 0
    %7017 = vmatpush2.bf16.msra.mxu0 %v6820
    %7018 = vmatprep.subr.bf16.mxu0 0
    %7019 = vmatpush2.bf16.msra.mxu0 %v6819
    %7020 = vmatprep.mubr.bf16.mxu0 %v6172
    %7021 = vmatmul.mubr.bf16.gmra.mxu0 %v6171
    %v7022 = vpop.f32.mrf.mxu0
    %v7023 = vadd.f32 %v6926, %v7022
    %v7024 = vpop.f32.mrf.mxu0
    %v7025 = vpop.f32.mrf.mxu0
    %v7026 = vadd.f32 %v6929, %v7025
    %v7027 = vpop.f32.mrf.mxu0
    %7028 = vmatprep.mubr.bf16.mxu0 %v6224
    %7029 = vmatmul.mubr.bf16.gmra.mxu0 %v6223
    %v7030 = vpop.f32.mrf.mxu0
    %v7031 = vadd.f32 %v6934, %v7030
    %v7032 = vpop.f32.mrf.mxu0
    %v7033 = vpop.f32.mrf.mxu0
    %v7034 = vadd.f32 %v6937, %v7033
    %v7035 = vpop.f32.mrf.mxu0
    %7036 = vmatprep.mubr.bf16.mxu0 %v6276
    %7037 = vmatmul.mubr.bf16.gmra.mxu0 %v6275
    %v7038 = vpop.f32.mrf.mxu0
    %v7039 = vadd.f32 %v6942, %v7038
    %v7040 = vpop.f32.mrf.mxu0
    %v7041 = vpop.f32.mrf.mxu0
    %v7042 = vadd.f32 %v6945, %v7041
    %v7043 = vpop.f32.mrf.mxu0
    %7044 = vmatprep.mubr.bf16.mxu0 %v6328
    %7045 = vmatmul.mubr.bf16.gmra.mxu0 %v6327
    %v7046 = vpop.f32.mrf.mxu0
    %v7047 = vadd.f32 %v6950, %v7046
    %v7048 = vpop.f32.mrf.mxu0
    %v7049 = vpop.f32.mrf.mxu0
    %v7050 = vadd.f32 %v6953, %v7049
    %v7051 = vpop.f32.mrf.mxu0
    %7052 = vmatprep.mubr.bf16.mxu0 %v6381
    %7053 = vmatmul.mubr.bf16.gmra.mxu0 %v6380
    %v7054 = vpop.f32.mrf.mxu0
    %v7055 = vadd.f32 %v6958, %v7054
    %v7056 = vpop.f32.mrf.mxu0
    %v7057 = vpop.f32.mrf.mxu0
    %v7058 = vadd.f32 %v6961, %v7057
    %v7059 = vpop.f32.mrf.mxu0
    %7060 = vmatprep.mubr.bf16.mxu0 %v6433
    %7061 = vmatmul.mubr.bf16.gmra.mxu0 %v6432
    %v7062 = vpop.f32.mrf.mxu0
    %v7063 = vadd.f32 %v6966, %v7062
    %v7064 = vpop.f32.mrf.mxu0
    %v7065 = vpop.f32.mrf.mxu0
    %v7066 = vadd.f32 %v6969, %v7065
    %v7067 = vpop.f32.mrf.mxu0
    %7068 = vmatprep.mubr.bf16.mxu0 %v6485
    %7069 = vmatmul.mubr.bf16.gmra.mxu0 %v6484
    %v7070 = vpop.f32.mrf.mxu0
    %v7071 = vadd.f32 %v6974, %v7070
    %v7072 = vpop.f32.mrf.mxu0
    %v7073 = vpop.f32.mrf.mxu0
    %v7074 = vadd.f32 %v6977, %v7073
    %v7075 = vpop.f32.mrf.mxu0
    %7076 = vmatprep.mubr.bf16.mxu0 %v6537
    %7077 = vmatmul.mubr.bf16.gmra.mxu0 %v6536
    %v7078 = vpop.f32.mrf.mxu0
    %v7079 = vadd.f32 %v6982, %v7078
    %v7080 = vpop.f32.mrf.mxu0
    %v7081 = vpop.f32.mrf.mxu0
    %v7082 = vadd.f32 %v6985, %v7081
    %v7083 = vpop.f32.mrf.mxu0
    %7084 = vdwg.mxu0
    %7085 = vmatprep.subr.bf16.mxu0 0
    %7086 = vmatpush1.bf16.msra.mxu0 %v6834
    %7087 = vmatprep.subr.bf16.mxu0 0
    %7088 = vmatpush1.bf16.msra.mxu0 %v6833
    %7089 = vmatprep.subr.bf16.mxu0 0
    %7090 = vmatpush1.bf16.msra.mxu0 %v6832
    %7091 = vmatprep.subr.bf16.mxu0 0
    %7092 = vmatpush1.bf16.msra.mxu0 %v6831
    %7093 = vmatprep.subr.bf16.mxu0 0
    %7094 = vmatpush1.bf16.msra.mxu0 %v6830
    %7095 = vmatprep.subr.bf16.mxu0 0
    %7096 = vmatpush1.bf16.msra.mxu0 %v6829
    %7097 = vmatprep.subr.bf16.mxu0 0
    %7098 = vmatpush1.bf16.msra.mxu0 %v6828
    %7099 = vmatprep.subr.bf16.mxu0 0
    %7100 = vmatpush1.bf16.msra.mxu0 %v6827
    %7101 = vmatprep.subr.bf16.mxu0 0
    %7102 = vmatpush2.bf16.msra.mxu0 %v6842
    %7103 = vmatprep.subr.bf16.mxu0 0
    %7104 = vmatpush2.bf16.msra.mxu0 %v6841
    %7105 = vmatprep.subr.bf16.mxu0 0
    %7106 = vmatpush2.bf16.msra.mxu0 %v6840
    %7107 = vmatprep.subr.bf16.mxu0 0
    %7108 = vmatpush2.bf16.msra.mxu0 %v6839
    %7109 = vmatprep.subr.bf16.mxu0 0
    %7110 = vmatpush2.bf16.msra.mxu0 %v6838
    %7111 = vmatprep.subr.bf16.mxu0 0
    %7112 = vmatpush2.bf16.msra.mxu0 %v6837
    %7113 = vmatprep.subr.bf16.mxu0 0
    %7114 = vmatpush2.bf16.msra.mxu0 %v6836
    %7115 = vmatprep.subr.bf16.mxu0 0
    %7116 = vmatpush2.bf16.msra.mxu0 %v6835
    %7117 = vmatprep.mubr.bf16.mxu0 %v6188
    %7118 = vmatmul.mubr.bf16.gmra.mxu0 %v6187
    %v7119 = vpop.f32.mrf.mxu0
    %v7120 = vadd.f32 %v7023, %v7119
    %v7121 = vpop.f32.mrf.mxu0
    %v7122 = vpop.f32.mrf.mxu0
    %v7123 = vadd.f32 %v7026, %v7122
    %v7124 = vpop.f32.mrf.mxu0
    %7125 = vmatprep.mubr.bf16.mxu0 %v6240
    %7126 = vmatmul.mubr.bf16.gmra.mxu0 %v6239
    %v7127 = vpop.f32.mrf.mxu0
    %v7128 = vadd.f32 %v7031, %v7127
    %v7129 = vpop.f32.mrf.mxu0
    %v7130 = vpop.f32.mrf.mxu0
    %v7131 = vadd.f32 %v7034, %v7130
    %v7132 = vpop.f32.mrf.mxu0
    %7133 = vmatprep.mubr.bf16.mxu0 %v6292
    %7134 = vmatmul.mubr.bf16.gmra.mxu0 %v6291
    %v7135 = vpop.f32.mrf.mxu0
    %v7136 = vadd.f32 %v7039, %v7135
    %v7137 = vpop.f32.mrf.mxu0
    %v7138 = vpop.f32.mrf.mxu0
    %v7139 = vadd.f32 %v7042, %v7138
    %v7140 = vpop.f32.mrf.mxu0
    %7141 = vmatprep.mubr.bf16.mxu0 %v6345
    %7142 = vmatmul.mubr.bf16.gmra.mxu0 %v6344
    %v7143 = vpop.f32.mrf.mxu0
    %v7144 = vadd.f32 %v7047, %v7143
    %v7145 = vpop.f32.mrf.mxu0
    %v7146 = vpop.f32.mrf.mxu0
    %v7147 = vadd.f32 %v7050, %v7146
    %v7148 = vpop.f32.mrf.mxu0
    %7149 = vmatprep.mubr.bf16.mxu0 %v6397
    %7150 = vmatmul.mubr.bf16.gmra.mxu0 %v6396
    %v7151 = vpop.f32.mrf.mxu0
    %v7152 = vadd.f32 %v7055, %v7151
    %v7153 = vpop.f32.mrf.mxu0
    %v7154 = vpop.f32.mrf.mxu0
    %v7155 = vadd.f32 %v7058, %v7154
    %v7156 = vpop.f32.mrf.mxu0
    %7157 = vmatprep.mubr.bf16.mxu0 %v6449
    %7158 = vmatmul.mubr.bf16.gmra.mxu0 %v6448
    %v7159 = vpop.f32.mrf.mxu0
    %v7160 = vadd.f32 %v7063, %v7159
    %v7161 = vpop.f32.mrf.mxu0
    %v7162 = vpop.f32.mrf.mxu0
    %v7163 = vadd.f32 %v7066, %v7162
    %v7164 = vpop.f32.mrf.mxu0
    %7165 = vmatprep.mubr.bf16.mxu0 %v6501
    %7166 = vmatmul.mubr.bf16.gmra.mxu0 %v6500
    %v7167 = vpop.f32.mrf.mxu0
    %v7168 = vadd.f32 %v7071, %v7167
    %v7169 = vpop.f32.mrf.mxu0
    %v7170 = vpop.f32.mrf.mxu0
    %v7171 = vadd.f32 %v7074, %v7170
    %v7172 = vpop.f32.mrf.mxu0
    %7173 = vmatprep.mubr.bf16.mxu0 %v6554
    %7174 = vmatmul.mubr.bf16.gmra.mxu0 %v6553
    %v7175 = vpop.f32.mrf.mxu0
    %v7176 = vadd.f32 %v7079, %v7175
    %v7177 = vpop.f32.mrf.mxu0
    %v7178 = vpop.f32.mrf.mxu0
    %v7179 = vadd.f32 %v7082, %v7178
    %v7180 = vpop.f32.mrf.mxu0
    %7181 = vdwg.mxu0
    %v7182 = vld [vmem:[%s9] sm:$0x1]
    %v7183 = vld [vmem:[%s10] sm:$0x1]
    %vm7184 = vcmask 523264
    %v7185 = vsel %vm7184, %v4838, 0.0
    %v7186 = vsel %vm7184, %v4841, 0.0
    %v7187 = vadd.f32 %v7185, %v7186
    %v7188 = vsel %vm7184, %v4846, 0.0
    %v7189 = vadd.f32 %v7187, %v7188
    %v7190 = vsel %vm7184, %v4849, 0.0
    %v7191 = vadd.f32 %v7189, %v7190
    %v7192 = vsel %vm7184, %v4854, 0.0
    %v7193 = vadd.f32 %v7191, %v7192
    %v7194 = vsel %vm7184, %v4857, 0.0
    %v7195 = vadd.f32 %v7193, %v7194
    %v7196 = vsel %vm7184, %v4862, 0.0
    %v7197 = vadd.f32 %v7195, %v7196
    %v7198 = vsel %vm7184, %v4865, 0.0
    %v7199 = vadd.f32 %v7197, %v7198
    %v7200 = vsel %vm7184, %v4870, 0.0
    %v7201 = vadd.f32 %v7199, %v7200
    %v7202 = vsel %vm7184, %v4873, 0.0
    %v7203 = vadd.f32 %v7201, %v7202
    %v7204 = vsel %vm7184, %v4878, 0.0
    %v7205 = vadd.f32 %v7203, %v7204
    %v7206 = vsel %vm7184, %v4881, 0.0
    %v7207 = vadd.f32 %v7205, %v7206
    %v7208 = vsel %vm7184, %v4886, 0.0
    %v7209 = vadd.f32 %v7207, %v7208
    %v7210 = vsel %vm7184, %v4889, 0.0
    %v7211 = vadd.f32 %v7209, %v7210
    %v7212 = vsel %vm7184, %v4894, 0.0
    %v7213 = vadd.f32 %v7211, %v7212
    %v7214 = vsel %vm7184, %v4897, 0.0
    %v7215 = vadd.f32 %v7213, %v7214
    %v7216 = vrot.slane %v7215, 4
    %v7217 = vadd.f32 %v7215, %v7216
    %v7218 = vrot.slane %v7217, 2
    %v7219 = vadd.f32 %v7217, %v7218
    %v7220 = vrot.slane %v7219, 1
    %v7221 = vadd.f32 %v7219, %v7220
    %v7222 = vmul.f32 %v4838, %v4838
    %v7223 = vmul.f32 %v4841, %v4841
    %v7224 = vmul.f32 %v4846, %v4846
    %v7225 = vmul.f32 %v4849, %v4849
    %v7226 = vmul.f32 %v4854, %v4854
    %v7227 = vmul.f32 %v4857, %v4857
    %v7228 = vmul.f32 %v4862, %v4862
    %v7229 = vmul.f32 %v4865, %v4865
    %v7230 = vmul.f32 %v4870, %v4870
    %v7231 = vmul.f32 %v4873, %v4873
    %v7232 = vmul.f32 %v4878, %v4878
    %v7233 = vmul.f32 %v4881, %v4881
    %v7234 = vmul.f32 %v4886, %v4886
    %v7235 = vmul.f32 %v4889, %v4889
    %v7236 = vmul.f32 %v4894, %v4894
    %v7237 = vmul.f32 %v4897, %v4897
    %v7238 = vsel %vm7184, %v7222, 0.0
    %v7239 = vsel %vm7184, %v7223, 0.0
    %v7240 = vadd.f32 %v7238, %v7239
    %v7241 = vsel %vm7184, %v7224, 0.0
    %v7242 = vadd.f32 %v7240, %v7241
    %v7243 = vsel %vm7184, %v7225, 0.0
    %v7244 = vadd.f32 %v7242, %v7243
    %v7245 = vsel %vm7184, %v7226, 0.0
    %v7246 = vadd.f32 %v7244, %v7245
    %v7247 = vsel %vm7184, %v7227, 0.0
    %v7248 = vadd.f32 %v7246, %v7247
    %v7249 = vsel %vm7184, %v7228, 0.0
    %v7250 = vadd.f32 %v7248, %v7249
    %v7251 = vsel %vm7184, %v7229, 0.0
    %v7252 = vadd.f32 %v7250, %v7251
    %v7253 = vsel %vm7184, %v7230, 0.0
    %v7254 = vadd.f32 %v7252, %v7253
    %v7255 = vsel %vm7184, %v7231, 0.0
    %v7256 = vadd.f32 %v7254, %v7255
    %v7257 = vsel %vm7184, %v7232, 0.0
    %v7258 = vadd.f32 %v7256, %v7257
    %v7259 = vsel %vm7184, %v7233, 0.0
    %v7260 = vadd.f32 %v7258, %v7259
    %v7261 = vsel %vm7184, %v7234, 0.0
    %v7262 = vadd.f32 %v7260, %v7261
    %v7263 = vsel %vm7184, %v7235, 0.0
    %v7264 = vadd.f32 %v7262, %v7263
    %v7265 = vsel %vm7184, %v7236, 0.0
    %v7266 = vadd.f32 %v7264, %v7265
    %v7267 = vsel %vm7184, %v7237, 0.0
    %v7268 = vadd.f32 %v7266, %v7267
    %v7269 = vrot.slane %v7268, 4
    %v7270 = vadd.f32 %v7268, %v7269
    %v7271 = vrot.slane %v7270, 2
    %v7272 = vadd.f32 %v7270, %v7271
    %v7273 = vrot.slane %v7272, 1
    %v7274 = vadd.f32 %v7272, %v7273
    %v7275 = vsel %vm7184, %v5979, 0.0
    %v7276 = vsel %vm7184, %v5982, 0.0
    %v7277 = vadd.f32 %v7275, %v7276
    %v7278 = vsel %vm7184, %v5987, 0.0
    %v7279 = vadd.f32 %v7277, %v7278
    %v7280 = vsel %vm7184, %v5990, 0.0
    %v7281 = vadd.f32 %v7279, %v7280
    %v7282 = vsel %vm7184, %v5995, 0.0
    %v7283 = vadd.f32 %v7281, %v7282
    %v7284 = vsel %vm7184, %v5998, 0.0
    %v7285 = vadd.f32 %v7283, %v7284
    %v7286 = vsel %vm7184, %v6003, 0.0
    %v7287 = vadd.f32 %v7285, %v7286
    %v7288 = vsel %vm7184, %v6006, 0.0
    %v7289 = vadd.f32 %v7287, %v7288
    %v7290 = vsel %vm7184, %v6011, 0.0
    %v7291 = vadd.f32 %v7289, %v7290
    %v7292 = vsel %vm7184, %v6014, 0.0
    %v7293 = vadd.f32 %v7291, %v7292
    %v7294 = vsel %vm7184, %v6019, 0.0
    %v7295 = vadd.f32 %v7293, %v7294
    %v7296 = vsel %vm7184, %v6022, 0.0
    %v7297 = vadd.f32 %v7295, %v7296
    %v7298 = vsel %vm7184, %v6027, 0.0
    %v7299 = vadd.f32 %v7297, %v7298
    %v7300 = vsel %vm7184, %v6030, 0.0
    %v7301 = vadd.f32 %v7299, %v7300
    %v7302 = vsel %vm7184, %v6035, 0.0
    %v7303 = vadd.f32 %v7301, %v7302
    %v7304 = vsel %vm7184, %v6038, 0.0
    %v7305 = vadd.f32 %v7303, %v7304
    %v7306 = vrot.slane %v7305, 4
    %v7307 = vadd.f32 %v7305, %v7306
    %v7308 = vrot.slane %v7307, 2
    %v7309 = vadd.f32 %v7307, %v7308
    %v7310 = vrot.slane %v7309, 1
    %v7311 = vadd.f32 %v7309, %v7310
    %v7312 = vadd.f32 %v7221, %v7311
    %v7313 = vmul.f32 %v5979, %v5979
    %v7314 = vmul.f32 %v5982, %v5982
    %v7315 = vmul.f32 %v5987, %v5987
    %v7316 = vmul.f32 %v5990, %v5990
    %v7317 = vmul.f32 %v5995, %v5995
    %v7318 = vmul.f32 %v5998, %v5998
    %v7319 = vmul.f32 %v6003, %v6003
    %v7320 = vmul.f32 %v6006, %v6006
    %v7321 = vmul.f32 %v6011, %v6011
    %v7322 = vmul.f32 %v6014, %v6014
    %v7323 = vmul.f32 %v6019, %v6019
    %v7324 = vmul.f32 %v6022, %v6022
    %v7325 = vmul.f32 %v6027, %v6027
    %v7326 = vmul.f32 %v6030, %v6030
    %v7327 = vmul.f32 %v6035, %v6035
    %v7328 = vmul.f32 %v6038, %v6038
    %v7329 = vsel %vm7184, %v7313, 0.0
    %v7330 = vsel %vm7184, %v7314, 0.0
    %v7331 = vadd.f32 %v7329, %v7330
    %v7332 = vsel %vm7184, %v7315, 0.0
    %v7333 = vadd.f32 %v7331, %v7332
    %v7334 = vsel %vm7184, %v7316, 0.0
    %v7335 = vadd.f32 %v7333, %v7334
    %v7336 = vsel %vm7184, %v7317, 0.0
    %v7337 = vadd.f32 %v7335, %v7336
    %v7338 = vsel %vm7184, %v7318, 0.0
    %v7339 = vadd.f32 %v7337, %v7338
    %v7340 = vsel %vm7184, %v7319, 0.0
    %v7341 = vadd.f32 %v7339, %v7340
    %v7342 = vsel %vm7184, %v7320, 0.0
    %v7343 = vadd.f32 %v7341, %v7342
    %v7344 = vsel %vm7184, %v7321, 0.0
    %v7345 = vadd.f32 %v7343, %v7344
    %v7346 = vsel %vm7184, %v7322, 0.0
    %v7347 = vadd.f32 %v7345, %v7346
    %v7348 = vsel %vm7184, %v7323, 0.0
    %v7349 = vadd.f32 %v7347, %v7348
    %v7350 = vsel %vm7184, %v7324, 0.0
    %v7351 = vadd.f32 %v7349, %v7350
    %v7352 = vsel %vm7184, %v7325, 0.0
    %v7353 = vadd.f32 %v7351, %v7352
    %v7354 = vsel %vm7184, %v7326, 0.0
    %v7355 = vadd.f32 %v7353, %v7354
    %v7356 = vsel %vm7184, %v7327, 0.0
    %v7357 = vadd.f32 %v7355, %v7356
    %v7358 = vsel %vm7184, %v7328, 0.0
    %v7359 = vadd.f32 %v7357, %v7358
    %v7360 = vrot.slane %v7359, 4
    %v7361 = vadd.f32 %v7359, %v7360
    %v7362 = vrot.slane %v7361, 2
    %v7363 = vadd.f32 %v7361, %v7362
    %v7364 = vrot.slane %v7363, 1
    %v7365 = vadd.f32 %v7363, %v7364
    %v7366 = vadd.f32 %v7274, %v7365
    %vm7367 = vcmask 1048064
    %v7368 = vsel %vm7367, %v5979, 0.0
    %v7369 = vsel %vm7367, %v5982, 0.0
    %v7370 = vadd.f32 %v7368, %v7369
    %v7371 = vsel %vm7367, %v5987, 0.0
    %v7372 = vadd.f32 %v7370, %v7371
    %v7373 = vsel %vm7367, %v5990, 0.0
    %v7374 = vadd.f32 %v7372, %v7373
    %v7375 = vsel %vm7367, %v5995, 0.0
    %v7376 = vadd.f32 %v7374, %v7375
    %v7377 = vsel %vm7367, %v5998, 0.0
    %v7378 = vadd.f32 %v7376, %v7377
    %v7379 = vsel %vm7367, %v6003, 0.0
    %v7380 = vadd.f32 %v7378, %v7379
    %v7381 = vsel %vm7367, %v6006, 0.0
    %v7382 = vadd.f32 %v7380, %v7381
    %v7383 = vsel %vm7367, %v6011, 0.0
    %v7384 = vadd.f32 %v7382, %v7383
    %v7385 = vsel %vm7367, %v6014, 0.0
    %v7386 = vadd.f32 %v7384, %v7385
    %v7387 = vsel %vm7367, %v6019, 0.0
    %v7388 = vadd.f32 %v7386, %v7387
    %v7389 = vsel %vm7367, %v6022, 0.0
    %v7390 = vadd.f32 %v7388, %v7389
    %v7391 = vsel %vm7367, %v6027, 0.0
    %v7392 = vadd.f32 %v7390, %v7391
    %v7393 = vsel %vm7367, %v6030, 0.0
    %v7394 = vadd.f32 %v7392, %v7393
    %v7395 = vsel %vm7367, %v6035, 0.0
    %v7396 = vadd.f32 %v7394, %v7395
    %v7397 = vsel %vm7367, %v6038, 0.0
    %v7398 = vadd.f32 %v7396, %v7397
    %v7399 = vrot.slane %v7398, 4
    %v7400 = vadd.f32 %v7398, %v7399
    %v7401 = vrot.slane %v7400, 2
    %v7402 = vadd.f32 %v7400, %v7401
    %v7403 = vrot.slane %v7402, 1
    %v7404 = vadd.f32 %v7402, %v7403
    %7406 = vrot.lane.b32.xlu0 %v7404, 64
    %v7407 = vpop.permute.xlu0 %7406
    %v7409 = vadd.f32 %v7312, %v7407
    %v7410 = vsel %vm7367, %v7313, 0.0
    %v7411 = vsel %vm7367, %v7314, 0.0
    %v7412 = vadd.f32 %v7410, %v7411
    %v7413 = vsel %vm7367, %v7315, 0.0
    %v7414 = vadd.f32 %v7412, %v7413
    %v7415 = vsel %vm7367, %v7316, 0.0
    %v7416 = vadd.f32 %v7414, %v7415
    %v7417 = vsel %vm7367, %v7317, 0.0
    %v7418 = vadd.f32 %v7416, %v7417
    %v7419 = vsel %vm7367, %v7318, 0.0
    %v7420 = vadd.f32 %v7418, %v7419
    %v7421 = vsel %vm7367, %v7319, 0.0
    %v7422 = vadd.f32 %v7420, %v7421
    %v7423 = vsel %vm7367, %v7320, 0.0
    %v7424 = vadd.f32 %v7422, %v7423
    %v7425 = vsel %vm7367, %v7321, 0.0
    %v7426 = vadd.f32 %v7424, %v7425
    %v7427 = vsel %vm7367, %v7322, 0.0
    %v7428 = vadd.f32 %v7426, %v7427
    %v7429 = vsel %vm7367, %v7323, 0.0
    %v7430 = vadd.f32 %v7428, %v7429
    %v7431 = vsel %vm7367, %v7324, 0.0
    %v7432 = vadd.f32 %v7430, %v7431
    %v7433 = vsel %vm7367, %v7325, 0.0
    %v7434 = vadd.f32 %v7432, %v7433
    %v7435 = vsel %vm7367, %v7326, 0.0
    %v7436 = vadd.f32 %v7434, %v7435
    %v7437 = vsel %vm7367, %v7327, 0.0
    %v7438 = vadd.f32 %v7436, %v7437
    %v7439 = vsel %vm7367, %v7328, 0.0
    %v7440 = vadd.f32 %v7438, %v7439
    %v7441 = vrot.slane %v7440, 4
    %v7442 = vadd.f32 %v7440, %v7441
    %v7443 = vrot.slane %v7442, 2
    %v7444 = vadd.f32 %v7442, %v7443
    %v7445 = vrot.slane %v7444, 1
    %v7446 = vadd.f32 %v7444, %v7445
    %7448 = vrot.lane.b32.xlu0 %v7446, 64
    %v7449 = vpop.permute.xlu0 %7448
    %v7451 = vadd.f32 %v7366, %v7449
    %v7452 = vsel %vm7184, %v7120, 0.0
    %v7453 = vsel %vm7184, %v7123, 0.0
    %v7454 = vadd.f32 %v7452, %v7453
    %v7455 = vsel %vm7184, %v7128, 0.0
    %v7456 = vadd.f32 %v7454, %v7455
    %v7457 = vsel %vm7184, %v7131, 0.0
    %v7458 = vadd.f32 %v7456, %v7457
    %v7459 = vsel %vm7184, %v7136, 0.0
    %v7460 = vadd.f32 %v7458, %v7459
    %v7461 = vsel %vm7184, %v7139, 0.0
    %v7462 = vadd.f32 %v7460, %v7461
    %v7463 = vsel %vm7184, %v7144, 0.0
    %v7464 = vadd.f32 %v7462, %v7463
    %v7465 = vsel %vm7184, %v7147, 0.0
    %v7466 = vadd.f32 %v7464, %v7465
    %v7467 = vsel %vm7184, %v7152, 0.0
    %v7468 = vadd.f32 %v7466, %v7467
    %v7469 = vsel %vm7184, %v7155, 0.0
    %v7470 = vadd.f32 %v7468, %v7469
    %v7471 = vsel %vm7184, %v7160, 0.0
    %v7472 = vadd.f32 %v7470, %v7471
    %v7473 = vsel %vm7184, %v7163, 0.0
    %v7474 = vadd.f32 %v7472, %v7473
    %v7475 = vsel %vm7184, %v7168, 0.0
    %v7476 = vadd.f32 %v7474, %v7475
    %v7477 = vsel %vm7184, %v7171, 0.0
    %v7478 = vadd.f32 %v7476, %v7477
    %v7479 = vsel %vm7184, %v7176, 0.0
    %v7480 = vadd.f32 %v7478, %v7479
    %v7481 = vsel %vm7184, %v7179, 0.0
    %v7482 = vadd.f32 %v7480, %v7481
    %v7483 = vrot.slane %v7482, 4
    %v7484 = vadd.f32 %v7482, %v7483
    %v7485 = vrot.slane %v7484, 2
    %v7486 = vadd.f32 %v7484, %v7485
    %v7487 = vrot.slane %v7486, 1
    %v7488 = vadd.f32 %v7486, %v7487
    %v7489 = vadd.f32 %v7409, %v7488
    %v7490 = vmul.f32 %v7120, %v7120
    %v7491 = vmul.f32 %v7123, %v7123
    %v7492 = vmul.f32 %v7128, %v7128
    %v7493 = vmul.f32 %v7131, %v7131
    %v7494 = vmul.f32 %v7136, %v7136
    %v7495 = vmul.f32 %v7139, %v7139
    %v7496 = vmul.f32 %v7144, %v7144
    %v7497 = vmul.f32 %v7147, %v7147
    %v7498 = vmul.f32 %v7152, %v7152
    %v7499 = vmul.f32 %v7155, %v7155
    %v7500 = vmul.f32 %v7160, %v7160
    %v7501 = vmul.f32 %v7163, %v7163
    %v7502 = vmul.f32 %v7168, %v7168
    %v7503 = vmul.f32 %v7171, %v7171
    %v7504 = vmul.f32 %v7176, %v7176
    %v7505 = vmul.f32 %v7179, %v7179
    %v7506 = vsel %vm7184, %v7490, 0.0
    %v7507 = vsel %vm7184, %v7491, 0.0
    %v7508 = vadd.f32 %v7506, %v7507
    %v7509 = vsel %vm7184, %v7492, 0.0
    %v7510 = vadd.f32 %v7508, %v7509
    %v7511 = vsel %vm7184, %v7493, 0.0
    %v7512 = vadd.f32 %v7510, %v7511
    %v7513 = vsel %vm7184, %v7494, 0.0
    %v7514 = vadd.f32 %v7512, %v7513
    %v7515 = vsel %vm7184, %v7495, 0.0
    %v7516 = vadd.f32 %v7514, %v7515
    %v7517 = vsel %vm7184, %v7496, 0.0
    %v7518 = vadd.f32 %v7516, %v7517
    %v7519 = vsel %vm7184, %v7497, 0.0
    %v7520 = vadd.f32 %v7518, %v7519
    %v7521 = vsel %vm7184, %v7498, 0.0
    %v7522 = vadd.f32 %v7520, %v7521
    %v7523 = vsel %vm7184, %v7499, 0.0
    %v7524 = vadd.f32 %v7522, %v7523
    %v7525 = vsel %vm7184, %v7500, 0.0
    %v7526 = vadd.f32 %v7524, %v7525
    %v7527 = vsel %vm7184, %v7501, 0.0
    %v7528 = vadd.f32 %v7526, %v7527
    %v7529 = vsel %vm7184, %v7502, 0.0
    %v7530 = vadd.f32 %v7528, %v7529
    %v7531 = vsel %vm7184, %v7503, 0.0
    %v7532 = vadd.f32 %v7530, %v7531
    %v7533 = vsel %vm7184, %v7504, 0.0
    %v7534 = vadd.f32 %v7532, %v7533
    %v7535 = vsel %vm7184, %v7505, 0.0
    %v7536 = vadd.f32 %v7534, %v7535
    %v7537 = vrot.slane %v7536, 4
    %v7538 = vadd.f32 %v7536, %v7537
    %v7539 = vrot.slane %v7538, 2
    %v7540 = vadd.f32 %v7538, %v7539
    %v7541 = vrot.slane %v7540, 1
    %v7542 = vadd.f32 %v7540, %v7541
    %v7543 = vadd.f32 %v7451, %v7542
    %v7544 = vmul.f32 %v7489, 0.001953125
    %v7545 = vmul.f32 %v7543, 0.001953125
    %v7546 = vmul.f32 %v7544, %v7544
    %v7547 = vsub.f32 %v7545, %v7546
    %v7548 = vadd.f32 %v7547, 0.8
    %v7549 = vrsqrt.pop %v7548
    %v7550 = vmul.f32 %v7549, %v7182
    %v7551 = vmul.f32 %v7544, %v7550
    %v7552 = vsub.f32 %v7183, %v7551
    %v7553 = vlaneseq
    %v7554 = vshrl.u32 %v7553, 7
    %v7555 = vsub.s32 0, %v7554
    %v7556 = vrot.slane %v7550, %v7555
    %v7557 = vmul.f32 %v4838, %v7556
    %v7558 = vmul.f32 %v4841, %v7556
    %v7559 = vmul.f32 %v4846, %v7556
    %v7560 = vmul.f32 %v4849, %v7556
    %v7561 = vmul.f32 %v4854, %v7556
    %v7562 = vmul.f32 %v4857, %v7556
    %v7563 = vmul.f32 %v4862, %v7556
    %v7564 = vmul.f32 %v4865, %v7556
    %v7565 = vmul.f32 %v4870, %v7556
    %v7566 = vmul.f32 %v4873, %v7556
    %v7567 = vmul.f32 %v4878, %v7556
    %v7568 = vmul.f32 %v4881, %v7556
    %v7569 = vmul.f32 %v4886, %v7556
    %v7570 = vmul.f32 %v4889, %v7556
    %v7571 = vmul.f32 %v4894, %v7556
    %v7572 = vmul.f32 %v4897, %v7556
    %v7574 = vlaneseq
    %v7575 = vshrl.u32 %v7574, 7
    %v7576 = vsub.s32 0, %v7575
    %v7577 = vrot.slane %v7552, %v7576
    %v7579 = vadd.f32 %v7557, %v7577
    %v7580 = vadd.f32 %v7558, %v7577
    %v7581 = vadd.f32 %v7559, %v7577
    %v7582 = vadd.f32 %v7560, %v7577
    %v7583 = vadd.f32 %v7561, %v7577
    %v7584 = vadd.f32 %v7562, %v7577
    %v7585 = vadd.f32 %v7563, %v7577
    %v7586 = vadd.f32 %v7564, %v7577
    %v7587 = vadd.f32 %v7565, %v7577
    %v7588 = vadd.f32 %v7566, %v7577
    %v7589 = vadd.f32 %v7567, %v7577
    %v7590 = vadd.f32 %v7568, %v7577
    %v7591 = vadd.f32 %v7569, %v7577
    %v7592 = vadd.f32 %v7570, %v7577
    %v7593 = vadd.f32 %v7571, %v7577
    %v7594 = vadd.f32 %v7572, %v7577
    %v7595 = vmul.f32 %v7579, 0.2
    %v7596 = vmul.f32 %v7580, 0.2
    %v7597 = vmul.f32 %v7581, 0.2
    %v7598 = vmul.f32 %v7582, 0.2
    %v7599 = vmul.f32 %v7583, 0.2
    %v7600 = vmul.f32 %v7584, 0.2
    %v7601 = vmul.f32 %v7585, 0.2
    %v7602 = vmul.f32 %v7586, 0.2
    %v7603 = vmul.f32 %v7587, 0.2
    %v7604 = vmul.f32 %v7588, 0.2
    %v7605 = vmul.f32 %v7589, 0.2
    %v7606 = vmul.f32 %v7590, 0.2
    %v7607 = vmul.f32 %v7591, 0.2
    %v7608 = vmul.f32 %v7592, 0.2
    %v7609 = vmul.f32 %v7593, 0.2
    %v7610 = vmul.f32 %v7594, 0.2
    %v7611 = vmax.f32 %v7579, %v7595
    %v7612 = vmax.f32 %v7580, %v7596
    %v7613 = vmax.f32 %v7581, %v7597
    %v7614 = vmax.f32 %v7582, %v7598
    %v7615 = vmax.f32 %v7583, %v7599
    %v7616 = vmax.f32 %v7584, %v7600
    %v7617 = vmax.f32 %v7585, %v7601
    %v7618 = vmax.f32 %v7586, %v7602
    %v7619 = vmax.f32 %v7587, %v7603
    %v7620 = vmax.f32 %v7588, %v7604
    %v7621 = vmax.f32 %v7589, %v7605
    %v7622 = vmax.f32 %v7590, %v7606
    %v7623 = vmax.f32 %v7591, %v7607
    %v7624 = vmax.f32 %v7592, %v7608
    %v7625 = vmax.f32 %v7593, %v7609
    %v7626 = vmax.f32 %v7594, %v7610
    %v7627 = vmul.f32 %v5979, %v7556
    %v7628 = vmul.f32 %v5982, %v7556
    %v7629 = vmul.f32 %v5987, %v7556
    %v7630 = vmul.f32 %v5990, %v7556
    %v7631 = vmul.f32 %v5995, %v7556
    %v7632 = vmul.f32 %v5998, %v7556
    %v7633 = vmul.f32 %v6003, %v7556
    %v7634 = vmul.f32 %v6006, %v7556
    %v7635 = vmul.f32 %v6011, %v7556
    %v7636 = vmul.f32 %v6014, %v7556
    %v7637 = vmul.f32 %v6019, %v7556
    %v7638 = vmul.f32 %v6022, %v7556
    %v7639 = vmul.f32 %v6027, %v7556
    %v7640 = vmul.f32 %v6030, %v7556
    %v7641 = vmul.f32 %v6035, %v7556
    %v7642 = vmul.f32 %v6038, %v7556
    %v7643 = vadd.f32 %v7627, %v7577
    %v7644 = vadd.f32 %v7628, %v7577
    %v7645 = vadd.f32 %v7629, %v7577
    %v7646 = vadd.f32 %v7630, %v7577
    %v7647 = vadd.f32 %v7631, %v7577
    %v7648 = vadd.f32 %v7632, %v7577
    %v7649 = vadd.f32 %v7633, %v7577
    %v7650 = vadd.f32 %v7634, %v7577
    %v7651 = vadd.f32 %v7635, %v7577
    %v7652 = vadd.f32 %v7636, %v7577
    %v7653 = vadd.f32 %v7637, %v7577
    %v7654 = vadd.f32 %v7638, %v7577
    %v7655 = vadd.f32 %v7639, %v7577
    %v7656 = vadd.f32 %v7640, %v7577
    %v7657 = vadd.f32 %v7641, %v7577
    %v7658 = vadd.f32 %v7642, %v7577
    %v7659 = vmul.f32 %v7643, 0.2
    %v7660 = vmul.f32 %v7644, 0.2
    %v7661 = vmul.f32 %v7645, 0.2
    %v7662 = vmul.f32 %v7646, 0.2
    %v7663 = vmul.f32 %v7647, 0.2
    %v7664 = vmul.f32 %v7648, 0.2
    %v7665 = vmul.f32 %v7649, 0.2
    %v7666 = vmul.f32 %v7650, 0.2
    %v7667 = vmul.f32 %v7651, 0.2
    %v7668 = vmul.f32 %v7652, 0.2
    %v7669 = vmul.f32 %v7653, 0.2
    %v7670 = vmul.f32 %v7654, 0.2
    %v7671 = vmul.f32 %v7655, 0.2
    %v7672 = vmul.f32 %v7656, 0.2
    %v7673 = vmul.f32 %v7657, 0.2
    %v7674 = vmul.f32 %v7658, 0.2
    %v7675 = vmax.f32 %v7643, %v7659
    %v7676 = vmax.f32 %v7644, %v7660
    %v7677 = vmax.f32 %v7645, %v7661
    %v7678 = vmax.f32 %v7646, %v7662
    %v7679 = vmax.f32 %v7647, %v7663
    %v7680 = vmax.f32 %v7648, %v7664
    %v7681 = vmax.f32 %v7649, %v7665
    %v7682 = vmax.f32 %v7650, %v7666
    %v7683 = vmax.f32 %v7651, %v7667
    %v7684 = vmax.f32 %v7652, %v7668
    %v7685 = vmax.f32 %v7653, %v7669
    %v7686 = vmax.f32 %v7654, %v7670
    %v7687 = vmax.f32 %v7655, %v7671
    %v7688 = vmax.f32 %v7656, %v7672
    %v7689 = vmax.f32 %v7657, %v7673
    %v7690 = vmax.f32 %v7658, %v7674
    %7692 = vrot.lane.b32.xlu0 %v7556, 64
    %v7693 = vpop.permute.xlu0 %7692
    %v7695 = vmul.f32 %v5979, %v7693
    %v7696 = vmul.f32 %v5982, %v7693
    %v7697 = vmul.f32 %v5987, %v7693
    %v7698 = vmul.f32 %v5990, %v7693
    %v7699 = vmul.f32 %v5995, %v7693
    %v7700 = vmul.f32 %v5998, %v7693
    %v7701 = vmul.f32 %v6003, %v7693
    %v7702 = vmul.f32 %v6006, %v7693
    %v7703 = vmul.f32 %v6011, %v7693
    %v7704 = vmul.f32 %v6014, %v7693
    %v7705 = vmul.f32 %v6019, %v7693
    %v7706 = vmul.f32 %v6022, %v7693
    %v7707 = vmul.f32 %v6027, %v7693
    %v7708 = vmul.f32 %v6030, %v7693
    %v7709 = vmul.f32 %v6035, %v7693
    %v7710 = vmul.f32 %v6038, %v7693
    %7711 = vrot.lane.b32.xlu0 %v7577, 64
    %v7712 = vpop.permute.xlu0 %7711
    %v7714 = vadd.f32 %v7695, %v7712
    %v7715 = vadd.f32 %v7696, %v7712
    %v7716 = vadd.f32 %v7697, %v7712
    %v7717 = vadd.f32 %v7698, %v7712
    %v7718 = vadd.f32 %v7699, %v7712
    %v7719 = vadd.f32 %v7700, %v7712
    %v7720 = vadd.f32 %v7701, %v7712
    %v7721 = vadd.f32 %v7702, %v7712
    %v7722 = vadd.f32 %v7703, %v7712
    %v7723 = vadd.f32 %v7704, %v7712
    %v7724 = vadd.f32 %v7705, %v7712
    %v7725 = vadd.f32 %v7706, %v7712
    %v7726 = vadd.f32 %v7707, %v7712
    %v7727 = vadd.f32 %v7708, %v7712
    %v7728 = vadd.f32 %v7709, %v7712
    %v7729 = vadd.f32 %v7710, %v7712
    %v7730 = vmul.f32 %v7714, 0.2
    %v7731 = vmul.f32 %v7715, 0.2
    %v7732 = vmul.f32 %v7716, 0.2
    %v7733 = vmul.f32 %v7717, 0.2
    %v7734 = vmul.f32 %v7718, 0.2
    %v7735 = vmul.f32 %v7719, 0.2
    %v7736 = vmul.f32 %v7720, 0.2
    %v7737 = vmul.f32 %v7721, 0.2
    %v7738 = vmul.f32 %v7722, 0.2
    %v7739 = vmul.f32 %v7723, 0.2
    %v7740 = vmul.f32 %v7724, 0.2
    %v7741 = vmul.f32 %v7725, 0.2
    %v7742 = vmul.f32 %v7726, 0.2
    %v7743 = vmul.f32 %v7727, 0.2
    %v7744 = vmul.f32 %v7728, 0.2
    %v7745 = vmul.f32 %v7729, 0.2
    %v7746 = vmax.f32 %v7714, %v7730
    %v7747 = vmax.f32 %v7715, %v7731
    %v7748 = vmax.f32 %v7716, %v7732
    %v7749 = vmax.f32 %v7717, %v7733
    %v7750 = vmax.f32 %v7718, %v7734
    %v7751 = vmax.f32 %v7719, %v7735
    %v7752 = vmax.f32 %v7720, %v7736
    %v7753 = vmax.f32 %v7721, %v7737
    %v7754 = vmax.f32 %v7722, %v7738
    %v7755 = vmax.f32 %v7723, %v7739
    %v7756 = vmax.f32 %v7724, %v7740
    %v7757 = vmax.f32 %v7725, %v7741
    %v7758 = vmax.f32 %v7726, %v7742
    %v7759 = vmax.f32 %v7727, %v7743
    %v7760 = vmax.f32 %v7728, %v7744
    %v7761 = vmax.f32 %v7729, %v7745
    %v7762 = vmul.f32 %v7120, %v7556
    %v7763 = vmul.f32 %v7123, %v7556
    %v7764 = vmul.f32 %v7128, %v7556
    %v7765 = vmul.f32 %v7131, %v7556
    %v7766 = vmul.f32 %v7136, %v7556
    %v7767 = vmul.f32 %v7139, %v7556
    %v7768 = vmul.f32 %v7144, %v7556
    %v7769 = vmul.f32 %v7147, %v7556
    %v7770 = vmul.f32 %v7152, %v7556
    %v7771 = vmul.f32 %v7155, %v7556
    %v7772 = vmul.f32 %v7160, %v7556
    %v7773 = vmul.f32 %v7163, %v7556
    %v7774 = vmul.f32 %v7168, %v7556
    %v7775 = vmul.f32 %v7171, %v7556
    %v7776 = vmul.f32 %v7176, %v7556
    %v7777 = vmul.f32 %v7179, %v7556
    %v7778 = vadd.f32 %v7762, %v7577
    %v7779 = vadd.f32 %v7763, %v7577
    %v7780 = vadd.f32 %v7764, %v7577
    %v7781 = vadd.f32 %v7765, %v7577
    %v7782 = vadd.f32 %v7766, %v7577
    %v7783 = vadd.f32 %v7767, %v7577
    %v7784 = vadd.f32 %v7768, %v7577
    %v7785 = vadd.f32 %v7769, %v7577
    %v7786 = vadd.f32 %v7770, %v7577
    %v7787 = vadd.f32 %v7771, %v7577
    %v7788 = vadd.f32 %v7772, %v7577
    %v7789 = vadd.f32 %v7773, %v7577
    %v7790 = vadd.f32 %v7774, %v7577
    %v7791 = vadd.f32 %v7775, %v7577
    %v7792 = vadd.f32 %v7776, %v7577
    %v7793 = vadd.f32 %v7777, %v7577
    %v7794 = vmul.f32 %v7778, 0.2
    %v7795 = vmul.f32 %v7779, 0.2
    %v7796 = vmul.f32 %v7780, 0.2
    %v7797 = vmul.f32 %v7781, 0.2
    %v7798 = vmul.f32 %v7782, 0.2
    %v7799 = vmul.f32 %v7783, 0.2
    %v7800 = vmul.f32 %v7784, 0.2
    %v7801 = vmul.f32 %v7785, 0.2
    %v7802 = vmul.f32 %v7786, 0.2
    %v7803 = vmul.f32 %v7787, 0.2
    %v7804 = vmul.f32 %v7788, 0.2
    %v7805 = vmul.f32 %v7789, 0.2
    %v7806 = vmul.f32 %v7790, 0.2
    %v7807 = vmul.f32 %v7791, 0.2
    %v7808 = vmul.f32 %v7792, 0.2
    %v7809 = vmul.f32 %v7793, 0.2
    %v7810 = vmax.f32 %v7778, %v7794
    %v7811 = vmax.f32 %v7779, %v7795
    %v7812 = vmax.f32 %v7780, %v7796
    %v7813 = vmax.f32 %v7781, %v7797
    %v7814 = vmax.f32 %v7782, %v7798
    %v7815 = vmax.f32 %v7783, %v7799
    %v7816 = vmax.f32 %v7784, %v7800
    %v7817 = vmax.f32 %v7785, %v7801
    %v7818 = vmax.f32 %v7786, %v7802
    %v7819 = vmax.f32 %v7787, %v7803
    %v7820 = vmax.f32 %v7788, %v7804
    %v7821 = vmax.f32 %v7789, %v7805
    %v7822 = vmax.f32 %v7790, %v7806
    %v7823 = vmax.f32 %v7791, %v7807
    %v7824 = vmax.f32 %v7792, %v7808
    %v7825 = vmax.f32 %v7793, %v7809
    %v7842 = vcombine.high %v7611, %v7611
    %v7843 = vcombine.high %v7612, %v7612
    %v7844 = vcombine.high %v7613, %v7613
    %v7845 = vcombine.high %v7614, %v7614
    %v7846 = vcombine.high %v7615, %v7615
    %v7847 = vcombine.high %v7616, %v7616
    %v7848 = vcombine.high %v7617, %v7617
    %v7849 = vcombine.high %v7618, %v7618
    %v7850 = vcombine.high %v7619, %v7619
    %v7851 = vcombine.high %v7620, %v7620
    %v7852 = vcombine.high %v7621, %v7621
    %v7853 = vcombine.high %v7622, %v7622
    %v7854 = vcombine.high %v7623, %v7623
    %v7855 = vcombine.high %v7624, %v7624
    %v7856 = vcombine.high %v7625, %v7625
    %v7857 = vcombine.high %v7626, %v7626
    %v7874 = vpack.c.bf16 %v7611, %v7611
    %v7875 = vpack.c.bf16 %v7842, %v7842
    %v7876 = vpack.c.bf16 %v7612, %v7612
    %v7877 = vpack.c.bf16 %v7843, %v7843
    %v7878 = vpack.c.bf16 %v7613, %v7613
    %v7879 = vpack.c.bf16 %v7844, %v7844
    %v7880 = vpack.c.bf16 %v7614, %v7614
    %v7881 = vpack.c.bf16 %v7845, %v7845
    %v7882 = vpack.c.bf16 %v7615, %v7615
    %v7883 = vpack.c.bf16 %v7846, %v7846
    %v7884 = vpack.c.bf16 %v7616, %v7616
    %v7885 = vpack.c.bf16 %v7847, %v7847
    %v7886 = vpack.c.bf16 %v7617, %v7617
    %v7887 = vpack.c.bf16 %v7848, %v7848
    %v7888 = vpack.c.bf16 %v7618, %v7618
    %v7889 = vpack.c.bf16 %v7849, %v7849
    %v7890 = vpack.c.bf16 %v7619, %v7619
    %v7891 = vpack.c.bf16 %v7850, %v7850
    %v7892 = vpack.c.bf16 %v7620, %v7620
    %v7893 = vpack.c.bf16 %v7851, %v7851
    %v7894 = vpack.c.bf16 %v7621, %v7621
    %v7895 = vpack.c.bf16 %v7852, %v7852
    %v7896 = vpack.c.bf16 %v7622, %v7622
    %v7897 = vpack.c.bf16 %v7853, %v7853
    %v7898 = vpack.c.bf16 %v7623, %v7623
    %v7899 = vpack.c.bf16 %v7854, %v7854
    %v7900 = vpack.c.bf16 %v7624, %v7624
    %v7901 = vpack.c.bf16 %v7855, %v7855
    %v7902 = vpack.c.bf16 %v7625, %v7625
    %v7903 = vpack.c.bf16 %v7856, %v7856
    %v7904 = vpack.c.bf16 %v7626, %v7626
    %v7905 = vpack.c.bf16 %v7857, %v7857
    %v7922 = vcombine.high %v7675, %v7675
    %v7923 = vcombine.high %v7676, %v7676
    %v7924 = vcombine.high %v7677, %v7677
    %v7925 = vcombine.high %v7678, %v7678
    %v7926 = vcombine.high %v7679, %v7679
    %v7927 = vcombine.high %v7680, %v7680
    %v7928 = vcombine.high %v7681, %v7681
    %v7929 = vcombine.high %v7682, %v7682
    %v7930 = vcombine.high %v7683, %v7683
    %v7931 = vcombine.high %v7684, %v7684
    %v7932 = vcombine.high %v7685, %v7685
    %v7933 = vcombine.high %v7686, %v7686
    %v7934 = vcombine.high %v7687, %v7687
    %v7935 = vcombine.high %v7688, %v7688
    %v7936 = vcombine.high %v7689, %v7689
    %v7937 = vcombine.high %v7690, %v7690
    %v7954 = vpack.c.bf16 %v7675, %v7675
    %v7955 = vpack.c.bf16 %v7922, %v7922
    %v7956 = vpack.c.bf16 %v7676, %v7676
    %v7957 = vpack.c.bf16 %v7923, %v7923
    %v7958 = vpack.c.bf16 %v7677, %v7677
    %v7959 = vpack.c.bf16 %v7924, %v7924
    %v7960 = vpack.c.bf16 %v7678, %v7678
    %v7961 = vpack.c.bf16 %v7925, %v7925
    %v7962 = vpack.c.bf16 %v7679, %v7679
    %v7963 = vpack.c.bf16 %v7926, %v7926
    %v7964 = vpack.c.bf16 %v7680, %v7680
    %v7965 = vpack.c.bf16 %v7927, %v7927
    %v7966 = vpack.c.bf16 %v7681, %v7681
    %v7967 = vpack.c.bf16 %v7928, %v7928
    %v7968 = vpack.c.bf16 %v7682, %v7682
    %v7969 = vpack.c.bf16 %v7929, %v7929
    %v7970 = vpack.c.bf16 %v7683, %v7683
    %v7971 = vpack.c.bf16 %v7930, %v7930
    %v7972 = vpack.c.bf16 %v7684, %v7684
    %v7973 = vpack.c.bf16 %v7931, %v7931
    %v7974 = vpack.c.bf16 %v7685, %v7685
    %v7975 = vpack.c.bf16 %v7932, %v7932
    %v7976 = vpack.c.bf16 %v7686, %v7686
    %v7977 = vpack.c.bf16 %v7933, %v7933
    %v7978 = vpack.c.bf16 %v7687, %v7687
    %v7979 = vpack.c.bf16 %v7934, %v7934
    %v7980 = vpack.c.bf16 %v7688, %v7688
    %v7981 = vpack.c.bf16 %v7935, %v7935
    %v7982 = vpack.c.bf16 %v7689, %v7689
    %v7983 = vpack.c.bf16 %v7936, %v7936
    %v7984 = vpack.c.bf16 %v7690, %v7690
    %v7985 = vpack.c.bf16 %v7937, %v7937
    %v8002 = vcombine.high %v7746, %v7746
    %v8003 = vcombine.high %v7747, %v7747
    %v8004 = vcombine.high %v7748, %v7748
    %v8005 = vcombine.high %v7749, %v7749
    %v8006 = vcombine.high %v7750, %v7750
    %v8007 = vcombine.high %v7751, %v7751
    %v8008 = vcombine.high %v7752, %v7752
    %v8009 = vcombine.high %v7753, %v7753
    %v8010 = vcombine.high %v7754, %v7754
    %v8011 = vcombine.high %v7755, %v7755
    %v8012 = vcombine.high %v7756, %v7756
    %v8013 = vcombine.high %v7757, %v7757
    %v8014 = vcombine.high %v7758, %v7758
    %v8015 = vcombine.high %v7759, %v7759
    %v8016 = vcombine.high %v7760, %v7760
    %v8017 = vcombine.high %v7761, %v7761
    %v8034 = vpack.c.bf16 %v7746, %v7746
    %v8035 = vpack.c.bf16 %v8002, %v8002
    %v8036 = vpack.c.bf16 %v7747, %v7747
    %v8037 = vpack.c.bf16 %v8003, %v8003
    %v8038 = vpack.c.bf16 %v7748, %v7748
    %v8039 = vpack.c.bf16 %v8004, %v8004
    %v8040 = vpack.c.bf16 %v7749, %v7749
    %v8041 = vpack.c.bf16 %v8005, %v8005
    %v8042 = vpack.c.bf16 %v7750, %v7750
    %v8043 = vpack.c.bf16 %v8006, %v8006
    %v8044 = vpack.c.bf16 %v7751, %v7751
    %v8045 = vpack.c.bf16 %v8007, %v8007
    %v8046 = vpack.c.bf16 %v7752, %v7752
    %v8047 = vpack.c.bf16 %v8008, %v8008
    %v8048 = vpack.c.bf16 %v7753, %v7753
    %v8049 = vpack.c.bf16 %v8009, %v8009
    %v8050 = vpack.c.bf16 %v7754, %v7754
    %v8051 = vpack.c.bf16 %v8010, %v8010
    %v8052 = vpack.c.bf16 %v7755, %v7755
    %v8053 = vpack.c.bf16 %v8011, %v8011
    %v8054 = vpack.c.bf16 %v7756, %v7756
    %v8055 = vpack.c.bf16 %v8012, %v8012
    %v8056 = vpack.c.bf16 %v7757, %v7757
    %v8057 = vpack.c.bf16 %v8013, %v8013
    %v8058 = vpack.c.bf16 %v7758, %v7758
    %v8059 = vpack.c.bf16 %v8014, %v8014
    %v8060 = vpack.c.bf16 %v7759, %v7759
    %v8061 = vpack.c.bf16 %v8015, %v8015
    %v8062 = vpack.c.bf16 %v7760, %v7760
    %v8063 = vpack.c.bf16 %v8016, %v8016
    %v8064 = vpack.c.bf16 %v7761, %v7761
    %v8065 = vpack.c.bf16 %v8017, %v8017
    %v8082 = vcombine.high %v7810, %v7810
    %v8083 = vcombine.high %v7811, %v7811
    %v8084 = vcombine.high %v7812, %v7812
    %v8085 = vcombine.high %v7813, %v7813
    %v8086 = vcombine.high %v7814, %v7814
    %v8087 = vcombine.high %v7815, %v7815
    %v8088 = vcombine.high %v7816, %v7816
    %v8089 = vcombine.high %v7817, %v7817
    %v8090 = vcombine.high %v7818, %v7818
    %v8091 = vcombine.high %v7819, %v7819
    %v8092 = vcombine.high %v7820, %v7820
    %v8093 = vcombine.high %v7821, %v7821
    %v8094 = vcombine.high %v7822, %v7822
    %v8095 = vcombine.high %v7823, %v7823
    %v8096 = vcombine.high %v7824, %v7824
    %v8097 = vcombine.high %v7825, %v7825
    %v8114 = vpack.c.bf16 %v7810, %v7810
    %v8115 = vpack.c.bf16 %v8082, %v8082
    %v8116 = vpack.c.bf16 %v7811, %v7811
    %v8117 = vpack.c.bf16 %v8083, %v8083
    %v8118 = vpack.c.bf16 %v7812, %v7812
    %v8119 = vpack.c.bf16 %v8084, %v8084
    %v8120 = vpack.c.bf16 %v7813, %v7813
    %v8121 = vpack.c.bf16 %v8085, %v8085
    %v8122 = vpack.c.bf16 %v7814, %v7814
    %v8123 = vpack.c.bf16 %v8086, %v8086
    %v8124 = vpack.c.bf16 %v7815, %v7815
    %v8125 = vpack.c.bf16 %v8087, %v8087
    %v8126 = vpack.c.bf16 %v7816, %v7816
    %v8127 = vpack.c.bf16 %v8088, %v8088
    %v8128 = vpack.c.bf16 %v7817, %v7817
    %v8129 = vpack.c.bf16 %v8089, %v8089
    %v8130 = vpack.c.bf16 %v7818, %v7818
    %v8131 = vpack.c.bf16 %v8090, %v8090
    %v8132 = vpack.c.bf16 %v7819, %v7819
    %v8133 = vpack.c.bf16 %v8091, %v8091
    %v8134 = vpack.c.bf16 %v7820, %v7820
    %v8135 = vpack.c.bf16 %v8092, %v8092
    %v8136 = vpack.c.bf16 %v7821, %v7821
    %v8137 = vpack.c.bf16 %v8093, %v8093
    %v8138 = vpack.c.bf16 %v7822, %v7822
    %v8139 = vpack.c.bf16 %v8094, %v8094
    %v8140 = vpack.c.bf16 %v7823, %v7823
    %v8141 = vpack.c.bf16 %v8095, %v8095
    %v8142 = vpack.c.bf16 %v7824, %v7824
    %v8143 = vpack.c.bf16 %v8096, %v8096
    %v8144 = vpack.c.bf16 %v7825, %v7825
    %v8145 = vpack.c.bf16 %v8097, %v8097
    %8178 = vrot.lane.b32.xlu0 %v8034, 64
    %v8179 = vpop.permute.xlu0 %8178
    %8180 = vrot.lane.b32.xlu0 %v8035, 64
    %v8181 = vpop.permute.xlu0 %8180
    %8182 = vrot.lane.b32.xlu0 %v8036, 64
    %v8183 = vpop.permute.xlu0 %8182
    %8184 = vrot.lane.b32.xlu0 %v8037, 64
    %v8185 = vpop.permute.xlu0 %8184
    %8186 = vrot.lane.b32.xlu0 %v8038, 64
    %v8187 = vpop.permute.xlu0 %8186
    %8188 = vrot.lane.b32.xlu0 %v8039, 64
    %v8189 = vpop.permute.xlu0 %8188
    %8190 = vrot.lane.b32.xlu0 %v8040, 64
    %v8191 = vpop.permute.xlu0 %8190
    %8192 = vrot.lane.b32.xlu0 %v8041, 64
    %v8193 = vpop.permute.xlu0 %8192
    %8194 = vrot.lane.b32.xlu0 %v8042, 64
    %v8195 = vpop.permute.xlu0 %8194
    %8196 = vrot.lane.b32.xlu0 %v8043, 64
    %v8197 = vpop.permute.xlu0 %8196
    %8198 = vrot.lane.b32.xlu0 %v8044, 64
    %v8199 = vpop.permute.xlu0 %8198
    %8200 = vrot.lane.b32.xlu0 %v8045, 64
    %v8201 = vpop.permute.xlu0 %8200
    %8202 = vrot.lane.b32.xlu0 %v8046, 64
    %v8203 = vpop.permute.xlu0 %8202
    %8204 = vrot.lane.b32.xlu0 %v8047, 64
    %v8205 = vpop.permute.xlu0 %8204
    %8206 = vrot.lane.b32.xlu0 %v8048, 64
    %v8207 = vpop.permute.xlu0 %8206
    %8208 = vrot.lane.b32.xlu0 %v8049, 64
    %v8209 = vpop.permute.xlu0 %8208
    %8210 = vrot.lane.b32.xlu0 %v8050, 64
    %v8211 = vpop.permute.xlu0 %8210
    %8212 = vrot.lane.b32.xlu0 %v8051, 64
    %v8213 = vpop.permute.xlu0 %8212
    %8214 = vrot.lane.b32.xlu0 %v8052, 64
    %v8215 = vpop.permute.xlu0 %8214
    %8216 = vrot.lane.b32.xlu0 %v8053, 64
    %v8217 = vpop.permute.xlu0 %8216
    %8218 = vrot.lane.b32.xlu0 %v8054, 64
    %v8219 = vpop.permute.xlu0 %8218
    %8220 = vrot.lane.b32.xlu0 %v8055, 64
    %v8221 = vpop.permute.xlu0 %8220
    %8222 = vrot.lane.b32.xlu0 %v8056, 64
    %v8223 = vpop.permute.xlu0 %8222
    %8224 = vrot.lane.b32.xlu0 %v8057, 64
    %v8225 = vpop.permute.xlu0 %8224
    %8226 = vrot.lane.b32.xlu0 %v8058, 64
    %v8227 = vpop.permute.xlu0 %8226
    %8228 = vrot.lane.b32.xlu0 %v8059, 64
    %v8229 = vpop.permute.xlu0 %8228
    %8230 = vrot.lane.b32.xlu0 %v8060, 64
    %v8231 = vpop.permute.xlu0 %8230
    %8232 = vrot.lane.b32.xlu0 %v8061, 64
    %v8233 = vpop.permute.xlu0 %8232
    %8234 = vrot.lane.b32.xlu0 %v8062, 64
    %v8235 = vpop.permute.xlu0 %8234
    %8236 = vrot.lane.b32.xlu0 %v8063, 64
    %v8237 = vpop.permute.xlu0 %8236
    %8238 = vrot.lane.b32.xlu0 %v8064, 64
    %v8239 = vpop.permute.xlu0 %8238
    %8240 = vrot.lane.b32.xlu0 %v8065, 64
    %v8241 = vpop.permute.xlu0 %8240
    %v8243 = vshrl.u32 %v8114, 16
    %v8245 = vrot.slane %v8243, 7
    %v8246 = vshll.u32 %v8114, 16
    %v8248 = vor.u32 %v8245, %v8246
    %v8250 = vshrl.u32 %v8115, 16
    %v8252 = vrot.slane %v8250, 7
    %v8253 = vshll.u32 %v8115, 16
    %v8255 = vor.u32 %v8252, %v8253
    %v8257 = vshrl.u32 %v8116, 16
    %v8259 = vrot.slane %v8257, 7
    %v8260 = vshll.u32 %v8116, 16
    %v8262 = vor.u32 %v8259, %v8260
    %v8264 = vshrl.u32 %v8117, 16
    %v8266 = vrot.slane %v8264, 7
    %v8267 = vshll.u32 %v8117, 16
    %v8269 = vor.u32 %v8266, %v8267
    %v8271 = vshrl.u32 %v8118, 16
    %v8273 = vrot.slane %v8271, 7
    %v8274 = vshll.u32 %v8118, 16
    %v8276 = vor.u32 %v8273, %v8274
    %v8278 = vshrl.u32 %v8119, 16
    %v8280 = vrot.slane %v8278, 7
    %v8281 = vshll.u32 %v8119, 16
    %v8283 = vor.u32 %v8280, %v8281
    %v8285 = vshrl.u32 %v8120, 16
    %v8287 = vrot.slane %v8285, 7
    %v8288 = vshll.u32 %v8120, 16
    %v8290 = vor.u32 %v8287, %v8288
    %v8292 = vshrl.u32 %v8121, 16
    %v8294 = vrot.slane %v8292, 7
    %v8295 = vshll.u32 %v8121, 16
    %v8297 = vor.u32 %v8294, %v8295
    %v8299 = vshrl.u32 %v8122, 16
    %v8301 = vrot.slane %v8299, 7
    %v8302 = vshll.u32 %v8122, 16
    %v8304 = vor.u32 %v8301, %v8302
    %v8306 = vshrl.u32 %v8123, 16
    %v8308 = vrot.slane %v8306, 7
    %v8309 = vshll.u32 %v8123, 16
    %v8311 = vor.u32 %v8308, %v8309
    %v8313 = vshrl.u32 %v8124, 16
    %v8315 = vrot.slane %v8313, 7
    %v8316 = vshll.u32 %v8124, 16
    %v8318 = vor.u32 %v8315, %v8316
    %v8320 = vshrl.u32 %v8125, 16
    %v8322 = vrot.slane %v8320, 7
    %v8323 = vshll.u32 %v8125, 16
    %v8325 = vor.u32 %v8322, %v8323
    %v8327 = vshrl.u32 %v8126, 16
    %v8329 = vrot.slane %v8327, 7
    %v8330 = vshll.u32 %v8126, 16
    %v8332 = vor.u32 %v8329, %v8330
    %v8334 = vshrl.u32 %v8127, 16
    %v8336 = vrot.slane %v8334, 7
    %v8337 = vshll.u32 %v8127, 16
    %v8339 = vor.u32 %v8336, %v8337
    %v8341 = vshrl.u32 %v8128, 16
    %v8343 = vrot.slane %v8341, 7
    %v8344 = vshll.u32 %v8128, 16
    %v8346 = vor.u32 %v8343, %v8344
    %v8348 = vshrl.u32 %v8129, 16
    %v8350 = vrot.slane %v8348, 7
    %v8351 = vshll.u32 %v8129, 16
    %v8353 = vor.u32 %v8350, %v8351
    %v8355 = vshrl.u32 %v8130, 16
    %v8357 = vrot.slane %v8355, 7
    %v8358 = vshll.u32 %v8130, 16
    %v8360 = vor.u32 %v8357, %v8358
    %v8362 = vshrl.u32 %v8131, 16
    %v8364 = vrot.slane %v8362, 7
    %v8365 = vshll.u32 %v8131, 16
    %v8367 = vor.u32 %v8364, %v8365
    %v8369 = vshrl.u32 %v8132, 16
    %v8371 = vrot.slane %v8369, 7
    %v8372 = vshll.u32 %v8132, 16
    %v8374 = vor.u32 %v8371, %v8372
    %v8376 = vshrl.u32 %v8133, 16
    %v8378 = vrot.slane %v8376, 7
    %v8379 = vshll.u32 %v8133, 16
    %v8381 = vor.u32 %v8378, %v8379
    %v8383 = vshrl.u32 %v8134, 16
    %v8385 = vrot.slane %v8383, 7
    %v8386 = vshll.u32 %v8134, 16
    %v8388 = vor.u32 %v8385, %v8386
    %v8390 = vshrl.u32 %v8135, 16
    %v8392 = vrot.slane %v8390, 7
    %v8393 = vshll.u32 %v8135, 16
    %v8395 = vor.u32 %v8392, %v8393
    %v8397 = vshrl.u32 %v8136, 16
    %v8399 = vrot.slane %v8397, 7
    %v8400 = vshll.u32 %v8136, 16
    %v8402 = vor.u32 %v8399, %v8400
    %v8404 = vshrl.u32 %v8137, 16
    %v8406 = vrot.slane %v8404, 7
    %v8407 = vshll.u32 %v8137, 16
    %v8409 = vor.u32 %v8406, %v8407
    %v8411 = vshrl.u32 %v8138, 16
    %v8413 = vrot.slane %v8411, 7
    %v8414 = vshll.u32 %v8138, 16
    %v8416 = vor.u32 %v8413, %v8414
    %v8418 = vshrl.u32 %v8139, 16
    %v8420 = vrot.slane %v8418, 7
    %v8421 = vshll.u32 %v8139, 16
    %v8423 = vor.u32 %v8420, %v8421
    %v8425 = vshrl.u32 %v8140, 16
    %v8427 = vrot.slane %v8425, 7
    %v8428 = vshll.u32 %v8140, 16
    %v8430 = vor.u32 %v8427, %v8428
    %v8432 = vshrl.u32 %v8141, 16
    %v8434 = vrot.slane %v8432, 7
    %v8435 = vshll.u32 %v8141, 16
    %v8437 = vor.u32 %v8434, %v8435
    %v8439 = vshrl.u32 %v8142, 16
    %v8441 = vrot.slane %v8439, 7
    %v8442 = vshll.u32 %v8142, 16
    %v8444 = vor.u32 %v8441, %v8442
    %v8446 = vshrl.u32 %v8143, 16
    %v8448 = vrot.slane %v8446, 7
    %v8449 = vshll.u32 %v8143, 16
    %v8451 = vor.u32 %v8448, %v8449
    %v8453 = vshrl.u32 %v8144, 16
    %v8455 = vrot.slane %v8453, 7
    %v8456 = vshll.u32 %v8144, 16
    %v8458 = vor.u32 %v8455, %v8456
    %v8460 = vshrl.u32 %v8145, 16
    %v8462 = vrot.slane %v8460, 7
    %v8463 = vshll.u32 %v8145, 16
    %v8465 = vor.u32 %v8462, %v8463
    %v8498 = vsel %vm828, 0, %v8248
    %v8499 = vsel %vm828, 0, %v8255
    %v8500 = vsel %vm828, 0, %v8262
    %v8501 = vsel %vm828, 0, %v8269
    %v8502 = vsel %vm828, 0, %v8276
    %v8503 = vsel %vm828, 0, %v8283
    %v8504 = vsel %vm828, 0, %v8290
    %v8505 = vsel %vm828, 0, %v8297
    %v8506 = vsel %vm828, 0, %v8304
    %v8507 = vsel %vm828, 0, %v8311
    %v8508 = vsel %vm828, 0, %v8318
    %v8509 = vsel %vm828, 0, %v8325
    %v8510 = vsel %vm828, 0, %v8332
    %v8511 = vsel %vm828, 0, %v8339
    %v8512 = vsel %vm828, 0, %v8346
    %v8513 = vsel %vm828, 0, %v8353
    %v8514 = vsel %vm828, 0, %v8360
    %v8515 = vsel %vm828, 0, %v8367
    %v8516 = vsel %vm828, 0, %v8374
    %v8517 = vsel %vm828, 0, %v8381
    %v8518 = vsel %vm828, 0, %v8388
    %v8519 = vsel %vm828, 0, %v8395
    %v8520 = vsel %vm828, 0, %v8402
    %v8521 = vsel %vm828, 0, %v8409
    %v8522 = vsel %vm828, 0, %v8416
    %v8523 = vsel %vm828, 0, %v8423
    %v8524 = vsel %vm828, 0, %v8430
    %v8525 = vsel %vm828, 0, %v8437
    %v8526 = vsel %vm828, 0, %v8444
    %v8527 = vsel %vm828, 0, %v8451
    %v8528 = vsel %vm828, 0, %v8458
    %v8529 = vsel %vm828, 0, %v8465
    %v8531 = vshrl.u32 %v7874, 16
    %v8533 = vshll.u32 %v7874, 16
    %v8535 = vrot.slane %v8533, 1
    %v8536 = vor.u32 %v8531, %v8535
    %v8538 = vshrl.u32 %v7875, 16
    %v8540 = vshll.u32 %v7875, 16
    %v8542 = vrot.slane %v8540, 1
    %v8543 = vor.u32 %v8538, %v8542
    %v8545 = vshrl.u32 %v7876, 16
    %v8547 = vshll.u32 %v7876, 16
    %v8549 = vrot.slane %v8547, 1
    %v8550 = vor.u32 %v8545, %v8549
    %v8552 = vshrl.u32 %v7877, 16
    %v8554 = vshll.u32 %v7877, 16
    %v8556 = vrot.slane %v8554, 1
    %v8557 = vor.u32 %v8552, %v8556
    %v8559 = vshrl.u32 %v7878, 16
    %v8561 = vshll.u32 %v7878, 16
    %v8563 = vrot.slane %v8561, 1
    %v8564 = vor.u32 %v8559, %v8563
    %v8566 = vshrl.u32 %v7879, 16
    %v8568 = vshll.u32 %v7879, 16
    %v8570 = vrot.slane %v8568, 1
    %v8571 = vor.u32 %v8566, %v8570
    %v8573 = vshrl.u32 %v7880, 16
    %v8575 = vshll.u32 %v7880, 16
    %v8577 = vrot.slane %v8575, 1
    %v8578 = vor.u32 %v8573, %v8577
    %v8580 = vshrl.u32 %v7881, 16
    %v8582 = vshll.u32 %v7881, 16
    %v8584 = vrot.slane %v8582, 1
    %v8585 = vor.u32 %v8580, %v8584
    %v8587 = vshrl.u32 %v7882, 16
    %v8589 = vshll.u32 %v7882, 16
    %v8591 = vrot.slane %v8589, 1
    %v8592 = vor.u32 %v8587, %v8591
    %v8594 = vshrl.u32 %v7883, 16
    %v8596 = vshll.u32 %v7883, 16
    %v8598 = vrot.slane %v8596, 1
    %v8599 = vor.u32 %v8594, %v8598
    %v8601 = vshrl.u32 %v7884, 16
    %v8603 = vshll.u32 %v7884, 16
    %v8605 = vrot.slane %v8603, 1
    %v8606 = vor.u32 %v8601, %v8605
    %v8608 = vshrl.u32 %v7885, 16
    %v8610 = vshll.u32 %v7885, 16
    %v8612 = vrot.slane %v8610, 1
    %v8613 = vor.u32 %v8608, %v8612
    %v8615 = vshrl.u32 %v7886, 16
    %v8617 = vshll.u32 %v7886, 16
    %v8619 = vrot.slane %v8617, 1
    %v8620 = vor.u32 %v8615, %v8619
    %v8622 = vshrl.u32 %v7887, 16
    %v8624 = vshll.u32 %v7887, 16
    %v8626 = vrot.slane %v8624, 1
    %v8627 = vor.u32 %v8622, %v8626
    %v8629 = vshrl.u32 %v7888, 16
    %v8631 = vshll.u32 %v7888, 16
    %v8633 = vrot.slane %v8631, 1
    %v8634 = vor.u32 %v8629, %v8633
    %v8636 = vshrl.u32 %v7889, 16
    %v8638 = vshll.u32 %v7889, 16
    %v8640 = vrot.slane %v8638, 1
    %v8641 = vor.u32 %v8636, %v8640
    %v8643 = vshrl.u32 %v7890, 16
    %v8645 = vshll.u32 %v7890, 16
    %v8647 = vrot.slane %v8645, 1
    %v8648 = vor.u32 %v8643, %v8647
    %v8650 = vshrl.u32 %v7891, 16
    %v8652 = vshll.u32 %v7891, 16
    %v8654 = vrot.slane %v8652, 1
    %v8655 = vor.u32 %v8650, %v8654
    %v8657 = vshrl.u32 %v7892, 16
    %v8659 = vshll.u32 %v7892, 16
    %v8661 = vrot.slane %v8659, 1
    %v8662 = vor.u32 %v8657, %v8661
    %v8664 = vshrl.u32 %v7893, 16
    %v8666 = vshll.u32 %v7893, 16
    %v8668 = vrot.slane %v8666, 1
    %v8669 = vor.u32 %v8664, %v8668
    %v8671 = vshrl.u32 %v7894, 16
    %v8673 = vshll.u32 %v7894, 16
    %v8675 = vrot.slane %v8673, 1
    %v8676 = vor.u32 %v8671, %v8675
    %v8678 = vshrl.u32 %v7895, 16
    %v8680 = vshll.u32 %v7895, 16
    %v8682 = vrot.slane %v8680, 1
    %v8683 = vor.u32 %v8678, %v8682
    %v8685 = vshrl.u32 %v7896, 16
    %v8687 = vshll.u32 %v7896, 16
    %v8689 = vrot.slane %v8687, 1
    %v8690 = vor.u32 %v8685, %v8689
    %v8692 = vshrl.u32 %v7897, 16
    %v8694 = vshll.u32 %v7897, 16
    %v8696 = vrot.slane %v8694, 1
    %v8697 = vor.u32 %v8692, %v8696
    %v8699 = vshrl.u32 %v7898, 16
    %v8701 = vshll.u32 %v7898, 16
    %v8703 = vrot.slane %v8701, 1
    %v8704 = vor.u32 %v8699, %v8703
    %v8706 = vshrl.u32 %v7899, 16
    %v8708 = vshll.u32 %v7899, 16
    %v8710 = vrot.slane %v8708, 1
    %v8711 = vor.u32 %v8706, %v8710
    %v8713 = vshrl.u32 %v7900, 16
    %v8715 = vshll.u32 %v7900, 16
    %v8717 = vrot.slane %v8715, 1
    %v8718 = vor.u32 %v8713, %v8717
    %v8720 = vshrl.u32 %v7901, 16
    %v8722 = vshll.u32 %v7901, 16
    %v8724 = vrot.slane %v8722, 1
    %v8725 = vor.u32 %v8720, %v8724
    %v8727 = vshrl.u32 %v7902, 16
    %v8729 = vshll.u32 %v7902, 16
    %v8731 = vrot.slane %v8729, 1
    %v8732 = vor.u32 %v8727, %v8731
    %v8734 = vshrl.u32 %v7903, 16
    %v8736 = vshll.u32 %v7903, 16
    %v8738 = vrot.slane %v8736, 1
    %v8739 = vor.u32 %v8734, %v8738
    %v8741 = vshrl.u32 %v7904, 16
    %v8743 = vshll.u32 %v7904, 16
    %v8745 = vrot.slane %v8743, 1
    %v8746 = vor.u32 %v8741, %v8745
    %v8748 = vshrl.u32 %v7905, 16
    %v8750 = vshll.u32 %v7905, 16
    %v8752 = vrot.slane %v8750, 1
    %v8753 = vor.u32 %v8748, %v8752
    %v8786 = vsel %vm863, %v8536, 0
    %v8787 = vsel %vm863, %v8543, 0
    %v8788 = vsel %vm863, %v8550, 0
    %v8789 = vsel %vm863, %v8557, 0
    %v8790 = vsel %vm863, %v8564, 0
    %v8791 = vsel %vm863, %v8571, 0
    %v8792 = vsel %vm863, %v8578, 0
    %v8793 = vsel %vm863, %v8585, 0
    %v8794 = vsel %vm863, %v8592, 0
    %v8795 = vsel %vm863, %v8599, 0
    %v8796 = vsel %vm863, %v8606, 0
    %v8797 = vsel %vm863, %v8613, 0
    %v8798 = vsel %vm863, %v8620, 0
    %v8799 = vsel %vm863, %v8627, 0
    %v8800 = vsel %vm863, %v8634, 0
    %v8801 = vsel %vm863, %v8641, 0
    %v8802 = vsel %vm863, %v8648, 0
    %v8803 = vsel %vm863, %v8655, 0
    %v8804 = vsel %vm863, %v8662, 0
    %v8805 = vsel %vm863, %v8669, 0
    %v8806 = vsel %vm863, %v8676, 0
    %v8807 = vsel %vm863, %v8683, 0
    %v8808 = vsel %vm863, %v8690, 0
    %v8809 = vsel %vm863, %v8697, 0
    %v8810 = vsel %vm863, %v8704, 0
    %v8811 = vsel %vm863, %v8711, 0
    %v8812 = vsel %vm863, %v8718, 0
    %v8813 = vsel %vm863, %v8725, 0
    %v8814 = vsel %vm863, %v8732, 0
    %v8815 = vsel %vm863, %v8739, 0
    %v8816 = vsel %vm863, %v8746, 0
    %v8817 = vsel %vm863, %v8753, 0
    %8848 = vrot.lane.b32.xlu0 0, 64
    %v8849 = vpop.permute.xlu0 %8848
    %8850 = vrot.lane.b32.xlu0 %v8786, 64
    %v8851 = vpop.permute.xlu0 %8850
    %8852 = vrot.lane.b32.xlu0 %v8787, 64
    %v8853 = vpop.permute.xlu0 %8852
    %8854 = vrot.lane.b32.xlu0 %v8788, 64
    %v8855 = vpop.permute.xlu0 %8854
    %8856 = vrot.lane.b32.xlu0 %v8789, 64
    %v8857 = vpop.permute.xlu0 %8856
    %8858 = vrot.lane.b32.xlu0 %v8790, 64
    %v8859 = vpop.permute.xlu0 %8858
    %8860 = vrot.lane.b32.xlu0 %v8791, 64
    %v8861 = vpop.permute.xlu0 %8860
    %8862 = vrot.lane.b32.xlu0 %v8792, 64
    %v8863 = vpop.permute.xlu0 %8862
    %8864 = vrot.lane.b32.xlu0 %v8793, 64
    %v8865 = vpop.permute.xlu0 %8864
    %8866 = vrot.lane.b32.xlu0 %v8794, 64
    %v8867 = vpop.permute.xlu0 %8866
    %8868 = vrot.lane.b32.xlu0 %v8795, 64
    %v8869 = vpop.permute.xlu0 %8868
    %8870 = vrot.lane.b32.xlu0 %v8796, 64
    %v8871 = vpop.permute.xlu0 %8870
    %8872 = vrot.lane.b32.xlu0 %v8797, 64
    %v8873 = vpop.permute.xlu0 %8872
    %8874 = vrot.lane.b32.xlu0 %v8798, 64
    %v8875 = vpop.permute.xlu0 %8874
    %8876 = vrot.lane.b32.xlu0 %v8799, 64
    %v8877 = vpop.permute.xlu0 %8876
    %8878 = vrot.lane.b32.xlu0 %v8800, 64
    %v8879 = vpop.permute.xlu0 %8878
    %8880 = vrot.lane.b32.xlu0 %v8802, 64
    %v8881 = vpop.permute.xlu0 %8880
    %8882 = vrot.lane.b32.xlu0 %v8803, 64
    %v8883 = vpop.permute.xlu0 %8882
    %8884 = vrot.lane.b32.xlu0 %v8804, 64
    %v8885 = vpop.permute.xlu0 %8884
    %8886 = vrot.lane.b32.xlu0 %v8805, 64
    %v8887 = vpop.permute.xlu0 %8886
    %8888 = vrot.lane.b32.xlu0 %v8806, 64
    %v8889 = vpop.permute.xlu0 %8888
    %8890 = vrot.lane.b32.xlu0 %v8807, 64
    %v8891 = vpop.permute.xlu0 %8890
    %8892 = vrot.lane.b32.xlu0 %v8808, 64
    %v8893 = vpop.permute.xlu0 %8892
    %8894 = vrot.lane.b32.xlu0 %v8809, 64
    %v8895 = vpop.permute.xlu0 %8894
    %8896 = vrot.lane.b32.xlu0 %v8810, 64
    %v8897 = vpop.permute.xlu0 %8896
    %8898 = vrot.lane.b32.xlu0 %v8811, 64
    %v8899 = vpop.permute.xlu0 %8898
    %8900 = vrot.lane.b32.xlu0 %v8812, 64
    %v8901 = vpop.permute.xlu0 %8900
    %8902 = vrot.lane.b32.xlu0 %v8813, 64
    %v8903 = vpop.permute.xlu0 %8902
    %8904 = vrot.lane.b32.xlu0 %v8814, 64
    %v8905 = vpop.permute.xlu0 %8904
    %8906 = vrot.lane.b32.xlu0 %v8815, 64
    %v8907 = vpop.permute.xlu0 %8906
    %8908 = vrot.lane.b32.xlu0 %v8816, 64
    %v8909 = vpop.permute.xlu0 %8908
    %8910 = vrot.lane.b32.xlu0 %v8179, 64
    %v8911 = vpop.permute.xlu0 %8910
    %8912 = vrot.lane.b32.xlu0 %v8181, 64
    %v8913 = vpop.permute.xlu0 %8912
    %8914 = vrot.lane.b32.xlu0 %v8183, 64
    %v8915 = vpop.permute.xlu0 %8914
    %8916 = vrot.lane.b32.xlu0 %v8185, 64
    %v8917 = vpop.permute.xlu0 %8916
    %8918 = vrot.lane.b32.xlu0 %v8187, 64
    %v8919 = vpop.permute.xlu0 %8918
    %8920 = vrot.lane.b32.xlu0 %v8189, 64
    %v8921 = vpop.permute.xlu0 %8920
    %8922 = vrot.lane.b32.xlu0 %v8191, 64
    %v8923 = vpop.permute.xlu0 %8922
    %8924 = vrot.lane.b32.xlu0 %v8193, 64
    %v8925 = vpop.permute.xlu0 %8924
    %8926 = vrot.lane.b32.xlu0 %v8195, 64
    %v8927 = vpop.permute.xlu0 %8926
    %8928 = vrot.lane.b32.xlu0 %v8197, 64
    %v8929 = vpop.permute.xlu0 %8928
    %8930 = vrot.lane.b32.xlu0 %v8199, 64
    %v8931 = vpop.permute.xlu0 %8930
    %8932 = vrot.lane.b32.xlu0 %v8201, 64
    %v8933 = vpop.permute.xlu0 %8932
    %8934 = vrot.lane.b32.xlu0 %v8203, 64
    %v8935 = vpop.permute.xlu0 %8934
    %8936 = vrot.lane.b32.xlu0 %v8205, 64
    %v8937 = vpop.permute.xlu0 %8936
    %8938 = vrot.lane.b32.xlu0 %v8207, 64
    %v8939 = vpop.permute.xlu0 %8938
    %8940 = vrot.lane.b32.xlu0 %v8211, 64
    %v8941 = vpop.permute.xlu0 %8940
    %8942 = vrot.lane.b32.xlu0 %v8213, 64
    %v8943 = vpop.permute.xlu0 %8942
    %8944 = vrot.lane.b32.xlu0 %v8215, 64
    %v8945 = vpop.permute.xlu0 %8944
    %8946 = vrot.lane.b32.xlu0 %v8217, 64
    %v8947 = vpop.permute.xlu0 %8946
    %8948 = vrot.lane.b32.xlu0 %v8219, 64
    %v8949 = vpop.permute.xlu0 %8948
    %8950 = vrot.lane.b32.xlu0 %v8221, 64
    %v8951 = vpop.permute.xlu0 %8950
    %8952 = vrot.lane.b32.xlu0 %v8223, 64
    %v8953 = vpop.permute.xlu0 %8952
    %8954 = vrot.lane.b32.xlu0 %v8225, 64
    %v8955 = vpop.permute.xlu0 %8954
    %8956 = vrot.lane.b32.xlu0 %v8227, 64
    %v8957 = vpop.permute.xlu0 %8956
    %8958 = vrot.lane.b32.xlu0 %v8229, 64
    %v8959 = vpop.permute.xlu0 %8958
    %8960 = vrot.lane.b32.xlu0 %v8231, 64
    %v8961 = vpop.permute.xlu0 %8960
    %8962 = vrot.lane.b32.xlu0 %v8233, 64
    %v8963 = vpop.permute.xlu0 %8962
    %8964 = vrot.lane.b32.xlu0 %v8235, 64
    %v8965 = vpop.permute.xlu0 %8964
    %8966 = vrot.lane.b32.xlu0 %v8237, 64
    %v8967 = vpop.permute.xlu0 %8966
    %8968 = vrot.lane.b32.xlu0 %v8239, 64
    %v8969 = vpop.permute.xlu0 %8968
    %9000 = vrot.lane.b32.xlu0 %v8114, 64
    %v9001 = vpop.permute.xlu0 %9000
    %9002 = vrot.lane.b32.xlu0 %v8115, 64
    %v9003 = vpop.permute.xlu0 %9002
    %9004 = vrot.lane.b32.xlu0 %v8116, 64
    %v9005 = vpop.permute.xlu0 %9004
    %9006 = vrot.lane.b32.xlu0 %v8117, 64
    %v9007 = vpop.permute.xlu0 %9006
    %9008 = vrot.lane.b32.xlu0 %v8118, 64
    %v9009 = vpop.permute.xlu0 %9008
    %9010 = vrot.lane.b32.xlu0 %v8119, 64
    %v9011 = vpop.permute.xlu0 %9010
    %9012 = vrot.lane.b32.xlu0 %v8120, 64
    %v9013 = vpop.permute.xlu0 %9012
    %9014 = vrot.lane.b32.xlu0 %v8121, 64
    %v9015 = vpop.permute.xlu0 %9014
    %9016 = vrot.lane.b32.xlu0 %v8122, 64
    %v9017 = vpop.permute.xlu0 %9016
    %9018 = vrot.lane.b32.xlu0 %v8123, 64
    %v9019 = vpop.permute.xlu0 %9018
    %9020 = vrot.lane.b32.xlu0 %v8124, 64
    %v9021 = vpop.permute.xlu0 %9020
    %9022 = vrot.lane.b32.xlu0 %v8125, 64
    %v9023 = vpop.permute.xlu0 %9022
    %9024 = vrot.lane.b32.xlu0 %v8126, 64
    %v9025 = vpop.permute.xlu0 %9024
    %9026 = vrot.lane.b32.xlu0 %v8127, 64
    %v9027 = vpop.permute.xlu0 %9026
    %9028 = vrot.lane.b32.xlu0 %v8128, 64
    %v9029 = vpop.permute.xlu0 %9028
    %9030 = vrot.lane.b32.xlu0 %v8130, 64
    %v9031 = vpop.permute.xlu0 %9030
    %9032 = vrot.lane.b32.xlu0 %v8131, 64
    %v9033 = vpop.permute.xlu0 %9032
    %9034 = vrot.lane.b32.xlu0 %v8132, 64
    %v9035 = vpop.permute.xlu0 %9034
    %9036 = vrot.lane.b32.xlu0 %v8133, 64
    %v9037 = vpop.permute.xlu0 %9036
    %9038 = vrot.lane.b32.xlu0 %v8134, 64
    %v9039 = vpop.permute.xlu0 %9038
    %9040 = vrot.lane.b32.xlu0 %v8135, 64
    %v9041 = vpop.permute.xlu0 %9040
    %9042 = vrot.lane.b32.xlu0 %v8136, 64
    %v9043 = vpop.permute.xlu0 %9042
    %9044 = vrot.lane.b32.xlu0 %v8137, 64
    %v9045 = vpop.permute.xlu0 %9044
    %9046 = vrot.lane.b32.xlu0 %v8138, 64
    %v9047 = vpop.permute.xlu0 %9046
    %9048 = vrot.lane.b32.xlu0 %v8139, 64
    %v9049 = vpop.permute.xlu0 %9048
    %9050 = vrot.lane.b32.xlu0 %v8140, 64
    %v9051 = vpop.permute.xlu0 %9050
    %9052 = vrot.lane.b32.xlu0 %v8141, 64
    %v9053 = vpop.permute.xlu0 %9052
    %9054 = vrot.lane.b32.xlu0 %v8142, 64
    %v9055 = vpop.permute.xlu0 %9054
    %9056 = vrot.lane.b32.xlu0 %v8143, 64
    %v9057 = vpop.permute.xlu0 %9056
    %9058 = vrot.lane.b32.xlu0 %v8144, 64
    %v9059 = vpop.permute.xlu0 %9058
    %9062 = vrot.lane.b32.xlu0 %v8801, 64
    %v9063 = vpop.permute.xlu0 %9062
    %9064 = vrot.lane.b32.xlu0 %v8817, 64
    %v9065 = vpop.permute.xlu0 %9064
    %9066 = vrot.lane.b32.xlu0 %v8209, 64
    %v9067 = vpop.permute.xlu0 %9066
    %9068 = vrot.lane.b32.xlu0 %v8241, 64
    %v9069 = vpop.permute.xlu0 %9068
    %9072 = vrot.lane.b32.xlu0 %v8129, 64
    %v9073 = vpop.permute.xlu0 %9072
    %9074 = vrot.lane.b32.xlu0 %v8145, 64
    %v9075 = vpop.permute.xlu0 %9074
    %v9078 = vsel %vm7184, 0, %v8849
    %v9080 = vsel %vm7184, %v7874, %v8851
    %v9082 = vsel %vm7184, %v7875, %v8853
    %v9084 = vsel %vm7184, %v7876, %v8855
    %v9086 = vsel %vm7184, %v7877, %v8857
    %v9088 = vsel %vm7184, %v7878, %v8859
    %v9090 = vsel %vm7184, %v7879, %v8861
    %v9092 = vsel %vm7184, %v7880, %v8863
    %v9094 = vsel %vm7184, %v7881, %v8865
    %v9096 = vsel %vm7184, %v7882, %v8867
    %v9098 = vsel %vm7184, %v7883, %v8869
    %v9100 = vsel %vm7184, %v7884, %v8871
    %v9102 = vsel %vm7184, %v7885, %v8873
    %v9104 = vsel %vm7184, %v7886, %v8875
    %v9106 = vsel %vm7184, %v7887, %v8877
    %v9108 = vsel %vm7184, %v7888, %v8879
    %v9110 = vsel %vm7184, %v7890, %v8881
    %v9112 = vsel %vm7184, %v7891, %v8883
    %v9114 = vsel %vm7184, %v7892, %v8885
    %v9116 = vsel %vm7184, %v7893, %v8887
    %v9118 = vsel %vm7184, %v7894, %v8889
    %v9120 = vsel %vm7184, %v7895, %v8891
    %v9122 = vsel %vm7184, %v7896, %v8893
    %v9124 = vsel %vm7184, %v7897, %v8895
    %v9126 = vsel %vm7184, %v7898, %v8897
    %v9128 = vsel %vm7184, %v7899, %v8899
    %v9130 = vsel %vm7184, %v7900, %v8901
    %v9132 = vsel %vm7184, %v7901, %v8903
    %v9134 = vsel %vm7184, %v7902, %v8905
    %v9136 = vsel %vm7184, %v7903, %v8907
    %v9138 = vsel %vm7184, %v7904, %v8909
    %v9141 = vsel %vm7184, %v7954, %v8911
    %v9144 = vsel %vm7184, %v7955, %v8913
    %v9147 = vsel %vm7184, %v7956, %v8915
    %v9150 = vsel %vm7184, %v7957, %v8917
    %v9153 = vsel %vm7184, %v7958, %v8919
    %v9156 = vsel %vm7184, %v7959, %v8921
    %v9159 = vsel %vm7184, %v7960, %v8923
    %v9162 = vsel %vm7184, %v7961, %v8925
    %v9165 = vsel %vm7184, %v7962, %v8927
    %v9168 = vsel %vm7184, %v7963, %v8929
    %v9171 = vsel %vm7184, %v7964, %v8931
    %v9174 = vsel %vm7184, %v7965, %v8933
    %v9177 = vsel %vm7184, %v7966, %v8935
    %v9180 = vsel %vm7184, %v7967, %v8937
    %v9183 = vsel %vm7184, %v7968, %v8939
    %v9186 = vsel %vm7184, %v7970, %v8941
    %v9189 = vsel %vm7184, %v7971, %v8943
    %v9192 = vsel %vm7184, %v7972, %v8945
    %v9195 = vsel %vm7184, %v7973, %v8947
    %v9198 = vsel %vm7184, %v7974, %v8949
    %v9201 = vsel %vm7184, %v7975, %v8951
    %v9204 = vsel %vm7184, %v7976, %v8953
    %v9207 = vsel %vm7184, %v7977, %v8955
    %v9210 = vsel %vm7184, %v7978, %v8957
    %v9213 = vsel %vm7184, %v7979, %v8959
    %v9216 = vsel %vm7184, %v7980, %v8961
    %v9219 = vsel %vm7184, %v7981, %v8963
    %v9222 = vsel %vm7184, %v7982, %v8965
    %v9225 = vsel %vm7184, %v7983, %v8967
    %v9228 = vsel %vm7184, %v7984, %v8969
    %v9231 = vsel %vm7184, %v8498, %v9001
    %v9234 = vsel %vm7184, %v8499, %v9003
    %v9237 = vsel %vm7184, %v8500, %v9005
    %v9240 = vsel %vm7184, %v8501, %v9007
    %v9243 = vsel %vm7184, %v8502, %v9009
    %v9246 = vsel %vm7184, %v8503, %v9011
    %v9249 = vsel %vm7184, %v8504, %v9013
    %v9252 = vsel %vm7184, %v8505, %v9015
    %v9255 = vsel %vm7184, %v8506, %v9017
    %v9258 = vsel %vm7184, %v8507, %v9019
    %v9261 = vsel %vm7184, %v8508, %v9021
    %v9264 = vsel %vm7184, %v8509, %v9023
    %v9267 = vsel %vm7184, %v8510, %v9025
    %v9270 = vsel %vm7184, %v8511, %v9027
    %v9273 = vsel %vm7184, %v8512, %v9029
    %v9276 = vsel %vm7184, %v8514, %v9031
    %v9279 = vsel %vm7184, %v8515, %v9033
    %v9282 = vsel %vm7184, %v8516, %v9035
    %v9285 = vsel %vm7184, %v8517, %v9037
    %v9288 = vsel %vm7184, %v8518, %v9039
    %v9291 = vsel %vm7184, %v8519, %v9041
    %v9294 = vsel %vm7184, %v8520, %v9043
    %v9297 = vsel %vm7184, %v8521, %v9045
    %v9300 = vsel %vm7184, %v8522, %v9047
    %v9303 = vsel %vm7184, %v8523, %v9049
    %v9306 = vsel %vm7184, %v8524, %v9051
    %v9309 = vsel %vm7184, %v8525, %v9053
    %v9312 = vsel %vm7184, %v8526, %v9055
    %v9315 = vsel %vm7184, %v8527, %v9057
    %v9318 = vsel %vm7184, %v8528, %v9059
    %v9320 = vsel %vm7184, %v7889, %v9063
    %v9322 = vsel %vm7184, %v7905, %v9065
    %v9325 = vsel %vm7184, %v7969, %v9067
    %v9328 = vsel %vm7184, %v7985, %v9069
    %v9331 = vsel %vm7184, %v8513, %v9073
    %v9334 = vsel %vm7184, %v8529, %v9075
    %v9432 = vcombine.low %v9078, %v9078
    %v9433 = vcombine.low %v9078, %v9080
    %v9435 = vunpack.c.l.s4 1983009808
    %v9436 = vunpack.c.0.s8 %v9435
    %v9437 = vlaneseq
    %v9438 = vshrl.u32 %v9437, 7
    %v9439 = vsub.s32 %v9436, %v9438
    %v9440 = vrot.slane %v9432, %v9439
    %v9442 = vunpack.c.l.s4 1983009808
    %v9443 = vunpack.c.0.s8 %v9442
    %v9444 = vlaneseq
    %v9445 = vshrl.u32 %v9444, 7
    %v9446 = vsub.s32 %v9443, %v9445
    %v9447 = vrot.slane %v9433, %v9446
    %v9448 = vcombine.low %v9440, %v9447
    %v9449 = vcombine.low %v9141, %v9231
    %v9450 = vcombine.low %v9082, %v9144
    %v9452 = vunpack.c.l.s4 1983009808
    %v9453 = vunpack.c.0.s8 %v9452
    %v9454 = vlaneseq
    %v9455 = vshrl.u32 %v9454, 7
    %v9456 = vsub.s32 %v9453, %v9455
    %v9457 = vrot.slane %v9449, %v9456
    %v9459 = vunpack.c.l.s4 1983009808
    %v9460 = vunpack.c.0.s8 %v9459
    %v9461 = vlaneseq
    %v9462 = vshrl.u32 %v9461, 7
    %v9463 = vsub.s32 %v9460, %v9462
    %v9464 = vrot.slane %v9450, %v9463
    %v9465 = vcombine.low %v9457, %v9464
    %v9467 = vunpack.c.l.s4 1983009808
    %v9468 = vunpack.c.0.s8 %v9467
    %v9469 = vlaneseq
    %v9470 = vshrl.u32 %v9469, 7
    %v9471 = vsub.s32 %v9468, %v9470
    %v9472 = vrot.slane %v9234, %v9471
    %v9473 = vcombine.low %v9080, %v9141
    %v9474 = vcombine.low %v9231, %v9082
    %v9476 = vunpack.c.l.s4 1983009808
    %v9477 = vunpack.c.0.s8 %v9476
    %v9478 = vlaneseq
    %v9479 = vshrl.u32 %v9478, 7
    %v9480 = vsub.s32 %v9477, %v9479
    %v9481 = vrot.slane %v9473, %v9480
    %v9483 = vunpack.c.l.s4 1983009808
    %v9484 = vunpack.c.0.s8 %v9483
    %v9485 = vlaneseq
    %v9486 = vshrl.u32 %v9485, 7
    %v9487 = vsub.s32 %v9484, %v9486
    %v9488 = vrot.slane %v9474, %v9487
    %v9489 = vcombine.low %v9481, %v9488
    %v9490 = vcombine.low %v9144, %v9234
    %v9491 = vcombine.low %v9084, %v9147
    %v9493 = vunpack.c.l.s4 1983009808
    %v9494 = vunpack.c.0.s8 %v9493
    %v9495 = vlaneseq
    %v9496 = vshrl.u32 %v9495, 7
    %v9497 = vsub.s32 %v9494, %v9496
    %v9498 = vrot.slane %v9490, %v9497
    %v9500 = vunpack.c.l.s4 1983009808
    %v9501 = vunpack.c.0.s8 %v9500
    %v9502 = vlaneseq
    %v9503 = vshrl.u32 %v9502, 7
    %v9504 = vsub.s32 %v9501, %v9503
    %v9505 = vrot.slane %v9491, %v9504
    %v9506 = vcombine.low %v9498, %v9505
    %v9508 = vunpack.c.l.s4 1983009808
    %v9509 = vunpack.c.0.s8 %v9508
    %v9510 = vlaneseq
    %v9511 = vshrl.u32 %v9510, 7
    %v9512 = vsub.s32 %v9509, %v9511
    %v9513 = vrot.slane %v9237, %v9512
    %v9514 = vcombine.low %v9234, %v9084
    %v9516 = vunpack.c.l.s4 1983009808
    %v9517 = vunpack.c.0.s8 %v9516
    %v9518 = vlaneseq
    %v9519 = vshrl.u32 %v9518, 7
    %v9520 = vsub.s32 %v9517, %v9519
    %v9521 = vrot.slane %v9514, %v9520
    %v9522 = vcombine.low %v9464, %v9521
    %v9523 = vcombine.low %v9147, %v9237
    %v9524 = vcombine.low %v9086, %v9150
    %v9526 = vunpack.c.l.s4 1983009808
    %v9527 = vunpack.c.0.s8 %v9526
    %v9528 = vlaneseq
    %v9529 = vshrl.u32 %v9528, 7
    %v9530 = vsub.s32 %v9527, %v9529
    %v9531 = vrot.slane %v9523, %v9530
    %v9533 = vunpack.c.l.s4 1983009808
    %v9534 = vunpack.c.0.s8 %v9533
    %v9535 = vlaneseq
    %v9536 = vshrl.u32 %v9535, 7
    %v9537 = vsub.s32 %v9534, %v9536
    %v9538 = vrot.slane %v9524, %v9537
    %v9539 = vcombine.low %v9531, %v9538
    %v9541 = vunpack.c.l.s4 1983009808
    %v9542 = vunpack.c.0.s8 %v9541
    %v9543 = vlaneseq
    %v9544 = vshrl.u32 %v9543, 7
    %v9545 = vsub.s32 %v9542, %v9544
    %v9546 = vrot.slane %v9240, %v9545
    %v9547 = vcombine.low %v9237, %v9086
    %v9549 = vunpack.c.l.s4 1983009808
    %v9550 = vunpack.c.0.s8 %v9549
    %v9551 = vlaneseq
    %v9552 = vshrl.u32 %v9551, 7
    %v9553 = vsub.s32 %v9550, %v9552
    %v9554 = vrot.slane %v9547, %v9553
    %v9555 = vcombine.low %v9505, %v9554
    %v9556 = vcombine.low %v9150, %v9240
    %v9557 = vcombine.low %v9088, %v9153
    %v9559 = vunpack.c.l.s4 1983009808
    %v9560 = vunpack.c.0.s8 %v9559
    %v9561 = vlaneseq
    %v9562 = vshrl.u32 %v9561, 7
    %v9563 = vsub.s32 %v9560, %v9562
    %v9564 = vrot.slane %v9556, %v9563
    %v9566 = vunpack.c.l.s4 1983009808
    %v9567 = vunpack.c.0.s8 %v9566
    %v9568 = vlaneseq
    %v9569 = vshrl.u32 %v9568, 7
    %v9570 = vsub.s32 %v9567, %v9569
    %v9571 = vrot.slane %v9557, %v9570
    %v9572 = vcombine.low %v9564, %v9571
    %v9574 = vunpack.c.l.s4 1983009808
    %v9575 = vunpack.c.0.s8 %v9574
    %v9576 = vlaneseq
    %v9577 = vshrl.u32 %v9576, 7
    %v9578 = vsub.s32 %v9575, %v9577
    %v9579 = vrot.slane %v9243, %v9578
    %v9580 = vcombine.low %v9240, %v9088
    %v9582 = vunpack.c.l.s4 1983009808
    %v9583 = vunpack.c.0.s8 %v9582
    %v9584 = vlaneseq
    %v9585 = vshrl.u32 %v9584, 7
    %v9586 = vsub.s32 %v9583, %v9585
    %v9587 = vrot.slane %v9580, %v9586
    %v9588 = vcombine.low %v9538, %v9587
    %v9589 = vcombine.low %v9153, %v9243
    %v9590 = vcombine.low %v9090, %v9156
    %v9592 = vunpack.c.l.s4 1983009808
    %v9593 = vunpack.c.0.s8 %v9592
    %v9594 = vlaneseq
    %v9595 = vshrl.u32 %v9594, 7
    %v9596 = vsub.s32 %v9593, %v9595
    %v9597 = vrot.slane %v9589, %v9596
    %v9599 = vunpack.c.l.s4 1983009808
    %v9600 = vunpack.c.0.s8 %v9599
    %v9601 = vlaneseq
    %v9602 = vshrl.u32 %v9601, 7
    %v9603 = vsub.s32 %v9600, %v9602
    %v9604 = vrot.slane %v9590, %v9603
    %v9605 = vcombine.low %v9597, %v9604
    %v9607 = vunpack.c.l.s4 1983009808
    %v9608 = vunpack.c.0.s8 %v9607
    %v9609 = vlaneseq
    %v9610 = vshrl.u32 %v9609, 7
    %v9611 = vsub.s32 %v9608, %v9610
    %v9612 = vrot.slane %v9246, %v9611
    %v9613 = vcombine.low %v9243, %v9090
    %v9615 = vunpack.c.l.s4 1983009808
    %v9616 = vunpack.c.0.s8 %v9615
    %v9617 = vlaneseq
    %v9618 = vshrl.u32 %v9617, 7
    %v9619 = vsub.s32 %v9616, %v9618
    %v9620 = vrot.slane %v9613, %v9619
    %v9621 = vcombine.low %v9571, %v9620
    %v9622 = vcombine.low %v9156, %v9246
    %v9623 = vcombine.low %v9092, %v9159
    %v9625 = vunpack.c.l.s4 1983009808
    %v9626 = vunpack.c.0.s8 %v9625
    %v9627 = vlaneseq
    %v9628 = vshrl.u32 %v9627, 7
    %v9629 = vsub.s32 %v9626, %v9628
    %v9630 = vrot.slane %v9622, %v9629
    %v9632 = vunpack.c.l.s4 1983009808
    %v9633 = vunpack.c.0.s8 %v9632
    %v9634 = vlaneseq
    %v9635 = vshrl.u32 %v9634, 7
    %v9636 = vsub.s32 %v9633, %v9635
    %v9637 = vrot.slane %v9623, %v9636
    %v9638 = vcombine.low %v9630, %v9637
    %v9640 = vunpack.c.l.s4 1983009808
    %v9641 = vunpack.c.0.s8 %v9640
    %v9642 = vlaneseq
    %v9643 = vshrl.u32 %v9642, 7
    %v9644 = vsub.s32 %v9641, %v9643
    %v9645 = vrot.slane %v9249, %v9644
    %v9646 = vcombine.low %v9246, %v9092
    %v9648 = vunpack.c.l.s4 1983009808
    %v9649 = vunpack.c.0.s8 %v9648
    %v9650 = vlaneseq
    %v9651 = vshrl.u32 %v9650, 7
    %v9652 = vsub.s32 %v9649, %v9651
    %v9653 = vrot.slane %v9646, %v9652
    %v9654 = vcombine.low %v9604, %v9653
    %v9655 = vcombine.low %v9159, %v9249
    %v9656 = vcombine.low %v9094, %v9162
    %v9658 = vunpack.c.l.s4 1983009808
    %v9659 = vunpack.c.0.s8 %v9658
    %v9660 = vlaneseq
    %v9661 = vshrl.u32 %v9660, 7
    %v9662 = vsub.s32 %v9659, %v9661
    %v9663 = vrot.slane %v9655, %v9662
    %v9665 = vunpack.c.l.s4 1983009808
    %v9666 = vunpack.c.0.s8 %v9665
    %v9667 = vlaneseq
    %v9668 = vshrl.u32 %v9667, 7
    %v9669 = vsub.s32 %v9666, %v9668
    %v9670 = vrot.slane %v9656, %v9669
    %v9671 = vcombine.low %v9663, %v9670
    %v9673 = vunpack.c.l.s4 1983009808
    %v9674 = vunpack.c.0.s8 %v9673
    %v9675 = vlaneseq
    %v9676 = vshrl.u32 %v9675, 7
    %v9677 = vsub.s32 %v9674, %v9676
    %v9678 = vrot.slane %v9252, %v9677
    %v9679 = vcombine.low %v9249, %v9094
    %v9681 = vunpack.c.l.s4 1983009808
    %v9682 = vunpack.c.0.s8 %v9681
    %v9683 = vlaneseq
    %v9684 = vshrl.u32 %v9683, 7
    %v9685 = vsub.s32 %v9682, %v9684
    %v9686 = vrot.slane %v9679, %v9685
    %v9687 = vcombine.low %v9637, %v9686
    %v9688 = vcombine.low %v9162, %v9252
    %v9689 = vcombine.low %v9096, %v9165
    %v9691 = vunpack.c.l.s4 1983009808
    %v9692 = vunpack.c.0.s8 %v9691
    %v9693 = vlaneseq
    %v9694 = vshrl.u32 %v9693, 7
    %v9695 = vsub.s32 %v9692, %v9694
    %v9696 = vrot.slane %v9688, %v9695
    %v9698 = vunpack.c.l.s4 1983009808
    %v9699 = vunpack.c.0.s8 %v9698
    %v9700 = vlaneseq
    %v9701 = vshrl.u32 %v9700, 7
    %v9702 = vsub.s32 %v9699, %v9701
    %v9703 = vrot.slane %v9689, %v9702
    %v9704 = vcombine.low %v9696, %v9703
    %v9706 = vunpack.c.l.s4 1983009808
    %v9707 = vunpack.c.0.s8 %v9706
    %v9708 = vlaneseq
    %v9709 = vshrl.u32 %v9708, 7
    %v9710 = vsub.s32 %v9707, %v9709
    %v9711 = vrot.slane %v9255, %v9710
    %v9712 = vcombine.low %v9252, %v9096
    %v9714 = vunpack.c.l.s4 1983009808
    %v9715 = vunpack.c.0.s8 %v9714
    %v9716 = vlaneseq
    %v9717 = vshrl.u32 %v9716, 7
    %v9718 = vsub.s32 %v9715, %v9717
    %v9719 = vrot.slane %v9712, %v9718
    %v9720 = vcombine.low %v9670, %v9719
    %v9721 = vcombine.low %v9165, %v9255
    %v9722 = vcombine.low %v9098, %v9168
    %v9724 = vunpack.c.l.s4 1983009808
    %v9725 = vunpack.c.0.s8 %v9724
    %v9726 = vlaneseq
    %v9727 = vshrl.u32 %v9726, 7
    %v9728 = vsub.s32 %v9725, %v9727
    %v9729 = vrot.slane %v9721, %v9728
    %v9731 = vunpack.c.l.s4 1983009808
    %v9732 = vunpack.c.0.s8 %v9731
    %v9733 = vlaneseq
    %v9734 = vshrl.u32 %v9733, 7
    %v9735 = vsub.s32 %v9732, %v9734
    %v9736 = vrot.slane %v9722, %v9735
    %v9737 = vcombine.low %v9729, %v9736
    %v9739 = vunpack.c.l.s4 1983009808
    %v9740 = vunpack.c.0.s8 %v9739
    %v9741 = vlaneseq
    %v9742 = vshrl.u32 %v9741, 7
    %v9743 = vsub.s32 %v9740, %v9742
    %v9744 = vrot.slane %v9258, %v9743
    %v9745 = vcombine.low %v9255, %v9098
    %v9747 = vunpack.c.l.s4 1983009808
    %v9748 = vunpack.c.0.s8 %v9747
    %v9749 = vlaneseq
    %v9750 = vshrl.u32 %v9749, 7
    %v9751 = vsub.s32 %v9748, %v9750
    %v9752 = vrot.slane %v9745, %v9751
    %v9753 = vcombine.low %v9703, %v9752
    %v9754 = vcombine.low %v9168, %v9258
    %v9755 = vcombine.low %v9100, %v9171
    %v9757 = vunpack.c.l.s4 1983009808
    %v9758 = vunpack.c.0.s8 %v9757
    %v9759 = vlaneseq
    %v9760 = vshrl.u32 %v9759, 7
    %v9761 = vsub.s32 %v9758, %v9760
    %v9762 = vrot.slane %v9754, %v9761
    %v9764 = vunpack.c.l.s4 1983009808
    %v9765 = vunpack.c.0.s8 %v9764
    %v9766 = vlaneseq
    %v9767 = vshrl.u32 %v9766, 7
    %v9768 = vsub.s32 %v9765, %v9767
    %v9769 = vrot.slane %v9755, %v9768
    %v9770 = vcombine.low %v9762, %v9769
    %v9772 = vunpack.c.l.s4 1983009808
    %v9773 = vunpack.c.0.s8 %v9772
    %v9774 = vlaneseq
    %v9775 = vshrl.u32 %v9774, 7
    %v9776 = vsub.s32 %v9773, %v9775
    %v9777 = vrot.slane %v9261, %v9776
    %v9778 = vcombine.low %v9258, %v9100
    %v9780 = vunpack.c.l.s4 1983009808
    %v9781 = vunpack.c.0.s8 %v9780
    %v9782 = vlaneseq
    %v9783 = vshrl.u32 %v9782, 7
    %v9784 = vsub.s32 %v9781, %v9783
    %v9785 = vrot.slane %v9778, %v9784
    %v9786 = vcombine.low %v9736, %v9785
    %v9787 = vcombine.low %v9171, %v9261
    %v9788 = vcombine.low %v9102, %v9174
    %v9790 = vunpack.c.l.s4 1983009808
    %v9791 = vunpack.c.0.s8 %v9790
    %v9792 = vlaneseq
    %v9793 = vshrl.u32 %v9792, 7
    %v9794 = vsub.s32 %v9791, %v9793
    %v9795 = vrot.slane %v9787, %v9794
    %v9797 = vunpack.c.l.s4 1983009808
    %v9798 = vunpack.c.0.s8 %v9797
    %v9799 = vlaneseq
    %v9800 = vshrl.u32 %v9799, 7
    %v9801 = vsub.s32 %v9798, %v9800
    %v9802 = vrot.slane %v9788, %v9801
    %v9803 = vcombine.low %v9795, %v9802
    %v9805 = vunpack.c.l.s4 1983009808
    %v9806 = vunpack.c.0.s8 %v9805
    %v9807 = vlaneseq
    %v9808 = vshrl.u32 %v9807, 7
    %v9809 = vsub.s32 %v9806, %v9808
    %v9810 = vrot.slane %v9264, %v9809
    %v9811 = vcombine.low %v9261, %v9102
    %v9813 = vunpack.c.l.s4 1983009808
    %v9814 = vunpack.c.0.s8 %v9813
    %v9815 = vlaneseq
    %v9816 = vshrl.u32 %v9815, 7
    %v9817 = vsub.s32 %v9814, %v9816
    %v9818 = vrot.slane %v9811, %v9817
    %v9819 = vcombine.low %v9769, %v9818
    %v9820 = vcombine.low %v9174, %v9264
    %v9821 = vcombine.low %v9104, %v9177
    %v9823 = vunpack.c.l.s4 1983009808
    %v9824 = vunpack.c.0.s8 %v9823
    %v9825 = vlaneseq
    %v9826 = vshrl.u32 %v9825, 7
    %v9827 = vsub.s32 %v9824, %v9826
    %v9828 = vrot.slane %v9820, %v9827
    %v9830 = vunpack.c.l.s4 1983009808
    %v9831 = vunpack.c.0.s8 %v9830
    %v9832 = vlaneseq
    %v9833 = vshrl.u32 %v9832, 7
    %v9834 = vsub.s32 %v9831, %v9833
    %v9835 = vrot.slane %v9821, %v9834
    %v9836 = vcombine.low %v9828, %v9835
    %v9838 = vunpack.c.l.s4 1983009808
    %v9839 = vunpack.c.0.s8 %v9838
    %v9840 = vlaneseq
    %v9841 = vshrl.u32 %v9840, 7
    %v9842 = vsub.s32 %v9839, %v9841
    %v9843 = vrot.slane %v9267, %v9842
    %v9844 = vcombine.low %v9264, %v9104
    %v9846 = vunpack.c.l.s4 1983009808
    %v9847 = vunpack.c.0.s8 %v9846
    %v9848 = vlaneseq
    %v9849 = vshrl.u32 %v9848, 7
    %v9850 = vsub.s32 %v9847, %v9849
    %v9851 = vrot.slane %v9844, %v9850
    %v9852 = vcombine.low %v9802, %v9851
    %v9853 = vcombine.low %v9177, %v9267
    %v9854 = vcombine.low %v9106, %v9180
    %v9856 = vunpack.c.l.s4 1983009808
    %v9857 = vunpack.c.0.s8 %v9856
    %v9858 = vlaneseq
    %v9859 = vshrl.u32 %v9858, 7
    %v9860 = vsub.s32 %v9857, %v9859
    %v9861 = vrot.slane %v9853, %v9860
    %v9863 = vunpack.c.l.s4 1983009808
    %v9864 = vunpack.c.0.s8 %v9863
    %v9865 = vlaneseq
    %v9866 = vshrl.u32 %v9865, 7
    %v9867 = vsub.s32 %v9864, %v9866
    %v9868 = vrot.slane %v9854, %v9867
    %v9869 = vcombine.low %v9861, %v9868
    %v9871 = vunpack.c.l.s4 1983009808
    %v9872 = vunpack.c.0.s8 %v9871
    %v9873 = vlaneseq
    %v9874 = vshrl.u32 %v9873, 7
    %v9875 = vsub.s32 %v9872, %v9874
    %v9876 = vrot.slane %v9270, %v9875
    %v9877 = vcombine.low %v9267, %v9106
    %v9879 = vunpack.c.l.s4 1983009808
    %v9880 = vunpack.c.0.s8 %v9879
    %v9881 = vlaneseq
    %v9882 = vshrl.u32 %v9881, 7
    %v9883 = vsub.s32 %v9880, %v9882
    %v9884 = vrot.slane %v9877, %v9883
    %v9885 = vcombine.low %v9835, %v9884
    %v9886 = vcombine.low %v9180, %v9270
    %v9887 = vcombine.low %v9108, %v9183
    %v9889 = vunpack.c.l.s4 1983009808
    %v9890 = vunpack.c.0.s8 %v9889
    %v9891 = vlaneseq
    %v9892 = vshrl.u32 %v9891, 7
    %v9893 = vsub.s32 %v9890, %v9892
    %v9894 = vrot.slane %v9886, %v9893
    %v9896 = vunpack.c.l.s4 1983009808
    %v9897 = vunpack.c.0.s8 %v9896
    %v9898 = vlaneseq
    %v9899 = vshrl.u32 %v9898, 7
    %v9900 = vsub.s32 %v9897, %v9899
    %v9901 = vrot.slane %v9887, %v9900
    %v9902 = vcombine.low %v9894, %v9901
    %v9904 = vunpack.c.l.s4 1983009808
    %v9905 = vunpack.c.0.s8 %v9904
    %v9906 = vlaneseq
    %v9907 = vshrl.u32 %v9906, 7
    %v9908 = vsub.s32 %v9905, %v9907
    %v9909 = vrot.slane %v9273, %v9908
    %v9910 = vcombine.low %v9270, %v9108
    %v9912 = vunpack.c.l.s4 1983009808
    %v9913 = vunpack.c.0.s8 %v9912
    %v9914 = vlaneseq
    %v9915 = vshrl.u32 %v9914, 7
    %v9916 = vsub.s32 %v9913, %v9915
    %v9917 = vrot.slane %v9910, %v9916
    %v9918 = vcombine.low %v9868, %v9917
    %v9919 = vcombine.low %v9183, %v9273
    %v9920 = vcombine.low %v9320, %v9325
    %v9922 = vunpack.c.l.s4 1983009808
    %v9923 = vunpack.c.0.s8 %v9922
    %v9924 = vlaneseq
    %v9925 = vshrl.u32 %v9924, 7
    %v9926 = vsub.s32 %v9923, %v9925
    %v9927 = vrot.slane %v9919, %v9926
    %v9929 = vunpack.c.l.s4 1983009808
    %v9930 = vunpack.c.0.s8 %v9929
    %v9931 = vlaneseq
    %v9932 = vshrl.u32 %v9931, 7
    %v9933 = vsub.s32 %v9930, %v9932
    %v9934 = vrot.slane %v9920, %v9933
    %v9935 = vcombine.low %v9927, %v9934
    %v9937 = vunpack.c.l.s4 1983009808
    %v9938 = vunpack.c.0.s8 %v9937
    %v9939 = vlaneseq
    %v9940 = vshrl.u32 %v9939, 7
    %v9941 = vsub.s32 %v9938, %v9940
    %v9942 = vrot.slane %v9331, %v9941
    %v9943 = vcombine.low %v9273, %v9320
    %v9945 = vunpack.c.l.s4 1983009808
    %v9946 = vunpack.c.0.s8 %v9945
    %v9947 = vlaneseq
    %v9948 = vshrl.u32 %v9947, 7
    %v9949 = vsub.s32 %v9946, %v9948
    %v9950 = vrot.slane %v9943, %v9949
    %v9951 = vcombine.low %v9901, %v9950
    %v9952 = vcombine.low %v9325, %v9331
    %v9954 = vunpack.c.l.s4 1983009808
    %v9955 = vunpack.c.0.s8 %v9954
    %v9956 = vlaneseq
    %v9957 = vshrl.u32 %v9956, 7
    %v9958 = vsub.s32 %v9955, %v9957
    %v9959 = vrot.slane %v9952, %v9958
    %v9960 = vcombine.low %v9959, %v9440
    %v9962 = vunpack.c.l.s4 1983009808
    %v9963 = vunpack.c.0.s8 %v9962
    %v9964 = vlaneseq
    %v9965 = vshrl.u32 %v9964, 7
    %v9966 = vsub.s32 %v9963, %v9965
    %v9967 = vrot.slane %v9078, %v9966
    %v9968 = vcombine.low %v9078, %v9110
    %v9970 = vunpack.c.l.s4 1983009808
    %v9971 = vunpack.c.0.s8 %v9970
    %v9972 = vlaneseq
    %v9973 = vshrl.u32 %v9972, 7
    %v9974 = vsub.s32 %v9971, %v9973
    %v9975 = vrot.slane %v9968, %v9974
    %v9976 = vcombine.low %v9440, %v9975
    %v9977 = vcombine.low %v9186, %v9276
    %v9978 = vcombine.low %v9112, %v9189
    %v9980 = vunpack.c.l.s4 1983009808
    %v9981 = vunpack.c.0.s8 %v9980
    %v9982 = vlaneseq
    %v9983 = vshrl.u32 %v9982, 7
    %v9984 = vsub.s32 %v9981, %v9983
    %v9985 = vrot.slane %v9977, %v9984
    %v9987 = vunpack.c.l.s4 1983009808
    %v9988 = vunpack.c.0.s8 %v9987
    %v9989 = vlaneseq
    %v9990 = vshrl.u32 %v9989, 7
    %v9991 = vsub.s32 %v9988, %v9990
    %v9992 = vrot.slane %v9978, %v9991
    %v9993 = vcombine.low %v9985, %v9992
    %v9995 = vunpack.c.l.s4 1983009808
    %v9996 = vunpack.c.0.s8 %v9995
    %v9997 = vlaneseq
    %v9998 = vshrl.u32 %v9997, 7
    %v9999 = vsub.s32 %v9996, %v9998
    %v10000 = vrot.slane %v9279, %v9999
    %v10001 = vcombine.low %v9110, %v9186
    %v10002 = vcombine.low %v9276, %v9112
    %v10004 = vunpack.c.l.s4 1983009808
    %v10005 = vunpack.c.0.s8 %v10004
    %v10006 = vlaneseq
    %v10007 = vshrl.u32 %v10006, 7
    %v10008 = vsub.s32 %v10005, %v10007
    %v10009 = vrot.slane %v10001, %v10008
    %v10011 = vunpack.c.l.s4 1983009808
    %v10012 = vunpack.c.0.s8 %v10011
    %v10013 = vlaneseq
    %v10014 = vshrl.u32 %v10013, 7
    %v10015 = vsub.s32 %v10012, %v10014
    %v10016 = vrot.slane %v10002, %v10015
    %v10017 = vcombine.low %v10009, %v10016
    %v10018 = vcombine.low %v9189, %v9279
    %v10019 = vcombine.low %v9114, %v9192
    %v10021 = vunpack.c.l.s4 1983009808
    %v10022 = vunpack.c.0.s8 %v10021
    %v10023 = vlaneseq
    %v10024 = vshrl.u32 %v10023, 7
    %v10025 = vsub.s32 %v10022, %v10024
    %v10026 = vrot.slane %v10018, %v10025
    %v10028 = vunpack.c.l.s4 1983009808
    %v10029 = vunpack.c.0.s8 %v10028
    %v10030 = vlaneseq
    %v10031 = vshrl.u32 %v10030, 7
    %v10032 = vsub.s32 %v10029, %v10031
    %v10033 = vrot.slane %v10019, %v10032
    %v10034 = vcombine.low %v10026, %v10033
    %v10036 = vunpack.c.l.s4 1983009808
    %v10037 = vunpack.c.0.s8 %v10036
    %v10038 = vlaneseq
    %v10039 = vshrl.u32 %v10038, 7
    %v10040 = vsub.s32 %v10037, %v10039
    %v10041 = vrot.slane %v9282, %v10040
    %v10042 = vcombine.low %v9279, %v9114
    %v10044 = vunpack.c.l.s4 1983009808
    %v10045 = vunpack.c.0.s8 %v10044
    %v10046 = vlaneseq
    %v10047 = vshrl.u32 %v10046, 7
    %v10048 = vsub.s32 %v10045, %v10047
    %v10049 = vrot.slane %v10042, %v10048
    %v10050 = vcombine.low %v9992, %v10049
    %v10051 = vcombine.low %v9192, %v9282
    %v10052 = vcombine.low %v9116, %v9195
    %v10054 = vunpack.c.l.s4 1983009808
    %v10055 = vunpack.c.0.s8 %v10054
    %v10056 = vlaneseq
    %v10057 = vshrl.u32 %v10056, 7
    %v10058 = vsub.s32 %v10055, %v10057
    %v10059 = vrot.slane %v10051, %v10058
    %v10061 = vunpack.c.l.s4 1983009808
    %v10062 = vunpack.c.0.s8 %v10061
    %v10063 = vlaneseq
    %v10064 = vshrl.u32 %v10063, 7
    %v10065 = vsub.s32 %v10062, %v10064
    %v10066 = vrot.slane %v10052, %v10065
    %v10067 = vcombine.low %v10059, %v10066
    %v10069 = vunpack.c.l.s4 1983009808
    %v10070 = vunpack.c.0.s8 %v10069
    %v10071 = vlaneseq
    %v10072 = vshrl.u32 %v10071, 7
    %v10073 = vsub.s32 %v10070, %v10072
    %v10074 = vrot.slane %v9285, %v10073
    %v10075 = vcombine.low %v9282, %v9116
    %v10077 = vunpack.c.l.s4 1983009808
    %v10078 = vunpack.c.0.s8 %v10077
    %v10079 = vlaneseq
    %v10080 = vshrl.u32 %v10079, 7
    %v10081 = vsub.s32 %v10078, %v10080
    %v10082 = vrot.slane %v10075, %v10081
    %v10083 = vcombine.low %v10033, %v10082
    %v10084 = vcombine.low %v9195, %v9285
    %v10085 = vcombine.low %v9118, %v9198
    %v10087 = vunpack.c.l.s4 1983009808
    %v10088 = vunpack.c.0.s8 %v10087
    %v10089 = vlaneseq
    %v10090 = vshrl.u32 %v10089, 7
    %v10091 = vsub.s32 %v10088, %v10090
    %v10092 = vrot.slane %v10084, %v10091
    %v10094 = vunpack.c.l.s4 1983009808
    %v10095 = vunpack.c.0.s8 %v10094
    %v10096 = vlaneseq
    %v10097 = vshrl.u32 %v10096, 7
    %v10098 = vsub.s32 %v10095, %v10097
    %v10099 = vrot.slane %v10085, %v10098
    %v10100 = vcombine.low %v10092, %v10099
    %v10102 = vunpack.c.l.s4 1983009808
    %v10103 = vunpack.c.0.s8 %v10102
    %v10104 = vlaneseq
    %v10105 = vshrl.u32 %v10104, 7
    %v10106 = vsub.s32 %v10103, %v10105
    %v10107 = vrot.slane %v9288, %v10106
    %v10108 = vcombine.low %v9285, %v9118
    %v10110 = vunpack.c.l.s4 1983009808
    %v10111 = vunpack.c.0.s8 %v10110
    %v10112 = vlaneseq
    %v10113 = vshrl.u32 %v10112, 7
    %v10114 = vsub.s32 %v10111, %v10113
    %v10115 = vrot.slane %v10108, %v10114
    %v10116 = vcombine.low %v10066, %v10115
    %v10117 = vcombine.low %v9198, %v9288
    %v10118 = vcombine.low %v9120, %v9201
    %v10120 = vunpack.c.l.s4 1983009808
    %v10121 = vunpack.c.0.s8 %v10120
    %v10122 = vlaneseq
    %v10123 = vshrl.u32 %v10122, 7
    %v10124 = vsub.s32 %v10121, %v10123
    %v10125 = vrot.slane %v10117, %v10124
    %v10127 = vunpack.c.l.s4 1983009808
    %v10128 = vunpack.c.0.s8 %v10127
    %v10129 = vlaneseq
    %v10130 = vshrl.u32 %v10129, 7
    %v10131 = vsub.s32 %v10128, %v10130
    %v10132 = vrot.slane %v10118, %v10131
    %v10133 = vcombine.low %v10125, %v10132
    %v10135 = vunpack.c.l.s4 1983009808
    %v10136 = vunpack.c.0.s8 %v10135
    %v10137 = vlaneseq
    %v10138 = vshrl.u32 %v10137, 7
    %v10139 = vsub.s32 %v10136, %v10138
    %v10140 = vrot.slane %v9291, %v10139
    %v10141 = vcombine.low %v9288, %v9120
    %v10143 = vunpack.c.l.s4 1983009808
    %v10144 = vunpack.c.0.s8 %v10143
    %v10145 = vlaneseq
    %v10146 = vshrl.u32 %v10145, 7
    %v10147 = vsub.s32 %v10144, %v10146
    %v10148 = vrot.slane %v10141, %v10147
    %v10149 = vcombine.low %v10099, %v10148
    %v10150 = vcombine.low %v9201, %v9291
    %v10151 = vcombine.low %v9122, %v9204
    %v10153 = vunpack.c.l.s4 1983009808
    %v10154 = vunpack.c.0.s8 %v10153
    %v10155 = vlaneseq
    %v10156 = vshrl.u32 %v10155, 7
    %v10157 = vsub.s32 %v10154, %v10156
    %v10158 = vrot.slane %v10150, %v10157
    %v10160 = vunpack.c.l.s4 1983009808
    %v10161 = vunpack.c.0.s8 %v10160
    %v10162 = vlaneseq
    %v10163 = vshrl.u32 %v10162, 7
    %v10164 = vsub.s32 %v10161, %v10163
    %v10165 = vrot.slane %v10151, %v10164
    %v10166 = vcombine.low %v10158, %v10165
    %v10168 = vunpack.c.l.s4 1983009808
    %v10169 = vunpack.c.0.s8 %v10168
    %v10170 = vlaneseq
    %v10171 = vshrl.u32 %v10170, 7
    %v10172 = vsub.s32 %v10169, %v10171
    %v10173 = vrot.slane %v9294, %v10172
    %v10174 = vcombine.low %v9291, %v9122
    %v10176 = vunpack.c.l.s4 1983009808
    %v10177 = vunpack.c.0.s8 %v10176
    %v10178 = vlaneseq
    %v10179 = vshrl.u32 %v10178, 7
    %v10180 = vsub.s32 %v10177, %v10179
    %v10181 = vrot.slane %v10174, %v10180
    %v10182 = vcombine.low %v10132, %v10181
    %v10183 = vcombine.low %v9204, %v9294
    %v10184 = vcombine.low %v9124, %v9207
    %v10186 = vunpack.c.l.s4 1983009808
    %v10187 = vunpack.c.0.s8 %v10186
    %v10188 = vlaneseq
    %v10189 = vshrl.u32 %v10188, 7
    %v10190 = vsub.s32 %v10187, %v10189
    %v10191 = vrot.slane %v10183, %v10190
    %v10193 = vunpack.c.l.s4 1983009808
    %v10194 = vunpack.c.0.s8 %v10193
    %v10195 = vlaneseq
    %v10196 = vshrl.u32 %v10195, 7
    %v10197 = vsub.s32 %v10194, %v10196
    %v10198 = vrot.slane %v10184, %v10197
    %v10199 = vcombine.low %v10191, %v10198
    %v10201 = vunpack.c.l.s4 1983009808
    %v10202 = vunpack.c.0.s8 %v10201
    %v10203 = vlaneseq
    %v10204 = vshrl.u32 %v10203, 7
    %v10205 = vsub.s32 %v10202, %v10204
    %v10206 = vrot.slane %v9297, %v10205
    %v10207 = vcombine.low %v9294, %v9124
    %v10209 = vunpack.c.l.s4 1983009808
    %v10210 = vunpack.c.0.s8 %v10209
    %v10211 = vlaneseq
    %v10212 = vshrl.u32 %v10211, 7
    %v10213 = vsub.s32 %v10210, %v10212
    %v10214 = vrot.slane %v10207, %v10213
    %v10215 = vcombine.low %v10165, %v10214
    %v10216 = vcombine.low %v9207, %v9297
    %v10217 = vcombine.low %v9126, %v9210
    %v10219 = vunpack.c.l.s4 1983009808
    %v10220 = vunpack.c.0.s8 %v10219
    %v10221 = vlaneseq
    %v10222 = vshrl.u32 %v10221, 7
    %v10223 = vsub.s32 %v10220, %v10222
    %v10224 = vrot.slane %v10216, %v10223
    %v10226 = vunpack.c.l.s4 1983009808
    %v10227 = vunpack.c.0.s8 %v10226
    %v10228 = vlaneseq
    %v10229 = vshrl.u32 %v10228, 7
    %v10230 = vsub.s32 %v10227, %v10229
    %v10231 = vrot.slane %v10217, %v10230
    %v10232 = vcombine.low %v10224, %v10231
    %v10234 = vunpack.c.l.s4 1983009808
    %v10235 = vunpack.c.0.s8 %v10234
    %v10236 = vlaneseq
    %v10237 = vshrl.u32 %v10236, 7
    %v10238 = vsub.s32 %v10235, %v10237
    %v10239 = vrot.slane %v9300, %v10238
    %v10240 = vcombine.low %v9297, %v9126
    %v10242 = vunpack.c.l.s4 1983009808
    %v10243 = vunpack.c.0.s8 %v10242
    %v10244 = vlaneseq
    %v10245 = vshrl.u32 %v10244, 7
    %v10246 = vsub.s32 %v10243, %v10245
    %v10247 = vrot.slane %v10240, %v10246
    %v10248 = vcombine.low %v10198, %v10247
    %v10249 = vcombine.low %v9210, %v9300
    %v10250 = vcombine.low %v9128, %v9213
    %v10252 = vunpack.c.l.s4 1983009808
    %v10253 = vunpack.c.0.s8 %v10252
    %v10254 = vlaneseq
    %v10255 = vshrl.u32 %v10254, 7
    %v10256 = vsub.s32 %v10253, %v10255
    %v10257 = vrot.slane %v10249, %v10256
    %v10259 = vunpack.c.l.s4 1983009808
    %v10260 = vunpack.c.0.s8 %v10259
    %v10261 = vlaneseq
    %v10262 = vshrl.u32 %v10261, 7
    %v10263 = vsub.s32 %v10260, %v10262
    %v10264 = vrot.slane %v10250, %v10263
    %v10265 = vcombine.low %v10257, %v10264
    %v10267 = vunpack.c.l.s4 1983009808
    %v10268 = vunpack.c.0.s8 %v10267
    %v10269 = vlaneseq
    %v10270 = vshrl.u32 %v10269, 7
    %v10271 = vsub.s32 %v10268, %v10270
    %v10272 = vrot.slane %v9303, %v10271
    %v10273 = vcombine.low %v9300, %v9128
    %v10275 = vunpack.c.l.s4 1983009808
    %v10276 = vunpack.c.0.s8 %v10275
    %v10277 = vlaneseq
    %v10278 = vshrl.u32 %v10277, 7
    %v10279 = vsub.s32 %v10276, %v10278
    %v10280 = vrot.slane %v10273, %v10279
    %v10281 = vcombine.low %v10231, %v10280
    %v10282 = vcombine.low %v9213, %v9303
    %v10283 = vcombine.low %v9130, %v9216
    %v10285 = vunpack.c.l.s4 1983009808
    %v10286 = vunpack.c.0.s8 %v10285
    %v10287 = vlaneseq
    %v10288 = vshrl.u32 %v10287, 7
    %v10289 = vsub.s32 %v10286, %v10288
    %v10290 = vrot.slane %v10282, %v10289
    %v10292 = vunpack.c.l.s4 1983009808
    %v10293 = vunpack.c.0.s8 %v10292
    %v10294 = vlaneseq
    %v10295 = vshrl.u32 %v10294, 7
    %v10296 = vsub.s32 %v10293, %v10295
    %v10297 = vrot.slane %v10283, %v10296
    %v10298 = vcombine.low %v10290, %v10297
    %v10300 = vunpack.c.l.s4 1983009808
    %v10301 = vunpack.c.0.s8 %v10300
    %v10302 = vlaneseq
    %v10303 = vshrl.u32 %v10302, 7
    %v10304 = vsub.s32 %v10301, %v10303
    %v10305 = vrot.slane %v9306, %v10304
    %v10306 = vcombine.low %v9303, %v9130
    %v10308 = vunpack.c.l.s4 1983009808
    %v10309 = vunpack.c.0.s8 %v10308
    %v10310 = vlaneseq
    %v10311 = vshrl.u32 %v10310, 7
    %v10312 = vsub.s32 %v10309, %v10311
    %v10313 = vrot.slane %v10306, %v10312
    %v10314 = vcombine.low %v10264, %v10313
    %v10315 = vcombine.low %v9216, %v9306
    %v10316 = vcombine.low %v9132, %v9219
    %v10318 = vunpack.c.l.s4 1983009808
    %v10319 = vunpack.c.0.s8 %v10318
    %v10320 = vlaneseq
    %v10321 = vshrl.u32 %v10320, 7
    %v10322 = vsub.s32 %v10319, %v10321
    %v10323 = vrot.slane %v10315, %v10322
    %v10325 = vunpack.c.l.s4 1983009808
    %v10326 = vunpack.c.0.s8 %v10325
    %v10327 = vlaneseq
    %v10328 = vshrl.u32 %v10327, 7
    %v10329 = vsub.s32 %v10326, %v10328
    %v10330 = vrot.slane %v10316, %v10329
    %v10331 = vcombine.low %v10323, %v10330
    %v10333 = vunpack.c.l.s4 1983009808
    %v10334 = vunpack.c.0.s8 %v10333
    %v10335 = vlaneseq
    %v10336 = vshrl.u32 %v10335, 7
    %v10337 = vsub.s32 %v10334, %v10336
    %v10338 = vrot.slane %v9309, %v10337
    %v10339 = vcombine.low %v9306, %v9132
    %v10341 = vunpack.c.l.s4 1983009808
    %v10342 = vunpack.c.0.s8 %v10341
    %v10343 = vlaneseq
    %v10344 = vshrl.u32 %v10343, 7
    %v10345 = vsub.s32 %v10342, %v10344
    %v10346 = vrot.slane %v10339, %v10345
    %v10347 = vcombine.low %v10297, %v10346
    %v10348 = vcombine.low %v9219, %v9309
    %v10349 = vcombine.low %v9134, %v9222
    %v10351 = vunpack.c.l.s4 1983009808
    %v10352 = vunpack.c.0.s8 %v10351
    %v10353 = vlaneseq
    %v10354 = vshrl.u32 %v10353, 7
    %v10355 = vsub.s32 %v10352, %v10354
    %v10356 = vrot.slane %v10348, %v10355
    %v10358 = vunpack.c.l.s4 1983009808
    %v10359 = vunpack.c.0.s8 %v10358
    %v10360 = vlaneseq
    %v10361 = vshrl.u32 %v10360, 7
    %v10362 = vsub.s32 %v10359, %v10361
    %v10363 = vrot.slane %v10349, %v10362
    %v10364 = vcombine.low %v10356, %v10363
    %v10366 = vunpack.c.l.s4 1983009808
    %v10367 = vunpack.c.0.s8 %v10366
    %v10368 = vlaneseq
    %v10369 = vshrl.u32 %v10368, 7
    %v10370 = vsub.s32 %v10367, %v10369
    %v10371 = vrot.slane %v9312, %v10370
    %v10372 = vcombine.low %v9309, %v9134
    %v10374 = vunpack.c.l.s4 1983009808
    %v10375 = vunpack.c.0.s8 %v10374
    %v10376 = vlaneseq
    %v10377 = vshrl.u32 %v10376, 7
    %v10378 = vsub.s32 %v10375, %v10377
    %v10379 = vrot.slane %v10372, %v10378
    %v10380 = vcombine.low %v10330, %v10379
    %v10381 = vcombine.low %v9222, %v9312
    %v10382 = vcombine.low %v9136, %v9225
    %v10384 = vunpack.c.l.s4 1983009808
    %v10385 = vunpack.c.0.s8 %v10384
    %v10386 = vlaneseq
    %v10387 = vshrl.u32 %v10386, 7
    %v10388 = vsub.s32 %v10385, %v10387
    %v10389 = vrot.slane %v10381, %v10388
    %v10391 = vunpack.c.l.s4 1983009808
    %v10392 = vunpack.c.0.s8 %v10391
    %v10393 = vlaneseq
    %v10394 = vshrl.u32 %v10393, 7
    %v10395 = vsub.s32 %v10392, %v10394
    %v10396 = vrot.slane %v10382, %v10395
    %v10397 = vcombine.low %v10389, %v10396
    %v10399 = vunpack.c.l.s4 1983009808
    %v10400 = vunpack.c.0.s8 %v10399
    %v10401 = vlaneseq
    %v10402 = vshrl.u32 %v10401, 7
    %v10403 = vsub.s32 %v10400, %v10402
    %v10404 = vrot.slane %v9315, %v10403
    %v10405 = vcombine.low %v9312, %v9136
    %v10407 = vunpack.c.l.s4 1983009808
    %v10408 = vunpack.c.0.s8 %v10407
    %v10409 = vlaneseq
    %v10410 = vshrl.u32 %v10409, 7
    %v10411 = vsub.s32 %v10408, %v10410
    %v10412 = vrot.slane %v10405, %v10411
    %v10413 = vcombine.low %v10363, %v10412
    %v10414 = vcombine.low %v9225, %v9315
    %v10415 = vcombine.low %v9138, %v9228
    %v10417 = vunpack.c.l.s4 1983009808
    %v10418 = vunpack.c.0.s8 %v10417
    %v10419 = vlaneseq
    %v10420 = vshrl.u32 %v10419, 7
    %v10421 = vsub.s32 %v10418, %v10420
    %v10422 = vrot.slane %v10414, %v10421
    %v10424 = vunpack.c.l.s4 1983009808
    %v10425 = vunpack.c.0.s8 %v10424
    %v10426 = vlaneseq
    %v10427 = vshrl.u32 %v10426, 7
    %v10428 = vsub.s32 %v10425, %v10427
    %v10429 = vrot.slane %v10415, %v10428
    %v10430 = vcombine.low %v10422, %v10429
    %v10432 = vunpack.c.l.s4 1983009808
    %v10433 = vunpack.c.0.s8 %v10432
    %v10434 = vlaneseq
    %v10435 = vshrl.u32 %v10434, 7
    %v10436 = vsub.s32 %v10433, %v10435
    %v10437 = vrot.slane %v9318, %v10436
    %v10438 = vcombine.low %v9315, %v9138
    %v10440 = vunpack.c.l.s4 1983009808
    %v10441 = vunpack.c.0.s8 %v10440
    %v10442 = vlaneseq
    %v10443 = vshrl.u32 %v10442, 7
    %v10444 = vsub.s32 %v10441, %v10443
    %v10445 = vrot.slane %v10438, %v10444
    %v10446 = vcombine.low %v10396, %v10445
    %v10447 = vcombine.low %v9228, %v9318
    %v10448 = vcombine.low %v9322, %v9328
    %v10450 = vunpack.c.l.s4 1983009808
    %v10451 = vunpack.c.0.s8 %v10450
    %v10452 = vlaneseq
    %v10453 = vshrl.u32 %v10452, 7
    %v10454 = vsub.s32 %v10451, %v10453
    %v10455 = vrot.slane %v10447, %v10454
    %v10457 = vunpack.c.l.s4 1983009808
    %v10458 = vunpack.c.0.s8 %v10457
    %v10459 = vlaneseq
    %v10460 = vshrl.u32 %v10459, 7
    %v10461 = vsub.s32 %v10458, %v10460
    %v10462 = vrot.slane %v10448, %v10461
    %v10463 = vcombine.low %v10455, %v10462
    %v10465 = vunpack.c.l.s4 1983009808
    %v10466 = vunpack.c.0.s8 %v10465
    %v10467 = vlaneseq
    %v10468 = vshrl.u32 %v10467, 7
    %v10469 = vsub.s32 %v10466, %v10468
    %v10470 = vrot.slane %v9334, %v10469
    %v10471 = vcombine.low %v9318, %v9322
    %v10473 = vunpack.c.l.s4 1983009808
    %v10474 = vunpack.c.0.s8 %v10473
    %v10475 = vlaneseq
    %v10476 = vshrl.u32 %v10475, 7
    %v10477 = vsub.s32 %v10474, %v10476
    %v10478 = vrot.slane %v10471, %v10477
    %v10479 = vcombine.low %v10429, %v10478
    %v10480 = vcombine.low %v9328, %v9334
    %v10482 = vunpack.c.l.s4 1983009808
    %v10483 = vunpack.c.0.s8 %v10482
    %v10484 = vlaneseq
    %v10485 = vshrl.u32 %v10484, 7
    %v10486 = vsub.s32 %v10483, %v10485
    %v10487 = vrot.slane %v10480, %v10486
    %v10488 = vcombine.low %v10487, %v9440
    %v10489 = vld [vmem:[#allocation6] sm:$0xf]
    %v10490 = vld [vmem:[#allocation6 + $0x4] sm:$0xf]
    %v10491 = vld [vmem:[#allocation6 + $0x8] sm:$0xf]
    %v10492 = vld [vmem:[#allocation6 + $0xc] sm:$0xf]
    %v10493 = vld [vmem:[#allocation6 + $0x10] sm:$0xf]
    %v10494 = vld [vmem:[#allocation6 + $0x14] sm:$0xf]
    %v10495 = vld [vmem:[#allocation6 + $0x18] sm:$0xf]
    %v10496 = vld [vmem:[#allocation6 + $0x1c] sm:$0xf]
    %v10497 = vld [vmem:[#allocation6 + $0x20] sm:$0xf]
    %v10498 = vld [vmem:[#allocation6 + $0x24] sm:$0xf]
    %v10499 = vld [vmem:[#allocation6 + $0x28] sm:$0xf]
    %v10500 = vld [vmem:[#allocation6 + $0x2c] sm:$0xf]
    %v10501 = vld [vmem:[#allocation6 + $0x30] sm:$0xf]
    %v10502 = vld [vmem:[#allocation6 + $0x34] sm:$0xf]
    %v10503 = vld [vmem:[#allocation6 + $0x38] sm:$0xf]
    %v10504 = vld [vmem:[#allocation6 + $0x3c] sm:$0xf]
    %v10505 = vld [vmem:[#allocation6 + $0x40] sm:$0xf]
    %v10506 = vld [vmem:[#allocation6 + $0x44] sm:$0xf]
    %v10507 = vld [vmem:[#allocation6 + $0x48] sm:$0xf]
    %v10508 = vld [vmem:[#allocation6 + $0x4c] sm:$0xf]
    %v10509 = vld [vmem:[#allocation6 + $0x50] sm:$0xf]
    %v10510 = vld [vmem:[#allocation6 + $0x54] sm:$0xf]
    %v10511 = vld [vmem:[#allocation6 + $0x58] sm:$0xf]
    %v10512 = vld [vmem:[#allocation6 + $0x5c] sm:$0xf]
    %v10513 = vld [vmem:[#allocation6 + $0x60] sm:$0xf]
    %v10514 = vld [vmem:[#allocation6 + $0x64] sm:$0xf]
    %v10515 = vld [vmem:[#allocation6 + $0x68] sm:$0xf]
    %v10516 = vld [vmem:[#allocation6 + $0x6c] sm:$0xf]
    %v10517 = vld [vmem:[#allocation6 + $0x70] sm:$0xf]
    %v10518 = vld [vmem:[#allocation6 + $0x74] sm:$0xf]
    %v10519 = vld [vmem:[#allocation6 + $0x78] sm:$0xf]
    %v10520 = vld [vmem:[#allocation6 + $0x7c] sm:$0xf]
    %v10521 = vld [vmem:[#allocation6 + $0x80] sm:$0xf]
    %v10522 = vld [vmem:[#allocation6 + $0x84] sm:$0xf]
    %v10523 = vld [vmem:[#allocation6 + $0x88] sm:$0xf]
    %v10524 = vld [vmem:[#allocation6 + $0x8c] sm:$0xf]
    %v10525 = vld [vmem:[#allocation6 + $0x90] sm:$0xf]
    %v10526 = vld [vmem:[#allocation6 + $0x94] sm:$0xf]
    %v10527 = vld [vmem:[#allocation6 + $0x98] sm:$0xf]
    %v10528 = vld [vmem:[#allocation6 + $0x9c] sm:$0xf]
    %v10529 = vld [vmem:[#allocation6 + $0xa0] sm:$0xf]
    %v10530 = vld [vmem:[#allocation6 + $0xa4] sm:$0xf]
    %v10531 = vld [vmem:[#allocation6 + $0xa8] sm:$0xf]
    %v10532 = vld [vmem:[#allocation6 + $0xac] sm:$0xf]
    %v10533 = vld [vmem:[#allocation6 + $0xb0] sm:$0xf]
    %v10534 = vld [vmem:[#allocation6 + $0xb4] sm:$0xf]
    %v10535 = vld [vmem:[#allocation6 + $0xb8] sm:$0xf]
    %v10536 = vld [vmem:[#allocation6 + $0xbc] sm:$0xf]
    %v10537 = vld [vmem:[#allocation6 + $0xc0] sm:$0xf]
    %v10538 = vld [vmem:[#allocation6 + $0xc4] sm:$0xf]
    %v10539 = vld [vmem:[#allocation6 + $0xc8] sm:$0xf]
    %v10540 = vld [vmem:[#allocation6 + $0xcc] sm:$0xf]
    %v10541 = vld [vmem:[#allocation6 + $0xd0] sm:$0xf]
    %v10542 = vld [vmem:[#allocation6 + $0xd4] sm:$0xf]
    %v10543 = vld [vmem:[#allocation6 + $0xd8] sm:$0xf]
    %v10544 = vld [vmem:[#allocation6 + $0xdc] sm:$0xf]
    %v10545 = vld [vmem:[#allocation6 + $0xe0] sm:$0xf]
    %v10546 = vld [vmem:[#allocation6 + $0xe4] sm:$0xf]
    %v10547 = vld [vmem:[#allocation6 + $0xe8] sm:$0xf]
    %v10548 = vld [vmem:[#allocation6 + $0xec] sm:$0xf]
    %v10549 = vld [vmem:[#allocation6 + $0xf0] sm:$0xf]
    %v10550 = vld [vmem:[#allocation6 + $0xf4] sm:$0xf]
    %v10551 = vld [vmem:[#allocation6 + $0xf8] sm:$0xf]
    %v10552 = vld [vmem:[#allocation6 + $0xfc] sm:$0xf]
    %v10553 = vld [vmem:[#allocation6 + $0x100] sm:$0xf]
    %v10554 = vld [vmem:[#allocation6 + $0x104] sm:$0xf]
    %v10555 = vld [vmem:[#allocation6 + $0x108] sm:$0xf]
    %v10556 = vld [vmem:[#allocation6 + $0x10c] sm:$0xf]
    %v10557 = vld [vmem:[#allocation6 + $0x110] sm:$0xf]
    %v10558 = vld [vmem:[#allocation6 + $0x114] sm:$0xf]
    %v10559 = vld [vmem:[#allocation6 + $0x118] sm:$0xf]
    %v10560 = vld [vmem:[#allocation6 + $0x11c] sm:$0xf]
    %v10561 = vld [vmem:[#allocation6 + $0x120] sm:$0xf]
    %v10562 = vld [vmem:[#allocation6 + $0x124] sm:$0xf]
    %v10563 = vld [vmem:[#allocation6 + $0x128] sm:$0xf]
    %v10564 = vld [vmem:[#allocation6 + $0x12c] sm:$0xf]
    %v10565 = vld [vmem:[#allocation6 + $0x130] sm:$0xf]
    %v10566 = vld [vmem:[#allocation6 + $0x134] sm:$0xf]
    %v10567 = vld [vmem:[#allocation6 + $0x138] sm:$0xf]
    %v10568 = vld [vmem:[#allocation6 + $0x13c] sm:$0xf]
    %v10569 = vld [vmem:[#allocation6 + $0x140] sm:$0xf]
    %v10570 = vld [vmem:[#allocation6 + $0x144] sm:$0xf]
    %v10571 = vld [vmem:[#allocation6 + $0x148] sm:$0xf]
    %v10572 = vld [vmem:[#allocation6 + $0x14c] sm:$0xf]
    %v10573 = vld [vmem:[#allocation6 + $0x150] sm:$0xf]
    %v10574 = vld [vmem:[#allocation6 + $0x154] sm:$0xf]
    %v10575 = vld [vmem:[#allocation6 + $0x158] sm:$0xf]
    %v10576 = vld [vmem:[#allocation6 + $0x15c] sm:$0xf]
    %v10577 = vld [vmem:[#allocation6 + $0x160] sm:$0xf]
    %v10578 = vld [vmem:[#allocation6 + $0x164] sm:$0xf]
    %v10579 = vld [vmem:[#allocation6 + $0x168] sm:$0xf]
    %v10580 = vld [vmem:[#allocation6 + $0x16c] sm:$0xf]
    %v10581 = vld [vmem:[#allocation6 + $0x170] sm:$0xf]
    %v10582 = vld [vmem:[#allocation6 + $0x174] sm:$0xf]
    %v10583 = vld [vmem:[#allocation6 + $0x178] sm:$0xf]
    %v10584 = vld [vmem:[#allocation6 + $0x17c] sm:$0xf]
    %v10585 = vld [vmem:[#allocation6 + $0x180] sm:$0xf]
    %v10586 = vld [vmem:[#allocation6 + $0x184] sm:$0xf]
    %v10587 = vld [vmem:[#allocation6 + $0x188] sm:$0xf]
    %v10588 = vld [vmem:[#allocation6 + $0x18c] sm:$0xf]
    %v10589 = vld [vmem:[#allocation6 + $0x190] sm:$0xf]
    %v10590 = vld [vmem:[#allocation6 + $0x194] sm:$0xf]
    %v10591 = vld [vmem:[#allocation6 + $0x198] sm:$0xf]
    %v10592 = vld [vmem:[#allocation6 + $0x19c] sm:$0xf]
    %v10593 = vld [vmem:[#allocation6 + $0x1a0] sm:$0xf]
    %v10594 = vld [vmem:[#allocation6 + $0x1a4] sm:$0xf]
    %v10595 = vld [vmem:[#allocation6 + $0x1a8] sm:$0xf]
    %v10596 = vld [vmem:[#allocation6 + $0x1ac] sm:$0xf]
    %v10597 = vld [vmem:[#allocation6 + $0x1b0] sm:$0xf]
    %v10598 = vld [vmem:[#allocation6 + $0x1b4] sm:$0xf]
    %v10599 = vld [vmem:[#allocation6 + $0x1b8] sm:$0xf]
    %v10600 = vld [vmem:[#allocation6 + $0x1bc] sm:$0xf]
    %v10601 = vld [vmem:[#allocation6 + $0x1c0] sm:$0xf]
    %v10602 = vld [vmem:[#allocation6 + $0x1c4] sm:$0xf]
    %v10603 = vld [vmem:[#allocation6 + $0x1c8] sm:$0xf]
    %v10604 = vld [vmem:[#allocation6 + $0x1cc] sm:$0xf]
    %v10605 = vld [vmem:[#allocation6 + $0x1d0] sm:$0xf]
    %v10606 = vld [vmem:[#allocation6 + $0x1d4] sm:$0xf]
    %v10607 = vld [vmem:[#allocation6 + $0x1d8] sm:$0xf]
    %v10608 = vld [vmem:[#allocation6 + $0x1dc] sm:$0xf]
    %v10609 = vld [vmem:[#allocation6 + $0x1e0] sm:$0xf]
    %v10610 = vld [vmem:[#allocation6 + $0x1e4] sm:$0xf]
    %v10611 = vld [vmem:[#allocation6 + $0x1e8] sm:$0xf]
    %v10612 = vld [vmem:[#allocation6 + $0x1ec] sm:$0xf]
    %v10613 = vld [vmem:[#allocation6 + $0x1f0] sm:$0xf]
    %v10614 = vld [vmem:[#allocation6 + $0x1f4] sm:$0xf]
    %v10615 = vld [vmem:[#allocation6 + $0x1f8] sm:$0xf]
    %v10616 = vld [vmem:[#allocation6 + $0x1fc] sm:$0xf]
    %v10617 = vld [vmem:[#allocation6 + $0x200] sm:$0xf]
    %v10618 = vld [vmem:[#allocation6 + $0x204] sm:$0xf]
    %v10619 = vld [vmem:[#allocation6 + $0x208] sm:$0xf]
    %v10620 = vld [vmem:[#allocation6 + $0x20c] sm:$0xf]
    %v10621 = vld [vmem:[#allocation6 + $0x210] sm:$0xf]
    %v10622 = vld [vmem:[#allocation6 + $0x214] sm:$0xf]
    %v10623 = vld [vmem:[#allocation6 + $0x218] sm:$0xf]
    %v10624 = vld [vmem:[#allocation6 + $0x21c] sm:$0xf]
    %v10625 = vld [vmem:[#allocation6 + $0x220] sm:$0xf]
    %v10626 = vld [vmem:[#allocation6 + $0x224] sm:$0xf]
    %v10627 = vld [vmem:[#allocation6 + $0x228] sm:$0xf]
    %v10628 = vld [vmem:[#allocation6 + $0x22c] sm:$0xf]
    %v10629 = vld [vmem:[#allocation6 + $0x230] sm:$0xf]
    %v10630 = vld [vmem:[#allocation6 + $0x234] sm:$0xf]
    %v10631 = vld [vmem:[#allocation6 + $0x238] sm:$0xf]
    %v10632 = vld [vmem:[#allocation6 + $0x23c] sm:$0xf]
    %v10633 = vld [vmem:[%s12] sm:$0x1]
    %v10635 = vlaneseq
    %v10636 = vshrl.u32 %v10635, 7
    %v10637 = vsub.s32 0, %v10636
    %v10638 = vrot.slane %v10633, %v10637
    %v10640 = vcombine.low %v9448, %v9489
    %v10641 = vcombine.high %v9448, %v9489
    %v10642 = vcombine.low %v9522, %v9555
    %v10643 = vcombine.high %v9522, %v9555
    %v10645 = vunpack.c.l.s4 1983009808
    %v10646 = vunpack.c.0.s8 %v10645
    %v10647 = vlaneseq
    %v10648 = vshrl.u32 %v10647, 7
    %v10649 = vsub.s32 %v10646, %v10648
    %v10650 = vrot.slane %v10640, %v10649
    %v10652 = vunpack.c.l.s4 1983009808
    %v10653 = vunpack.c.0.s8 %v10652
    %v10654 = vlaneseq
    %v10655 = vshrl.u32 %v10654, 7
    %v10656 = vsub.s32 %v10653, %v10655
    %v10657 = vrot.slane %v10641, %v10656
    %v10659 = vunpack.c.l.s4 1983009808
    %v10660 = vunpack.c.0.s8 %v10659
    %v10661 = vlaneseq
    %v10662 = vshrl.u32 %v10661, 7
    %v10663 = vsub.s32 %v10660, %v10662
    %v10664 = vrot.slane %v10642, %v10663
    %v10666 = vunpack.c.l.s4 1983009808
    %v10667 = vunpack.c.0.s8 %v10666
    %v10668 = vlaneseq
    %v10669 = vshrl.u32 %v10668, 7
    %v10670 = vsub.s32 %v10667, %v10669
    %v10671 = vrot.slane %v10643, %v10670
    %v10672 = vcombine.low %v10650, %v10664
    %v10673 = vcombine.high %v10650, %v10664
    %v10674 = vcombine.low %v10657, %v10671
    %v10675 = vcombine.high %v10657, %v10671
    %v10676 = vcombine.low %v9465, %v9506
    %v10677 = vcombine.high %v9465, %v9506
    %v10678 = vcombine.low %v9539, %v9572
    %v10679 = vcombine.high %v9539, %v9572
    %v10681 = vunpack.c.l.s4 1983009808
    %v10682 = vunpack.c.0.s8 %v10681
    %v10683 = vlaneseq
    %v10684 = vshrl.u32 %v10683, 7
    %v10685 = vsub.s32 %v10682, %v10684
    %v10686 = vrot.slane %v10676, %v10685
    %v10688 = vunpack.c.l.s4 1983009808
    %v10689 = vunpack.c.0.s8 %v10688
    %v10690 = vlaneseq
    %v10691 = vshrl.u32 %v10690, 7
    %v10692 = vsub.s32 %v10689, %v10691
    %v10693 = vrot.slane %v10677, %v10692
    %v10695 = vunpack.c.l.s4 1983009808
    %v10696 = vunpack.c.0.s8 %v10695
    %v10697 = vlaneseq
    %v10698 = vshrl.u32 %v10697, 7
    %v10699 = vsub.s32 %v10696, %v10698
    %v10700 = vrot.slane %v10678, %v10699
    %v10702 = vunpack.c.l.s4 1983009808
    %v10703 = vunpack.c.0.s8 %v10702
    %v10704 = vlaneseq
    %v10705 = vshrl.u32 %v10704, 7
    %v10706 = vsub.s32 %v10703, %v10705
    %v10707 = vrot.slane %v10679, %v10706
    %v10708 = vcombine.low %v10686, %v10700
    %v10709 = vcombine.high %v10686, %v10700
    %v10710 = vcombine.low %v10693, %v10707
    %v10711 = vcombine.high %v10693, %v10707
    %v10712 = vcombine.low %v9472, %v9513
    %v10713 = vcombine.low %v9546, %v9579
    %v10715 = vunpack.c.l.s4 1983009808
    %v10716 = vunpack.c.0.s8 %v10715
    %v10717 = vlaneseq
    %v10718 = vshrl.u32 %v10717, 7
    %v10719 = vsub.s32 %v10716, %v10718
    %v10720 = vrot.slane %v10712, %v10719
    %v10722 = vunpack.c.l.s4 1983009808
    %v10723 = vunpack.c.0.s8 %v10722
    %v10724 = vlaneseq
    %v10725 = vshrl.u32 %v10724, 7
    %v10726 = vsub.s32 %v10723, %v10725
    %v10727 = vrot.slane %v10713, %v10726
    %v10728 = vcombine.low %v10720, %v10727
    %v10729 = vcombine.low %v9588, %v9621
    %v10730 = vcombine.high %v9588, %v9621
    %v10731 = vcombine.low %v9654, %v9687
    %v10732 = vcombine.high %v9654, %v9687
    %v10734 = vunpack.c.l.s4 1983009808
    %v10735 = vunpack.c.0.s8 %v10734
    %v10736 = vlaneseq
    %v10737 = vshrl.u32 %v10736, 7
    %v10738 = vsub.s32 %v10735, %v10737
    %v10739 = vrot.slane %v10729, %v10738
    %v10741 = vunpack.c.l.s4 1983009808
    %v10742 = vunpack.c.0.s8 %v10741
    %v10743 = vlaneseq
    %v10744 = vshrl.u32 %v10743, 7
    %v10745 = vsub.s32 %v10742, %v10744
    %v10746 = vrot.slane %v10730, %v10745
    %v10748 = vunpack.c.l.s4 1983009808
    %v10749 = vunpack.c.0.s8 %v10748
    %v10750 = vlaneseq
    %v10751 = vshrl.u32 %v10750, 7
    %v10752 = vsub.s32 %v10749, %v10751
    %v10753 = vrot.slane %v10731, %v10752
    %v10755 = vunpack.c.l.s4 1983009808
    %v10756 = vunpack.c.0.s8 %v10755
    %v10757 = vlaneseq
    %v10758 = vshrl.u32 %v10757, 7
    %v10759 = vsub.s32 %v10756, %v10758
    %v10760 = vrot.slane %v10732, %v10759
    %v10761 = vcombine.low %v10739, %v10753
    %v10762 = vcombine.high %v10739, %v10753
    %v10763 = vcombine.low %v10746, %v10760
    %v10764 = vcombine.high %v10746, %v10760
    %v10765 = vcombine.low %v9605, %v9638
    %v10766 = vcombine.high %v9605, %v9638
    %v10767 = vcombine.low %v9671, %v9704
    %v10768 = vcombine.high %v9671, %v9704
    %v10770 = vunpack.c.l.s4 1983009808
    %v10771 = vunpack.c.0.s8 %v10770
    %v10772 = vlaneseq
    %v10773 = vshrl.u32 %v10772, 7
    %v10774 = vsub.s32 %v10771, %v10773
    %v10775 = vrot.slane %v10765, %v10774
    %v10777 = vunpack.c.l.s4 1983009808
    %v10778 = vunpack.c.0.s8 %v10777
    %v10779 = vlaneseq
    %v10780 = vshrl.u32 %v10779, 7
    %v10781 = vsub.s32 %v10778, %v10780
    %v10782 = vrot.slane %v10766, %v10781
    %v10784 = vunpack.c.l.s4 1983009808
    %v10785 = vunpack.c.0.s8 %v10784
    %v10786 = vlaneseq
    %v10787 = vshrl.u32 %v10786, 7
    %v10788 = vsub.s32 %v10785, %v10787
    %v10789 = vrot.slane %v10767, %v10788
    %v10791 = vunpack.c.l.s4 1983009808
    %v10792 = vunpack.c.0.s8 %v10791
    %v10793 = vlaneseq
    %v10794 = vshrl.u32 %v10793, 7
    %v10795 = vsub.s32 %v10792, %v10794
    %v10796 = vrot.slane %v10768, %v10795
    %v10797 = vcombine.low %v10775, %v10789
    %v10798 = vcombine.high %v10775, %v10789
    %v10799 = vcombine.low %v10782, %v10796
    %v10800 = vcombine.high %v10782, %v10796
    %v10801 = vcombine.low %v9612, %v9645
    %v10802 = vcombine.low %v9678, %v9711
    %v10804 = vunpack.c.l.s4 1983009808
    %v10805 = vunpack.c.0.s8 %v10804
    %v10806 = vlaneseq
    %v10807 = vshrl.u32 %v10806, 7
    %v10808 = vsub.s32 %v10805, %v10807
    %v10809 = vrot.slane %v10801, %v10808
    %v10811 = vunpack.c.l.s4 1983009808
    %v10812 = vunpack.c.0.s8 %v10811
    %v10813 = vlaneseq
    %v10814 = vshrl.u32 %v10813, 7
    %v10815 = vsub.s32 %v10812, %v10814
    %v10816 = vrot.slane %v10802, %v10815
    %v10817 = vcombine.low %v10809, %v10816
    %v10818 = vcombine.low %v9720, %v9753
    %v10819 = vcombine.high %v9720, %v9753
    %v10820 = vcombine.low %v9786, %v9819
    %v10821 = vcombine.high %v9786, %v9819
    %v10823 = vunpack.c.l.s4 1983009808
    %v10824 = vunpack.c.0.s8 %v10823
    %v10825 = vlaneseq
    %v10826 = vshrl.u32 %v10825, 7
    %v10827 = vsub.s32 %v10824, %v10826
    %v10828 = vrot.slane %v10818, %v10827
    %v10830 = vunpack.c.l.s4 1983009808
    %v10831 = vunpack.c.0.s8 %v10830
    %v10832 = vlaneseq
    %v10833 = vshrl.u32 %v10832, 7
    %v10834 = vsub.s32 %v10831, %v10833
    %v10835 = vrot.slane %v10819, %v10834
    %v10837 = vunpack.c.l.s4 1983009808
    %v10838 = vunpack.c.0.s8 %v10837
    %v10839 = vlaneseq
    %v10840 = vshrl.u32 %v10839, 7
    %v10841 = vsub.s32 %v10838, %v10840
    %v10842 = vrot.slane %v10820, %v10841
    %v10844 = vunpack.c.l.s4 1983009808
    %v10845 = vunpack.c.0.s8 %v10844
    %v10846 = vlaneseq
    %v10847 = vshrl.u32 %v10846, 7
    %v10848 = vsub.s32 %v10845, %v10847
    %v10849 = vrot.slane %v10821, %v10848
    %v10850 = vcombine.low %v10828, %v10842
    %v10851 = vcombine.high %v10828, %v10842
    %v10852 = vcombine.low %v10835, %v10849
    %v10853 = vcombine.high %v10835, %v10849
    %v10854 = vcombine.low %v9737, %v9770
    %v10855 = vcombine.high %v9737, %v9770
    %v10856 = vcombine.low %v9803, %v9836
    %v10857 = vcombine.high %v9803, %v9836
    %v10859 = vunpack.c.l.s4 1983009808
    %v10860 = vunpack.c.0.s8 %v10859
    %v10861 = vlaneseq
    %v10862 = vshrl.u32 %v10861, 7
    %v10863 = vsub.s32 %v10860, %v10862
    %v10864 = vrot.slane %v10854, %v10863
    %v10866 = vunpack.c.l.s4 1983009808
    %v10867 = vunpack.c.0.s8 %v10866
    %v10868 = vlaneseq
    %v10869 = vshrl.u32 %v10868, 7
    %v10870 = vsub.s32 %v10867, %v10869
    %v10871 = vrot.slane %v10855, %v10870
    %v10873 = vunpack.c.l.s4 1983009808
    %v10874 = vunpack.c.0.s8 %v10873
    %v10875 = vlaneseq
    %v10876 = vshrl.u32 %v10875, 7
    %v10877 = vsub.s32 %v10874, %v10876
    %v10878 = vrot.slane %v10856, %v10877
    %v10880 = vunpack.c.l.s4 1983009808
    %v10881 = vunpack.c.0.s8 %v10880
    %v10882 = vlaneseq
    %v10883 = vshrl.u32 %v10882, 7
    %v10884 = vsub.s32 %v10881, %v10883
    %v10885 = vrot.slane %v10857, %v10884
    %v10886 = vcombine.low %v10864, %v10878
    %v10887 = vcombine.high %v10864, %v10878
    %v10888 = vcombine.low %v10871, %v10885
    %v10889 = vcombine.high %v10871, %v10885
    %v10890 = vcombine.low %v9744, %v9777
    %v10891 = vcombine.low %v9810, %v9843
    %v10893 = vunpack.c.l.s4 1983009808
    %v10894 = vunpack.c.0.s8 %v10893
    %v10895 = vlaneseq
    %v10896 = vshrl.u32 %v10895, 7
    %v10897 = vsub.s32 %v10894, %v10896
    %v10898 = vrot.slane %v10890, %v10897
    %v10900 = vunpack.c.l.s4 1983009808
    %v10901 = vunpack.c.0.s8 %v10900
    %v10902 = vlaneseq
    %v10903 = vshrl.u32 %v10902, 7
    %v10904 = vsub.s32 %v10901, %v10903
    %v10905 = vrot.slane %v10891, %v10904
    %v10906 = vcombine.low %v10898, %v10905
    %v10907 = vcombine.low %v9852, %v9885
    %v10908 = vcombine.high %v9852, %v9885
    %v10909 = vcombine.low %v9918, %v9951
    %v10910 = vcombine.high %v9918, %v9951
    %v10912 = vunpack.c.l.s4 1983009808
    %v10913 = vunpack.c.0.s8 %v10912
    %v10914 = vlaneseq
    %v10915 = vshrl.u32 %v10914, 7
    %v10916 = vsub.s32 %v10913, %v10915
    %v10917 = vrot.slane %v10907, %v10916
    %v10919 = vunpack.c.l.s4 1983009808
    %v10920 = vunpack.c.0.s8 %v10919
    %v10921 = vlaneseq
    %v10922 = vshrl.u32 %v10921, 7
    %v10923 = vsub.s32 %v10920, %v10922
    %v10924 = vrot.slane %v10908, %v10923
    %v10926 = vunpack.c.l.s4 1983009808
    %v10927 = vunpack.c.0.s8 %v10926
    %v10928 = vlaneseq
    %v10929 = vshrl.u32 %v10928, 7
    %v10930 = vsub.s32 %v10927, %v10929
    %v10931 = vrot.slane %v10909, %v10930
    %v10933 = vunpack.c.l.s4 1983009808
    %v10934 = vunpack.c.0.s8 %v10933
    %v10935 = vlaneseq
    %v10936 = vshrl.u32 %v10935, 7
    %v10937 = vsub.s32 %v10934, %v10936
    %v10938 = vrot.slane %v10910, %v10937
    %v10939 = vcombine.low %v10917, %v10931
    %v10940 = vcombine.high %v10917, %v10931
    %v10941 = vcombine.low %v10924, %v10938
    %v10942 = vcombine.high %v10924, %v10938
    %v10943 = vcombine.low %v9869, %v9902
    %v10944 = vcombine.high %v9869, %v9902
    %v10945 = vcombine.low %v9935, %v9960
    %v10946 = vcombine.high %v9935, %v9960
    %v10948 = vunpack.c.l.s4 1983009808
    %v10949 = vunpack.c.0.s8 %v10948
    %v10950 = vlaneseq
    %v10951 = vshrl.u32 %v10950, 7
    %v10952 = vsub.s32 %v10949, %v10951
    %v10953 = vrot.slane %v10943, %v10952
    %v10955 = vunpack.c.l.s4 1983009808
    %v10956 = vunpack.c.0.s8 %v10955
    %v10957 = vlaneseq
    %v10958 = vshrl.u32 %v10957, 7
    %v10959 = vsub.s32 %v10956, %v10958
    %v10960 = vrot.slane %v10944, %v10959
    %v10962 = vunpack.c.l.s4 1983009808
    %v10963 = vunpack.c.0.s8 %v10962
    %v10964 = vlaneseq
    %v10965 = vshrl.u32 %v10964, 7
    %v10966 = vsub.s32 %v10963, %v10965
    %v10967 = vrot.slane %v10945, %v10966
    %v10969 = vunpack.c.l.s4 1983009808
    %v10970 = vunpack.c.0.s8 %v10969
    %v10971 = vlaneseq
    %v10972 = vshrl.u32 %v10971, 7
    %v10973 = vsub.s32 %v10970, %v10972
    %v10974 = vrot.slane %v10946, %v10973
    %v10975 = vcombine.low %v10953, %v10967
    %v10976 = vcombine.high %v10953, %v10967
    %v10977 = vcombine.low %v10960, %v10974
    %v10978 = vcombine.high %v10960, %v10974
    %v10979 = vcombine.low %v9876, %v9909
    %v10980 = vcombine.low %v9942, %v9967
    %v10982 = vunpack.c.l.s4 1983009808
    %v10983 = vunpack.c.0.s8 %v10982
    %v10984 = vlaneseq
    %v10985 = vshrl.u32 %v10984, 7
    %v10986 = vsub.s32 %v10983, %v10985
    %v10987 = vrot.slane %v10979, %v10986
    %v10989 = vunpack.c.l.s4 1983009808
    %v10990 = vunpack.c.0.s8 %v10989
    %v10991 = vlaneseq
    %v10992 = vshrl.u32 %v10991, 7
    %v10993 = vsub.s32 %v10990, %v10992
    %v10994 = vrot.slane %v10980, %v10993
    %v10995 = vcombine.low %v10987, %v10994
    %v10996 = vcombine.low %v9976, %v10017
    %v10997 = vcombine.high %v9976, %v10017
    %v10998 = vcombine.low %v10050, %v10083
    %v10999 = vcombine.high %v10050, %v10083
    %v11001 = vunpack.c.l.s4 1983009808
    %v11002 = vunpack.c.0.s8 %v11001
    %v11003 = vlaneseq
    %v11004 = vshrl.u32 %v11003, 7
    %v11005 = vsub.s32 %v11002, %v11004
    %v11006 = vrot.slane %v10996, %v11005
    %v11008 = vunpack.c.l.s4 1983009808
    %v11009 = vunpack.c.0.s8 %v11008
    %v11010 = vlaneseq
    %v11011 = vshrl.u32 %v11010, 7
    %v11012 = vsub.s32 %v11009, %v11011
    %v11013 = vrot.slane %v10997, %v11012
    %v11015 = vunpack.c.l.s4 1983009808
    %v11016 = vunpack.c.0.s8 %v11015
    %v11017 = vlaneseq
    %v11018 = vshrl.u32 %v11017, 7
    %v11019 = vsub.s32 %v11016, %v11018
    %v11020 = vrot.slane %v10998, %v11019
    %v11022 = vunpack.c.l.s4 1983009808
    %v11023 = vunpack.c.0.s8 %v11022
    %v11024 = vlaneseq
    %v11025 = vshrl.u32 %v11024, 7
    %v11026 = vsub.s32 %v11023, %v11025
    %v11027 = vrot.slane %v10999, %v11026
    %v11028 = vcombine.low %v11006, %v11020
    %v11029 = vcombine.high %v11006, %v11020
    %v11030 = vcombine.low %v11013, %v11027
    %v11031 = vcombine.high %v11013, %v11027
    %v11032 = vcombine.low %v9993, %v10034
    %v11033 = vcombine.high %v9993, %v10034
    %v11034 = vcombine.low %v10067, %v10100
    %v11035 = vcombine.high %v10067, %v10100
    %v11037 = vunpack.c.l.s4 1983009808
    %v11038 = vunpack.c.0.s8 %v11037
    %v11039 = vlaneseq
    %v11040 = vshrl.u32 %v11039, 7
    %v11041 = vsub.s32 %v11038, %v11040
    %v11042 = vrot.slane %v11032, %v11041
    %v11044 = vunpack.c.l.s4 1983009808
    %v11045 = vunpack.c.0.s8 %v11044
    %v11046 = vlaneseq
    %v11047 = vshrl.u32 %v11046, 7
    %v11048 = vsub.s32 %v11045, %v11047
    %v11049 = vrot.slane %v11033, %v11048
    %v11051 = vunpack.c.l.s4 1983009808
    %v11052 = vunpack.c.0.s8 %v11051
    %v11053 = vlaneseq
    %v11054 = vshrl.u32 %v11053, 7
    %v11055 = vsub.s32 %v11052, %v11054
    %v11056 = vrot.slane %v11034, %v11055
    %v11058 = vunpack.c.l.s4 1983009808
    %v11059 = vunpack.c.0.s8 %v11058
    %v11060 = vlaneseq
    %v11061 = vshrl.u32 %v11060, 7
    %v11062 = vsub.s32 %v11059, %v11061
    %v11063 = vrot.slane %v11035, %v11062
    %v11064 = vcombine.low %v11042, %v11056
    %v11065 = vcombine.high %v11042, %v11056
    %v11066 = vcombine.low %v11049, %v11063
    %v11067 = vcombine.high %v11049, %v11063
    %v11068 = vcombine.low %v10000, %v10041
    %v11069 = vcombine.low %v10074, %v10107
    %v11071 = vunpack.c.l.s4 1983009808
    %v11072 = vunpack.c.0.s8 %v11071
    %v11073 = vlaneseq
    %v11074 = vshrl.u32 %v11073, 7
    %v11075 = vsub.s32 %v11072, %v11074
    %v11076 = vrot.slane %v11068, %v11075
    %v11078 = vunpack.c.l.s4 1983009808
    %v11079 = vunpack.c.0.s8 %v11078
    %v11080 = vlaneseq
    %v11081 = vshrl.u32 %v11080, 7
    %v11082 = vsub.s32 %v11079, %v11081
    %v11083 = vrot.slane %v11069, %v11082
    %v11084 = vcombine.low %v11076, %v11083
    %v11085 = vcombine.low %v10116, %v10149
    %v11086 = vcombine.high %v10116, %v10149
    %v11087 = vcombine.low %v10182, %v10215
    %v11088 = vcombine.high %v10182, %v10215
    %v11090 = vunpack.c.l.s4 1983009808
    %v11091 = vunpack.c.0.s8 %v11090
    %v11092 = vlaneseq
    %v11093 = vshrl.u32 %v11092, 7
    %v11094 = vsub.s32 %v11091, %v11093
    %v11095 = vrot.slane %v11085, %v11094
    %v11097 = vunpack.c.l.s4 1983009808
    %v11098 = vunpack.c.0.s8 %v11097
    %v11099 = vlaneseq
    %v11100 = vshrl.u32 %v11099, 7
    %v11101 = vsub.s32 %v11098, %v11100
    %v11102 = vrot.slane %v11086, %v11101
    %v11104 = vunpack.c.l.s4 1983009808
    %v11105 = vunpack.c.0.s8 %v11104
    %v11106 = vlaneseq
    %v11107 = vshrl.u32 %v11106, 7
    %v11108 = vsub.s32 %v11105, %v11107
    %v11109 = vrot.slane %v11087, %v11108
    %v11111 = vunpack.c.l.s4 1983009808
    %v11112 = vunpack.c.0.s8 %v11111
    %v11113 = vlaneseq
    %v11114 = vshrl.u32 %v11113, 7
    %v11115 = vsub.s32 %v11112, %v11114
    %v11116 = vrot.slane %v11088, %v11115
    %v11117 = vcombine.low %v11095, %v11109
    %v11118 = vcombine.high %v11095, %v11109
    %v11119 = vcombine.low %v11102, %v11116
    %v11120 = vcombine.high %v11102, %v11116
    %v11121 = vcombine.low %v10133, %v10166
    %v11122 = vcombine.high %v10133, %v10166
    %v11123 = vcombine.low %v10199, %v10232
    %v11124 = vcombine.high %v10199, %v10232
    %v11126 = vunpack.c.l.s4 1983009808
    %v11127 = vunpack.c.0.s8 %v11126
    %v11128 = vlaneseq
    %v11129 = vshrl.u32 %v11128, 7
    %v11130 = vsub.s32 %v11127, %v11129
    %v11131 = vrot.slane %v11121, %v11130
    %v11133 = vunpack.c.l.s4 1983009808
    %v11134 = vunpack.c.0.s8 %v11133
    %v11135 = vlaneseq
    %v11136 = vshrl.u32 %v11135, 7
    %v11137 = vsub.s32 %v11134, %v11136
    %v11138 = vrot.slane %v11122, %v11137
    %v11140 = vunpack.c.l.s4 1983009808
    %v11141 = vunpack.c.0.s8 %v11140
    %v11142 = vlaneseq
    %v11143 = vshrl.u32 %v11142, 7
    %v11144 = vsub.s32 %v11141, %v11143
    %v11145 = vrot.slane %v11123, %v11144
    %v11147 = vunpack.c.l.s4 1983009808
    %v11148 = vunpack.c.0.s8 %v11147
    %v11149 = vlaneseq
    %v11150 = vshrl.u32 %v11149, 7
    %v11151 = vsub.s32 %v11148, %v11150
    %v11152 = vrot.slane %v11124, %v11151
    %v11153 = vcombine.low %v11131, %v11145
    %v11154 = vcombine.high %v11131, %v11145
    %v11155 = vcombine.low %v11138, %v11152
    %v11156 = vcombine.high %v11138, %v11152
    %v11157 = vcombine.low %v10140, %v10173
    %v11158 = vcombine.low %v10206, %v10239
    %v11160 = vunpack.c.l.s4 1983009808
    %v11161 = vunpack.c.0.s8 %v11160
    %v11162 = vlaneseq
    %v11163 = vshrl.u32 %v11162, 7
    %v11164 = vsub.s32 %v11161, %v11163
    %v11165 = vrot.slane %v11157, %v11164
    %v11167 = vunpack.c.l.s4 1983009808
    %v11168 = vunpack.c.0.s8 %v11167
    %v11169 = vlaneseq
    %v11170 = vshrl.u32 %v11169, 7
    %v11171 = vsub.s32 %v11168, %v11170
    %v11172 = vrot.slane %v11158, %v11171
    %v11173 = vcombine.low %v11165, %v11172
    %v11174 = vcombine.low %v10248, %v10281
    %v11175 = vcombine.high %v10248, %v10281
    %v11176 = vcombine.low %v10314, %v10347
    %v11177 = vcombine.high %v10314, %v10347
    %v11179 = vunpack.c.l.s4 1983009808
    %v11180 = vunpack.c.0.s8 %v11179
    %v11181 = vlaneseq
    %v11182 = vshrl.u32 %v11181, 7
    %v11183 = vsub.s32 %v11180, %v11182
    %v11184 = vrot.slane %v11174, %v11183
    %v11186 = vunpack.c.l.s4 1983009808
    %v11187 = vunpack.c.0.s8 %v11186
    %v11188 = vlaneseq
    %v11189 = vshrl.u32 %v11188, 7
    %v11190 = vsub.s32 %v11187, %v11189
    %v11191 = vrot.slane %v11175, %v11190
    %v11193 = vunpack.c.l.s4 1983009808
    %v11194 = vunpack.c.0.s8 %v11193
    %v11195 = vlaneseq
    %v11196 = vshrl.u32 %v11195, 7
    %v11197 = vsub.s32 %v11194, %v11196
    %v11198 = vrot.slane %v11176, %v11197
    %v11200 = vunpack.c.l.s4 1983009808
    %v11201 = vunpack.c.0.s8 %v11200
    %v11202 = vlaneseq
    %v11203 = vshrl.u32 %v11202, 7
    %v11204 = vsub.s32 %v11201, %v11203
    %v11205 = vrot.slane %v11177, %v11204
    %v11206 = vcombine.low %v11184, %v11198
    %v11207 = vcombine.high %v11184, %v11198
    %v11208 = vcombine.low %v11191, %v11205
    %v11209 = vcombine.high %v11191, %v11205
    %v11210 = vcombine.low %v10265, %v10298
    %v11211 = vcombine.high %v10265, %v10298
    %v11212 = vcombine.low %v10331, %v10364
    %v11213 = vcombine.high %v10331, %v10364
    %v11215 = vunpack.c.l.s4 1983009808
    %v11216 = vunpack.c.0.s8 %v11215
    %v11217 = vlaneseq
    %v11218 = vshrl.u32 %v11217, 7
    %v11219 = vsub.s32 %v11216, %v11218
    %v11220 = vrot.slane %v11210, %v11219
    %v11222 = vunpack.c.l.s4 1983009808
    %v11223 = vunpack.c.0.s8 %v11222
    %v11224 = vlaneseq
    %v11225 = vshrl.u32 %v11224, 7
    %v11226 = vsub.s32 %v11223, %v11225
    %v11227 = vrot.slane %v11211, %v11226
    %v11229 = vunpack.c.l.s4 1983009808
    %v11230 = vunpack.c.0.s8 %v11229
    %v11231 = vlaneseq
    %v11232 = vshrl.u32 %v11231, 7
    %v11233 = vsub.s32 %v11230, %v11232
    %v11234 = vrot.slane %v11212, %v11233
    %v11236 = vunpack.c.l.s4 1983009808
    %v11237 = vunpack.c.0.s8 %v11236
    %v11238 = vlaneseq
    %v11239 = vshrl.u32 %v11238, 7
    %v11240 = vsub.s32 %v11237, %v11239
    %v11241 = vrot.slane %v11213, %v11240
    %v11242 = vcombine.low %v11220, %v11234
    %v11243 = vcombine.high %v11220, %v11234
    %v11244 = vcombine.low %v11227, %v11241
    %v11245 = vcombine.high %v11227, %v11241
    %v11246 = vcombine.low %v10272, %v10305
    %v11247 = vcombine.low %v10338, %v10371
    %v11249 = vunpack.c.l.s4 1983009808
    %v11250 = vunpack.c.0.s8 %v11249
    %v11251 = vlaneseq
    %v11252 = vshrl.u32 %v11251, 7
    %v11253 = vsub.s32 %v11250, %v11252
    %v11254 = vrot.slane %v11246, %v11253
    %v11256 = vunpack.c.l.s4 1983009808
    %v11257 = vunpack.c.0.s8 %v11256
    %v11258 = vlaneseq
    %v11259 = vshrl.u32 %v11258, 7
    %v11260 = vsub.s32 %v11257, %v11259
    %v11261 = vrot.slane %v11247, %v11260
    %v11262 = vcombine.low %v11254, %v11261
    %v11263 = vcombine.low %v10380, %v10413
    %v11264 = vcombine.high %v10380, %v10413
    %v11265 = vcombine.low %v10446, %v10479
    %v11266 = vcombine.high %v10446, %v10479
    %v11268 = vunpack.c.l.s4 1983009808
    %v11269 = vunpack.c.0.s8 %v11268
    %v11270 = vlaneseq
    %v11271 = vshrl.u32 %v11270, 7
    %v11272 = vsub.s32 %v11269, %v11271
    %v11273 = vrot.slane %v11263, %v11272
    %v11275 = vunpack.c.l.s4 1983009808
    %v11276 = vunpack.c.0.s8 %v11275
    %v11277 = vlaneseq
    %v11278 = vshrl.u32 %v11277, 7
    %v11279 = vsub.s32 %v11276, %v11278
    %v11280 = vrot.slane %v11264, %v11279
    %v11282 = vunpack.c.l.s4 1983009808
    %v11283 = vunpack.c.0.s8 %v11282
    %v11284 = vlaneseq
    %v11285 = vshrl.u32 %v11284, 7
    %v11286 = vsub.s32 %v11283, %v11285
    %v11287 = vrot.slane %v11265, %v11286
    %v11289 = vunpack.c.l.s4 1983009808
    %v11290 = vunpack.c.0.s8 %v11289
    %v11291 = vlaneseq
    %v11292 = vshrl.u32 %v11291, 7
    %v11293 = vsub.s32 %v11290, %v11292
    %v11294 = vrot.slane %v11266, %v11293
    %v11295 = vcombine.low %v11273, %v11287
    %v11296 = vcombine.high %v11273, %v11287
    %v11297 = vcombine.low %v11280, %v11294
    %v11298 = vcombine.high %v11280, %v11294
    %v11299 = vcombine.low %v10397, %v10430
    %v11300 = vcombine.high %v10397, %v10430
    %v11301 = vcombine.low %v10463, %v10488
    %v11302 = vcombine.high %v10463, %v10488
    %v11304 = vunpack.c.l.s4 1983009808
    %v11305 = vunpack.c.0.s8 %v11304
    %v11306 = vlaneseq
    %v11307 = vshrl.u32 %v11306, 7
    %v11308 = vsub.s32 %v11305, %v11307
    %v11309 = vrot.slane %v11299, %v11308
    %v11311 = vunpack.c.l.s4 1983009808
    %v11312 = vunpack.c.0.s8 %v11311
    %v11313 = vlaneseq
    %v11314 = vshrl.u32 %v11313, 7
    %v11315 = vsub.s32 %v11312, %v11314
    %v11316 = vrot.slane %v11300, %v11315
    %v11318 = vunpack.c.l.s4 1983009808
    %v11319 = vunpack.c.0.s8 %v11318
    %v11320 = vlaneseq
    %v11321 = vshrl.u32 %v11320, 7
    %v11322 = vsub.s32 %v11319, %v11321
    %v11323 = vrot.slane %v11301, %v11322
    %v11325 = vunpack.c.l.s4 1983009808
    %v11326 = vunpack.c.0.s8 %v11325
    %v11327 = vlaneseq
    %v11328 = vshrl.u32 %v11327, 7
    %v11329 = vsub.s32 %v11326, %v11328
    %v11330 = vrot.slane %v11302, %v11329
    %v11331 = vcombine.low %v11309, %v11323
    %v11332 = vcombine.high %v11309, %v11323
    %v11333 = vcombine.low %v11316, %v11330
    %v11334 = vcombine.high %v11316, %v11330
    %v11335 = vcombine.low %v10404, %v10437
    %v11336 = vcombine.low %v10470, %v9967
    %v11338 = vunpack.c.l.s4 1983009808
    %v11339 = vunpack.c.0.s8 %v11338
    %v11340 = vlaneseq
    %v11341 = vshrl.u32 %v11340, 7
    %v11342 = vsub.s32 %v11339, %v11341
    %v11343 = vrot.slane %v11335, %v11342
    %v11345 = vunpack.c.l.s4 1983009808
    %v11346 = vunpack.c.0.s8 %v11345
    %v11347 = vlaneseq
    %v11348 = vshrl.u32 %v11347, 7
    %v11349 = vsub.s32 %v11346, %v11348
    %v11350 = vrot.slane %v11336, %v11349
    %v11351 = vcombine.low %v11343, %v11350
    %v11568 = vunpack.c.l.b16 %v10489
    %v11569 = vunpack.c.l.b16 %v10490
    %v11570 = vunpack.c.l.b16 %v10491
    %v11571 = vunpack.c.l.b16 %v10492
    %v11572 = vunpack.c.l.b16 %v10493
    %v11573 = vunpack.c.l.b16 %v10494
    %v11574 = vunpack.c.l.b16 %v10495
    %v11575 = vunpack.c.l.b16 %v10496
    %v11576 = vunpack.c.l.b16 %v10497
    %v11577 = vunpack.c.l.b16 %v10498
    %v11578 = vunpack.c.l.b16 %v10499
    %v11579 = vunpack.c.l.b16 %v10500
    %v11580 = vunpack.c.l.b16 %v10501
    %v11581 = vunpack.c.l.b16 %v10502
    %v11582 = vunpack.c.l.b16 %v10503
    %v11583 = vunpack.c.l.b16 %v10504
    %v11584 = vunpack.c.l.b16 %v10505
    %v11585 = vunpack.c.l.b16 %v10506
    %v11586 = vunpack.c.l.b16 %v10507
    %v11587 = vunpack.c.l.b16 %v10508
    %v11588 = vunpack.c.l.b16 %v10509
    %v11589 = vunpack.c.l.b16 %v10510
    %v11590 = vunpack.c.l.b16 %v10511
    %v11591 = vunpack.c.l.b16 %v10512
    %v11592 = vunpack.c.l.b16 %v10513
    %v11593 = vunpack.c.l.b16 %v10514
    %v11594 = vunpack.c.l.b16 %v10515
    %v11595 = vunpack.c.l.b16 %v10516
    %v11596 = vunpack.c.l.b16 %v10517
    %v11597 = vunpack.c.l.b16 %v10518
    %v11598 = vunpack.c.l.b16 %v10519
    %v11599 = vunpack.c.l.b16 %v10520
    %v11600 = vunpack.c.l.b16 %v10521
    %v11601 = vunpack.c.l.b16 %v10522
    %v11602 = vunpack.c.l.b16 %v10523
    %v11603 = vunpack.c.l.b16 %v10524
    %v11604 = vunpack.c.l.b16 %v10525
    %v11605 = vunpack.c.l.b16 %v10526
    %v11606 = vunpack.c.l.b16 %v10527
    %v11607 = vunpack.c.l.b16 %v10528
    %v11608 = vunpack.c.l.b16 %v10529
    %v11609 = vunpack.c.l.b16 %v10530
    %v11610 = vunpack.c.l.b16 %v10531
    %v11611 = vunpack.c.l.b16 %v10532
    %v11612 = vunpack.c.l.b16 %v10533
    %v11613 = vunpack.c.l.b16 %v10534
    %v11614 = vunpack.c.l.b16 %v10535
    %v11615 = vunpack.c.l.b16 %v10536
    %v11616 = vunpack.c.l.b16 %v10537
    %v11617 = vunpack.c.l.b16 %v10538
    %v11618 = vunpack.c.l.b16 %v10539
    %v11619 = vunpack.c.l.b16 %v10540
    %v11620 = vunpack.c.l.b16 %v10541
    %v11621 = vunpack.c.l.b16 %v10542
    %v11622 = vunpack.c.l.b16 %v10543
    %v11623 = vunpack.c.l.b16 %v10544
    %v11624 = vunpack.c.l.b16 %v10545
    %v11625 = vunpack.c.l.b16 %v10546
    %v11626 = vunpack.c.l.b16 %v10547
    %v11627 = vunpack.c.l.b16 %v10548
    %v11628 = vunpack.c.l.b16 %v10549
    %v11629 = vunpack.c.l.b16 %v10550
    %v11630 = vunpack.c.l.b16 %v10551
    %v11631 = vunpack.c.l.b16 %v10552
    %v11632 = vunpack.c.l.b16 %v10553
    %v11633 = vunpack.c.l.b16 %v10554
    %v11634 = vunpack.c.l.b16 %v10555
    %v11635 = vunpack.c.l.b16 %v10556
    %v11636 = vunpack.c.l.b16 %v10557
    %v11637 = vunpack.c.l.b16 %v10558
    %v11638 = vunpack.c.l.b16 %v10559
    %v11639 = vunpack.c.l.b16 %v10560
    %v11640 = vunpack.c.l.b16 %v10561
    %v11641 = vunpack.c.l.b16 %v10562
    %v11642 = vunpack.c.l.b16 %v10563
    %v11643 = vunpack.c.l.b16 %v10564
    %v11644 = vunpack.c.l.b16 %v10565
    %v11645 = vunpack.c.l.b16 %v10566
    %v11646 = vunpack.c.l.b16 %v10567
    %v11647 = vunpack.c.l.b16 %v10568
    %v11648 = vunpack.c.l.b16 %v10569
    %v11649 = vunpack.c.l.b16 %v10570
    %v11650 = vunpack.c.l.b16 %v10571
    %v11651 = vunpack.c.l.b16 %v10572
    %v11652 = vunpack.c.l.b16 %v10573
    %v11653 = vunpack.c.l.b16 %v10574
    %v11654 = vunpack.c.l.b16 %v10575
    %v11655 = vunpack.c.l.b16 %v10576
    %v11656 = vunpack.c.l.b16 %v10577
    %v11657 = vunpack.c.l.b16 %v10578
    %v11658 = vunpack.c.l.b16 %v10579
    %v11659 = vunpack.c.l.b16 %v10580
    %v11660 = vunpack.c.l.b16 %v10581
    %v11661 = vunpack.c.l.b16 %v10582
    %v11662 = vunpack.c.l.b16 %v10583
    %v11663 = vunpack.c.l.b16 %v10584
    %v11664 = vunpack.c.l.b16 %v10585
    %v11665 = vunpack.c.l.b16 %v10586
    %v11666 = vunpack.c.l.b16 %v10587
    %v11667 = vunpack.c.l.b16 %v10588
    %v11668 = vunpack.c.l.b16 %v10589
    %v11669 = vunpack.c.l.b16 %v10590
    %v11670 = vunpack.c.l.b16 %v10591
    %v11671 = vunpack.c.l.b16 %v10592
    %v11672 = vunpack.c.l.b16 %v10593
    %v11673 = vunpack.c.l.b16 %v10594
    %v11674 = vunpack.c.l.b16 %v10595
    %v11675 = vunpack.c.l.b16 %v10596
    %v11676 = vunpack.c.l.b16 %v10597
    %v11677 = vunpack.c.l.b16 %v10598
    %v11678 = vunpack.c.l.b16 %v10599
    %v11679 = vunpack.c.l.b16 %v10600
    %v11680 = vunpack.c.l.b16 %v10601
    %v11681 = vunpack.c.l.b16 %v10602
    %v11682 = vunpack.c.l.b16 %v10603
    %v11683 = vunpack.c.l.b16 %v10604
    %v11684 = vunpack.c.l.b16 %v10605
    %v11685 = vunpack.c.l.b16 %v10606
    %v11686 = vunpack.c.l.b16 %v10607
    %v11687 = vunpack.c.l.b16 %v10608
    %v11688 = vunpack.c.l.b16 %v10609
    %v11689 = vunpack.c.l.b16 %v10610
    %v11690 = vunpack.c.l.b16 %v10611
    %v11691 = vunpack.c.l.b16 %v10612
    %v11692 = vunpack.c.l.b16 %v10613
    %v11693 = vunpack.c.l.b16 %v10614
    %v11694 = vunpack.c.l.b16 %v10615
    %v11695 = vunpack.c.l.b16 %v10616
    %v11696 = vunpack.c.l.b16 %v10617
    %v11697 = vunpack.c.l.b16 %v10618
    %v11698 = vunpack.c.l.b16 %v10619
    %v11699 = vunpack.c.l.b16 %v10620
    %v11700 = vunpack.c.l.b16 %v10621
    %v11701 = vunpack.c.l.b16 %v10622
    %v11702 = vunpack.c.l.b16 %v10623
    %v11703 = vunpack.c.l.b16 %v10624
    %v11704 = vunpack.c.l.b16 %v10625
    %v11705 = vunpack.c.l.b16 %v10626
    %v11706 = vunpack.c.l.b16 %v10627
    %v11707 = vunpack.c.l.b16 %v10628
    %v11708 = vunpack.c.l.b16 %v10629
    %v11709 = vunpack.c.l.b16 %v10630
    %v11710 = vunpack.c.l.b16 %v10631
    %v11711 = vunpack.c.l.b16 %v10632
    %v11712 = vpack.c.b16 %v11569, %v11568
    %v11713 = vpack.c.b16 %v11571, %v11570
    %v11714 = vpack.c.b16 %v11573, %v11572
    %v11715 = vpack.c.b16 %v11575, %v11574
    %v11716 = vpack.c.b16 %v11577, %v11576
    %v11717 = vpack.c.b16 %v11579, %v11578
    %v11718 = vpack.c.b16 %v11581, %v11580
    %v11719 = vpack.c.b16 %v11583, %v11582
    %v11720 = vpack.c.b16 %v11585, %v11584
    %v11721 = vpack.c.b16 %v11587, %v11586
    %v11722 = vpack.c.b16 %v11589, %v11588
    %v11723 = vpack.c.b16 %v11591, %v11590
    %v11724 = vpack.c.b16 %v11593, %v11592
    %v11725 = vpack.c.b16 %v11595, %v11594
    %v11726 = vpack.c.b16 %v11597, %v11596
    %v11727 = vpack.c.b16 %v11599, %v11598
    %v11728 = vpack.c.b16 %v11601, %v11600
    %v11729 = vpack.c.b16 %v11603, %v11602
    %v11730 = vpack.c.b16 %v11605, %v11604
    %v11731 = vpack.c.b16 %v11607, %v11606
    %v11732 = vpack.c.b16 %v11609, %v11608
    %v11733 = vpack.c.b16 %v11611, %v11610
    %v11734 = vpack.c.b16 %v11613, %v11612
    %v11735 = vpack.c.b16 %v11615, %v11614
    %v11736 = vpack.c.b16 %v11617, %v11616
    %v11737 = vpack.c.b16 %v11619, %v11618
    %v11738 = vpack.c.b16 %v11621, %v11620
    %v11739 = vpack.c.b16 %v11623, %v11622
    %v11740 = vpack.c.b16 %v11625, %v11624
    %v11741 = vpack.c.b16 %v11627, %v11626
    %v11742 = vpack.c.b16 %v11629, %v11628
    %v11743 = vpack.c.b16 %v11631, %v11630
    %v11744 = vpack.c.b16 %v11633, %v11632
    %v11745 = vpack.c.b16 %v11635, %v11634
    %v11746 = vpack.c.b16 %v11637, %v11636
    %v11747 = vpack.c.b16 %v11639, %v11638
    %v11748 = vpack.c.b16 %v11641, %v11640
    %v11749 = vpack.c.b16 %v11643, %v11642
    %v11750 = vpack.c.b16 %v11645, %v11644
    %v11751 = vpack.c.b16 %v11647, %v11646
    %v11752 = vpack.c.b16 %v11649, %v11648
    %v11753 = vpack.c.b16 %v11651, %v11650
    %v11754 = vpack.c.b16 %v11653, %v11652
    %v11755 = vpack.c.b16 %v11655, %v11654
    %v11756 = vpack.c.b16 %v11657, %v11656
    %v11757 = vpack.c.b16 %v11659, %v11658
    %v11758 = vpack.c.b16 %v11661, %v11660
    %v11759 = vpack.c.b16 %v11663, %v11662
    %v11760 = vpack.c.b16 %v11665, %v11664
    %v11761 = vpack.c.b16 %v11667, %v11666
    %v11762 = vpack.c.b16 %v11669, %v11668
    %v11763 = vpack.c.b16 %v11671, %v11670
    %v11764 = vpack.c.b16 %v11673, %v11672
    %v11765 = vpack.c.b16 %v11675, %v11674
    %v11766 = vpack.c.b16 %v11677, %v11676
    %v11767 = vpack.c.b16 %v11679, %v11678
    %v11768 = vpack.c.b16 %v11681, %v11680
    %v11769 = vpack.c.b16 %v11683, %v11682
    %v11770 = vpack.c.b16 %v11685, %v11684
    %v11771 = vpack.c.b16 %v11687, %v11686
    %v11772 = vpack.c.b16 %v11689, %v11688
    %v11773 = vpack.c.b16 %v11691, %v11690
    %v11774 = vpack.c.b16 %v11693, %v11692
    %v11775 = vpack.c.b16 %v11695, %v11694
    %v11776 = vpack.c.b16 %v11697, %v11696
    %v11777 = vpack.c.b16 %v11699, %v11698
    %v11778 = vpack.c.b16 %v11701, %v11700
    %v11779 = vpack.c.b16 %v11703, %v11702
    %v11780 = vpack.c.b16 %v11705, %v11704
    %v11781 = vpack.c.b16 %v11707, %v11706
    %v11782 = vpack.c.b16 %v11709, %v11708
    %v11783 = vpack.c.b16 %v11711, %v11710
    %11856 = vmatprep.subr.bf16.mxu0 0
    %11857 = vmatpush1.bf16.msra.mxu0 %v11719
    %11858 = vmatprep.subr.bf16.mxu0 0
    %11859 = vmatpush1.bf16.msra.mxu0 %v11718
    %11860 = vmatprep.subr.bf16.mxu0 0
    %11861 = vmatpush1.bf16.msra.mxu0 %v11717
    %11862 = vmatprep.subr.bf16.mxu0 0
    %11863 = vmatpush1.bf16.msra.mxu0 %v11716
    %11864 = vmatprep.subr.bf16.mxu0 0
    %11865 = vmatpush1.bf16.msra.mxu0 %v11715
    %11866 = vmatprep.subr.bf16.mxu0 0
    %11867 = vmatpush1.bf16.msra.mxu0 %v11714
    %11868 = vmatprep.subr.bf16.mxu0 0
    %11869 = vmatpush1.bf16.msra.mxu0 %v11713
    %11870 = vmatprep.subr.bf16.mxu0 0
    %11871 = vmatpush1.bf16.msra.mxu0 %v11712
    %11872 = vmatprep.subr.bf16.mxu0 0
    %11873 = vmatpush2.bf16.msra.mxu0 %v11727
    %11874 = vmatprep.subr.bf16.mxu0 0
    %11875 = vmatpush2.bf16.msra.mxu0 %v11726
    %11876 = vmatprep.subr.bf16.mxu0 0
    %11877 = vmatpush2.bf16.msra.mxu0 %v11725
    %11878 = vmatprep.subr.bf16.mxu0 0
    %11879 = vmatpush2.bf16.msra.mxu0 %v11724
    %11880 = vmatprep.subr.bf16.mxu0 0
    %11881 = vmatpush2.bf16.msra.mxu0 %v11723
    %11882 = vmatprep.subr.bf16.mxu0 0
    %11883 = vmatpush2.bf16.msra.mxu0 %v11722
    %11884 = vmatprep.subr.bf16.mxu0 0
    %11885 = vmatpush2.bf16.msra.mxu0 %v11721
    %11886 = vmatprep.subr.bf16.mxu0 0
    %11887 = vmatpush2.bf16.msra.mxu0 %v11720
    %11888 = vmatprep.mubr.bf16.mxu0 %v10673
    %11889 = vmatmul.mubr.bf16.gmra.mxu0 %v10672
    %v11890 = vpop.f32.mrf.mxu0
    %v11891 = vadd.f32 %v10638, %v11890
    %v11892 = vpop.f32.mrf.mxu0
    %v11893 = vpop.f32.mrf.mxu0
    %v11894 = vadd.f32 %v10638, %v11893
    %v11895 = vpop.f32.mrf.mxu0
    %11896 = vmatprep.mubr.bf16.mxu0 %v10762
    %11897 = vmatmul.mubr.bf16.gmra.mxu0 %v10761
    %v11898 = vpop.f32.mrf.mxu0
    %v11899 = vadd.f32 %v10638, %v11898
    %v11900 = vpop.f32.mrf.mxu0
    %v11901 = vpop.f32.mrf.mxu0
    %v11902 = vadd.f32 %v10638, %v11901
    %v11903 = vpop.f32.mrf.mxu0
    %11904 = vmatprep.mubr.bf16.mxu0 %v10851
    %11905 = vmatmul.mubr.bf16.gmra.mxu0 %v10850
    %v11906 = vpop.f32.mrf.mxu0
    %v11907 = vadd.f32 %v10638, %v11906
    %v11908 = vpop.f32.mrf.mxu0
    %v11909 = vpop.f32.mrf.mxu0
    %v11910 = vadd.f32 %v10638, %v11909
    %v11911 = vpop.f32.mrf.mxu0
    %11912 = vmatprep.mubr.bf16.mxu0 %v10940
    %11913 = vmatmul.mubr.bf16.gmra.mxu0 %v10939
    %v11914 = vpop.f32.mrf.mxu0
    %v11915 = vadd.f32 %v10638, %v11914
    %v11916 = vpop.f32.mrf.mxu0
    %v11917 = vpop.f32.mrf.mxu0
    %v11918 = vadd.f32 %v10638, %v11917
    %v11919 = vpop.f32.mrf.mxu0
    %11920 = vmatprep.mubr.bf16.mxu0 %v11029
    %11921 = vmatmul.mubr.bf16.gmra.mxu0 %v11028
    %v11922 = vpop.f32.mrf.mxu0
    %v11923 = vadd.f32 %v10638, %v11922
    %v11924 = vpop.f32.mrf.mxu0
    %v11925 = vpop.f32.mrf.mxu0
    %v11926 = vadd.f32 %v10638, %v11925
    %v11927 = vpop.f32.mrf.mxu0
    %11928 = vmatprep.mubr.bf16.mxu0 %v11118
    %11929 = vmatmul.mubr.bf16.gmra.mxu0 %v11117
    %v11930 = vpop.f32.mrf.mxu0
    %v11931 = vadd.f32 %v10638, %v11930
    %v11932 = vpop.f32.mrf.mxu0
    %v11933 = vpop.f32.mrf.mxu0
    %v11934 = vadd.f32 %v10638, %v11933
    %v11935 = vpop.f32.mrf.mxu0
    %11936 = vmatprep.mubr.bf16.mxu0 %v11207
    %11937 = vmatmul.mubr.bf16.gmra.mxu0 %v11206
    %v11938 = vpop.f32.mrf.mxu0
    %v11939 = vadd.f32 %v10638, %v11938
    %v11940 = vpop.f32.mrf.mxu0
    %v11941 = vpop.f32.mrf.mxu0
    %v11942 = vadd.f32 %v10638, %v11941
    %v11943 = vpop.f32.mrf.mxu0
    %11944 = vmatprep.mubr.bf16.mxu0 %v11296
    %11945 = vmatmul.mubr.bf16.gmra.mxu0 %v11295
    %v11946 = vpop.f32.mrf.mxu0
    %v11947 = vadd.f32 %v10638, %v11946
    %v11948 = vpop.f32.mrf.mxu0
    %v11949 = vpop.f32.mrf.mxu0
    %v11950 = vadd.f32 %v10638, %v11949
    %v11951 = vpop.f32.mrf.mxu0
    %11952 = vdwg.mxu0
    %11953 = vmatprep.subr.bf16.mxu0 0
    %11954 = vmatpush1.bf16.msra.mxu0 %v11735
    %11955 = vmatprep.subr.bf16.mxu0 0
    %11956 = vmatpush1.bf16.msra.mxu0 %v11734
    %11957 = vmatprep.subr.bf16.mxu0 0
    %11958 = vmatpush1.bf16.msra.mxu0 %v11733
    %11959 = vmatprep.subr.bf16.mxu0 0
    %11960 = vmatpush1.bf16.msra.mxu0 %v11732
    %11961 = vmatprep.subr.bf16.mxu0 0
    %11962 = vmatpush1.bf16.msra.mxu0 %v11731
    %11963 = vmatprep.subr.bf16.mxu0 0
    %11964 = vmatpush1.bf16.msra.mxu0 %v11730
    %11965 = vmatprep.subr.bf16.mxu0 0
    %11966 = vmatpush1.bf16.msra.mxu0 %v11729
    %11967 = vmatprep.subr.bf16.mxu0 0
    %11968 = vmatpush1.bf16.msra.mxu0 %v11728
    %11969 = vmatprep.subr.bf16.mxu0 0
    %11970 = vmatpush2.bf16.msra.mxu0 %v11743
    %11971 = vmatprep.subr.bf16.mxu0 0
    %11972 = vmatpush2.bf16.msra.mxu0 %v11742
    %11973 = vmatprep.subr.bf16.mxu0 0
    %11974 = vmatpush2.bf16.msra.mxu0 %v11741
    %11975 = vmatprep.subr.bf16.mxu0 0
    %11976 = vmatpush2.bf16.msra.mxu0 %v11740
    %11977 = vmatprep.subr.bf16.mxu0 0
    %11978 = vmatpush2.bf16.msra.mxu0 %v11739
    %11979 = vmatprep.subr.bf16.mxu0 0
    %11980 = vmatpush2.bf16.msra.mxu0 %v11738
    %11981 = vmatprep.subr.bf16.mxu0 0
    %11982 = vmatpush2.bf16.msra.mxu0 %v11737
    %11983 = vmatprep.subr.bf16.mxu0 0
    %11984 = vmatpush2.bf16.msra.mxu0 %v11736
    %11985 = vmatprep.mubr.bf16.mxu0 %v10675
    %11986 = vmatmul.mubr.bf16.gmra.mxu0 %v10674
    %v11987 = vpop.f32.mrf.mxu0
    %v11988 = vadd.f32 %v11891, %v11987
    %v11989 = vpop.f32.mrf.mxu0
    %v11990 = vpop.f32.mrf.mxu0
    %v11991 = vadd.f32 %v11894, %v11990
    %v11992 = vpop.f32.mrf.mxu0
    %11993 = vmatprep.mubr.bf16.mxu0 %v10764
    %11994 = vmatmul.mubr.bf16.gmra.mxu0 %v10763
    %v11995 = vpop.f32.mrf.mxu0
    %v11996 = vadd.f32 %v11899, %v11995
    %v11997 = vpop.f32.mrf.mxu0
    %v11998 = vpop.f32.mrf.mxu0
    %v11999 = vadd.f32 %v11902, %v11998
    %v12000 = vpop.f32.mrf.mxu0
    %12001 = vmatprep.mubr.bf16.mxu0 %v10853
    %12002 = vmatmul.mubr.bf16.gmra.mxu0 %v10852
    %v12003 = vpop.f32.mrf.mxu0
    %v12004 = vadd.f32 %v11907, %v12003
    %v12005 = vpop.f32.mrf.mxu0
    %v12006 = vpop.f32.mrf.mxu0
    %v12007 = vadd.f32 %v11910, %v12006
    %v12008 = vpop.f32.mrf.mxu0
    %12009 = vmatprep.mubr.bf16.mxu0 %v10942
    %12010 = vmatmul.mubr.bf16.gmra.mxu0 %v10941
    %v12011 = vpop.f32.mrf.mxu0
    %v12012 = vadd.f32 %v11915, %v12011
    %v12013 = vpop.f32.mrf.mxu0
    %v12014 = vpop.f32.mrf.mxu0
    %v12015 = vadd.f32 %v11918, %v12014
    %v12016 = vpop.f32.mrf.mxu0
    %12017 = vmatprep.mubr.bf16.mxu0 %v11031
    %12018 = vmatmul.mubr.bf16.gmra.mxu0 %v11030
    %v12019 = vpop.f32.mrf.mxu0
    %v12020 = vadd.f32 %v11923, %v12019
    %v12021 = vpop.f32.mrf.mxu0
    %v12022 = vpop.f32.mrf.mxu0
    %v12023 = vadd.f32 %v11926, %v12022
    %v12024 = vpop.f32.mrf.mxu0
    %12025 = vmatprep.mubr.bf16.mxu0 %v11120
    %12026 = vmatmul.mubr.bf16.gmra.mxu0 %v11119
    %v12027 = vpop.f32.mrf.mxu0
    %v12028 = vadd.f32 %v11931, %v12027
    %v12029 = vpop.f32.mrf.mxu0
    %v12030 = vpop.f32.mrf.mxu0
    %v12031 = vadd.f32 %v11934, %v12030
    %v12032 = vpop.f32.mrf.mxu0
    %12033 = vmatprep.mubr.bf16.mxu0 %v11209
    %12034 = vmatmul.mubr.bf16.gmra.mxu0 %v11208
    %v12035 = vpop.f32.mrf.mxu0
    %v12036 = vadd.f32 %v11939, %v12035
    %v12037 = vpop.f32.mrf.mxu0
    %v12038 = vpop.f32.mrf.mxu0
    %v12039 = vadd.f32 %v11942, %v12038
    %v12040 = vpop.f32.mrf.mxu0
    %12041 = vmatprep.mubr.bf16.mxu0 %v11298
    %12042 = vmatmul.mubr.bf16.gmra.mxu0 %v11297
    %v12043 = vpop.f32.mrf.mxu0
    %v12044 = vadd.f32 %v11947, %v12043
    %v12045 = vpop.f32.mrf.mxu0
    %v12046 = vpop.f32.mrf.mxu0
    %v12047 = vadd.f32 %v11950, %v12046
    %v12048 = vpop.f32.mrf.mxu0
    %12049 = vdwg.mxu0
    %12050 = vmatprep.subr.bf16.mxu0 0
    %12051 = vmatpush1.bf16.msra.mxu0 %v11751
    %12052 = vmatprep.subr.bf16.mxu0 0
    %12053 = vmatpush1.bf16.msra.mxu0 %v11750
    %12054 = vmatprep.subr.bf16.mxu0 0
    %12055 = vmatpush1.bf16.msra.mxu0 %v11749
    %12056 = vmatprep.subr.bf16.mxu0 0
    %12057 = vmatpush1.bf16.msra.mxu0 %v11748
    %12058 = vmatprep.subr.bf16.mxu0 0
    %12059 = vmatpush1.bf16.msra.mxu0 %v11747
    %12060 = vmatprep.subr.bf16.mxu0 0
    %12061 = vmatpush1.bf16.msra.mxu0 %v11746
    %12062 = vmatprep.subr.bf16.mxu0 0
    %12063 = vmatpush1.bf16.msra.mxu0 %v11745
    %12064 = vmatprep.subr.bf16.mxu0 0
    %12065 = vmatpush1.bf16.msra.mxu0 %v11744
    %12066 = vmatprep.subr.bf16.mxu0 0
    %12067 = vmatpush2.bf16.msra.mxu0 %v11759
    %12068 = vmatprep.subr.bf16.mxu0 0
    %12069 = vmatpush2.bf16.msra.mxu0 %v11758
    %12070 = vmatprep.subr.bf16.mxu0 0
    %12071 = vmatpush2.bf16.msra.mxu0 %v11757
    %12072 = vmatprep.subr.bf16.mxu0 0
    %12073 = vmatpush2.bf16.msra.mxu0 %v11756
    %12074 = vmatprep.subr.bf16.mxu0 0
    %12075 = vmatpush2.bf16.msra.mxu0 %v11755
    %12076 = vmatprep.subr.bf16.mxu0 0
    %12077 = vmatpush2.bf16.msra.mxu0 %v11754
    %12078 = vmatprep.subr.bf16.mxu0 0
    %12079 = vmatpush2.bf16.msra.mxu0 %v11753
    %12080 = vmatprep.subr.bf16.mxu0 0
    %12081 = vmatpush2.bf16.msra.mxu0 %v11752
    %12082 = vmatprep.mubr.bf16.mxu0 %v10709
    %12083 = vmatmul.mubr.bf16.gmra.mxu0 %v10708
    %v12084 = vpop.f32.mrf.mxu0
    %v12085 = vadd.f32 %v11988, %v12084
    %v12086 = vpop.f32.mrf.mxu0
    %v12087 = vpop.f32.mrf.mxu0
    %v12088 = vadd.f32 %v11991, %v12087
    %v12089 = vpop.f32.mrf.mxu0
    %12090 = vmatprep.mubr.bf16.mxu0 %v10798
    %12091 = vmatmul.mubr.bf16.gmra.mxu0 %v10797
    %v12092 = vpop.f32.mrf.mxu0
    %v12093 = vadd.f32 %v11996, %v12092
    %v12094 = vpop.f32.mrf.mxu0
    %v12095 = vpop.f32.mrf.mxu0
    %v12096 = vadd.f32 %v11999, %v12095
    %v12097 = vpop.f32.mrf.mxu0
    %12098 = vmatprep.mubr.bf16.mxu0 %v10887
    %12099 = vmatmul.mubr.bf16.gmra.mxu0 %v10886
    %v12100 = vpop.f32.mrf.mxu0
    %v12101 = vadd.f32 %v12004, %v12100
    %v12102 = vpop.f32.mrf.mxu0
    %v12103 = vpop.f32.mrf.mxu0
    %v12104 = vadd.f32 %v12007, %v12103
    %v12105 = vpop.f32.mrf.mxu0
    %12106 = vmatprep.mubr.bf16.mxu0 %v10976
    %12107 = vmatmul.mubr.bf16.gmra.mxu0 %v10975
    %v12108 = vpop.f32.mrf.mxu0
    %v12109 = vadd.f32 %v12012, %v12108
    %v12110 = vpop.f32.mrf.mxu0
    %v12111 = vpop.f32.mrf.mxu0
    %v12112 = vadd.f32 %v12015, %v12111
    %v12113 = vpop.f32.mrf.mxu0
    %12114 = vmatprep.mubr.bf16.mxu0 %v11065
    %12115 = vmatmul.mubr.bf16.gmra.mxu0 %v11064
    %v12116 = vpop.f32.mrf.mxu0
    %v12117 = vadd.f32 %v12020, %v12116
    %v12118 = vpop.f32.mrf.mxu0
    %v12119 = vpop.f32.mrf.mxu0
    %v12120 = vadd.f32 %v12023, %v12119
    %v12121 = vpop.f32.mrf.mxu0
    %12122 = vmatprep.mubr.bf16.mxu0 %v11154
    %12123 = vmatmul.mubr.bf16.gmra.mxu0 %v11153
    %v12124 = vpop.f32.mrf.mxu0
    %v12125 = vadd.f32 %v12028, %v12124
    %v12126 = vpop.f32.mrf.mxu0
    %v12127 = vpop.f32.mrf.mxu0
    %v12128 = vadd.f32 %v12031, %v12127
    %v12129 = vpop.f32.mrf.mxu0
    %12130 = vmatprep.mubr.bf16.mxu0 %v11243
    %12131 = vmatmul.mubr.bf16.gmra.mxu0 %v11242
    %v12132 = vpop.f32.mrf.mxu0
    %v12133 = vadd.f32 %v12036, %v12132
    %v12134 = vpop.f32.mrf.mxu0
    %v12135 = vpop.f32.mrf.mxu0
    %v12136 = vadd.f32 %v12039, %v12135
    %v12137 = vpop.f32.mrf.mxu0
    %12138 = vmatprep.mubr.bf16.mxu0 %v11332
    %12139 = vmatmul.mubr.bf16.gmra.mxu0 %v11331
    %v12140 = vpop.f32.mrf.mxu0
    %v12141 = vadd.f32 %v12044, %v12140
    %v12142 = vpop.f32.mrf.mxu0
    %v12143 = vpop.f32.mrf.mxu0
    %v12144 = vadd.f32 %v12047, %v12143
    %v12145 = vpop.f32.mrf.mxu0
    %12146 = vdwg.mxu0
    %12147 = vmatprep.subr.bf16.mxu0 0
    %12148 = vmatpush1.bf16.msra.mxu0 %v11767
    %12149 = vmatprep.subr.bf16.mxu0 0
    %12150 = vmatpush1.bf16.msra.mxu0 %v11766
    %12151 = vmatprep.subr.bf16.mxu0 0
    %12152 = vmatpush1.bf16.msra.mxu0 %v11765
    %12153 = vmatprep.subr.bf16.mxu0 0
    %12154 = vmatpush1.bf16.msra.mxu0 %v11764
    %12155 = vmatprep.subr.bf16.mxu0 0
    %12156 = vmatpush1.bf16.msra.mxu0 %v11763
    %12157 = vmatprep.subr.bf16.mxu0 0
    %12158 = vmatpush1.bf16.msra.mxu0 %v11762
    %12159 = vmatprep.subr.bf16.mxu0 0
    %12160 = vmatpush1.bf16.msra.mxu0 %v11761
    %12161 = vmatprep.subr.bf16.mxu0 0
    %12162 = vmatpush1.bf16.msra.mxu0 %v11760
    %12163 = vmatprep.subr.bf16.mxu0 0
    %12164 = vmatpush2.bf16.msra.mxu0 %v11775
    %12165 = vmatprep.subr.bf16.mxu0 0
    %12166 = vmatpush2.bf16.msra.mxu0 %v11774
    %12167 = vmatprep.subr.bf16.mxu0 0
    %12168 = vmatpush2.bf16.msra.mxu0 %v11773
    %12169 = vmatprep.subr.bf16.mxu0 0
    %12170 = vmatpush2.bf16.msra.mxu0 %v11772
    %12171 = vmatprep.subr.bf16.mxu0 0
    %12172 = vmatpush2.bf16.msra.mxu0 %v11771
    %12173 = vmatprep.subr.bf16.mxu0 0
    %12174 = vmatpush2.bf16.msra.mxu0 %v11770
    %12175 = vmatprep.subr.bf16.mxu0 0
    %12176 = vmatpush2.bf16.msra.mxu0 %v11769
    %12177 = vmatprep.subr.bf16.mxu0 0
    %12178 = vmatpush2.bf16.msra.mxu0 %v11768
    %12179 = vmatprep.mubr.bf16.mxu0 %v10711
    %12180 = vmatmul.mubr.bf16.gmra.mxu0 %v10710
    %v12181 = vpop.f32.mrf.mxu0
    %v12182 = vadd.f32 %v12085, %v12181
    %v12183 = vpop.f32.mrf.mxu0
    %v12184 = vpop.f32.mrf.mxu0
    %v12185 = vadd.f32 %v12088, %v12184
    %v12186 = vpop.f32.mrf.mxu0
    %12187 = vmatprep.mubr.bf16.mxu0 %v10800
    %12188 = vmatmul.mubr.bf16.gmra.mxu0 %v10799
    %v12189 = vpop.f32.mrf.mxu0
    %v12190 = vadd.f32 %v12093, %v12189
    %v12191 = vpop.f32.mrf.mxu0
    %v12192 = vpop.f32.mrf.mxu0
    %v12193 = vadd.f32 %v12096, %v12192
    %v12194 = vpop.f32.mrf.mxu0
    %12195 = vmatprep.mubr.bf16.mxu0 %v10889
    %12196 = vmatmul.mubr.bf16.gmra.mxu0 %v10888
    %v12197 = vpop.f32.mrf.mxu0
    %v12198 = vadd.f32 %v12101, %v12197
    %v12199 = vpop.f32.mrf.mxu0
    %v12200 = vpop.f32.mrf.mxu0
    %v12201 = vadd.f32 %v12104, %v12200
    %v12202 = vpop.f32.mrf.mxu0
    %12203 = vmatprep.mubr.bf16.mxu0 %v10978
    %12204 = vmatmul.mubr.bf16.gmra.mxu0 %v10977
    %v12205 = vpop.f32.mrf.mxu0
    %v12206 = vadd.f32 %v12109, %v12205
    %v12207 = vpop.f32.mrf.mxu0
    %v12208 = vpop.f32.mrf.mxu0
    %v12209 = vadd.f32 %v12112, %v12208
    %v12210 = vpop.f32.mrf.mxu0
    %12211 = vmatprep.mubr.bf16.mxu0 %v11067
    %12212 = vmatmul.mubr.bf16.gmra.mxu0 %v11066
    %v12213 = vpop.f32.mrf.mxu0
    %v12214 = vadd.f32 %v12117, %v12213
    %v12215 = vpop.f32.mrf.mxu0
    %v12216 = vpop.f32.mrf.mxu0
    %v12217 = vadd.f32 %v12120, %v12216
    %v12218 = vpop.f32.mrf.mxu0
    %12219 = vmatprep.mubr.bf16.mxu0 %v11156
    %12220 = vmatmul.mubr.bf16.gmra.mxu0 %v11155
    %v12221 = vpop.f32.mrf.mxu0
    %v12222 = vadd.f32 %v12125, %v12221
    %v12223 = vpop.f32.mrf.mxu0
    %v12224 = vpop.f32.mrf.mxu0
    %v12225 = vadd.f32 %v12128, %v12224
    %v12226 = vpop.f32.mrf.mxu0
    %12227 = vmatprep.mubr.bf16.mxu0 %v11245
    %12228 = vmatmul.mubr.bf16.gmra.mxu0 %v11244
    %v12229 = vpop.f32.mrf.mxu0
    %v12230 = vadd.f32 %v12133, %v12229
    %v12231 = vpop.f32.mrf.mxu0
    %v12232 = vpop.f32.mrf.mxu0
    %v12233 = vadd.f32 %v12136, %v12232
    %v12234 = vpop.f32.mrf.mxu0
    %12235 = vmatprep.mubr.bf16.mxu0 %v11334
    %12236 = vmatmul.mubr.bf16.gmra.mxu0 %v11333
    %v12237 = vpop.f32.mrf.mxu0
    %v12238 = vadd.f32 %v12141, %v12237
    %v12239 = vpop.f32.mrf.mxu0
    %v12240 = vpop.f32.mrf.mxu0
    %v12241 = vadd.f32 %v12144, %v12240
    %v12242 = vpop.f32.mrf.mxu0
    %12243 = vdwg.mxu0
    %12244 = vmatprep.subr.bf16.mxu0 0
    %12245 = vmatpush1.bf16.msra.mxu0 %v11783
    %12246 = vmatprep.subr.bf16.mxu0 0
    %12247 = vmatpush1.bf16.msra.mxu0 %v11782
    %12248 = vmatprep.subr.bf16.mxu0 0
    %12249 = vmatpush1.bf16.msra.mxu0 %v11781
    %12250 = vmatprep.subr.bf16.mxu0 0
    %12251 = vmatpush1.bf16.msra.mxu0 %v11780
    %12252 = vmatprep.subr.bf16.mxu0 0
    %12253 = vmatpush1.bf16.msra.mxu0 %v11779
    %12254 = vmatprep.subr.bf16.mxu0 0
    %12255 = vmatpush1.bf16.msra.mxu0 %v11778
    %12256 = vmatprep.subr.bf16.mxu0 0
    %12257 = vmatpush1.bf16.msra.mxu0 %v11777
    %12258 = vmatprep.subr.bf16.mxu0 0
    %12259 = vmatpush1.bf16.msra.mxu0 %v11776
    %12260 = vmatprep.subr.bf16.mxu0 0
    %12261 = vmatpush2.bf16.msra.mxu0 0
    %12262 = vmatprep.subr.bf16.mxu0 0
    %12263 = vmatpush2.bf16.msra.mxu0 0
    %12264 = vmatprep.subr.bf16.mxu0 0
    %12265 = vmatpush2.bf16.msra.mxu0 0
    %12266 = vmatprep.subr.bf16.mxu0 0
    %12267 = vmatpush2.bf16.msra.mxu0 0
    %12268 = vmatprep.subr.bf16.mxu0 0
    %12269 = vmatpush2.bf16.msra.mxu0 0
    %12270 = vmatprep.subr.bf16.mxu0 0
    %12271 = vmatpush2.bf16.msra.mxu0 0
    %12272 = vmatprep.subr.bf16.mxu0 0
    %12273 = vmatpush2.bf16.msra.mxu0 0
    %12274 = vmatprep.subr.bf16.mxu0 0
    %12275 = vmatpush2.bf16.msra.mxu0 0
    %12276 = vmatprep.mubr.bf16.mxu0 0
    %12277 = vmatmul.mubr.bf16.gmra.mxu0 %v10728
    %v12278 = vpop.f32.mrf.mxu0
    %v12279 = vadd.f32 %v12182, %v12278
    %v12280 = vpop.f32.mrf.mxu0
    %v12281 = vpop.f32.mrf.mxu0
    %v12282 = vadd.f32 %v12185, %v12281
    %v12283 = vpop.f32.mrf.mxu0
    %12284 = vmatprep.mubr.bf16.mxu0 0
    %12285 = vmatmul.mubr.bf16.gmra.mxu0 %v10817
    %v12286 = vpop.f32.mrf.mxu0
    %v12287 = vadd.f32 %v12190, %v12286
    %v12288 = vpop.f32.mrf.mxu0
    %v12289 = vpop.f32.mrf.mxu0
    %v12290 = vadd.f32 %v12193, %v12289
    %v12291 = vpop.f32.mrf.mxu0
    %12292 = vmatprep.mubr.bf16.mxu0 0
    %12293 = vmatmul.mubr.bf16.gmra.mxu0 %v10906
    %v12294 = vpop.f32.mrf.mxu0
    %v12295 = vadd.f32 %v12198, %v12294
    %v12296 = vpop.f32.mrf.mxu0
    %v12297 = vpop.f32.mrf.mxu0
    %v12298 = vadd.f32 %v12201, %v12297
    %v12299 = vpop.f32.mrf.mxu0
    %12300 = vmatprep.mubr.bf16.mxu0 0
    %12301 = vmatmul.mubr.bf16.gmra.mxu0 %v10995
    %v12302 = vpop.f32.mrf.mxu0
    %v12303 = vadd.f32 %v12206, %v12302
    %v12304 = vpop.f32.mrf.mxu0
    %v12305 = vpop.f32.mrf.mxu0
    %v12306 = vadd.f32 %v12209, %v12305
    %v12307 = vpop.f32.mrf.mxu0
    %12308 = vmatprep.mubr.bf16.mxu0 0
    %12309 = vmatmul.mubr.bf16.gmra.mxu0 %v11084
    %v12310 = vpop.f32.mrf.mxu0
    %v12311 = vadd.f32 %v12214, %v12310
    %v12312 = vpop.f32.mrf.mxu0
    %v12313 = vpop.f32.mrf.mxu0
    %v12314 = vadd.f32 %v12217, %v12313
    %v12315 = vpop.f32.mrf.mxu0
    %12316 = vmatprep.mubr.bf16.mxu0 0
    %12317 = vmatmul.mubr.bf16.gmra.mxu0 %v11173
    %v12318 = vpop.f32.mrf.mxu0
    %v12319 = vadd.f32 %v12222, %v12318
    %v12320 = vpop.f32.mrf.mxu0
    %v12321 = vpop.f32.mrf.mxu0
    %v12322 = vadd.f32 %v12225, %v12321
    %v12323 = vpop.f32.mrf.mxu0
    %12324 = vmatprep.mubr.bf16.mxu0 0
    %12325 = vmatmul.mubr.bf16.gmra.mxu0 %v11262
    %v12326 = vpop.f32.mrf.mxu0
    %v12327 = vadd.f32 %v12230, %v12326
    %v12328 = vpop.f32.mrf.mxu0
    %v12329 = vpop.f32.mrf.mxu0
    %v12330 = vadd.f32 %v12233, %v12329
    %v12331 = vpop.f32.mrf.mxu0
    %12332 = vmatprep.mubr.bf16.mxu0 0
    %12333 = vmatmul.mubr.bf16.gmra.mxu0 %v11351
    %v12334 = vpop.f32.mrf.mxu0
    %v12335 = vadd.f32 %v12238, %v12334
    %v12336 = vpop.f32.mrf.mxu0
    %v12337 = vpop.f32.mrf.mxu0
    %v12338 = vadd.f32 %v12241, %v12337
    %v12339 = vpop.f32.mrf.mxu0
    %12340 = vdwg.mxu0
    %v12341 = vtanh.pop %v12279
    %v12342 = vtanh.pop %v12282
    %v12343 = vtanh.pop %v12287
    %v12344 = vtanh.pop %v12290
    %v12345 = vtanh.pop %v12295
    %v12346 = vtanh.pop %v12298
    %v12347 = vtanh.pop %v12303
    %v12348 = vtanh.pop %v12306
    %v12349 = vtanh.pop %v12311
    %v12350 = vtanh.pop %v12314
    %v12351 = vtanh.pop %v12319
    %v12352 = vtanh.pop %v12322
    %v12353 = vtanh.pop %v12327
    %v12354 = vtanh.pop %v12330
    %v12355 = vtanh.pop %v12335
    %v12356 = vtanh.pop %v12338
    %v12373 = vcombine.high %v12341, %v12341
    %v12374 = vcombine.high %v12342, %v12342
    %v12375 = vcombine.high %v12343, %v12343
    %v12376 = vcombine.high %v12344, %v12344
    %v12377 = vcombine.high %v12345, %v12345
    %v12378 = vcombine.high %v12346, %v12346
    %v12379 = vcombine.high %v12347, %v12347
    %v12380 = vcombine.high %v12348, %v12348
    %v12381 = vcombine.high %v12349, %v12349
    %v12382 = vcombine.high %v12350, %v12350
    %v12383 = vcombine.high %v12351, %v12351
    %v12384 = vcombine.high %v12352, %v12352
    %v12385 = vcombine.high %v12353, %v12353
    %v12386 = vcombine.high %v12354, %v12354
    %v12387 = vcombine.high %v12355, %v12355
    %v12388 = vcombine.high %v12356, %v12356
    %12405 = vst [vmem:[%s13] sm:$0xf] %v12341
    %12406 = vst [vmem:[%s13 + $0x4] sm:$0xf] %v12373
    %12407 = vst [vmem:[%s13 + $0x8] sm:$0xf] %v12342
    %12408 = vst [vmem:[%s13 + $0xc] sm:$0xf] %v12374
    %12409 = vst [vmem:[%s13 + $0x10] sm:$0xf] %v12343
    %12410 = vst [vmem:[%s13 + $0x14] sm:$0xf] %v12375
    %12411 = vst [vmem:[%s13 + $0x18] sm:$0xf] %v12344
    %12412 = vst [vmem:[%s13 + $0x1c] sm:$0xf] %v12376
    %12413 = vst [vmem:[%s13 + $0x20] sm:$0xf] %v12345
    %12414 = vst [vmem:[%s13 + $0x24] sm:$0xf] %v12377
    %12415 = vst [vmem:[%s13 + $0x28] sm:$0xf] %v12346
    %12416 = vst [vmem:[%s13 + $0x2c] sm:$0xf] %v12378
    %12417 = vst [vmem:[%s13 + $0x30] sm:$0xf] %v12347
    %12418 = vst [vmem:[%s13 + $0x34] sm:$0xf] %v12379
    %12419 = vst [vmem:[%s13 + $0x38] sm:$0xf] %v12348
    %12420 = vst [vmem:[%s13 + $0x3c] sm:$0xf] %v12380
    %12421 = vst [vmem:[%s13 + $0x40] sm:$0xf] %v12349
    %12422 = vst [vmem:[%s13 + $0x44] sm:$0xf] %v12381
    %12423 = vst [vmem:[%s13 + $0x48] sm:$0xf] %v12350
    %12424 = vst [vmem:[%s13 + $0x4c] sm:$0xf] %v12382
    %12425 = vst [vmem:[%s13 + $0x50] sm:$0xf] %v12351
    %12426 = vst [vmem:[%s13 + $0x54] sm:$0xf] %v12383
    %12427 = vst [vmem:[%s13 + $0x58] sm:$0xf] %v12352
    %12428 = vst [vmem:[%s13 + $0x5c] sm:$0xf] %v12384
    %12429 = vst [vmem:[%s13 + $0x60] sm:$0xf] %v12353
    %12430 = vst [vmem:[%s13 + $0x64] sm:$0xf] %v12385
    %12431 = vst [vmem:[%s13 + $0x68] sm:$0xf] %v12354
    %12432 = vst [vmem:[%s13 + $0x6c] sm:$0xf] %v12386
    %12433 = vst [vmem:[%s13 + $0x70] sm:$0xf] %v12355
    %12434 = vst [vmem:[%s13 + $0x74] sm:$0xf] %v12387
    %12435 = vst [vmem:[%s13 + $0x78] sm:$0xf] %v12356
    %12436 = vst [vmem:[%s13 + $0x7c] sm:$0xf] %v12388
    // Predicated region
    $region66: #{generator_forward.1} parent=1 // pred_check
      _
    $region67: #{generator_forward.1} parent=1 // pred_check_branch
      %12438 = sbr.rel (0) target = $region69
    $region68: #{generator_forward.1} parent=1 // pred_region
      _
    $region69: #{generator_forward.1} parent=1 // pred_fallthru
      _
    // Predicated region
    $region70: #{generator_forward.1} parent=1 // pred_check
      _
    $region71: #{generator_forward.1} parent=1 // pred_check_branch
      %12440 = sbr.rel (0) target = $region73
    $region72: #{generator_forward.1} parent=1 // pred_region
      _
    $region73: #{generator_forward.1} parent=1 // pred_fallthru
      _
    %12441 = vsyncpa [#allocation3], 1
    %12442 = vsyncpa [#allocation5], 1

</llo_original>
